<compile_context>
chip_gen: v7x
topology: tpu7x:2x2x1
jax: 0.10.0
libtpu: 0.0.40
codegen_flags: <defaults>
</compile_context>

<pallas_src>
import numpy as np
import jax
import jax.numpy as jnp
from jax import lax
from jax.experimental import pallas as pl
from jax.experimental.pallas import tpu as pltpu


# ---------------------------------------------------------------------------
# Kernel
# ---------------------------------------------------------------------------
def _make_fused_kernel(NB, D, H, W, C):
    DH = D * H
    M = NB * DH            # matmul M (rows)
    WC = W * C             # lane-dense (W, C) axis
    f32 = jnp.float32
    bf16 = jnp.bfloat16

    def kernel(x_ref, w1_ref, sh1_ref, w2_ref, sh2_ref, out_ref,
               xpad_ref, ypad_ref, col_ref):

        def zero_halo(pad_ref):
            # Zero only the +/-1 D and H halo planes; the interior is written
            # exactly once afterwards (review: halve padding-stage stores).
            zd = jnp.zeros((NB, 1, H + 2, WC), bf16)
            zh = jnp.zeros((NB, D + 2, 1, WC), bf16)
            pad_ref[:, 0:1, :, :] = zd
            pad_ref[:, D + 1:D + 2, :, :] = zd
            pad_ref[:, :, 0:1, :] = zh
            pad_ref[:, :, H + 1:H + 2, :] = zh

        def conv_bn_relu(src_ref, w_ref, shift_ref):
            # im2col: copy the 9 (kd, kh)-shifted slabs into one buffer (the
            # kw tap + W zero padding are baked into the banded weights), then
            # a single K = 9*W*C matmul with bf16 operands / f32 accumulate.
            for kd in range(3):
                for kh in range(3):
                    p = kd * 3 + kh
                    col_ref[:, :, :, p * WC:(p + 1) * WC] = (
                        src_ref[:, kd:kd + D, kh:kh + H, :])
            col = col_ref[...].reshape(M, 9 * WC)             # aligned merge
            acc = jnp.dot(col, w_ref[...],
                          preferred_element_type=f32)         # bf16 x bf16 -> f32
            # folded conv-bias + BN shift (f32), then ReLU (lane-dense).
            return jnp.maximum(acc + shift_ref[...], 0.0)

        # ---- stage 0: D/H zero-halo padded input (bf16) in VMEM -------------
        zero_halo(xpad_ref)
        xpad_ref[:, 1:D + 1, 1:H + 1, :] = x_ref[...].astype(bf16)

        # ---- conv1 -> BN -> ReLU (intermediate never leaves VMEM) -----------
        y1 = conv_bn_relu(xpad_ref, w1_ref, sh1_ref)          # (M, WC) f32
        zero_halo(ypad_ref)
        ypad_ref[:, 1:D + 1, 1:H + 1, :] = (
            y1.reshape(NB, D, H, WC).astype(bf16))

        # ---- conv2 -> BN -> ReLU, then residual add (f32) --------------------
        y2 = conv_bn_relu(ypad_ref, w2_ref, sh2_ref)          # (M, WC) f32
        resid = x_ref[...].astype(f32).reshape(M, WC)
        out_ref[...] = (y2 + resid).reshape(NB, D, H, WC).astype(out_ref.dtype)

    return kernel


# ---------------------------------------------------------------------------
# Weight preparation (trace time): BN folding + banded kw/W-padding matrix
# ---------------------------------------------------------------------------
def _banded_weights(w_folded, W):
    """w_folded: (3,3,3,Cin,Cout) DHWIO weights (BN scale already folded in).

    Returns B of shape (9*W*Cin, W*Cout) with
      B[(kd*3+kh)*W*Cin + wi*Cin + ci, wo*Cout + co] = w[kd, kh, wi-wo+1, ci, co]
    when |wi - wo| <= 1, else 0 -- the kw tap and the W zero-padding are baked
    into a banded matrix so a whole W row is one lane-dense matmul operand.
    """
    _, _, _, Cin, Cout = w_folded.shape
    ind = np.zeros((3, W, W), np.float32)          # (kw, w_in, w_out)
    for kw in range(3):
        for wo in range(W):
            wi = wo + kw - 1
            if 0 <= wi < W:
                ind[kw, wi, wo] = 1.0
    B = jnp.einsum('kxw,dhkio->dhxiwo', jnp.asarray(ind), w_folded)
    return B.reshape(9 * W * Cin, W * Cout)


def _vmem_limit_bytes():
    # Generation-aware budget: ask for at most ~half of per-core VMEM and cap
    # conservatively so a v5e/v6e-sized number does not overshoot v7x (64 MiB).
    cap = None
    try:
        cap = pltpu.get_tpu_info().vmem_capacity_bytes
    except Exception:
        cap = None
    if not cap:
        cap = 64 * 1024 * 1024
    return int(min(cap // 2, 32 * 1024 * 1024))


# ---------------------------------------------------------------------------
# Wrapper: one fused pallas_call (grid over batch, NB elements per step)
# ---------------------------------------------------------------------------
def unet_res_conv3d(x, params, eps=1e-5, batch_block=2):
    """x: (N, D, H, W, C) float32. Residual block => Cin == Cout == C."""
    N, D, H, W, C = x.shape
    WC = W * C
    NB = batch_block if (batch_block > 0 and N % batch_block == 0) else 1

    def fold(w, b, gamma, beta, mean, var):
        scale = gamma / jnp.sqrt(var + eps)            # (Cout,)
        w_f = w * scale                                # fold BN scale into weights
        shift = b * scale + (beta - mean * scale)      # fold conv bias + BN shift
        return w_f, shift

    w1f, sh1 = fold(params["w1"], params["b1"], params["g1"], params["be1"],
                    params["m1"], params["v1"])
    w2f, sh2 = fold(params["w2"], params["b2"], params["g2"], params["be2"],
                    params["m2"], params["v2"])
    assert w1f.shape[3] == w1f.shape[4] == C, "residual add requires Cin == Cout"

    # Scaling guard (review): banded weights are O(9*(W*C)^2); past small W
    # they must be W-tiled instead of built whole.
    assert 9 * WC * WC * 2 <= 8 * 1024 * 1024, (
        "banded weights too large; add W tiling before scaling up W*C")

    B1 = _banded_weights(w1f, W).astype(jnp.bfloat16)     # (9*WC, WC) bf16
    B2 = _banded_weights(w2f, W).astype(jnp.bfloat16)
    sh1_t = jnp.tile(sh1, W).reshape(1, WC).astype(jnp.float32)
    sh2_t = jnp.tile(sh2, W).reshape(1, WC).astype(jnp.float32)

    x2 = x.reshape(N, D, H, WC)                           # free reshape

    out = pl.pallas_call(
        _make_fused_kernel(NB, D, H, W, C),
        out_shape=jax.ShapeDtypeStruct((N, D, H, WC), x.dtype),
        grid_spec=pltpu.PrefetchScalarGridSpec(
            num_scalar_prefetch=0,
            grid=(N // NB,),
            in_specs=[
                pl.BlockSpec((NB, D, H, WC), lambda n: (n, 0, 0, 0)),   # x
                pl.BlockSpec((9 * WC, WC), lambda n: (0, 0)),           # B1
                pl.BlockSpec((1, WC), lambda n: (0, 0)),                # shift1
                pl.BlockSpec((9 * WC, WC), lambda n: (0, 0)),           # B2
                pl.BlockSpec((1, WC), lambda n: (0, 0)),                # shift2
            ],
            out_specs=pl.BlockSpec((NB, D, H, WC), lambda n: (n, 0, 0, 0)),
            scratch_shapes=[
                pltpu.VMEM((NB, D + 2, H + 2, WC), jnp.bfloat16),   # padded x
                pltpu.VMEM((NB, D + 2, H + 2, WC), jnp.bfloat16),   # padded y1
                pltpu.VMEM((NB, D, H, 9 * WC), jnp.bfloat16),       # im2col
            ],
        ),
        compiler_params=pltpu.CompilerParams(
            dimension_semantics=("parallel",),
            vmem_limit_bytes=_vmem_limit_bytes(),
        ),
    )(x2, B1, sh1_t, B2, sh2_t)
    return out.reshape(N, D, H, W, C)


# ---------------------------------------------------------------------------
# Deterministic parameter init (mirrors nn.Conv3d / nn.BatchNorm3d shapes)
# ---------------------------------------------------------------------------
def init_params(key, in_size, out_size):
    assert in_size == out_size, "residual add requires in_size == out_size"
    ks = jax.random.split(key, 12)

    def conv_p(kw, kb, cin, cout):
        w = 0.1 * jax.random.normal(kw, (3, 3, 3, cin, cout), jnp.float32)  # DHWIO
        b = 0.1 * jax.random.normal(kb, (cout,), jnp.float32)
        return w, b

    def bn_p(kg, kb, km, kv, c):
        gamma = 1.0 + 0.1 * jax.random.normal(kg, (c,), jnp.float32)
        beta = 0.1 * jax.random.normal(kb, (c,), jnp.float32)
        mean = 0.05 * jax.random.normal(km, (c,), jnp.float32)
        var = 1.0 + 0.1 * jax.random.uniform(kv, (c,), jnp.float32)
        return gamma, beta, mean, var

    w1, b1 = conv_p(ks[0], ks[1], in_size, out_size)
    g1, be1, m1, v1 = bn_p(ks[2], ks[3], ks[4], ks[5], out_size)
    w2, b2 = conv_p(ks[6], ks[7], out_size, out_size)
    g2, be2, m2, v2 = bn_p(ks[8], ks[9], ks[10], ks[11], out_size)
    return dict(w1=w1, b1=b1, g1=g1, be1=be1, m1=m1, v1=v1,
                w2=w2, b2=b2, g2=g2, be2=be2, m2=m2, v2=v2)


# Pure-JAX f32 reference (lax conv), used only for the correctness check.
def ref_forward(x, p, eps=1e-5):
    def cbr(x, w, b, gamma, beta, mean, var):
        y = lax.conv_general_dilated(
            x, w, window_strides=(1, 1, 1), padding="SAME",
            dimension_numbers=("NDHWC", "DHWIO", "NDHWC"),
            precision=lax.Precision.HIGHEST)
        s = gamma / jnp.sqrt(var + eps)
        y = (y + b) * s + (beta - mean * s)
        return jnp.maximum(y, 0.0)

    y = cbr(x, p["w1"], p["b1"], p["g1"], p["be1"], p["m1"], p["v1"])
    y = cbr(y, p["w2"], p["b2"], p["g2"], p["be2"], p["m2"], p["v2"])
    return y + x


if __name__ == "__main__":
    # Small demo shapes; W*C = 128 -> fully lane-dense; NB=2 -> matmul M = 128.
    N, C, D, H, W = 4, 16, 8, 8, 8
    key = jax.random.PRNGKey(0)
    kx, kp = jax.random.split(key)
    params = init_params(kp, C, C)
    x = jax.random.normal(kx, (N, D, H, W, C), jnp.float32)

    out = jax.jit(unet_res_conv3d)(x, params)
    out = jax.block_until_ready(out)

    assert out.shape == (N, D, H, W, C)
    assert bool(jnp.isfinite(out).all())

    ref = ref_forward(x, params)
    max_err = float(jnp.max(jnp.abs(out - ref)))
    scale = float(jnp.max(jnp.abs(ref)))
    # bf16 MXU operands (f32 accumulate): allow ~2% of the output dynamic range.
    if max_err > 2e-2 * max(1.0, scale):
        raise AssertionError(
            f"mismatch vs reference: max abs err {max_err} (ref scale {scale})")

    print("KERNEL_OK")
</pallas_src>

<mosaic_0001>
module attributes {stable_mosaic.version = 11 : i64} {
  func.func @kernel(%arg0: i32, %arg1: memref<2x8x8x128xf32, #tpu.memory_space<vmem>>, %arg2: memref<1152x128xbf16, #tpu.memory_space<vmem>>, %arg3: memref<1x128xf32, #tpu.memory_space<vmem>>, %arg4: memref<1152x128xbf16, #tpu.memory_space<vmem>>, %arg5: memref<1x128xf32, #tpu.memory_space<vmem>>, %arg6: memref<2x8x8x128xf32, #tpu.memory_space<vmem>>, %arg7: memref<2x10x10x128xbf16, #tpu.memory_space<vmem>>, %arg8: memref<2x10x10x128xbf16, #tpu.memory_space<vmem>>, %arg9: memref<2x8x8x1152xbf16, #tpu.memory_space<vmem>>) attributes {dimension_semantics = [#tpu.dimension_semantics<parallel>], iteration_bounds = array<i64: 2>, scalar_prefetch = 0 : i64, scratch_operands = 3 : i64, tpu.core_type = #tpu.core_type<tc>, window_params = [{transform_indices = @transform_0, window_bounds = array<i64: 2, 8, 8, 128>}, {pipeline_mode = #tpu.pipeline_mode<synchronous>, transform_indices = @transform_1, window_bounds = array<i64: 1152, 128>}, {pipeline_mode = #tpu.pipeline_mode<synchronous>, transform_indices = @transform_2, window_bounds = array<i64: 1, 128>}, {pipeline_mode = #tpu.pipeline_mode<synchronous>, transform_indices = @transform_3, window_bounds = array<i64: 1152, 128>}, {pipeline_mode = #tpu.pipeline_mode<synchronous>, transform_indices = @transform_4, window_bounds = array<i64: 1, 128>}, {transform_indices = @transform_5, window_bounds = array<i64: 2, 8, 8, 128>}]} {
    %cst = arith.constant 0.000000e+00 : bf16
    %0 = vector.broadcast %cst : bf16 to vector<2x1x10x128xbf16>
    %cst_0 = arith.constant 0.000000e+00 : bf16
    %1 = vector.broadcast %cst_0 : bf16 to vector<2x10x1x128xbf16>
    %c0 = arith.constant 0 : index
    %c0_1 = arith.constant 0 : index
    %c0_2 = arith.constant 0 : index
    %c0_3 = arith.constant 0 : index
    %2 = vector.load %arg7[%c0, %c0_1, %c0_2, %c0_3] : memref<2x10x10x128xbf16, #tpu.memory_space<vmem>>, vector<2x1x10x128xbf16>
    tpu.vector_store %arg7[%c0, %c0_1, %c0_2, %c0_3], %0 {strides = array<i32>} : memref<2x10x10x128xbf16, #tpu.memory_space<vmem>>, vector<2x1x10x128xbf16>,
    %c0_4 = arith.constant 0 : index
    %c9 = arith.constant 9 : index
    %c0_5 = arith.constant 0 : index
    %c0_6 = arith.constant 0 : index
    %3 = vector.load %arg7[%c0_4, %c9, %c0_5, %c0_6] : memref<2x10x10x128xbf16, #tpu.memory_space<vmem>>, vector<2x1x10x128xbf16>
    tpu.vector_store %arg7[%c0_4, %c9, %c0_5, %c0_6], %0 {strides = array<i32>} : memref<2x10x10x128xbf16, #tpu.memory_space<vmem>>, vector<2x1x10x128xbf16>,
    %c0_7 = arith.constant 0 : index
    %c0_8 = arith.constant 0 : index
    %c0_9 = arith.constant 0 : index
    %c0_10 = arith.constant 0 : index
    %4 = vector.load %arg7[%c0_7, %c0_8, %c0_9, %c0_10] : memref<2x10x10x128xbf16, #tpu.memory_space<vmem>>, vector<2x10x1x128xbf16>
    tpu.vector_store %arg7[%c0_7, %c0_8, %c0_9, %c0_10], %1 {strides = array<i32>} : memref<2x10x10x128xbf16, #tpu.memory_space<vmem>>, vector<2x10x1x128xbf16>,
    %c0_11 = arith.constant 0 : index
    %c0_12 = arith.constant 0 : index
    %c9_13 = arith.constant 9 : index
    %c0_14 = arith.constant 0 : index
    %5 = vector.load %arg7[%c0_11, %c0_12, %c9_13, %c0_14] : memref<2x10x10x128xbf16, #tpu.memory_space<vmem>>, vector<2x10x1x128xbf16>
    tpu.vector_store %arg7[%c0_11, %c0_12, %c9_13, %c0_14], %1 {strides = array<i32>} : memref<2x10x10x128xbf16, #tpu.memory_space<vmem>>, vector<2x10x1x128xbf16>,
    %c0_15 = arith.constant 0 : index
    %c0_16 = arith.constant 0 : index
    %c0_17 = arith.constant 0 : index
    %c0_18 = arith.constant 0 : index
    %6 = vector.load %arg1[%c0_15, %c0_16, %c0_17, %c0_18] : memref<2x8x8x128xf32, #tpu.memory_space<vmem>>, vector<2x8x8x128xf32>
    %7 = arith.truncf %6 : vector<2x8x8x128xf32> to vector<2x8x8x128xbf16>
    %c0_19 = arith.constant 0 : index
    %c1 = arith.constant 1 : index
    %c1_20 = arith.constant 1 : index
    %c0_21 = arith.constant 0 : index
    %8 = vector.load %arg7[%c0_19, %c1, %c1_20, %c0_21] : memref<2x10x10x128xbf16, #tpu.memory_space<vmem>>, vector<2x8x8x128xbf16>
    tpu.vector_store %arg7[%c0_19, %c1, %c1_20, %c0_21], %7 {strides = array<i32>} : memref<2x10x10x128xbf16, #tpu.memory_space<vmem>>, vector<2x8x8x128xbf16>,
    %c0_22 = arith.constant 0 : index
    %c0_23 = arith.constant 0 : index
    %c0_24 = arith.constant 0 : index
    %c0_25 = arith.constant 0 : index
    %9 = vector.load %arg7[%c0_22, %c0_23, %c0_24, %c0_25] : memref<2x10x10x128xbf16, #tpu.memory_space<vmem>>, vector<2x8x8x128xbf16>
    %c0_26 = arith.constant 0 : index
    %c0_27 = arith.constant 0 : index
    %c0_28 = arith.constant 0 : index
    %c0_29 = arith.constant 0 : index
    %10 = vector.load %arg9[%c0_26, %c0_27, %c0_28, %c0_29] : memref<2x8x8x1152xbf16, #tpu.memory_space<vmem>>, vector<2x8x8x128xbf16>
    tpu.vector_store %arg9[%c0_26, %c0_27, %c0_28, %c0_29], %9 {strides = array<i32>} : memref<2x8x8x1152xbf16, #tpu.memory_space<vmem>>, vector<2x8x8x128xbf16>,
    %c0_30 = arith.constant 0 : index
    %c0_31 = arith.constant 0 : index
    %c1_32 = arith.constant 1 : index
    %c0_33 = arith.constant 0 : index
    %11 = vector.load %arg7[%c0_30, %c0_31, %c1_32, %c0_33] : memref<2x10x10x128xbf16, #tpu.memory_space<vmem>>, vector<2x8x8x128xbf16>
    %c0_34 = arith.constant 0 : index
    %c0_35 = arith.constant 0 : index
    %c0_36 = arith.constant 0 : index
    %c128 = arith.constant 128 : index
    %12 = vector.load %arg9[%c0_34, %c0_35, %c0_36, %c128] : memref<2x8x8x1152xbf16, #tpu.memory_space<vmem>>, vector<2x8x8x128xbf16>
    tpu.vector_store %arg9[%c0_34, %c0_35, %c0_36, %c128], %11 {strides = array<i32>} : memref<2x8x8x1152xbf16, #tpu.memory_space<vmem>>, vector<2x8x8x128xbf16>,
    %c0_37 = arith.constant 0 : index
    %c0_38 = arith.constant 0 : index
    %c2 = arith.constant 2 : index
    %c0_39 = arith.constant 0 : index
    %13 = vector.load %arg7[%c0_37, %c0_38, %c2, %c0_39] : memref<2x10x10x128xbf16, #tpu.memory_space<vmem>>, vector<2x8x8x128xbf16>
    %c0_40 = arith.constant 0 : index
    %c0_41 = arith.constant 0 : index
    %c0_42 = arith.constant 0 : index
    %c256 = arith.constant 256 : index
    %14 = vector.load %arg9[%c0_40, %c0_41, %c0_42, %c256] : memref<2x8x8x1152xbf16, #tpu.memory_space<vmem>>, vector<2x8x8x128xbf16>
    tpu.vector_store %arg9[%c0_40, %c0_41, %c0_42, %c256], %13 {strides = array<i32>} : memref<2x8x8x1152xbf16, #tpu.memory_space<vmem>>, vector<2x8x8x128xbf16>,
    %c0_43 = arith.constant 0 : index
    %c1_44 = arith.constant 1 : index
    %c0_45 = arith.constant 0 : index
    %c0_46 = arith.constant 0 : index
    %15 = vector.load %arg7[%c0_43, %c1_44, %c0_45, %c0_46] : memref<2x10x10x128xbf16, #tpu.memory_space<vmem>>, vector<2x8x8x128xbf16>
    %c0_47 = arith.constant 0 : index
    %c0_48 = arith.constant 0 : index
    %c0_49 = arith.constant 0 : index
    %c384 = arith.constant 384 : index
    %16 = vector.load %arg9[%c0_47, %c0_48, %c0_49, %c384] : memref<2x8x8x1152xbf16, #tpu.memory_space<vmem>>, vector<2x8x8x128xbf16>
    tpu.vector_store %arg9[%c0_47, %c0_48, %c0_49, %c384], %15 {strides = array<i32>} : memref<2x8x8x1152xbf16, #tpu.memory_space<vmem>>, vector<2x8x8x128xbf16>,
    %c0_50 = arith.constant 0 : index
    %c1_51 = arith.constant 1 : index
    %c1_52 = arith.constant 1 : index
    %c0_53 = arith.constant 0 : index
    %17 = vector.load %arg7[%c0_50, %c1_51, %c1_52, %c0_53] : memref<2x10x10x128xbf16, #tpu.memory_space<vmem>>, vector<2x8x8x128xbf16>
    %c0_54 = arith.constant 0 : index
    %c0_55 = arith.constant 0 : index
    %c0_56 = arith.constant 0 : index
    %c512 = arith.constant 512 : index
    %18 = vector.load %arg9[%c0_54, %c0_55, %c0_56, %c512] : memref<2x8x8x1152xbf16, #tpu.memory_space<vmem>>, vector<2x8x8x128xbf16>
    tpu.vector_store %arg9[%c0_54, %c0_55, %c0_56, %c512], %17 {strides = array<i32>} : memref<2x8x8x1152xbf16, #tpu.memory_space<vmem>>, vector<2x8x8x128xbf16>,
    %c0_57 = arith.constant 0 : index
    %c1_58 = arith.constant 1 : index
    %c2_59 = arith.constant 2 : index
    %c0_60 = arith.constant 0 : index
    %19 = vector.load %arg7[%c0_57, %c1_58, %c2_59, %c0_60] : memref<2x10x10x128xbf16, #tpu.memory_space<vmem>>, vector<2x8x8x128xbf16>
    %c0_61 = arith.constant 0 : index
    %c0_62 = arith.constant 0 : index
    %c0_63 = arith.constant 0 : index
    %c640 = arith.constant 640 : index
    %20 = vector.load %arg9[%c0_61, %c0_62, %c0_63, %c640] : memref<2x8x8x1152xbf16, #tpu.memory_space<vmem>>, vector<2x8x8x128xbf16>
    tpu.vector_store %arg9[%c0_61, %c0_62, %c0_63, %c640], %19 {strides = array<i32>} : memref<2x8x8x1152xbf16, #tpu.memory_space<vmem>>, vector<2x8x8x128xbf16>,
    %c0_64 = arith.constant 0 : index
    %c2_65 = arith.constant 2 : index
    %c0_66 = arith.constant 0 : index
    %c0_67 = arith.constant 0 : index
    %21 = vector.load %arg7[%c0_64, %c2_65, %c0_66, %c0_67] : memref<2x10x10x128xbf16, #tpu.memory_space<vmem>>, vector<2x8x8x128xbf16>
    %c0_68 = arith.constant 0 : index
    %c0_69 = arith.constant 0 : index
    %c0_70 = arith.constant 0 : index
    %c768 = arith.constant 768 : index
    %22 = vector.load %arg9[%c0_68, %c0_69, %c0_70, %c768] : memref<2x8x8x1152xbf16, #tpu.memory_space<vmem>>, vector<2x8x8x128xbf16>
    tpu.vector_store %arg9[%c0_68, %c0_69, %c0_70, %c768], %21 {strides = array<i32>} : memref<2x8x8x1152xbf16, #tpu.memory_space<vmem>>, vector<2x8x8x128xbf16>,
    %c0_71 = arith.constant 0 : index
    %c2_72 = arith.constant 2 : index
    %c1_73 = arith.constant 1 : index
    %c0_74 = arith.constant 0 : index
    %23 = vector.load %arg7[%c0_71, %c2_72, %c1_73, %c0_74] : memref<2x10x10x128xbf16, #tpu.memory_space<vmem>>, vector<2x8x8x128xbf16>
    %c0_75 = arith.constant 0 : index
    %c0_76 = arith.constant 0 : index
    %c0_77 = arith.constant 0 : index
    %c896 = arith.constant 896 : index
    %24 = vector.load %arg9[%c0_75, %c0_76, %c0_77, %c896] : memref<2x8x8x1152xbf16, #tpu.memory_space<vmem>>, vector<2x8x8x128xbf16>
    tpu.vector_store %arg9[%c0_75, %c0_76, %c0_77, %c896], %23 {strides = array<i32>} : memref<2x8x8x1152xbf16, #tpu.memory_space<vmem>>, vector<2x8x8x128xbf16>,
    %c0_78 = arith.constant 0 : index
    %c2_79 = arith.constant 2 : index
    %c2_80 = arith.constant 2 : index
    %c0_81 = arith.constant 0 : index
    %25 = vector.load %arg7[%c0_78, %c2_79, %c2_80, %c0_81] : memref<2x10x10x128xbf16, #tpu.memory_space<vmem>>, vector<2x8x8x128xbf16>
    %c0_82 = arith.constant 0 : index
    %c0_83 = arith.constant 0 : index
    %c0_84 = arith.constant 0 : index
    %c1024 = arith.constant 1024 : index
    %26 = vector.load %arg9[%c0_82, %c0_83, %c0_84, %c1024] : memref<2x8x8x1152xbf16, #tpu.memory_space<vmem>>, vector<2x8x8x128xbf16>
    tpu.vector_store %arg9[%c0_82, %c0_83, %c0_84, %c1024], %25 {strides = array<i32>} : memref<2x8x8x1152xbf16, #tpu.memory_space<vmem>>, vector<2x8x8x128xbf16>,
    %c0_85 = arith.constant 0 : index
    %c0_86 = arith.constant 0 : index
    %c0_87 = arith.constant 0 : index
    %c0_88 = arith.constant 0 : index
    %27 = vector.load %arg9[%c0_85, %c0_86, %c0_87, %c0_88] : memref<2x8x8x1152xbf16, #tpu.memory_space<vmem>>, vector<2x8x8x1152xbf16>
    %28 = vector.shape_cast %27 : vector<2x8x8x1152xbf16> to vector<128x1152xbf16>
    %c0_89 = arith.constant 0 : index
    %c0_90 = arith.constant 0 : index
    %29 = vector.load %arg2[%c0_89, %c0_90] : memref<1152x128xbf16, #tpu.memory_space<vmem>>, vector<1152x128xbf16>
    %cst_91 = arith.constant dense<0.000000e+00> : vector<128x128xf32>
    %30 = tpu.matmul %28, %29, %cst_91 {dimension_numbers = #tpu.dot_dimension_numbers<[1], [0], [0], [1], [0, 0, 1, 1], [], []>} : vector<128x1152xbf16>, vector<1152x128xbf16>, vector<128x128xf32> -> vector<128x128xf32>
    %c0_92 = arith.constant 0 : index
    %c0_93 = arith.constant 0 : index
    %31 = vector.load %arg3[%c0_92, %c0_93] : memref<1x128xf32, #tpu.memory_space<vmem>>, vector<1x128xf32>
    %32 = vector.broadcast %31 : vector<1x128xf32> to vector<128x128xf32>
    %33 = arith.addf %30, %32 : vector<128x128xf32>
    %cst_94 = arith.constant 0.000000e+00 : f32
    %34 = vector.broadcast %cst_94 : f32 to vector<128x128xf32>
    %35 = arith.maximumf %33, %34 : vector<128x128xf32>
    %cst_95 = arith.constant 0.000000e+00 : bf16
    %36 = vector.broadcast %cst_95 : bf16 to vector<2x1x10x128xbf16>
    %cst_96 = arith.constant 0.000000e+00 : bf16
    %37 = vector.broadcast %cst_96 : bf16 to vector<2x10x1x128xbf16>
    %c0_97 = arith.constant 0 : index
    %c0_98 = arith.constant 0 : index
    %c0_99 = arith.constant 0 : index
    %c0_100 = arith.constant 0 : index
    %38 = vector.load %arg8[%c0_97, %c0_98, %c0_99, %c0_100] : memref<2x10x10x128xbf16, #tpu.memory_space<vmem>>, vector<2x1x10x128xbf16>
    tpu.vector_store %arg8[%c0_97, %c0_98, %c0_99, %c0_100], %36 {strides = array<i32>} : memref<2x10x10x128xbf16, #tpu.memory_space<vmem>>, vector<2x1x10x128xbf16>,
    %c0_101 = arith.constant 0 : index
    %c9_102 = arith.constant 9 : index
    %c0_103 = arith.constant 0 : index
    %c0_104 = arith.constant 0 : index
    %39 = vector.load %arg8[%c0_101, %c9_102, %c0_103, %c0_104] : memref<2x10x10x128xbf16, #tpu.memory_space<vmem>>, vector<2x1x10x128xbf16>
    tpu.vector_store %arg8[%c0_101, %c9_102, %c0_103, %c0_104], %36 {strides = array<i32>} : memref<2x10x10x128xbf16, #tpu.memory_space<vmem>>, vector<2x1x10x128xbf16>,
    %c0_105 = arith.constant 0 : index
    %c0_106 = arith.constant 0 : index
    %c0_107 = arith.constant 0 : index
    %c0_108 = arith.constant 0 : index
    %40 = vector.load %arg8[%c0_105, %c0_106, %c0_107, %c0_108] : memref<2x10x10x128xbf16, #tpu.memory_space<vmem>>, vector<2x10x1x128xbf16>
    tpu.vector_store %arg8[%c0_105, %c0_106, %c0_107, %c0_108], %37 {strides = array<i32>} : memref<2x10x10x128xbf16, #tpu.memory_space<vmem>>, vector<2x10x1x128xbf16>,
    %c0_109 = arith.constant 0 : index
    %c0_110 = arith.constant 0 : index
    %c9_111 = arith.constant 9 : index
    %c0_112 = arith.constant 0 : index
    %41 = vector.load %arg8[%c0_109, %c0_110, %c9_111, %c0_112] : memref<2x10x10x128xbf16, #tpu.memory_space<vmem>>, vector<2x10x1x128xbf16>
    tpu.vector_store %arg8[%c0_109, %c0_110, %c9_111, %c0_112], %37 {strides = array<i32>} : memref<2x10x10x128xbf16, #tpu.memory_space<vmem>>, vector<2x10x1x128xbf16>,
    %42 = vector.shape_cast %35 : vector<128x128xf32> to vector<2x8x8x128xf32>
    %43 = arith.truncf %42 : vector<2x8x8x128xf32> to vector<2x8x8x128xbf16>
    %c0_113 = arith.constant 0 : index
    %c1_114 = arith.constant 1 : index
    %c1_115 = arith.constant 1 : index
    %c0_116 = arith.constant 0 : index
    %44 = vector.load %arg8[%c0_113, %c1_114, %c1_115, %c0_116] : memref<2x10x10x128xbf16, #tpu.memory_space<vmem>>, vector<2x8x8x128xbf16>
    tpu.vector_store %arg8[%c0_113, %c1_114, %c1_115, %c0_116], %43 {strides = array<i32>} : memref<2x10x10x128xbf16, #tpu.memory_space<vmem>>, vector<2x8x8x128xbf16>,
    %c0_117 = arith.constant 0 : index
    %c0_118 = arith.constant 0 : index
    %c0_119 = arith.constant 0 : index
    %c0_120 = arith.constant 0 : index
    %45 = vector.load %arg8[%c0_117, %c0_118, %c0_119, %c0_120] : memref<2x10x10x128xbf16, #tpu.memory_space<vmem>>, vector<2x8x8x128xbf16>
    %c0_121 = arith.constant 0 : index
    %c0_122 = arith.constant 0 : index
    %c0_123 = arith.constant 0 : index
    %c0_124 = arith.constant 0 : index
    %46 = vector.load %arg9[%c0_121, %c0_122, %c0_123, %c0_124] : memref<2x8x8x1152xbf16, #tpu.memory_space<vmem>>, vector<2x8x8x128xbf16>
    tpu.vector_store %arg9[%c0_121, %c0_122, %c0_123, %c0_124], %45 {strides = array<i32>} : memref<2x8x8x1152xbf16, #tpu.memory_space<vmem>>, vector<2x8x8x128xbf16>,
    %c0_125 = arith.constant 0 : index
    %c0_126 = arith.constant 0 : index
    %c1_127 = arith.constant 1 : index
    %c0_128 = arith.constant 0 : index
    %47 = vector.load %arg8[%c0_125, %c0_126, %c1_127, %c0_128] : memref<2x10x10x128xbf16, #tpu.memory_space<vmem>>, vector<2x8x8x128xbf16>
    %c0_129 = arith.constant 0 : index
    %c0_130 = arith.constant 0 : index
    %c0_131 = arith.constant 0 : index
    %c128_132 = arith.constant 128 : index
    %48 = vector.load %arg9[%c0_129, %c0_130, %c0_131, %c128_132] : memref<2x8x8x1152xbf16, #tpu.memory_space<vmem>>, vector<2x8x8x128xbf16>
    tpu.vector_store %arg9[%c0_129, %c0_130, %c0_131, %c128_132], %47 {strides = array<i32>} : memref<2x8x8x1152xbf16, #tpu.memory_space<vmem>>, vector<2x8x8x128xbf16>,
    %c0_133 = arith.constant 0 : index
    %c0_134 = arith.constant 0 : index
    %c2_135 = arith.constant 2 : index
    %c0_136 = arith.constant 0 : index
    %49 = vector.load %arg8[%c0_133, %c0_134, %c2_135, %c0_136] : memref<2x10x10x128xbf16, #tpu.memory_space<vmem>>, vector<2x8x8x128xbf16>
    %c0_137 = arith.constant 0 : index
    %c0_138 = arith.constant 0 : index
    %c0_139 = arith.constant 0 : index
    %c256_140 = arith.constant 256 : index
    %50 = vector.load %arg9[%c0_137, %c0_138, %c0_139, %c256_140] : memref<2x8x8x1152xbf16, #tpu.memory_space<vmem>>, vector<2x8x8x128xbf16>
    tpu.vector_store %arg9[%c0_137, %c0_138, %c0_139, %c256_140], %49 {strides = array<i32>} : memref<2x8x8x1152xbf16, #tpu.memory_space<vmem>>, vector<2x8x8x128xbf16>,
    %c0_141 = arith.constant 0 : index
    %c1_142 = arith.constant 1 : index
    %c0_143 = arith.constant 0 : index
    %c0_144 = arith.constant 0 : index
    %51 = vector.load %arg8[%c0_141, %c1_142, %c0_143, %c0_144] : memref<2x10x10x128xbf16, #tpu.memory_space<vmem>>, vector<2x8x8x128xbf16>
    %c0_145 = arith.constant 0 : index
    %c0_146 = arith.constant 0 : index
    %c0_147 = arith.constant 0 : index
    %c384_148 = arith.constant 384 : index
    %52 = vector.load %arg9[%c0_145, %c0_146, %c0_147, %c384_148] : memref<2x8x8x1152xbf16, #tpu.memory_space<vmem>>, vector<2x8x8x128xbf16>
    tpu.vector_store %arg9[%c0_145, %c0_146, %c0_147, %c384_148], %51 {strides = array<i32>} : memref<2x8x8x1152xbf16, #tpu.memory_space<vmem>>, vector<2x8x8x128xbf16>,
    %c0_149 = arith.constant 0 : index
    %c1_150 = arith.constant 1 : index
    %c1_151 = arith.constant 1 : index
    %c0_152 = arith.constant 0 : index
    %53 = vector.load %arg8[%c0_149, %c1_150, %c1_151, %c0_152] : memref<2x10x10x128xbf16, #tpu.memory_space<vmem>>, vector<2x8x8x128xbf16>
    %c0_153 = arith.constant 0 : index
    %c0_154 = arith.constant 0 : index
    %c0_155 = arith.constant 0 : index
    %c512_156 = arith.constant 512 : index
    %54 = vector.load %arg9[%c0_153, %c0_154, %c0_155, %c512_156] : memref<2x8x8x1152xbf16, #tpu.memory_space<vmem>>, vector<2x8x8x128xbf16>
    tpu.vector_store %arg9[%c0_153, %c0_154, %c0_155, %c512_156], %53 {strides = array<i32>} : memref<2x8x8x1152xbf16, #tpu.memory_space<vmem>>, vector<2x8x8x128xbf16>,
    %c0_157 = arith.constant 0 : index
    %c1_158 = arith.constant 1 : index
    %c2_159 = arith.constant 2 : index
    %c0_160 = arith.constant 0 : index
    %55 = vector.load %arg8[%c0_157, %c1_158, %c2_159, %c0_160] : memref<2x10x10x128xbf16, #tpu.memory_space<vmem>>, vector<2x8x8x128xbf16>
    %c0_161 = arith.constant 0 : index
    %c0_162 = arith.constant 0 : index
    %c0_163 = arith.constant 0 : index
    %c640_164 = arith.constant 640 : index
    %56 = vector.load %arg9[%c0_161, %c0_162, %c0_163, %c640_164] : memref<2x8x8x1152xbf16, #tpu.memory_space<vmem>>, vector<2x8x8x128xbf16>
    tpu.vector_store %arg9[%c0_161, %c0_162, %c0_163, %c640_164], %55 {strides = array<i32>} : memref<2x8x8x1152xbf16, #tpu.memory_space<vmem>>, vector<2x8x8x128xbf16>,
    %c0_165 = arith.constant 0 : index
    %c2_166 = arith.constant 2 : index
    %c0_167 = arith.constant 0 : index
    %c0_168 = arith.constant 0 : index
    %57 = vector.load %arg8[%c0_165, %c2_166, %c0_167, %c0_168] : memref<2x10x10x128xbf16, #tpu.memory_space<vmem>>, vector<2x8x8x128xbf16>
    %c0_169 = arith.constant 0 : index
    %c0_170 = arith.constant 0 : index
    %c0_171 = arith.constant 0 : index
    %c768_172 = arith.constant 768 : index
    %58 = vector.load %arg9[%c0_169, %c0_170, %c0_171, %c768_172] : memref<2x8x8x1152xbf16, #tpu.memory_space<vmem>>, vector<2x8x8x128xbf16>
    tpu.vector_store %arg9[%c0_169, %c0_170, %c0_171, %c768_172], %57 {strides = array<i32>} : memref<2x8x8x1152xbf16, #tpu.memory_space<vmem>>, vector<2x8x8x128xbf16>,
    %c0_173 = arith.constant 0 : index
    %c2_174 = arith.constant 2 : index
    %c1_175 = arith.constant 1 : index
    %c0_176 = arith.constant 0 : index
    %59 = vector.load %arg8[%c0_173, %c2_174, %c1_175, %c0_176] : memref<2x10x10x128xbf16, #tpu.memory_space<vmem>>, vector<2x8x8x128xbf16>
    %c0_177 = arith.constant 0 : index
    %c0_178 = arith.constant 0 : index
    %c0_179 = arith.constant 0 : index
    %c896_180 = arith.constant 896 : index
    %60 = vector.load %arg9[%c0_177, %c0_178, %c0_179, %c896_180] : memref<2x8x8x1152xbf16, #tpu.memory_space<vmem>>, vector<2x8x8x128xbf16>
    tpu.vector_store %arg9[%c0_177, %c0_178, %c0_179, %c896_180], %59 {strides = array<i32>} : memref<2x8x8x1152xbf16, #tpu.memory_space<vmem>>, vector<2x8x8x128xbf16>,
    %c0_181 = arith.constant 0 : index
    %c2_182 = arith.constant 2 : index
    %c2_183 = arith.constant 2 : index
    %c0_184 = arith.constant 0 : index
    %61 = vector.load %arg8[%c0_181, %c2_182, %c2_183, %c0_184] : memref<2x10x10x128xbf16, #tpu.memory_space<vmem>>, vector<2x8x8x128xbf16>
    %c0_185 = arith.constant 0 : index
    %c0_186 = arith.constant 0 : index
    %c0_187 = arith.constant 0 : index
    %c1024_188 = arith.constant 1024 : index
    %62 = vector.load %arg9[%c0_185, %c0_186, %c0_187, %c1024_188] : memref<2x8x8x1152xbf16, #tpu.memory_space<vmem>>, vector<2x8x8x128xbf16>
    tpu.vector_store %arg9[%c0_185, %c0_186, %c0_187, %c1024_188], %61 {strides = array<i32>} : memref<2x8x8x1152xbf16, #tpu.memory_space<vmem>>, vector<2x8x8x128xbf16>,
    %c0_189 = arith.constant 0 : index
    %c0_190 = arith.constant 0 : index
    %c0_191 = arith.constant 0 : index
    %c0_192 = arith.constant 0 : index
    %63 = vector.load %arg9[%c0_189, %c0_190, %c0_191, %c0_192] : memref<2x8x8x1152xbf16, #tpu.memory_space<vmem>>, vector<2x8x8x1152xbf16>
    %64 = vector.shape_cast %63 : vector<2x8x8x1152xbf16> to vector<128x1152xbf16>
    %c0_193 = arith.constant 0 : index
    %c0_194 = arith.constant 0 : index
    %65 = vector.load %arg4[%c0_193, %c0_194] : memref<1152x128xbf16, #tpu.memory_space<vmem>>, vector<1152x128xbf16>
    %cst_195 = arith.constant dense<0.000000e+00> : vector<128x128xf32>
    %66 = tpu.matmul %64, %65, %cst_195 {dimension_numbers = #tpu.dot_dimension_numbers<[1], [0], [0], [1], [0, 0, 1, 1], [], []>} : vector<128x1152xbf16>, vector<1152x128xbf16>, vector<128x128xf32> -> vector<128x128xf32>
    %c0_196 = arith.constant 0 : index
    %c0_197 = arith.constant 0 : index
    %67 = vector.load %arg5[%c0_196, %c0_197] : memref<1x128xf32, #tpu.memory_space<vmem>>, vector<1x128xf32>
    %68 = vector.broadcast %67 : vector<1x128xf32> to vector<128x128xf32>
    %69 = arith.addf %66, %68 : vector<128x128xf32>
    %cst_198 = arith.constant 0.000000e+00 : f32
    %70 = vector.broadcast %cst_198 : f32 to vector<128x128xf32>
    %71 = arith.maximumf %69, %70 : vector<128x128xf32>
    %c0_199 = arith.constant 0 : index
    %c0_200 = arith.constant 0 : index
    %c0_201 = arith.constant 0 : index
    %c0_202 = arith.constant 0 : index
    %72 = vector.load %arg1[%c0_199, %c0_200, %c0_201, %c0_202] : memref<2x8x8x128xf32, #tpu.memory_space<vmem>>, vector<2x8x8x128xf32>
    %73 = vector.shape_cast %72 : vector<2x8x8x128xf32> to vector<128x128xf32>
    %74 = arith.addf %71, %73 : vector<128x128xf32>
    %75 = vector.shape_cast %74 : vector<128x128xf32> to vector<2x8x8x128xf32>
    %c0_203 = arith.constant 0 : index
    %c0_204 = arith.constant 0 : index
    %c0_205 = arith.constant 0 : index
    %c0_206 = arith.constant 0 : index
    %76 = vector.load %arg6[%c0_203, %c0_204, %c0_205, %c0_206] : memref<2x8x8x128xf32, #tpu.memory_space<vmem>>, vector<2x8x8x128xf32>
    tpu.vector_store %arg6[%c0_203, %c0_204, %c0_205, %c0_206], %75 {strides = array<i32>} : memref<2x8x8x128xf32, #tpu.memory_space<vmem>>, vector<2x8x8x128xf32>,
    return
  }
  func.func @transform_0(%arg0: i32) -> (i32, i32, i32, i32) {
    %c0_i32 = arith.constant 0 : i32
    %c0_i32_0 = arith.constant 0 : i32
    %c0_i32_1 = arith.constant 0 : i32
    %c0_i32_2 = arith.constant 0 : i32
    return %arg0, %c0_i32, %c0_i32_0, %c0_i32_1 : i32, i32, i32, i32
  }
  func.func @transform_1(%arg0: i32) -> (i32, i32) {
    %c0_i32 = arith.constant 0 : i32
    %c0_i32_0 = arith.constant 0 : i32
    %c0_i32_1 = arith.constant 0 : i32
    return %c0_i32, %c0_i32_0 : i32, i32
  }
  func.func @transform_2(%arg0: i32) -> (i32, i32) {
    %c0_i32 = arith.constant 0 : i32
    %c0_i32_0 = arith.constant 0 : i32
    %c0_i32_1 = arith.constant 0 : i32
    return %c0_i32, %c0_i32_0 : i32, i32
  }
  func.func @transform_3(%arg0: i32) -> (i32, i32) {
    %c0_i32 = arith.constant 0 : i32
    %c0_i32_0 = arith.constant 0 : i32
    %c0_i32_1 = arith.constant 0 : i32
    return %c0_i32, %c0_i32_0 : i32, i32
  }
  func.func @transform_4(%arg0: i32) -> (i32, i32) {
    %c0_i32 = arith.constant 0 : i32
    %c0_i32_0 = arith.constant 0 : i32
    %c0_i32_1 = arith.constant 0 : i32
    return %c0_i32, %c0_i32_0 : i32, i32
  }
  func.func @transform_5(%arg0: i32) -> (i32, i32, i32, i32) {
    %c0_i32 = arith.constant 0 : i32
    %c0_i32_0 = arith.constant 0 : i32
    %c0_i32_1 = arith.constant 0 : i32
    %c0_i32_2 = arith.constant 0 : i32
    return %arg0, %c0_i32, %c0_i32_0, %c0_i32_1 : i32, i32, i32, i32
  }
}

</mosaic_0001>

<llo_original>
// kernel: tile.13
$region0: #{tile.13}
  #allocation0 [shape = 's32[1]{0}', space=sflag, size = 0x4, scoped, tag = 'scoped memory for tile.13']
  %s0 = inlined_call_operand.vmem [shape: f32[16], index: 0, kind: input, shape index: {}]
  %s1 = inlined_call_operand.vmem [shape: f32[8,16], index: 1, kind: output, shape index: {}]
  // Predicated region
  $region2: #{tile.13} parent=0 // pred_check
    _
  $region3: #{tile.13} parent=0 // pred_check_branch
    %3 = sbr.rel (0) target = $region5
  $region4: #{tile.13} parent=0 // pred_region
    _
  $region5: #{tile.13} parent=0 // pred_fallthru
    _
  %v4 = vld [vmem:[%s0] ss:$0 sm:$0xff]
  %5 = vst [vmem:[%s1] sm:$0xff] %v4

// kernel: tile.14
$region0: #{tile.14}
  %s0 = inlined_call_operand.vmem [shape: f32[8,16], index: 0, kind: input, shape index: {}]
  %s1 = inlined_call_operand.vmem [shape: f32[1,128], index: 1, kind: output, shape index: {}]
  $region1: #{tile.14} parent=0
    #allocation0 [shape = 'u8[4096]{0}', space=vmem, size = 0x1000, scoped, tag = 'scoped mem for output reshape']
    %v2 = vld [vmem:[%s0] sm:$0x1]
    %vm3 = vcmask 130048
    %4 = vst.msk [vmem:[#allocation0] sm:$0x1] %vm3, %v2
    %s5 = scalar_lea.vmem %s0, 7
    %v6 = vld [vmem:[%s5] sm:$0x1]
    %7 = vrot.lane.b32.xlu0 %v6, 112
    %v8 = vpop.permute.xlu0 %7
    %vm9 = vcmask 1048448
    %10 = vst.msk [vmem:[#allocation0] sm:$0x1] %vm9, %v8
    %s11 = scalar_lea.vmem %s0, 6
    %v12 = vld [vmem:[%s11] sm:$0x1]
    %13 = vrot.lane.b32.xlu0 %v12, 96
    %v14 = vpop.permute.xlu0 %13
    %vm15 = vcmask 917248
    %16 = vst.msk [vmem:[#allocation0] sm:$0x1] %vm15, %v14
    %s17 = scalar_lea.vmem %s0, 5
    %v18 = vld [vmem:[%s17] sm:$0x1]
    %19 = vrot.lane.b32.xlu0 %v18, 80
    %v20 = vpop.permute.xlu0 %19
    %vm21 = vcmask 786048
    %22 = vst.msk [vmem:[#allocation0] sm:$0x1] %vm21, %v20
    %s23 = scalar_lea.vmem %s0, 4
    %v24 = vld [vmem:[%s23] sm:$0x1]
    %25 = vrot.lane.b32.xlu0 %v24, 64
    %v26 = vpop.permute.xlu0 %25
    %vm27 = vcmask 654848
    %28 = vst.msk [vmem:[#allocation0] sm:$0x1] %vm27, %v26
    %s29 = scalar_lea.vmem %s0, 3
    %v30 = vld [vmem:[%s29] sm:$0x1]
    %31 = vrot.lane.b32.xlu0 %v30, 48
    %v32 = vpop.permute.xlu0 %31
    %vm33 = vcmask 523648
    %34 = vst.msk [vmem:[#allocation0] sm:$0x1] %vm33, %v32
    %s35 = scalar_lea.vmem %s0, 2
    %v36 = vld [vmem:[%s35] sm:$0x1]
    %37 = vrot.lane.b32.xlu0 %v36, 32
    %v38 = vpop.permute.xlu0 %37
    %vm39 = vcmask 392448
    %40 = vst.msk [vmem:[#allocation0] sm:$0x1] %vm39, %v38
    %s41 = scalar_lea.vmem %s0, 1
    %v42 = vld [vmem:[%s41] sm:$0x1]
    %43 = vrot.lane.b32.xlu0 %v42, 16
    %v44 = vpop.permute.xlu0 %43
    %vm45 = vcmask 261248
    %46 = vst.msk [vmem:[#allocation0] sm:$0x1] %vm45, %v44
    %s48 = sshllo.u32 0, 1
    %v50 = vld [vmem:[#allocation0] sm:%s48]
    %s51 = sshllo.u32 0, 1
    %52 = vst [vmem:[%s1] sm:%s51] %v50

// kernel: unet_res_conv3d.1
$region0: #{unet_res_conv3d.1}
  #allocation0 [shape = 'u32[]', space=smem, size = 0x4, offset = 0x4, fixed_abs, tag = 'smem constant byte address 0x4 - core index']
  #allocation1 [shape = 'u32[144,128]{1,0:T(1,128)}', space=vmem, size = 0x12000, scoped, tag = 'internal scratch']
  #allocation2 [shape = 'bf16[2,10,10,128]{3,2,1,0:T(8,128)(2,1)}', space=vmem, size = 0x14000, scoped, tag = 'scratch operand']
  #allocation3 [shape = 'bf16[2,10,10,128]{3,2,1,0:T(8,128)(2,1)}', space=vmem, size = 0x14000, scoped, tag = 'scratch operand']
  #allocation4 [shape = 'bf16[2,8,8,1152]{3,2,1,0:T(8,128)(2,1)}', space=vmem, size = 0x48000, scoped, tag = 'scratch operand']
  %s0 = inlined_call_operand.vmem [shape: f32[4,8,8,128], index: 0, kind: input, shape index: {}]
  %s1 = inlined_call_operand.vmem [shape: bf16[1152,128], index: 1, kind: input, shape index: {}]
  %s2 = inlined_call_operand.vmem [shape: f32[1,128], index: 2, kind: input, shape index: {}]
  %s3 = inlined_call_operand.vmem [shape: bf16[1152,128], index: 3, kind: input, shape index: {}]
  %s4 = inlined_call_operand.vmem [shape: f32[1,128], index: 4, kind: input, shape index: {}]
  %s5 = inlined_call_operand.vmem [shape: f32[4,8,8,128], index: 5, kind: output, shape index: {}]
  %s6 = sld [smem:[#allocation0]]
  $region53: #{unet_res_conv3d.1} parent=0
    _
  %s8 = ssub.s32 1, %s6
  %s9 = scalar_select 0, %s8, %s6
  loop: start=0, step=1, limit=4
  $region2: #{unet_res_conv3d.1} parent=0 // loop_pre_header
    _
  $region3: #{unet_res_conv3d.1} parent=0 // loop_header
    %s11 = sphi 0, %s15
    %p12 = scmp.ge.s32.totalorder %s11, 4
    %s21 = sphi 0, %s23
    %s24 = sphi 0, %s21
    %s25 = sphi 0, %s24
    %s41 = sphi 0, %s25
    %s45 = sphi 0, %s45
    %s47 = sphi 0, %s45
    %s48 = sphi 0, %s47
    %s62 = sphi 0, %s48
    %s66 = sphi 0, %s66
    %s68 = sphi 0, %s66
    %s69 = sphi 0, %s68
    %s83 = sphi 0, %s69
    %s87 = sphi 0, %s87
    %s89 = sphi 0, %s87
    %s90 = sphi 0, %s89
    %s104 = sphi 0, %s90
    %s108 = sphi 0, %s108
    %s110 = sphi 0, %s108
    %s111 = sphi 0, %s110
    %s125 = sphi 0, %s111
    %s131 = sphi 0, %s133
    %s134 = sphi 0, %s131
    %s135 = sphi 0, %s134
    %s151 = sphi 0, %s135
  $region4: #{unet_res_conv3d.1} parent=0 // loop_header_branch
    %14 = sbr.rel (%p12) target = $region8
  $region5: #{unet_res_conv3d.1} parent=0 // loop_body
    %s16 = ssub.s32 %s11, 1
    %s17 = ssub.s32 %s11, 2
    %s18 = sadd.s32 %s11, 1
    %s19 = ssub.s32 %s11, %s18
    %p20 = scmp.eq.s32.totalorder %s19, 0
    %s22 = sadd.s32 %s21, 1
    %s23 = scalar_select %p20, %s21, %s22
    %p26 = pneg %p20
    %p27 = scmp.eq.s32.totalorder %s11, 1
    %p28 = por %p26, %p27
    %p29 = scmp.ne.s32.totalorder %s21, %s24
    %p30 = scmp.eq.s32.totalorder %s11, 0
    %p31 = por %p29, %p30
    %p32 = scmp.ne.s32.totalorder %s21, %s24
    %p33 = scmp.eq.s32.totalorder %s16, 1
    %p34 = por %p32, %p33
    %p35 = scmp.ne.s32.totalorder %s24, %s25
    %p36 = scmp.eq.s32.totalorder %s16, 0
    %p37 = por %p35, %p36
    %p38 = scmp.ne.s32.totalorder %s24, %s25
    %p39 = scmp.eq.s32.totalorder %s17, 1
    %p40 = por %p38, %p39
    %p42 = scmp.ne.s32.totalorder %s25, %s41
    %p43 = scmp.eq.s32.totalorder %s17, 0
    %p44 = por %p42, %p43
    %s46 = sadd.s32 %s45, 1
    %p49 = scmp.eq.s32.totalorder %s11, 1
    %p50 = scmp.ne.s32.totalorder %s45, %s47
    %p51 = scmp.eq.s32.totalorder %s11, 0
    %p52 = por %p50, %p51
    %p53 = scmp.ne.s32.totalorder %s45, %s47
    %p54 = scmp.eq.s32.totalorder %s16, 1
    %p55 = por %p53, %p54
    %p56 = scmp.ne.s32.totalorder %s47, %s48
    %p57 = scmp.eq.s32.totalorder %s16, 0
    %p58 = por %p56, %p57
    %p59 = scmp.ne.s32.totalorder %s47, %s48
    %p60 = scmp.eq.s32.totalorder %s17, 1
    %p61 = por %p59, %p60
    %p63 = scmp.ne.s32.totalorder %s48, %s62
    %p64 = scmp.eq.s32.totalorder %s17, 0
    %p65 = por %p63, %p64
    %s67 = sadd.s32 %s66, 1
    %p70 = scmp.eq.s32.totalorder %s11, 1
    %p71 = scmp.ne.s32.totalorder %s66, %s68
    %p72 = scmp.eq.s32.totalorder %s11, 0
    %p73 = por %p71, %p72
    %p74 = scmp.ne.s32.totalorder %s66, %s68
    %p75 = scmp.eq.s32.totalorder %s16, 1
    %p76 = por %p74, %p75
    %p77 = scmp.ne.s32.totalorder %s68, %s69
    %p78 = scmp.eq.s32.totalorder %s16, 0
    %p79 = por %p77, %p78
    %p80 = scmp.ne.s32.totalorder %s68, %s69
    %p81 = scmp.eq.s32.totalorder %s17, 1
    %p82 = por %p80, %p81
    %p84 = scmp.ne.s32.totalorder %s69, %s83
    %p85 = scmp.eq.s32.totalorder %s17, 0
    %p86 = por %p84, %p85
    %s88 = sadd.s32 %s87, 1
    %p91 = scmp.eq.s32.totalorder %s11, 1
    %p92 = scmp.ne.s32.totalorder %s87, %s89
    %p93 = scmp.eq.s32.totalorder %s11, 0
    %p94 = por %p92, %p93
    %p95 = scmp.ne.s32.totalorder %s87, %s89
    %p96 = scmp.eq.s32.totalorder %s16, 1
    %p97 = por %p95, %p96
    %p98 = scmp.ne.s32.totalorder %s89, %s90
    %p99 = scmp.eq.s32.totalorder %s16, 0
    %p100 = por %p98, %p99
    %p101 = scmp.ne.s32.totalorder %s89, %s90
    %p102 = scmp.eq.s32.totalorder %s17, 1
    %p103 = por %p101, %p102
    %p105 = scmp.ne.s32.totalorder %s90, %s104
    %p106 = scmp.eq.s32.totalorder %s17, 0
    %p107 = por %p105, %p106
    %s109 = sadd.s32 %s108, 1
    %p112 = scmp.eq.s32.totalorder %s11, 1
    %p113 = scmp.ne.s32.totalorder %s108, %s110
    %p114 = scmp.eq.s32.totalorder %s11, 0
    %p115 = por %p113, %p114
    %p116 = scmp.ne.s32.totalorder %s108, %s110
    %p117 = scmp.eq.s32.totalorder %s16, 1
    %p118 = por %p116, %p117
    %p119 = scmp.ne.s32.totalorder %s110, %s111
    %p120 = scmp.eq.s32.totalorder %s16, 0
    %p121 = por %p119, %p120
    %p122 = scmp.ne.s32.totalorder %s110, %s111
    %p123 = scmp.eq.s32.totalorder %s17, 1
    %p124 = por %p122, %p123
    %p126 = scmp.ne.s32.totalorder %s111, %s125
    %p127 = scmp.eq.s32.totalorder %s17, 0
    %p128 = por %p126, %p127
    %s129 = ssub.s32 %s11, %s18
    %p130 = scmp.eq.s32.totalorder %s129, 0
    %s132 = sadd.s32 %s131, 1
    %s133 = scalar_select %p130, %s131, %s132
    %p136 = pneg %p130
    %p137 = scmp.eq.s32.totalorder %s11, 1
    %p138 = por %p136, %p137
    %p139 = scmp.ne.s32.totalorder %s131, %s134
    %p140 = scmp.eq.s32.totalorder %s11, 0
    %p141 = por %p139, %p140
    %p142 = scmp.ne.s32.totalorder %s131, %s134
    %p143 = scmp.eq.s32.totalorder %s16, 1
    %p144 = por %p142, %p143
    %p145 = scmp.ne.s32.totalorder %s134, %s135
    %p146 = scmp.eq.s32.totalorder %s16, 0
    %p147 = por %p145, %p146
    %p148 = scmp.ne.s32.totalorder %s134, %s135
    %p149 = scmp.eq.s32.totalorder %s17, 1
    %p150 = por %p148, %p149
    %p152 = scmp.ne.s32.totalorder %s135, %s151
    %p153 = scmp.eq.s32.totalorder %s17, 0
    %p154 = por %p152, %p153
    %p155 = scmp.le.s32.totalorder 1, %s11
    %p156 = scmp.lt.s32.totalorder %s11, 3
    %p157 = pnand %p155, %p156
    %p158 = pneg %p157
    // Predicated region
    $region9: #{unet_res_conv3d.1} parent=5 // pred_check
      _
    $region10: #{unet_res_conv3d.1} parent=5 // pred_check_branch
      %160 = sbr.rel (%p157) target = $region12
    $region11: #{unet_res_conv3d.1} parent=5 // pred_region
      %s161 = ssub.s32 %s11, 1
      // Predicated region
      $region13: #{unet_res_conv3d.1} parent=11 // pred_check
        %p162 = pneg %p58
      $region14: #{unet_res_conv3d.1} parent=11 // pred_check_branch
        %164 = sbr.rel (%p162) target = $region16
      $region15: #{unet_res_conv3d.1} parent=11 // pred_region
        _
      $region16: #{unet_res_conv3d.1} parent=11 // pred_fallthru
        _
      // Predicated region
      $region17: #{unet_res_conv3d.1} parent=11 // pred_check
        %p165 = pneg %p79
      $region18: #{unet_res_conv3d.1} parent=11 // pred_check_branch
        %167 = sbr.rel (%p165) target = $region20
      $region19: #{unet_res_conv3d.1} parent=11 // pred_region
        _
      $region20: #{unet_res_conv3d.1} parent=11 // pred_fallthru
        _
      // Predicated region
      $region21: #{unet_res_conv3d.1} parent=11 // pred_check
        %p168 = pneg %p100
      $region22: #{unet_res_conv3d.1} parent=11 // pred_check_branch
        %170 = sbr.rel (%p168) target = $region24
      $region23: #{unet_res_conv3d.1} parent=11 // pred_region
        _
      $region24: #{unet_res_conv3d.1} parent=11 // pred_fallthru
        _
      // Predicated region
      $region25: #{unet_res_conv3d.1} parent=11 // pred_check
        %p171 = pneg %p121
      $region26: #{unet_res_conv3d.1} parent=11 // pred_check_branch
        %173 = sbr.rel (%p171) target = $region28
      $region27: #{unet_res_conv3d.1} parent=11 // pred_region
        _
      $region28: #{unet_res_conv3d.1} parent=11 // pred_fallthru
        _
    $region12: #{unet_res_conv3d.1} parent=5 // pred_fallthru
      _
    %p174 = scmp.lt.s32.totalorder %s11, 2
    // Predicated region
    $region29: #{unet_res_conv3d.1} parent=5 // pred_check
      %p175 = pneg %p174
    $region30: #{unet_res_conv3d.1} parent=5 // pred_check_branch
      %177 = sbr.rel (%p175) target = $region32
    $region31: #{unet_res_conv3d.1} parent=5 // pred_region
      // Predicated region
      $region33: #{unet_res_conv3d.1} parent=31 // pred_check
        %p178 = pneg %p31
      $region34: #{unet_res_conv3d.1} parent=31 // pred_check_branch
        %180 = sbr.rel (%p178) target = $region36
      $region35: #{unet_res_conv3d.1} parent=31 // pred_region
        %s181 = smul.u32 2, %s11
        %p182 = scmp.lt.s32.totalorder %s181, 3
        %s183 = scalar_select %p182, %s181, 3
        %s184 = smul.addr %s183, 8
        %s185 = smul.addr %s184, 8
        %s186 = scalar_lea.vmem %s0, %s185
        %s187 = smul.u32 2, %s11
      $region36: #{unet_res_conv3d.1} parent=31 // pred_fallthru
        _
    $region32: #{unet_res_conv3d.1} parent=5 // pred_fallthru
      _
    %p188 = scmp.le.s32.totalorder 1, %s11
    %p189 = scmp.lt.s32.totalorder %s11, 3
    %p190 = pnand %p188, %p189
    %p191 = pneg %p190
    // Predicated region
    $region37: #{unet_res_conv3d.1} parent=5 // pred_check
      _
    $region38: #{unet_res_conv3d.1} parent=5 // pred_check_branch
      %193 = sbr.rel (%p190) target = $region40
    $region39: #{unet_res_conv3d.1} parent=5 // pred_region
      %s194 = ssub.s32 %s11, 1
      %s195 = smul.u32 2, %s16
      %p196 = scmp.lt.s32.totalorder %s195, 3
      %s197 = scalar_select %p196, %s195, 3
      %s198 = smul.addr %s197, 8
      %s199 = smul.addr %s198, 8
      %s200 = scalar_lea.vmem %s0, %s199
      %p201 = pneg %p37
      %p202 = pneg %p34
      %p203 = pneg %p58
      %p204 = pneg %p55
      %p205 = pneg %p79
      %p206 = pneg %p76
      %p207 = pneg %p100
      %p208 = pneg %p97
      %p209 = pneg %p121
      %p210 = pneg %p118
      %p211 = pneg %p147
      %p212 = pneg %p144
      %s213 = smul.u32 2, %s16
      %p214 = scmp.lt.s32.totalorder %s213, 3
      %s215 = scalar_select %p214, %s213, 3
      %s216 = smul.addr %s215, 8
      %s217 = smul.addr %s216, 8
      %s218 = scalar_lea.vmem %s5, %s217
      %s219 = smul.u32 2, %s16
      %p220 = scmp.lt.s32.totalorder %s219, 3
      %s221 = scalar_select %p220, %s219, 3
      %s222 = smul.addr %s221, 8
      %s223 = smul.addr %s222, 8
      %s224 = scalar_lea.vmem %s0, %s223
      %s225 = smul.u32 2, %s16
      %s226 = smul.u32 2, %s16
      %p227 = scmp.lt.s32.totalorder %s226, 3
      %s228 = scalar_select %p227, %s226, 3
      %s229 = smul.addr %s228, 8
      %s230 = smul.addr %s229, 8
      %s231 = scalar_lea.vmem %s5, %s230
      %s232 = smul.u32 2, %s16
      %234 = vst [vmem:[#allocation2] sm:$0xf] 0
      %235 = vst [vmem:[#allocation2 + $0x4] sm:$0x1] 0
      %236 = vst [vmem:[#allocation2 + $0x50] sm:$0xf] 0
      %237 = vst [vmem:[#allocation2 + $0x54] sm:$0x1] 0
      %s238 = scalar_lea.vmem [#allocation2], 72
      %239 = vst [vmem:[%s238] sm:$0xf] 0
      %240 = vst [vmem:[%s238 + $0x4] sm:$0x1] 0
      %241 = vst [vmem:[%s238 + $0x50] sm:$0xf] 0
      %242 = vst [vmem:[%s238 + $0x54] sm:$0x1] 0
      %vm243 = vcmask 1040384
      %vm244 = vsmask.f32 256
      %vm245 = vmand %vm243, %vm244
      %v246 = vld [vmem:[#allocation2] sm:$0x1]
      %v247 = vsel %vm245, 0, %v246
      %248 = vst [vmem:[#allocation2] sm:$0x1] %v247
      %v249 = vld [vmem:[#allocation2 + $0x8] sm:$0x1]
      %v250 = vsel %vm245, 0, %v249
      %251 = vst [vmem:[#allocation2 + $0x8] sm:$0x1] %v250
      %v252 = vld [vmem:[#allocation2 + $0x10] sm:$0x1]
      %v253 = vsel %vm245, 0, %v252
      %254 = vst [vmem:[#allocation2 + $0x10] sm:$0x1] %v253
      %v255 = vld [vmem:[#allocation2 + $0x18] sm:$0x1]
      %v256 = vsel %vm245, 0, %v255
      %257 = vst [vmem:[#allocation2 + $0x18] sm:$0x1] %v256
      %v258 = vld [vmem:[#allocation2 + $0x20] sm:$0x1]
      %v259 = vsel %vm245, 0, %v258
      %260 = vst [vmem:[#allocation2 + $0x20] sm:$0x1] %v259
      %v261 = vld [vmem:[#allocation2 + $0x28] sm:$0x1]
      %v262 = vsel %vm245, 0, %v261
      %263 = vst [vmem:[#allocation2 + $0x28] sm:$0x1] %v262
      %v264 = vld [vmem:[#allocation2 + $0x30] sm:$0x1]
      %v265 = vsel %vm245, 0, %v264
      %266 = vst [vmem:[#allocation2 + $0x30] sm:$0x1] %v265
      %v267 = vld [vmem:[#allocation2 + $0x38] sm:$0x1]
      %v268 = vsel %vm245, 0, %v267
      %269 = vst [vmem:[#allocation2 + $0x38] sm:$0x1] %v268
      %v270 = vld [vmem:[#allocation2 + $0x40] sm:$0x1]
      %v271 = vsel %vm245, 0, %v270
      %272 = vst [vmem:[#allocation2 + $0x40] sm:$0x1] %v271
      %v273 = vld [vmem:[#allocation2 + $0x48] sm:$0x1]
      %v274 = vsel %vm245, 0, %v273
      %275 = vst [vmem:[#allocation2 + $0x48] sm:$0x1] %v274
      %v276 = vld [vmem:[#allocation2 + $0x50] sm:$0x1]
      %v277 = vsel %vm245, 0, %v276
      %278 = vst [vmem:[#allocation2 + $0x50] sm:$0x1] %v277
      %v279 = vld [vmem:[#allocation2 + $0x58] sm:$0x1]
      %v280 = vsel %vm245, 0, %v279
      %281 = vst [vmem:[#allocation2 + $0x58] sm:$0x1] %v280
      %v282 = vld [vmem:[#allocation2 + $0x60] sm:$0x1]
      %v283 = vsel %vm245, 0, %v282
      %284 = vst [vmem:[#allocation2 + $0x60] sm:$0x1] %v283
      %v285 = vld [vmem:[#allocation2 + $0x68] sm:$0x1]
      %v286 = vsel %vm245, 0, %v285
      %287 = vst [vmem:[#allocation2 + $0x68] sm:$0x1] %v286
      %v288 = vld [vmem:[#allocation2 + $0x70] sm:$0x1]
      %v289 = vsel %vm245, 0, %v288
      %290 = vst [vmem:[#allocation2 + $0x70] sm:$0x1] %v289
      %v291 = vld [vmem:[#allocation2 + $0x78] sm:$0x1]
      %v292 = vsel %vm245, 0, %v291
      %293 = vst [vmem:[#allocation2 + $0x78] sm:$0x1] %v292
      %v294 = vld [vmem:[#allocation2 + $0x80] sm:$0x1]
      %v295 = vsel %vm245, 0, %v294
      %296 = vst [vmem:[#allocation2 + $0x80] sm:$0x1] %v295
      %v297 = vld [vmem:[#allocation2 + $0x88] sm:$0x1]
      %v298 = vsel %vm245, 0, %v297
      %299 = vst [vmem:[#allocation2 + $0x88] sm:$0x1] %v298
      %v300 = vld [vmem:[#allocation2 + $0x90] sm:$0x1]
      %v301 = vsel %vm245, 0, %v300
      %302 = vst [vmem:[#allocation2 + $0x90] sm:$0x1] %v301
      %v303 = vld [vmem:[#allocation2 + $0x98] sm:$0x1]
      %v304 = vsel %vm245, 0, %v303
      %305 = vst [vmem:[#allocation2 + $0x98] sm:$0x1] %v304
      %vm306 = vsmask.f32 7938
      %vm307 = vmand %vm243, %vm306
      %v308 = vld [vmem:[#allocation2 + $0x4] sm:$0x1]
      %v309 = vsel %vm307, 0, %v308
      %310 = vst [vmem:[#allocation2 + $0x4] sm:$0x1] %v309
      %v311 = vld [vmem:[#allocation2 + $0xc] sm:$0x1]
      %v312 = vsel %vm307, 0, %v311
      %313 = vst [vmem:[#allocation2 + $0xc] sm:$0x1] %v312
      %v314 = vld [vmem:[#allocation2 + $0x14] sm:$0x1]
      %v315 = vsel %vm307, 0, %v314
      %316 = vst [vmem:[#allocation2 + $0x14] sm:$0x1] %v315
      %v317 = vld [vmem:[#allocation2 + $0x1c] sm:$0x1]
      %v318 = vsel %vm307, 0, %v317
      %319 = vst [vmem:[#allocation2 + $0x1c] sm:$0x1] %v318
      %v320 = vld [vmem:[#allocation2 + $0x24] sm:$0x1]
      %v321 = vsel %vm307, 0, %v320
      %322 = vst [vmem:[#allocation2 + $0x24] sm:$0x1] %v321
      %v323 = vld [vmem:[#allocation2 + $0x2c] sm:$0x1]
      %v324 = vsel %vm307, 0, %v323
      %325 = vst [vmem:[#allocation2 + $0x2c] sm:$0x1] %v324
      %v326 = vld [vmem:[#allocation2 + $0x34] sm:$0x1]
      %v327 = vsel %vm307, 0, %v326
      %328 = vst [vmem:[#allocation2 + $0x34] sm:$0x1] %v327
      %v329 = vld [vmem:[#allocation2 + $0x3c] sm:$0x1]
      %v330 = vsel %vm307, 0, %v329
      %331 = vst [vmem:[#allocation2 + $0x3c] sm:$0x1] %v330
      %v332 = vld [vmem:[#allocation2 + $0x44] sm:$0x1]
      %v333 = vsel %vm307, 0, %v332
      %334 = vst [vmem:[#allocation2 + $0x44] sm:$0x1] %v333
      %v335 = vld [vmem:[#allocation2 + $0x4c] sm:$0x1]
      %v336 = vsel %vm307, 0, %v335
      %337 = vst [vmem:[#allocation2 + $0x4c] sm:$0x1] %v336
      %v338 = vld [vmem:[#allocation2 + $0x54] sm:$0x1]
      %v339 = vsel %vm307, 0, %v338
      %340 = vst [vmem:[#allocation2 + $0x54] sm:$0x1] %v339
      %v341 = vld [vmem:[#allocation2 + $0x5c] sm:$0x1]
      %v342 = vsel %vm307, 0, %v341
      %343 = vst [vmem:[#allocation2 + $0x5c] sm:$0x1] %v342
      %v344 = vld [vmem:[#allocation2 + $0x64] sm:$0x1]
      %v345 = vsel %vm307, 0, %v344
      %346 = vst [vmem:[#allocation2 + $0x64] sm:$0x1] %v345
      %v347 = vld [vmem:[#allocation2 + $0x6c] sm:$0x1]
      %v348 = vsel %vm307, 0, %v347
      %349 = vst [vmem:[#allocation2 + $0x6c] sm:$0x1] %v348
      %v350 = vld [vmem:[#allocation2 + $0x74] sm:$0x1]
      %v351 = vsel %vm307, 0, %v350
      %352 = vst [vmem:[#allocation2 + $0x74] sm:$0x1] %v351
      %v353 = vld [vmem:[#allocation2 + $0x7c] sm:$0x1]
      %v354 = vsel %vm307, 0, %v353
      %355 = vst [vmem:[#allocation2 + $0x7c] sm:$0x1] %v354
      %v356 = vld [vmem:[#allocation2 + $0x84] sm:$0x1]
      %v357 = vsel %vm307, 0, %v356
      %358 = vst [vmem:[#allocation2 + $0x84] sm:$0x1] %v357
      %v359 = vld [vmem:[#allocation2 + $0x8c] sm:$0x1]
      %v360 = vsel %vm307, 0, %v359
      %361 = vst [vmem:[#allocation2 + $0x8c] sm:$0x1] %v360
      %v362 = vld [vmem:[#allocation2 + $0x94] sm:$0x1]
      %v363 = vsel %vm307, 0, %v362
      %364 = vst [vmem:[#allocation2 + $0x94] sm:$0x1] %v363
      %v365 = vld [vmem:[#allocation2 + $0x9c] sm:$0x1]
      %v366 = vsel %vm307, 0, %v365
      %367 = vst [vmem:[#allocation2 + $0x9c] sm:$0x1] %v366
      %v368 = vld [vmem:[%s224] sm:$0xff]
      %v369 = vld [vmem:[%s224 + $0x8] sm:$0xff]
      %v370 = vld [vmem:[%s224 + $0x10] sm:$0xff]
      %v371 = vld [vmem:[%s224 + $0x18] sm:$0xff]
      %v372 = vld [vmem:[%s224 + $0x20] sm:$0xff]
      %v373 = vld [vmem:[%s224 + $0x28] sm:$0xff]
      %v374 = vld [vmem:[%s224 + $0x30] sm:$0xff]
      %v375 = vld [vmem:[%s224 + $0x38] sm:$0xff]
      %v376 = vld [vmem:[%s224 + $0x40] sm:$0xff]
      %v377 = vld [vmem:[%s224 + $0x48] sm:$0xff]
      %v378 = vld [vmem:[%s224 + $0x50] sm:$0xff]
      %v379 = vld [vmem:[%s224 + $0x58] sm:$0xff]
      %v380 = vld [vmem:[%s224 + $0x60] sm:$0xff]
      %v381 = vld [vmem:[%s224 + $0x68] sm:$0xff]
      %v382 = vld [vmem:[%s224 + $0x70] sm:$0xff]
      %v383 = vld [vmem:[%s224 + $0x78] sm:$0xff]
      %v384 = vpack.c.bf16 %v368, %v368
      %v385 = vpack.c.bf16 %v369, %v369
      %v386 = vpack.c.bf16 %v370, %v370
      %v387 = vpack.c.bf16 %v371, %v371
      %v388 = vpack.c.bf16 %v372, %v372
      %v389 = vpack.c.bf16 %v373, %v373
      %v390 = vpack.c.bf16 %v374, %v374
      %v391 = vpack.c.bf16 %v375, %v375
      %v392 = vpack.c.bf16 %v376, %v376
      %v393 = vpack.c.bf16 %v377, %v377
      %v394 = vpack.c.bf16 %v378, %v378
      %v395 = vpack.c.bf16 %v379, %v379
      %v396 = vpack.c.bf16 %v380, %v380
      %v397 = vpack.c.bf16 %v381, %v381
      %v398 = vpack.c.bf16 %v382, %v382
      %v399 = vpack.c.bf16 %v383, %v383
      %v416 = vunpack.c.l.b16 %v384
      %v417 = vunpack.c.l.b16 %v385
      %v418 = vunpack.c.l.b16 %v386
      %v419 = vunpack.c.l.b16 %v387
      %v420 = vunpack.c.l.b16 %v388
      %v421 = vunpack.c.l.b16 %v389
      %v422 = vunpack.c.l.b16 %v390
      %v423 = vunpack.c.l.b16 %v391
      %v424 = vunpack.c.l.b16 %v392
      %v425 = vunpack.c.l.b16 %v393
      %v426 = vunpack.c.l.b16 %v394
      %v427 = vunpack.c.l.b16 %v395
      %v428 = vunpack.c.l.b16 %v396
      %v429 = vunpack.c.l.b16 %v397
      %v430 = vunpack.c.l.b16 %v398
      %v431 = vunpack.c.l.b16 %v399
      %v432 = vpack.c.b16 %v416, %v416
      %v433 = vpack.c.b16 %v417, %v417
      %v434 = vpack.c.b16 %v418, %v418
      %v435 = vpack.c.b16 %v419, %v419
      %v436 = vpack.c.b16 %v420, %v420
      %v437 = vpack.c.b16 %v421, %v421
      %v438 = vpack.c.b16 %v422, %v422
      %v439 = vpack.c.b16 %v423, %v423
      %v440 = vpack.c.b16 %v424, %v424
      %v441 = vpack.c.b16 %v425, %v425
      %v442 = vpack.c.b16 %v426, %v426
      %v443 = vpack.c.b16 %v427, %v427
      %v444 = vpack.c.b16 %v428, %v428
      %v445 = vpack.c.b16 %v429, %v429
      %v446 = vpack.c.b16 %v430, %v430
      %v447 = vpack.c.b16 %v431, %v431
      %v449 = vshrl.u32 %v432, 16
      %v451 = vrot.slane %v449, 7
      %v452 = vshll.u32 %v432, 16
      %v454 = vor.u32 %v451, %v452
      %v455 = vrot.slane %v451, 4
      %v457 = vshrl.u32 %v433, 16
      %v459 = vrot.slane %v457, 7
      %v460 = vshll.u32 %v433, 16
      %v462 = vor.u32 %v459, %v460
      %v463 = vrot.slane %v459, 4
      %v465 = vshrl.u32 %v434, 16
      %v467 = vrot.slane %v465, 7
      %v468 = vshll.u32 %v434, 16
      %v470 = vor.u32 %v467, %v468
      %v471 = vrot.slane %v467, 4
      %v473 = vshrl.u32 %v435, 16
      %v475 = vrot.slane %v473, 7
      %v476 = vshll.u32 %v435, 16
      %v478 = vor.u32 %v475, %v476
      %v479 = vrot.slane %v475, 4
      %v481 = vshrl.u32 %v436, 16
      %v483 = vrot.slane %v481, 7
      %v484 = vshll.u32 %v436, 16
      %v486 = vor.u32 %v483, %v484
      %v487 = vrot.slane %v483, 4
      %v489 = vshrl.u32 %v437, 16
      %v491 = vrot.slane %v489, 7
      %v492 = vshll.u32 %v437, 16
      %v494 = vor.u32 %v491, %v492
      %v495 = vrot.slane %v491, 4
      %v497 = vshrl.u32 %v438, 16
      %v499 = vrot.slane %v497, 7
      %v500 = vshll.u32 %v438, 16
      %v502 = vor.u32 %v499, %v500
      %v503 = vrot.slane %v499, 4
      %v505 = vshrl.u32 %v439, 16
      %v507 = vrot.slane %v505, 7
      %v508 = vshll.u32 %v439, 16
      %v510 = vor.u32 %v507, %v508
      %v511 = vrot.slane %v507, 4
      %v513 = vshrl.u32 %v440, 16
      %v515 = vrot.slane %v513, 7
      %v516 = vshll.u32 %v440, 16
      %v518 = vor.u32 %v515, %v516
      %v519 = vrot.slane %v515, 4
      %v521 = vshrl.u32 %v441, 16
      %v523 = vrot.slane %v521, 7
      %v524 = vshll.u32 %v441, 16
      %v526 = vor.u32 %v523, %v524
      %v527 = vrot.slane %v523, 4
      %v529 = vshrl.u32 %v442, 16
      %v531 = vrot.slane %v529, 7
      %v532 = vshll.u32 %v442, 16
      %v534 = vor.u32 %v531, %v532
      %v535 = vrot.slane %v531, 4
      %v537 = vshrl.u32 %v443, 16
      %v539 = vrot.slane %v537, 7
      %v540 = vshll.u32 %v443, 16
      %v542 = vor.u32 %v539, %v540
      %v543 = vrot.slane %v539, 4
      %v545 = vshrl.u32 %v444, 16
      %v547 = vrot.slane %v545, 7
      %v548 = vshll.u32 %v444, 16
      %v550 = vor.u32 %v547, %v548
      %v551 = vrot.slane %v547, 4
      %v553 = vshrl.u32 %v445, 16
      %v555 = vrot.slane %v553, 7
      %v556 = vshll.u32 %v445, 16
      %v558 = vor.u32 %v555, %v556
      %v559 = vrot.slane %v555, 4
      %v561 = vshrl.u32 %v446, 16
      %v563 = vrot.slane %v561, 7
      %v564 = vshll.u32 %v446, 16
      %v566 = vor.u32 %v563, %v564
      %v567 = vrot.slane %v563, 4
      %v569 = vshrl.u32 %v447, 16
      %v571 = vrot.slane %v569, 7
      %v572 = vshll.u32 %v447, 16
      %v574 = vor.u32 %v571, %v572
      %v575 = vrot.slane %v571, 4
      %s608 = scalar_lea.vmem [#allocation2], 8
      %vm609 = vcmask 1043456
      %vm610 = vmand %vm609, %vm306
      %v611 = vld [vmem:[%s608] sm:$0xf]
      %v612 = vsel %vm610, %v454, %v611
      %613 = vst [vmem:[%s608] sm:$0xf] %v612
      %v614 = vld [vmem:[%s608 + $0x4] sm:$0x1]
      %v615 = vsel %vm245, %v455, %v614
      %616 = vst [vmem:[%s608 + $0x4] sm:$0x1] %v615
      %v617 = vld [vmem:[%s608 + $0x8] sm:$0xf]
      %v618 = vsel %vm610, %v462, %v617
      %619 = vst [vmem:[%s608 + $0x8] sm:$0xf] %v618
      %v620 = vld [vmem:[%s608 + $0xc] sm:$0x1]
      %v621 = vsel %vm245, %v463, %v620
      %622 = vst [vmem:[%s608 + $0xc] sm:$0x1] %v621
      %v623 = vld [vmem:[%s608 + $0x10] sm:$0xf]
      %v624 = vsel %vm610, %v470, %v623
      %625 = vst [vmem:[%s608 + $0x10] sm:$0xf] %v624
      %v626 = vld [vmem:[%s608 + $0x14] sm:$0x1]
      %v627 = vsel %vm245, %v471, %v626
      %628 = vst [vmem:[%s608 + $0x14] sm:$0x1] %v627
      %v629 = vld [vmem:[%s608 + $0x18] sm:$0xf]
      %v630 = vsel %vm610, %v478, %v629
      %631 = vst [vmem:[%s608 + $0x18] sm:$0xf] %v630
      %v632 = vld [vmem:[%s608 + $0x1c] sm:$0x1]
      %v633 = vsel %vm245, %v479, %v632
      %634 = vst [vmem:[%s608 + $0x1c] sm:$0x1] %v633
      %v635 = vld [vmem:[%s608 + $0x20] sm:$0xf]
      %v636 = vsel %vm610, %v486, %v635
      %637 = vst [vmem:[%s608 + $0x20] sm:$0xf] %v636
      %v638 = vld [vmem:[%s608 + $0x24] sm:$0x1]
      %v639 = vsel %vm245, %v487, %v638
      %640 = vst [vmem:[%s608 + $0x24] sm:$0x1] %v639
      %v641 = vld [vmem:[%s608 + $0x28] sm:$0xf]
      %v642 = vsel %vm610, %v494, %v641
      %643 = vst [vmem:[%s608 + $0x28] sm:$0xf] %v642
      %v644 = vld [vmem:[%s608 + $0x2c] sm:$0x1]
      %v645 = vsel %vm245, %v495, %v644
      %646 = vst [vmem:[%s608 + $0x2c] sm:$0x1] %v645
      %v647 = vld [vmem:[%s608 + $0x30] sm:$0xf]
      %v648 = vsel %vm610, %v502, %v647
      %649 = vst [vmem:[%s608 + $0x30] sm:$0xf] %v648
      %v650 = vld [vmem:[%s608 + $0x34] sm:$0x1]
      %v651 = vsel %vm245, %v503, %v650
      %652 = vst [vmem:[%s608 + $0x34] sm:$0x1] %v651
      %v653 = vld [vmem:[%s608 + $0x38] sm:$0xf]
      %v654 = vsel %vm610, %v510, %v653
      %655 = vst [vmem:[%s608 + $0x38] sm:$0xf] %v654
      %v656 = vld [vmem:[%s608 + $0x3c] sm:$0x1]
      %v657 = vsel %vm245, %v511, %v656
      %658 = vst [vmem:[%s608 + $0x3c] sm:$0x1] %v657
      %v659 = vld [vmem:[%s608 + $0x50] sm:$0xf]
      %v660 = vsel %vm610, %v518, %v659
      %661 = vst [vmem:[%s608 + $0x50] sm:$0xf] %v660
      %v662 = vld [vmem:[%s608 + $0x54] sm:$0x1]
      %v663 = vsel %vm245, %v519, %v662
      %664 = vst [vmem:[%s608 + $0x54] sm:$0x1] %v663
      %v665 = vld [vmem:[%s608 + $0x58] sm:$0xf]
      %v666 = vsel %vm610, %v526, %v665
      %667 = vst [vmem:[%s608 + $0x58] sm:$0xf] %v666
      %v668 = vld [vmem:[%s608 + $0x5c] sm:$0x1]
      %v669 = vsel %vm245, %v527, %v668
      %670 = vst [vmem:[%s608 + $0x5c] sm:$0x1] %v669
      %v671 = vld [vmem:[%s608 + $0x60] sm:$0xf]
      %v672 = vsel %vm610, %v534, %v671
      %673 = vst [vmem:[%s608 + $0x60] sm:$0xf] %v672
      %v674 = vld [vmem:[%s608 + $0x64] sm:$0x1]
      %v675 = vsel %vm245, %v535, %v674
      %676 = vst [vmem:[%s608 + $0x64] sm:$0x1] %v675
      %v677 = vld [vmem:[%s608 + $0x68] sm:$0xf]
      %v678 = vsel %vm610, %v542, %v677
      %679 = vst [vmem:[%s608 + $0x68] sm:$0xf] %v678
      %v680 = vld [vmem:[%s608 + $0x6c] sm:$0x1]
      %v681 = vsel %vm245, %v543, %v680
      %682 = vst [vmem:[%s608 + $0x6c] sm:$0x1] %v681
      %v683 = vld [vmem:[%s608 + $0x70] sm:$0xf]
      %v684 = vsel %vm610, %v550, %v683
      %685 = vst [vmem:[%s608 + $0x70] sm:$0xf] %v684
      %v686 = vld [vmem:[%s608 + $0x74] sm:$0x1]
      %v687 = vsel %vm245, %v551, %v686
      %688 = vst [vmem:[%s608 + $0x74] sm:$0x1] %v687
      %v689 = vld [vmem:[%s608 + $0x78] sm:$0xf]
      %v690 = vsel %vm610, %v558, %v689
      %691 = vst [vmem:[%s608 + $0x78] sm:$0xf] %v690
      %v692 = vld [vmem:[%s608 + $0x7c] sm:$0x1]
      %v693 = vsel %vm245, %v559, %v692
      %694 = vst [vmem:[%s608 + $0x7c] sm:$0x1] %v693
      %v695 = vld [vmem:[%s608 + $0x80] sm:$0xf]
      %v696 = vsel %vm610, %v566, %v695
      %697 = vst [vmem:[%s608 + $0x80] sm:$0xf] %v696
      %v698 = vld [vmem:[%s608 + $0x84] sm:$0x1]
      %v699 = vsel %vm245, %v567, %v698
      %700 = vst [vmem:[%s608 + $0x84] sm:$0x1] %v699
      %v701 = vld [vmem:[%s608 + $0x88] sm:$0xf]
      %v702 = vsel %vm610, %v574, %v701
      %703 = vst [vmem:[%s608 + $0x88] sm:$0xf] %v702
      %v704 = vld [vmem:[%s608 + $0x8c] sm:$0x1]
      %v705 = vsel %vm245, %v575, %v704
      %706 = vst [vmem:[%s608 + $0x8c] sm:$0x1] %v705
      %v707 = vld [vmem:[#allocation2] sm:$0xf]
      %v708 = vld [vmem:[#allocation2 + $0x8] sm:$0xf]
      %v709 = vld [vmem:[#allocation2 + $0x10] sm:$0xf]
      %v710 = vld [vmem:[#allocation2 + $0x18] sm:$0xf]
      %v711 = vld [vmem:[#allocation2 + $0x20] sm:$0xf]
      %v712 = vld [vmem:[#allocation2 + $0x28] sm:$0xf]
      %v713 = vld [vmem:[#allocation2 + $0x30] sm:$0xf]
      %v714 = vld [vmem:[#allocation2 + $0x38] sm:$0xf]
      %v715 = vld [vmem:[#allocation2 + $0x50] sm:$0xf]
      %v716 = vld [vmem:[#allocation2 + $0x58] sm:$0xf]
      %v717 = vld [vmem:[#allocation2 + $0x60] sm:$0xf]
      %v718 = vld [vmem:[#allocation2 + $0x68] sm:$0xf]
      %v719 = vld [vmem:[#allocation2 + $0x70] sm:$0xf]
      %v720 = vld [vmem:[#allocation2 + $0x78] sm:$0xf]
      %v721 = vld [vmem:[#allocation2 + $0x80] sm:$0xf]
      %v722 = vld [vmem:[#allocation2 + $0x88] sm:$0xf]
      %723 = vst [vmem:[#allocation4] sm:$0xf] %v707
      %724 = vst [vmem:[#allocation4 + $0x24] sm:$0xf] %v708
      %725 = vst [vmem:[#allocation4 + $0x48] sm:$0xf] %v709
      %726 = vst [vmem:[#allocation4 + $0x6c] sm:$0xf] %v710
      %727 = vst [vmem:[#allocation4 + $0x90] sm:$0xf] %v711
      %728 = vst [vmem:[#allocation4 + $0xb4] sm:$0xf] %v712
      %729 = vst [vmem:[#allocation4 + $0xd8] sm:$0xf] %v713
      %730 = vst [vmem:[#allocation4 + $0xfc] sm:$0xf] %v714
      %731 = vst [vmem:[#allocation4 + $0x120] sm:$0xf] %v715
      %732 = vst [vmem:[#allocation4 + $0x144] sm:$0xf] %v716
      %733 = vst [vmem:[#allocation4 + $0x168] sm:$0xf] %v717
      %734 = vst [vmem:[#allocation4 + $0x18c] sm:$0xf] %v718
      %735 = vst [vmem:[#allocation4 + $0x1b0] sm:$0xf] %v719
      %736 = vst [vmem:[#allocation4 + $0x1d4] sm:$0xf] %v720
      %737 = vst [vmem:[#allocation4 + $0x1f8] sm:$0xf] %v721
      %738 = vst [vmem:[#allocation4 + $0x21c] sm:$0xf] %v722
      %v739 = vld [vmem:[#allocation2] sm:$0xf]
      %v740 = vld [vmem:[#allocation2 + $0x4] sm:$0x1]
      %v741 = vld [vmem:[#allocation2 + $0x8] sm:$0xf]
      %v742 = vld [vmem:[#allocation2 + $0xc] sm:$0x1]
      %v743 = vld [vmem:[#allocation2 + $0x10] sm:$0xf]
      %v744 = vld [vmem:[#allocation2 + $0x14] sm:$0x1]
      %v745 = vld [vmem:[#allocation2 + $0x18] sm:$0xf]
      %v746 = vld [vmem:[#allocation2 + $0x1c] sm:$0x1]
      %v747 = vld [vmem:[#allocation2 + $0x20] sm:$0xf]
      %v748 = vld [vmem:[#allocation2 + $0x24] sm:$0x1]
      %v749 = vld [vmem:[#allocation2 + $0x28] sm:$0xf]
      %v750 = vld [vmem:[#allocation2 + $0x2c] sm:$0x1]
      %v751 = vld [vmem:[#allocation2 + $0x30] sm:$0xf]
      %v752 = vld [vmem:[#allocation2 + $0x34] sm:$0x1]
      %v753 = vld [vmem:[#allocation2 + $0x38] sm:$0xf]
      %v754 = vld [vmem:[#allocation2 + $0x3c] sm:$0x1]
      %v755 = vld [vmem:[#allocation2 + $0x50] sm:$0xf]
      %v756 = vld [vmem:[#allocation2 + $0x54] sm:$0x1]
      %v757 = vld [vmem:[#allocation2 + $0x58] sm:$0xf]
      %v758 = vld [vmem:[#allocation2 + $0x5c] sm:$0x1]
      %v759 = vld [vmem:[#allocation2 + $0x60] sm:$0xf]
      %v760 = vld [vmem:[#allocation2 + $0x64] sm:$0x1]
      %v761 = vld [vmem:[#allocation2 + $0x68] sm:$0xf]
      %v762 = vld [vmem:[#allocation2 + $0x6c] sm:$0x1]
      %v763 = vld [vmem:[#allocation2 + $0x70] sm:$0xf]
      %v764 = vld [vmem:[#allocation2 + $0x74] sm:$0x1]
      %v765 = vld [vmem:[#allocation2 + $0x78] sm:$0xf]
      %v766 = vld [vmem:[#allocation2 + $0x7c] sm:$0x1]
      %v767 = vld [vmem:[#allocation2 + $0x80] sm:$0xf]
      %v768 = vld [vmem:[#allocation2 + $0x84] sm:$0x1]
      %v769 = vld [vmem:[#allocation2 + $0x88] sm:$0xf]
      %v770 = vld [vmem:[#allocation2 + $0x8c] sm:$0x1]
      %vm771 = vsmask.f32 3328
      %vm772 = vsmask.f32 7440
      %vm773 = vmor %vm771, %vm772
      %v775 = vshrl.u32 %v739, 16
      %v777 = vrot.slane %v775, 4
      %v778 = vshll.u32 %v739, 16
      %v780 = vrot.slane %v778, 5
      %v781 = vor.u32 %v777, %v780
      %v782 = vrot.slane %v781, 4
      %v784 = vshll.u32 %v740, 16
      %v786 = vrot.slane %v784, 5
      %v787 = vsel %vm773, %v782, %v786
      %v789 = vshrl.u32 %v741, 16
      %v791 = vrot.slane %v789, 4
      %v792 = vshll.u32 %v741, 16
      %v794 = vrot.slane %v792, 5
      %v795 = vor.u32 %v791, %v794
      %v796 = vrot.slane %v795, 4
      %v798 = vshll.u32 %v742, 16
      %v800 = vrot.slane %v798, 5
      %v801 = vsel %vm773, %v796, %v800
      %v803 = vshrl.u32 %v743, 16
      %v805 = vrot.slane %v803, 4
      %v806 = vshll.u32 %v743, 16
      %v808 = vrot.slane %v806, 5
      %v809 = vor.u32 %v805, %v808
      %v810 = vrot.slane %v809, 4
      %v812 = vshll.u32 %v744, 16
      %v814 = vrot.slane %v812, 5
      %v815 = vsel %vm773, %v810, %v814
      %v817 = vshrl.u32 %v745, 16
      %v819 = vrot.slane %v817, 4
      %v820 = vshll.u32 %v745, 16
      %v822 = vrot.slane %v820, 5
      %v823 = vor.u32 %v819, %v822
      %v824 = vrot.slane %v823, 4
      %v826 = vshll.u32 %v746, 16
      %v828 = vrot.slane %v826, 5
      %v829 = vsel %vm773, %v824, %v828
      %v831 = vshrl.u32 %v747, 16
      %v833 = vrot.slane %v831, 4
      %v834 = vshll.u32 %v747, 16
      %v836 = vrot.slane %v834, 5
      %v837 = vor.u32 %v833, %v836
      %v838 = vrot.slane %v837, 4
      %v840 = vshll.u32 %v748, 16
      %v842 = vrot.slane %v840, 5
      %v843 = vsel %vm773, %v838, %v842
      %v845 = vshrl.u32 %v749, 16
      %v847 = vrot.slane %v845, 4
      %v848 = vshll.u32 %v749, 16
      %v850 = vrot.slane %v848, 5
      %v851 = vor.u32 %v847, %v850
      %v852 = vrot.slane %v851, 4
      %v854 = vshll.u32 %v750, 16
      %v856 = vrot.slane %v854, 5
      %v857 = vsel %vm773, %v852, %v856
      %v859 = vshrl.u32 %v751, 16
      %v861 = vrot.slane %v859, 4
      %v862 = vshll.u32 %v751, 16
      %v864 = vrot.slane %v862, 5
      %v865 = vor.u32 %v861, %v864
      %v866 = vrot.slane %v865, 4
      %v868 = vshll.u32 %v752, 16
      %v870 = vrot.slane %v868, 5
      %v871 = vsel %vm773, %v866, %v870
      %v873 = vshrl.u32 %v753, 16
      %v875 = vrot.slane %v873, 4
      %v876 = vshll.u32 %v753, 16
      %v878 = vrot.slane %v876, 5
      %v879 = vor.u32 %v875, %v878
      %v880 = vrot.slane %v879, 4
      %v882 = vshll.u32 %v754, 16
      %v884 = vrot.slane %v882, 5
      %v885 = vsel %vm773, %v880, %v884
      %v887 = vshrl.u32 %v755, 16
      %v889 = vrot.slane %v887, 4
      %v890 = vshll.u32 %v755, 16
      %v892 = vrot.slane %v890, 5
      %v893 = vor.u32 %v889, %v892
      %v894 = vrot.slane %v893, 4
      %v896 = vshll.u32 %v756, 16
      %v898 = vrot.slane %v896, 5
      %v899 = vsel %vm773, %v894, %v898
      %v901 = vshrl.u32 %v757, 16
      %v903 = vrot.slane %v901, 4
      %v904 = vshll.u32 %v757, 16
      %v906 = vrot.slane %v904, 5
      %v907 = vor.u32 %v903, %v906
      %v908 = vrot.slane %v907, 4
      %v910 = vshll.u32 %v758, 16
      %v912 = vrot.slane %v910, 5
      %v913 = vsel %vm773, %v908, %v912
      %v915 = vshrl.u32 %v759, 16
      %v917 = vrot.slane %v915, 4
      %v918 = vshll.u32 %v759, 16
      %v920 = vrot.slane %v918, 5
      %v921 = vor.u32 %v917, %v920
      %v922 = vrot.slane %v921, 4
      %v924 = vshll.u32 %v760, 16
      %v926 = vrot.slane %v924, 5
      %v927 = vsel %vm773, %v922, %v926
      %v929 = vshrl.u32 %v761, 16
      %v931 = vrot.slane %v929, 4
      %v932 = vshll.u32 %v761, 16
      %v934 = vrot.slane %v932, 5
      %v935 = vor.u32 %v931, %v934
      %v936 = vrot.slane %v935, 4
      %v938 = vshll.u32 %v762, 16
      %v940 = vrot.slane %v938, 5
      %v941 = vsel %vm773, %v936, %v940
      %v943 = vshrl.u32 %v763, 16
      %v945 = vrot.slane %v943, 4
      %v946 = vshll.u32 %v763, 16
      %v948 = vrot.slane %v946, 5
      %v949 = vor.u32 %v945, %v948
      %v950 = vrot.slane %v949, 4
      %v952 = vshll.u32 %v764, 16
      %v954 = vrot.slane %v952, 5
      %v955 = vsel %vm773, %v950, %v954
      %v957 = vshrl.u32 %v765, 16
      %v959 = vrot.slane %v957, 4
      %v960 = vshll.u32 %v765, 16
      %v962 = vrot.slane %v960, 5
      %v963 = vor.u32 %v959, %v962
      %v964 = vrot.slane %v963, 4
      %v966 = vshll.u32 %v766, 16
      %v968 = vrot.slane %v966, 5
      %v969 = vsel %vm773, %v964, %v968
      %v971 = vshrl.u32 %v767, 16
      %v973 = vrot.slane %v971, 4
      %v974 = vshll.u32 %v767, 16
      %v976 = vrot.slane %v974, 5
      %v977 = vor.u32 %v973, %v976
      %v978 = vrot.slane %v977, 4
      %v980 = vshll.u32 %v768, 16
      %v982 = vrot.slane %v980, 5
      %v983 = vsel %vm773, %v978, %v982
      %v985 = vshrl.u32 %v769, 16
      %v987 = vrot.slane %v985, 4
      %v988 = vshll.u32 %v769, 16
      %v990 = vrot.slane %v988, 5
      %v991 = vor.u32 %v987, %v990
      %v992 = vrot.slane %v991, 4
      %v994 = vshll.u32 %v770, 16
      %v996 = vrot.slane %v994, 5
      %v997 = vsel %vm773, %v992, %v996
      %1014 = vst [vmem:[#allocation4 + $0x4] sm:$0xf] %v787
      %1015 = vst [vmem:[#allocation4 + $0x28] sm:$0xf] %v801
      %1016 = vst [vmem:[#allocation4 + $0x4c] sm:$0xf] %v815
      %1017 = vst [vmem:[#allocation4 + $0x70] sm:$0xf] %v829
      %1018 = vst [vmem:[#allocation4 + $0x94] sm:$0xf] %v843
      %1019 = vst [vmem:[#allocation4 + $0xb8] sm:$0xf] %v857
      %1020 = vst [vmem:[#allocation4 + $0xdc] sm:$0xf] %v871
      %1021 = vst [vmem:[#allocation4 + $0x100] sm:$0xf] %v885
      %1022 = vst [vmem:[#allocation4 + $0x124] sm:$0xf] %v899
      %1023 = vst [vmem:[#allocation4 + $0x148] sm:$0xf] %v913
      %1024 = vst [vmem:[#allocation4 + $0x16c] sm:$0xf] %v927
      %1025 = vst [vmem:[#allocation4 + $0x190] sm:$0xf] %v941
      %1026 = vst [vmem:[#allocation4 + $0x1b4] sm:$0xf] %v955
      %1027 = vst [vmem:[#allocation4 + $0x1d8] sm:$0xf] %v969
      %1028 = vst [vmem:[#allocation4 + $0x1fc] sm:$0xf] %v983
      %1029 = vst [vmem:[#allocation4 + $0x220] sm:$0xf] %v997
      %v1030 = vld [vmem:[#allocation2] sm:$0xe]
      %v1031 = vld [vmem:[#allocation2 + $0x4] sm:$0x1]
      %v1032 = vld [vmem:[#allocation2 + $0x8] sm:$0xe]
      %v1033 = vld [vmem:[#allocation2 + $0xc] sm:$0x1]
      %v1034 = vld [vmem:[#allocation2 + $0x10] sm:$0xe]
      %v1035 = vld [vmem:[#allocation2 + $0x14] sm:$0x1]
      %v1036 = vld [vmem:[#allocation2 + $0x18] sm:$0xe]
      %v1037 = vld [vmem:[#allocation2 + $0x1c] sm:$0x1]
      %v1038 = vld [vmem:[#allocation2 + $0x20] sm:$0xe]
      %v1039 = vld [vmem:[#allocation2 + $0x24] sm:$0x1]
      %v1040 = vld [vmem:[#allocation2 + $0x28] sm:$0xe]
      %v1041 = vld [vmem:[#allocation2 + $0x2c] sm:$0x1]
      %v1042 = vld [vmem:[#allocation2 + $0x30] sm:$0xe]
      %v1043 = vld [vmem:[#allocation2 + $0x34] sm:$0x1]
      %v1044 = vld [vmem:[#allocation2 + $0x38] sm:$0xe]
      %v1045 = vld [vmem:[#allocation2 + $0x3c] sm:$0x1]
      %v1046 = vld [vmem:[#allocation2 + $0x50] sm:$0xe]
      %v1047 = vld [vmem:[#allocation2 + $0x54] sm:$0x1]
      %v1048 = vld [vmem:[#allocation2 + $0x58] sm:$0xe]
      %v1049 = vld [vmem:[#allocation2 + $0x5c] sm:$0x1]
      %v1050 = vld [vmem:[#allocation2 + $0x60] sm:$0xe]
      %v1051 = vld [vmem:[#allocation2 + $0x64] sm:$0x1]
      %v1052 = vld [vmem:[#allocation2 + $0x68] sm:$0xe]
      %v1053 = vld [vmem:[#allocation2 + $0x6c] sm:$0x1]
      %v1054 = vld [vmem:[#allocation2 + $0x70] sm:$0xe]
      %v1055 = vld [vmem:[#allocation2 + $0x74] sm:$0x1]
      %v1056 = vld [vmem:[#allocation2 + $0x78] sm:$0xe]
      %v1057 = vld [vmem:[#allocation2 + $0x7c] sm:$0x1]
      %v1058 = vld [vmem:[#allocation2 + $0x80] sm:$0xe]
      %v1059 = vld [vmem:[#allocation2 + $0x84] sm:$0x1]
      %v1060 = vld [vmem:[#allocation2 + $0x88] sm:$0xe]
      %v1061 = vld [vmem:[#allocation2 + $0x8c] sm:$0x1]
      %vm1094 = vcmask 1042432
      %vm1095 = vcmask 1046532
      %vm1096 = vmor %vm1094, %vm1095
      %v1097 = vrot.slane %v1030, 5
      %v1098 = vrot.slane %v1097, 4
      %v1099 = vrot.slane %v1031, 5
      %v1100 = vsel %vm1096, %v1098, %v1099
      %v1101 = vrot.slane %v1032, 5
      %v1102 = vrot.slane %v1101, 4
      %v1103 = vrot.slane %v1033, 5
      %v1104 = vsel %vm1096, %v1102, %v1103
      %v1105 = vrot.slane %v1034, 5
      %v1106 = vrot.slane %v1105, 4
      %v1107 = vrot.slane %v1035, 5
      %v1108 = vsel %vm1096, %v1106, %v1107
      %v1109 = vrot.slane %v1036, 5
      %v1110 = vrot.slane %v1109, 4
      %v1111 = vrot.slane %v1037, 5
      %v1112 = vsel %vm1096, %v1110, %v1111
      %v1113 = vrot.slane %v1038, 5
      %v1114 = vrot.slane %v1113, 4
      %v1115 = vrot.slane %v1039, 5
      %v1116 = vsel %vm1096, %v1114, %v1115
      %v1117 = vrot.slane %v1040, 5
      %v1118 = vrot.slane %v1117, 4
      %v1119 = vrot.slane %v1041, 5
      %v1120 = vsel %vm1096, %v1118, %v1119
      %v1121 = vrot.slane %v1042, 5
      %v1122 = vrot.slane %v1121, 4
      %v1123 = vrot.slane %v1043, 5
      %v1124 = vsel %vm1096, %v1122, %v1123
      %v1125 = vrot.slane %v1044, 5
      %v1126 = vrot.slane %v1125, 4
      %v1127 = vrot.slane %v1045, 5
      %v1128 = vsel %vm1096, %v1126, %v1127
      %v1129 = vrot.slane %v1046, 5
      %v1130 = vrot.slane %v1129, 4
      %v1131 = vrot.slane %v1047, 5
      %v1132 = vsel %vm1096, %v1130, %v1131
      %v1133 = vrot.slane %v1048, 5
      %v1134 = vrot.slane %v1133, 4
      %v1135 = vrot.slane %v1049, 5
      %v1136 = vsel %vm1096, %v1134, %v1135
      %v1137 = vrot.slane %v1050, 5
      %v1138 = vrot.slane %v1137, 4
      %v1139 = vrot.slane %v1051, 5
      %v1140 = vsel %vm1096, %v1138, %v1139
      %v1141 = vrot.slane %v1052, 5
      %v1142 = vrot.slane %v1141, 4
      %v1143 = vrot.slane %v1053, 5
      %v1144 = vsel %vm1096, %v1142, %v1143
      %v1145 = vrot.slane %v1054, 5
      %v1146 = vrot.slane %v1145, 4
      %v1147 = vrot.slane %v1055, 5
      %v1148 = vsel %vm1096, %v1146, %v1147
      %v1149 = vrot.slane %v1056, 5
      %v1150 = vrot.slane %v1149, 4
      %v1151 = vrot.slane %v1057, 5
      %v1152 = vsel %vm1096, %v1150, %v1151
      %v1153 = vrot.slane %v1058, 5
      %v1154 = vrot.slane %v1153, 4
      %v1155 = vrot.slane %v1059, 5
      %v1156 = vsel %vm1096, %v1154, %v1155
      %v1157 = vrot.slane %v1060, 5
      %v1158 = vrot.slane %v1157, 4
      %v1159 = vrot.slane %v1061, 5
      %v1160 = vsel %vm1096, %v1158, %v1159
      %1177 = vst [vmem:[#allocation4 + $0x8] sm:$0xf] %v1100
      %1178 = vst [vmem:[#allocation4 + $0x2c] sm:$0xf] %v1104
      %1179 = vst [vmem:[#allocation4 + $0x50] sm:$0xf] %v1108
      %1180 = vst [vmem:[#allocation4 + $0x74] sm:$0xf] %v1112
      %1181 = vst [vmem:[#allocation4 + $0x98] sm:$0xf] %v1116
      %1182 = vst [vmem:[#allocation4 + $0xbc] sm:$0xf] %v1120
      %1183 = vst [vmem:[#allocation4 + $0xe0] sm:$0xf] %v1124
      %1184 = vst [vmem:[#allocation4 + $0x104] sm:$0xf] %v1128
      %1185 = vst [vmem:[#allocation4 + $0x128] sm:$0xf] %v1132
      %1186 = vst [vmem:[#allocation4 + $0x14c] sm:$0xf] %v1136
      %1187 = vst [vmem:[#allocation4 + $0x170] sm:$0xf] %v1140
      %1188 = vst [vmem:[#allocation4 + $0x194] sm:$0xf] %v1144
      %1189 = vst [vmem:[#allocation4 + $0x1b8] sm:$0xf] %v1148
      %1190 = vst [vmem:[#allocation4 + $0x1dc] sm:$0xf] %v1152
      %1191 = vst [vmem:[#allocation4 + $0x200] sm:$0xf] %v1156
      %1192 = vst [vmem:[#allocation4 + $0x224] sm:$0xf] %v1160
      %v1193 = vld [vmem:[%s608] sm:$0xf]
      %v1194 = vld [vmem:[%s608 + $0x8] sm:$0xf]
      %v1195 = vld [vmem:[%s608 + $0x10] sm:$0xf]
      %v1196 = vld [vmem:[%s608 + $0x18] sm:$0xf]
      %v1197 = vld [vmem:[%s608 + $0x20] sm:$0xf]
      %v1198 = vld [vmem:[%s608 + $0x28] sm:$0xf]
      %v1199 = vld [vmem:[%s608 + $0x30] sm:$0xf]
      %v1200 = vld [vmem:[%s608 + $0x38] sm:$0xf]
      %v1201 = vld [vmem:[%s608 + $0x50] sm:$0xf]
      %v1202 = vld [vmem:[%s608 + $0x58] sm:$0xf]
      %v1203 = vld [vmem:[%s608 + $0x60] sm:$0xf]
      %v1204 = vld [vmem:[%s608 + $0x68] sm:$0xf]
      %v1205 = vld [vmem:[%s608 + $0x70] sm:$0xf]
      %v1206 = vld [vmem:[%s608 + $0x78] sm:$0xf]
      %v1207 = vld [vmem:[%s608 + $0x80] sm:$0xf]
      %v1208 = vld [vmem:[%s608 + $0x88] sm:$0xf]
      %1209 = vst [vmem:[#allocation4 + $0xc] sm:$0xf] %v1193
      %1210 = vst [vmem:[#allocation4 + $0x30] sm:$0xf] %v1194
      %1211 = vst [vmem:[#allocation4 + $0x54] sm:$0xf] %v1195
      %1212 = vst [vmem:[#allocation4 + $0x78] sm:$0xf] %v1196
      %1213 = vst [vmem:[#allocation4 + $0x9c] sm:$0xf] %v1197
      %1214 = vst [vmem:[#allocation4 + $0xc0] sm:$0xf] %v1198
      %1215 = vst [vmem:[#allocation4 + $0xe4] sm:$0xf] %v1199
      %1216 = vst [vmem:[#allocation4 + $0x108] sm:$0xf] %v1200
      %1217 = vst [vmem:[#allocation4 + $0x12c] sm:$0xf] %v1201
      %1218 = vst [vmem:[#allocation4 + $0x150] sm:$0xf] %v1202
      %1219 = vst [vmem:[#allocation4 + $0x174] sm:$0xf] %v1203
      %1220 = vst [vmem:[#allocation4 + $0x198] sm:$0xf] %v1204
      %1221 = vst [vmem:[#allocation4 + $0x1bc] sm:$0xf] %v1205
      %1222 = vst [vmem:[#allocation4 + $0x1e0] sm:$0xf] %v1206
      %1223 = vst [vmem:[#allocation4 + $0x204] sm:$0xf] %v1207
      %1224 = vst [vmem:[#allocation4 + $0x228] sm:$0xf] %v1208
      %v1225 = vld [vmem:[%s608] sm:$0xf]
      %v1226 = vld [vmem:[%s608 + $0x4] sm:$0x1]
      %v1227 = vld [vmem:[%s608 + $0x8] sm:$0xf]
      %v1228 = vld [vmem:[%s608 + $0xc] sm:$0x1]
      %v1229 = vld [vmem:[%s608 + $0x10] sm:$0xf]
      %v1230 = vld [vmem:[%s608 + $0x14] sm:$0x1]
      %v1231 = vld [vmem:[%s608 + $0x18] sm:$0xf]
      %v1232 = vld [vmem:[%s608 + $0x1c] sm:$0x1]
      %v1233 = vld [vmem:[%s608 + $0x20] sm:$0xf]
      %v1234 = vld [vmem:[%s608 + $0x24] sm:$0x1]
      %v1235 = vld [vmem:[%s608 + $0x28] sm:$0xf]
      %v1236 = vld [vmem:[%s608 + $0x2c] sm:$0x1]
      %v1237 = vld [vmem:[%s608 + $0x30] sm:$0xf]
      %v1238 = vld [vmem:[%s608 + $0x34] sm:$0x1]
      %v1239 = vld [vmem:[%s608 + $0x38] sm:$0xf]
      %v1240 = vld [vmem:[%s608 + $0x3c] sm:$0x1]
      %v1241 = vld [vmem:[%s608 + $0x50] sm:$0xf]
      %v1242 = vld [vmem:[%s608 + $0x54] sm:$0x1]
      %v1243 = vld [vmem:[%s608 + $0x58] sm:$0xf]
      %v1244 = vld [vmem:[%s608 + $0x5c] sm:$0x1]
      %v1245 = vld [vmem:[%s608 + $0x60] sm:$0xf]
      %v1246 = vld [vmem:[%s608 + $0x64] sm:$0x1]
      %v1247 = vld [vmem:[%s608 + $0x68] sm:$0xf]
      %v1248 = vld [vmem:[%s608 + $0x6c] sm:$0x1]
      %v1249 = vld [vmem:[%s608 + $0x70] sm:$0xf]
      %v1250 = vld [vmem:[%s608 + $0x74] sm:$0x1]
      %v1251 = vld [vmem:[%s608 + $0x78] sm:$0xf]
      %v1252 = vld [vmem:[%s608 + $0x7c] sm:$0x1]
      %v1253 = vld [vmem:[%s608 + $0x80] sm:$0xf]
      %v1254 = vld [vmem:[%s608 + $0x84] sm:$0x1]
      %v1255 = vld [vmem:[%s608 + $0x88] sm:$0xf]
      %v1256 = vld [vmem:[%s608 + $0x8c] sm:$0x1]
      %v1258 = vshrl.u32 %v1225, 16
      %v1260 = vrot.slane %v1258, 4
      %v1261 = vshll.u32 %v1225, 16
      %v1263 = vrot.slane %v1261, 5
      %v1264 = vor.u32 %v1260, %v1263
      %v1265 = vrot.slane %v1264, 4
      %v1267 = vshll.u32 %v1226, 16
      %v1269 = vrot.slane %v1267, 5
      %v1270 = vsel %vm773, %v1265, %v1269
      %v1272 = vshrl.u32 %v1227, 16
      %v1274 = vrot.slane %v1272, 4
      %v1275 = vshll.u32 %v1227, 16
      %v1277 = vrot.slane %v1275, 5
      %v1278 = vor.u32 %v1274, %v1277
      %v1279 = vrot.slane %v1278, 4
      %v1281 = vshll.u32 %v1228, 16
      %v1283 = vrot.slane %v1281, 5
      %v1284 = vsel %vm773, %v1279, %v1283
      %v1286 = vshrl.u32 %v1229, 16
      %v1288 = vrot.slane %v1286, 4
      %v1289 = vshll.u32 %v1229, 16
      %v1291 = vrot.slane %v1289, 5
      %v1292 = vor.u32 %v1288, %v1291
      %v1293 = vrot.slane %v1292, 4
      %v1295 = vshll.u32 %v1230, 16
      %v1297 = vrot.slane %v1295, 5
      %v1298 = vsel %vm773, %v1293, %v1297
      %v1300 = vshrl.u32 %v1231, 16
      %v1302 = vrot.slane %v1300, 4
      %v1303 = vshll.u32 %v1231, 16
      %v1305 = vrot.slane %v1303, 5
      %v1306 = vor.u32 %v1302, %v1305
      %v1307 = vrot.slane %v1306, 4
      %v1309 = vshll.u32 %v1232, 16
      %v1311 = vrot.slane %v1309, 5
      %v1312 = vsel %vm773, %v1307, %v1311
      %v1314 = vshrl.u32 %v1233, 16
      %v1316 = vrot.slane %v1314, 4
      %v1317 = vshll.u32 %v1233, 16
      %v1319 = vrot.slane %v1317, 5
      %v1320 = vor.u32 %v1316, %v1319
      %v1321 = vrot.slane %v1320, 4
      %v1323 = vshll.u32 %v1234, 16
      %v1325 = vrot.slane %v1323, 5
      %v1326 = vsel %vm773, %v1321, %v1325
      %v1328 = vshrl.u32 %v1235, 16
      %v1330 = vrot.slane %v1328, 4
      %v1331 = vshll.u32 %v1235, 16
      %v1333 = vrot.slane %v1331, 5
      %v1334 = vor.u32 %v1330, %v1333
      %v1335 = vrot.slane %v1334, 4
      %v1337 = vshll.u32 %v1236, 16
      %v1339 = vrot.slane %v1337, 5
      %v1340 = vsel %vm773, %v1335, %v1339
      %v1342 = vshrl.u32 %v1237, 16
      %v1344 = vrot.slane %v1342, 4
      %v1345 = vshll.u32 %v1237, 16
      %v1347 = vrot.slane %v1345, 5
      %v1348 = vor.u32 %v1344, %v1347
      %v1349 = vrot.slane %v1348, 4
      %v1351 = vshll.u32 %v1238, 16
      %v1353 = vrot.slane %v1351, 5
      %v1354 = vsel %vm773, %v1349, %v1353
      %v1356 = vshrl.u32 %v1239, 16
      %v1358 = vrot.slane %v1356, 4
      %v1359 = vshll.u32 %v1239, 16
      %v1361 = vrot.slane %v1359, 5
      %v1362 = vor.u32 %v1358, %v1361
      %v1363 = vrot.slane %v1362, 4
      %v1365 = vshll.u32 %v1240, 16
      %v1367 = vrot.slane %v1365, 5
      %v1368 = vsel %vm773, %v1363, %v1367
      %v1370 = vshrl.u32 %v1241, 16
      %v1372 = vrot.slane %v1370, 4
      %v1373 = vshll.u32 %v1241, 16
      %v1375 = vrot.slane %v1373, 5
      %v1376 = vor.u32 %v1372, %v1375
      %v1377 = vrot.slane %v1376, 4
      %v1379 = vshll.u32 %v1242, 16
      %v1381 = vrot.slane %v1379, 5
      %v1382 = vsel %vm773, %v1377, %v1381
      %v1384 = vshrl.u32 %v1243, 16
      %v1386 = vrot.slane %v1384, 4
      %v1387 = vshll.u32 %v1243, 16
      %v1389 = vrot.slane %v1387, 5
      %v1390 = vor.u32 %v1386, %v1389
      %v1391 = vrot.slane %v1390, 4
      %v1393 = vshll.u32 %v1244, 16
      %v1395 = vrot.slane %v1393, 5
      %v1396 = vsel %vm773, %v1391, %v1395
      %v1398 = vshrl.u32 %v1245, 16
      %v1400 = vrot.slane %v1398, 4
      %v1401 = vshll.u32 %v1245, 16
      %v1403 = vrot.slane %v1401, 5
      %v1404 = vor.u32 %v1400, %v1403
      %v1405 = vrot.slane %v1404, 4
      %v1407 = vshll.u32 %v1246, 16
      %v1409 = vrot.slane %v1407, 5
      %v1410 = vsel %vm773, %v1405, %v1409
      %v1412 = vshrl.u32 %v1247, 16
      %v1414 = vrot.slane %v1412, 4
      %v1415 = vshll.u32 %v1247, 16
      %v1417 = vrot.slane %v1415, 5
      %v1418 = vor.u32 %v1414, %v1417
      %v1419 = vrot.slane %v1418, 4
      %v1421 = vshll.u32 %v1248, 16
      %v1423 = vrot.slane %v1421, 5
      %v1424 = vsel %vm773, %v1419, %v1423
      %v1426 = vshrl.u32 %v1249, 16
      %v1428 = vrot.slane %v1426, 4
      %v1429 = vshll.u32 %v1249, 16
      %v1431 = vrot.slane %v1429, 5
      %v1432 = vor.u32 %v1428, %v1431
      %v1433 = vrot.slane %v1432, 4
      %v1435 = vshll.u32 %v1250, 16
      %v1437 = vrot.slane %v1435, 5
      %v1438 = vsel %vm773, %v1433, %v1437
      %v1440 = vshrl.u32 %v1251, 16
      %v1442 = vrot.slane %v1440, 4
      %v1443 = vshll.u32 %v1251, 16
      %v1445 = vrot.slane %v1443, 5
      %v1446 = vor.u32 %v1442, %v1445
      %v1447 = vrot.slane %v1446, 4
      %v1449 = vshll.u32 %v1252, 16
      %v1451 = vrot.slane %v1449, 5
      %v1452 = vsel %vm773, %v1447, %v1451
      %v1454 = vshrl.u32 %v1253, 16
      %v1456 = vrot.slane %v1454, 4
      %v1457 = vshll.u32 %v1253, 16
      %v1459 = vrot.slane %v1457, 5
      %v1460 = vor.u32 %v1456, %v1459
      %v1461 = vrot.slane %v1460, 4
      %v1463 = vshll.u32 %v1254, 16
      %v1465 = vrot.slane %v1463, 5
      %v1466 = vsel %vm773, %v1461, %v1465
      %v1468 = vshrl.u32 %v1255, 16
      %v1470 = vrot.slane %v1468, 4
      %v1471 = vshll.u32 %v1255, 16
      %v1473 = vrot.slane %v1471, 5
      %v1474 = vor.u32 %v1470, %v1473
      %v1475 = vrot.slane %v1474, 4
      %v1477 = vshll.u32 %v1256, 16
      %v1479 = vrot.slane %v1477, 5
      %v1480 = vsel %vm773, %v1475, %v1479
      %1497 = vst [vmem:[#allocation4 + $0x10] sm:$0xf] %v1270
      %1498 = vst [vmem:[#allocation4 + $0x34] sm:$0xf] %v1284
      %1499 = vst [vmem:[#allocation4 + $0x58] sm:$0xf] %v1298
      %1500 = vst [vmem:[#allocation4 + $0x7c] sm:$0xf] %v1312
      %1501 = vst [vmem:[#allocation4 + $0xa0] sm:$0xf] %v1326
      %1502 = vst [vmem:[#allocation4 + $0xc4] sm:$0xf] %v1340
      %1503 = vst [vmem:[#allocation4 + $0xe8] sm:$0xf] %v1354
      %1504 = vst [vmem:[#allocation4 + $0x10c] sm:$0xf] %v1368
      %1505 = vst [vmem:[#allocation4 + $0x130] sm:$0xf] %v1382
      %1506 = vst [vmem:[#allocation4 + $0x154] sm:$0xf] %v1396
      %1507 = vst [vmem:[#allocation4 + $0x178] sm:$0xf] %v1410
      %1508 = vst [vmem:[#allocation4 + $0x19c] sm:$0xf] %v1424
      %1509 = vst [vmem:[#allocation4 + $0x1c0] sm:$0xf] %v1438
      %1510 = vst [vmem:[#allocation4 + $0x1e4] sm:$0xf] %v1452
      %1511 = vst [vmem:[#allocation4 + $0x208] sm:$0xf] %v1466
      %1512 = vst [vmem:[#allocation4 + $0x22c] sm:$0xf] %v1480
      %v1513 = vld [vmem:[%s608] sm:$0xe]
      %v1514 = vld [vmem:[%s608 + $0x4] sm:$0x1]
      %v1515 = vld [vmem:[%s608 + $0x8] sm:$0xe]
      %v1516 = vld [vmem:[%s608 + $0xc] sm:$0x1]
      %v1517 = vld [vmem:[%s608 + $0x10] sm:$0xe]
      %v1518 = vld [vmem:[%s608 + $0x14] sm:$0x1]
      %v1519 = vld [vmem:[%s608 + $0x18] sm:$0xe]
      %v1520 = vld [vmem:[%s608 + $0x1c] sm:$0x1]
      %v1521 = vld [vmem:[%s608 + $0x20] sm:$0xe]
      %v1522 = vld [vmem:[%s608 + $0x24] sm:$0x1]
      %v1523 = vld [vmem:[%s608 + $0x28] sm:$0xe]
      %v1524 = vld [vmem:[%s608 + $0x2c] sm:$0x1]
      %v1525 = vld [vmem:[%s608 + $0x30] sm:$0xe]
      %v1526 = vld [vmem:[%s608 + $0x34] sm:$0x1]
      %v1527 = vld [vmem:[%s608 + $0x38] sm:$0xe]
      %v1528 = vld [vmem:[%s608 + $0x3c] sm:$0x1]
      %v1529 = vld [vmem:[%s608 + $0x50] sm:$0xe]
      %v1530 = vld [vmem:[%s608 + $0x54] sm:$0x1]
      %v1531 = vld [vmem:[%s608 + $0x58] sm:$0xe]
      %v1532 = vld [vmem:[%s608 + $0x5c] sm:$0x1]
      %v1533 = vld [vmem:[%s608 + $0x60] sm:$0xe]
      %v1534 = vld [vmem:[%s608 + $0x64] sm:$0x1]
      %v1535 = vld [vmem:[%s608 + $0x68] sm:$0xe]
      %v1536 = vld [vmem:[%s608 + $0x6c] sm:$0x1]
      %v1537 = vld [vmem:[%s608 + $0x70] sm:$0xe]
      %v1538 = vld [vmem:[%s608 + $0x74] sm:$0x1]
      %v1539 = vld [vmem:[%s608 + $0x78] sm:$0xe]
      %v1540 = vld [vmem:[%s608 + $0x7c] sm:$0x1]
      %v1541 = vld [vmem:[%s608 + $0x80] sm:$0xe]
      %v1542 = vld [vmem:[%s608 + $0x84] sm:$0x1]
      %v1543 = vld [vmem:[%s608 + $0x88] sm:$0xe]
      %v1544 = vld [vmem:[%s608 + $0x8c] sm:$0x1]
      %v1577 = vrot.slane %v1513, 5
      %v1578 = vrot.slane %v1577, 4
      %v1579 = vrot.slane %v1514, 5
      %v1580 = vsel %vm1096, %v1578, %v1579
      %v1581 = vrot.slane %v1515, 5
      %v1582 = vrot.slane %v1581, 4
      %v1583 = vrot.slane %v1516, 5
      %v1584 = vsel %vm1096, %v1582, %v1583
      %v1585 = vrot.slane %v1517, 5
      %v1586 = vrot.slane %v1585, 4
      %v1587 = vrot.slane %v1518, 5
      %v1588 = vsel %vm1096, %v1586, %v1587
      %v1589 = vrot.slane %v1519, 5
      %v1590 = vrot.slane %v1589, 4
      %v1591 = vrot.slane %v1520, 5
      %v1592 = vsel %vm1096, %v1590, %v1591
      %v1593 = vrot.slane %v1521, 5
      %v1594 = vrot.slane %v1593, 4
      %v1595 = vrot.slane %v1522, 5
      %v1596 = vsel %vm1096, %v1594, %v1595
      %v1597 = vrot.slane %v1523, 5
      %v1598 = vrot.slane %v1597, 4
      %v1599 = vrot.slane %v1524, 5
      %v1600 = vsel %vm1096, %v1598, %v1599
      %v1601 = vrot.slane %v1525, 5
      %v1602 = vrot.slane %v1601, 4
      %v1603 = vrot.slane %v1526, 5
      %v1604 = vsel %vm1096, %v1602, %v1603
      %v1605 = vrot.slane %v1527, 5
      %v1606 = vrot.slane %v1605, 4
      %v1607 = vrot.slane %v1528, 5
      %v1608 = vsel %vm1096, %v1606, %v1607
      %v1609 = vrot.slane %v1529, 5
      %v1610 = vrot.slane %v1609, 4
      %v1611 = vrot.slane %v1530, 5
      %v1612 = vsel %vm1096, %v1610, %v1611
      %v1613 = vrot.slane %v1531, 5
      %v1614 = vrot.slane %v1613, 4
      %v1615 = vrot.slane %v1532, 5
      %v1616 = vsel %vm1096, %v1614, %v1615
      %v1617 = vrot.slane %v1533, 5
      %v1618 = vrot.slane %v1617, 4
      %v1619 = vrot.slane %v1534, 5
      %v1620 = vsel %vm1096, %v1618, %v1619
      %v1621 = vrot.slane %v1535, 5
      %v1622 = vrot.slane %v1621, 4
      %v1623 = vrot.slane %v1536, 5
      %v1624 = vsel %vm1096, %v1622, %v1623
      %v1625 = vrot.slane %v1537, 5
      %v1626 = vrot.slane %v1625, 4
      %v1627 = vrot.slane %v1538, 5
      %v1628 = vsel %vm1096, %v1626, %v1627
      %v1629 = vrot.slane %v1539, 5
      %v1630 = vrot.slane %v1629, 4
      %v1631 = vrot.slane %v1540, 5
      %v1632 = vsel %vm1096, %v1630, %v1631
      %v1633 = vrot.slane %v1541, 5
      %v1634 = vrot.slane %v1633, 4
      %v1635 = vrot.slane %v1542, 5
      %v1636 = vsel %vm1096, %v1634, %v1635
      %v1637 = vrot.slane %v1543, 5
      %v1638 = vrot.slane %v1637, 4
      %v1639 = vrot.slane %v1544, 5
      %v1640 = vsel %vm1096, %v1638, %v1639
      %1657 = vst [vmem:[#allocation4 + $0x14] sm:$0xf] %v1580
      %1658 = vst [vmem:[#allocation4 + $0x38] sm:$0xf] %v1584
      %1659 = vst [vmem:[#allocation4 + $0x5c] sm:$0xf] %v1588
      %1660 = vst [vmem:[#allocation4 + $0x80] sm:$0xf] %v1592
      %1661 = vst [vmem:[#allocation4 + $0xa4] sm:$0xf] %v1596
      %1662 = vst [vmem:[#allocation4 + $0xc8] sm:$0xf] %v1600
      %1663 = vst [vmem:[#allocation4 + $0xec] sm:$0xf] %v1604
      %1664 = vst [vmem:[#allocation4 + $0x110] sm:$0xf] %v1608
      %1665 = vst [vmem:[#allocation4 + $0x134] sm:$0xf] %v1612
      %1666 = vst [vmem:[#allocation4 + $0x158] sm:$0xf] %v1616
      %1667 = vst [vmem:[#allocation4 + $0x17c] sm:$0xf] %v1620
      %1668 = vst [vmem:[#allocation4 + $0x1a0] sm:$0xf] %v1624
      %1669 = vst [vmem:[#allocation4 + $0x1c4] sm:$0xf] %v1628
      %1670 = vst [vmem:[#allocation4 + $0x1e8] sm:$0xf] %v1632
      %1671 = vst [vmem:[#allocation4 + $0x20c] sm:$0xf] %v1636
      %1672 = vst [vmem:[#allocation4 + $0x230] sm:$0xf] %v1640
      %s1673 = scalar_lea.vmem [#allocation2], 16
      %v1674 = vld [vmem:[%s1673] sm:$0xf]
      %v1675 = vld [vmem:[%s1673 + $0x8] sm:$0xf]
      %v1676 = vld [vmem:[%s1673 + $0x10] sm:$0xf]
      %v1677 = vld [vmem:[%s1673 + $0x18] sm:$0xf]
      %v1678 = vld [vmem:[%s1673 + $0x20] sm:$0xf]
      %v1679 = vld [vmem:[%s1673 + $0x28] sm:$0xf]
      %v1680 = vld [vmem:[%s1673 + $0x30] sm:$0xf]
      %v1681 = vld [vmem:[%s1673 + $0x38] sm:$0xf]
      %v1682 = vld [vmem:[%s1673 + $0x50] sm:$0xf]
      %v1683 = vld [vmem:[%s1673 + $0x58] sm:$0xf]
      %v1684 = vld [vmem:[%s1673 + $0x60] sm:$0xf]
      %v1685 = vld [vmem:[%s1673 + $0x68] sm:$0xf]
      %v1686 = vld [vmem:[%s1673 + $0x70] sm:$0xf]
      %v1687 = vld [vmem:[%s1673 + $0x78] sm:$0xf]
      %v1688 = vld [vmem:[%s1673 + $0x80] sm:$0xf]
      %v1689 = vld [vmem:[%s1673 + $0x88] sm:$0xf]
      %1690 = vst [vmem:[#allocation4 + $0x18] sm:$0xf] %v1674
      %1691 = vst [vmem:[#allocation4 + $0x3c] sm:$0xf] %v1675
      %1692 = vst [vmem:[#allocation4 + $0x60] sm:$0xf] %v1676
      %1693 = vst [vmem:[#allocation4 + $0x84] sm:$0xf] %v1677
      %1694 = vst [vmem:[#allocation4 + $0xa8] sm:$0xf] %v1678
      %1695 = vst [vmem:[#allocation4 + $0xcc] sm:$0xf] %v1679
      %1696 = vst [vmem:[#allocation4 + $0xf0] sm:$0xf] %v1680
      %1697 = vst [vmem:[#allocation4 + $0x114] sm:$0xf] %v1681
      %1698 = vst [vmem:[#allocation4 + $0x138] sm:$0xf] %v1682
      %1699 = vst [vmem:[#allocation4 + $0x15c] sm:$0xf] %v1683
      %1700 = vst [vmem:[#allocation4 + $0x180] sm:$0xf] %v1684
      %1701 = vst [vmem:[#allocation4 + $0x1a4] sm:$0xf] %v1685
      %1702 = vst [vmem:[#allocation4 + $0x1c8] sm:$0xf] %v1686
      %1703 = vst [vmem:[#allocation4 + $0x1ec] sm:$0xf] %v1687
      %1704 = vst [vmem:[#allocation4 + $0x210] sm:$0xf] %v1688
      %1705 = vst [vmem:[#allocation4 + $0x234] sm:$0xf] %v1689
      %v1706 = vld [vmem:[%s1673] sm:$0xf]
      %v1707 = vld [vmem:[%s1673 + $0x4] sm:$0x1]
      %v1708 = vld [vmem:[%s1673 + $0x8] sm:$0xf]
      %v1709 = vld [vmem:[%s1673 + $0xc] sm:$0x1]
      %v1710 = vld [vmem:[%s1673 + $0x10] sm:$0xf]
      %v1711 = vld [vmem:[%s1673 + $0x14] sm:$0x1]
      %v1712 = vld [vmem:[%s1673 + $0x18] sm:$0xf]
      %v1713 = vld [vmem:[%s1673 + $0x1c] sm:$0x1]
      %v1714 = vld [vmem:[%s1673 + $0x20] sm:$0xf]
      %v1715 = vld [vmem:[%s1673 + $0x24] sm:$0x1]
      %v1716 = vld [vmem:[%s1673 + $0x28] sm:$0xf]
      %v1717 = vld [vmem:[%s1673 + $0x2c] sm:$0x1]
      %v1718 = vld [vmem:[%s1673 + $0x30] sm:$0xf]
      %v1719 = vld [vmem:[%s1673 + $0x34] sm:$0x1]
      %v1720 = vld [vmem:[%s1673 + $0x38] sm:$0xf]
      %v1721 = vld [vmem:[%s1673 + $0x3c] sm:$0x1]
      %v1722 = vld [vmem:[%s1673 + $0x50] sm:$0xf]
      %v1723 = vld [vmem:[%s1673 + $0x54] sm:$0x1]
      %v1724 = vld [vmem:[%s1673 + $0x58] sm:$0xf]
      %v1725 = vld [vmem:[%s1673 + $0x5c] sm:$0x1]
      %v1726 = vld [vmem:[%s1673 + $0x60] sm:$0xf]
      %v1727 = vld [vmem:[%s1673 + $0x64] sm:$0x1]
      %v1728 = vld [vmem:[%s1673 + $0x68] sm:$0xf]
      %v1729 = vld [vmem:[%s1673 + $0x6c] sm:$0x1]
      %v1730 = vld [vmem:[%s1673 + $0x70] sm:$0xf]
      %v1731 = vld [vmem:[%s1673 + $0x74] sm:$0x1]
      %v1732 = vld [vmem:[%s1673 + $0x78] sm:$0xf]
      %v1733 = vld [vmem:[%s1673 + $0x7c] sm:$0x1]
      %v1734 = vld [vmem:[%s1673 + $0x80] sm:$0xf]
      %v1735 = vld [vmem:[%s1673 + $0x84] sm:$0x1]
      %v1736 = vld [vmem:[%s1673 + $0x88] sm:$0xf]
      %v1737 = vld [vmem:[%s1673 + $0x8c] sm:$0x1]
      %v1739 = vshrl.u32 %v1706, 16
      %v1741 = vrot.slane %v1739, 4
      %v1742 = vshll.u32 %v1706, 16
      %v1744 = vrot.slane %v1742, 5
      %v1745 = vor.u32 %v1741, %v1744
      %v1746 = vrot.slane %v1745, 4
      %v1748 = vshll.u32 %v1707, 16
      %v1750 = vrot.slane %v1748, 5
      %v1751 = vsel %vm773, %v1746, %v1750
      %v1753 = vshrl.u32 %v1708, 16
      %v1755 = vrot.slane %v1753, 4
      %v1756 = vshll.u32 %v1708, 16
      %v1758 = vrot.slane %v1756, 5
      %v1759 = vor.u32 %v1755, %v1758
      %v1760 = vrot.slane %v1759, 4
      %v1762 = vshll.u32 %v1709, 16
      %v1764 = vrot.slane %v1762, 5
      %v1765 = vsel %vm773, %v1760, %v1764
      %v1767 = vshrl.u32 %v1710, 16
      %v1769 = vrot.slane %v1767, 4
      %v1770 = vshll.u32 %v1710, 16
      %v1772 = vrot.slane %v1770, 5
      %v1773 = vor.u32 %v1769, %v1772
      %v1774 = vrot.slane %v1773, 4
      %v1776 = vshll.u32 %v1711, 16
      %v1778 = vrot.slane %v1776, 5
      %v1779 = vsel %vm773, %v1774, %v1778
      %v1781 = vshrl.u32 %v1712, 16
      %v1783 = vrot.slane %v1781, 4
      %v1784 = vshll.u32 %v1712, 16
      %v1786 = vrot.slane %v1784, 5
      %v1787 = vor.u32 %v1783, %v1786
      %v1788 = vrot.slane %v1787, 4
      %v1790 = vshll.u32 %v1713, 16
      %v1792 = vrot.slane %v1790, 5
      %v1793 = vsel %vm773, %v1788, %v1792
      %v1795 = vshrl.u32 %v1714, 16
      %v1797 = vrot.slane %v1795, 4
      %v1798 = vshll.u32 %v1714, 16
      %v1800 = vrot.slane %v1798, 5
      %v1801 = vor.u32 %v1797, %v1800
      %v1802 = vrot.slane %v1801, 4
      %v1804 = vshll.u32 %v1715, 16
      %v1806 = vrot.slane %v1804, 5
      %v1807 = vsel %vm773, %v1802, %v1806
      %v1809 = vshrl.u32 %v1716, 16
      %v1811 = vrot.slane %v1809, 4
      %v1812 = vshll.u32 %v1716, 16
      %v1814 = vrot.slane %v1812, 5
      %v1815 = vor.u32 %v1811, %v1814
      %v1816 = vrot.slane %v1815, 4
      %v1818 = vshll.u32 %v1717, 16
      %v1820 = vrot.slane %v1818, 5
      %v1821 = vsel %vm773, %v1816, %v1820
      %v1823 = vshrl.u32 %v1718, 16
      %v1825 = vrot.slane %v1823, 4
      %v1826 = vshll.u32 %v1718, 16
      %v1828 = vrot.slane %v1826, 5
      %v1829 = vor.u32 %v1825, %v1828
      %v1830 = vrot.slane %v1829, 4
      %v1832 = vshll.u32 %v1719, 16
      %v1834 = vrot.slane %v1832, 5
      %v1835 = vsel %vm773, %v1830, %v1834
      %v1837 = vshrl.u32 %v1720, 16
      %v1839 = vrot.slane %v1837, 4
      %v1840 = vshll.u32 %v1720, 16
      %v1842 = vrot.slane %v1840, 5
      %v1843 = vor.u32 %v1839, %v1842
      %v1844 = vrot.slane %v1843, 4
      %v1846 = vshll.u32 %v1721, 16
      %v1848 = vrot.slane %v1846, 5
      %v1849 = vsel %vm773, %v1844, %v1848
      %v1851 = vshrl.u32 %v1722, 16
      %v1853 = vrot.slane %v1851, 4
      %v1854 = vshll.u32 %v1722, 16
      %v1856 = vrot.slane %v1854, 5
      %v1857 = vor.u32 %v1853, %v1856
      %v1858 = vrot.slane %v1857, 4
      %v1860 = vshll.u32 %v1723, 16
      %v1862 = vrot.slane %v1860, 5
      %v1863 = vsel %vm773, %v1858, %v1862
      %v1865 = vshrl.u32 %v1724, 16
      %v1867 = vrot.slane %v1865, 4
      %v1868 = vshll.u32 %v1724, 16
      %v1870 = vrot.slane %v1868, 5
      %v1871 = vor.u32 %v1867, %v1870
      %v1872 = vrot.slane %v1871, 4
      %v1874 = vshll.u32 %v1725, 16
      %v1876 = vrot.slane %v1874, 5
      %v1877 = vsel %vm773, %v1872, %v1876
      %v1879 = vshrl.u32 %v1726, 16
      %v1881 = vrot.slane %v1879, 4
      %v1882 = vshll.u32 %v1726, 16
      %v1884 = vrot.slane %v1882, 5
      %v1885 = vor.u32 %v1881, %v1884
      %v1886 = vrot.slane %v1885, 4
      %v1888 = vshll.u32 %v1727, 16
      %v1890 = vrot.slane %v1888, 5
      %v1891 = vsel %vm773, %v1886, %v1890
      %v1893 = vshrl.u32 %v1728, 16
      %v1895 = vrot.slane %v1893, 4
      %v1896 = vshll.u32 %v1728, 16
      %v1898 = vrot.slane %v1896, 5
      %v1899 = vor.u32 %v1895, %v1898
      %v1900 = vrot.slane %v1899, 4
      %v1902 = vshll.u32 %v1729, 16
      %v1904 = vrot.slane %v1902, 5
      %v1905 = vsel %vm773, %v1900, %v1904
      %v1907 = vshrl.u32 %v1730, 16
      %v1909 = vrot.slane %v1907, 4
      %v1910 = vshll.u32 %v1730, 16
      %v1912 = vrot.slane %v1910, 5
      %v1913 = vor.u32 %v1909, %v1912
      %v1914 = vrot.slane %v1913, 4
      %v1916 = vshll.u32 %v1731, 16
      %v1918 = vrot.slane %v1916, 5
      %v1919 = vsel %vm773, %v1914, %v1918
      %v1921 = vshrl.u32 %v1732, 16
      %v1923 = vrot.slane %v1921, 4
      %v1924 = vshll.u32 %v1732, 16
      %v1926 = vrot.slane %v1924, 5
      %v1927 = vor.u32 %v1923, %v1926
      %v1928 = vrot.slane %v1927, 4
      %v1930 = vshll.u32 %v1733, 16
      %v1932 = vrot.slane %v1930, 5
      %v1933 = vsel %vm773, %v1928, %v1932
      %v1935 = vshrl.u32 %v1734, 16
      %v1937 = vrot.slane %v1935, 4
      %v1938 = vshll.u32 %v1734, 16
      %v1940 = vrot.slane %v1938, 5
      %v1941 = vor.u32 %v1937, %v1940
      %v1942 = vrot.slane %v1941, 4
      %v1944 = vshll.u32 %v1735, 16
      %v1946 = vrot.slane %v1944, 5
      %v1947 = vsel %vm773, %v1942, %v1946
      %v1949 = vshrl.u32 %v1736, 16
      %v1951 = vrot.slane %v1949, 4
      %v1952 = vshll.u32 %v1736, 16
      %v1954 = vrot.slane %v1952, 5
      %v1955 = vor.u32 %v1951, %v1954
      %v1956 = vrot.slane %v1955, 4
      %v1958 = vshll.u32 %v1737, 16
      %v1960 = vrot.slane %v1958, 5
      %v1961 = vsel %vm773, %v1956, %v1960
      %1978 = vst [vmem:[#allocation4 + $0x1c] sm:$0xf] %v1751
      %1979 = vst [vmem:[#allocation4 + $0x40] sm:$0xf] %v1765
      %1980 = vst [vmem:[#allocation4 + $0x64] sm:$0xf] %v1779
      %1981 = vst [vmem:[#allocation4 + $0x88] sm:$0xf] %v1793
      %1982 = vst [vmem:[#allocation4 + $0xac] sm:$0xf] %v1807
      %1983 = vst [vmem:[#allocation4 + $0xd0] sm:$0xf] %v1821
      %1984 = vst [vmem:[#allocation4 + $0xf4] sm:$0xf] %v1835
      %1985 = vst [vmem:[#allocation4 + $0x118] sm:$0xf] %v1849
      %1986 = vst [vmem:[#allocation4 + $0x13c] sm:$0xf] %v1863
      %1987 = vst [vmem:[#allocation4 + $0x160] sm:$0xf] %v1877
      %1988 = vst [vmem:[#allocation4 + $0x184] sm:$0xf] %v1891
      %1989 = vst [vmem:[#allocation4 + $0x1a8] sm:$0xf] %v1905
      %1990 = vst [vmem:[#allocation4 + $0x1cc] sm:$0xf] %v1919
      %1991 = vst [vmem:[#allocation4 + $0x1f0] sm:$0xf] %v1933
      %1992 = vst [vmem:[#allocation4 + $0x214] sm:$0xf] %v1947
      %1993 = vst [vmem:[#allocation4 + $0x238] sm:$0xf] %v1961
      %v1994 = vld [vmem:[%s1673] sm:$0xe]
      %v1995 = vld [vmem:[%s1673 + $0x4] sm:$0x1]
      %v1996 = vld [vmem:[%s1673 + $0x8] sm:$0xe]
      %v1997 = vld [vmem:[%s1673 + $0xc] sm:$0x1]
      %v1998 = vld [vmem:[%s1673 + $0x10] sm:$0xe]
      %v1999 = vld [vmem:[%s1673 + $0x14] sm:$0x1]
      %v2000 = vld [vmem:[%s1673 + $0x18] sm:$0xe]
      %v2001 = vld [vmem:[%s1673 + $0x1c] sm:$0x1]
      %v2002 = vld [vmem:[%s1673 + $0x20] sm:$0xe]
      %v2003 = vld [vmem:[%s1673 + $0x24] sm:$0x1]
      %v2004 = vld [vmem:[%s1673 + $0x28] sm:$0xe]
      %v2005 = vld [vmem:[%s1673 + $0x2c] sm:$0x1]
      %v2006 = vld [vmem:[%s1673 + $0x30] sm:$0xe]
      %v2007 = vld [vmem:[%s1673 + $0x34] sm:$0x1]
      %v2008 = vld [vmem:[%s1673 + $0x38] sm:$0xe]
      %v2009 = vld [vmem:[%s1673 + $0x3c] sm:$0x1]
      %v2010 = vld [vmem:[%s1673 + $0x50] sm:$0xe]
      %v2011 = vld [vmem:[%s1673 + $0x54] sm:$0x1]
      %v2012 = vld [vmem:[%s1673 + $0x58] sm:$0xe]
      %v2013 = vld [vmem:[%s1673 + $0x5c] sm:$0x1]
      %v2014 = vld [vmem:[%s1673 + $0x60] sm:$0xe]
      %v2015 = vld [vmem:[%s1673 + $0x64] sm:$0x1]
      %v2016 = vld [vmem:[%s1673 + $0x68] sm:$0xe]
      %v2017 = vld [vmem:[%s1673 + $0x6c] sm:$0x1]
      %v2018 = vld [vmem:[%s1673 + $0x70] sm:$0xe]
      %v2019 = vld [vmem:[%s1673 + $0x74] sm:$0x1]
      %v2020 = vld [vmem:[%s1673 + $0x78] sm:$0xe]
      %v2021 = vld [vmem:[%s1673 + $0x7c] sm:$0x1]
      %v2022 = vld [vmem:[%s1673 + $0x80] sm:$0xe]
      %v2023 = vld [vmem:[%s1673 + $0x84] sm:$0x1]
      %v2024 = vld [vmem:[%s1673 + $0x88] sm:$0xe]
      %v2025 = vld [vmem:[%s1673 + $0x8c] sm:$0x1]
      %v2058 = vrot.slane %v1994, 5
      %v2059 = vrot.slane %v2058, 4
      %v2060 = vrot.slane %v1995, 5
      %v2061 = vsel %vm1096, %v2059, %v2060
      %v2062 = vrot.slane %v1996, 5
      %v2063 = vrot.slane %v2062, 4
      %v2064 = vrot.slane %v1997, 5
      %v2065 = vsel %vm1096, %v2063, %v2064
      %v2066 = vrot.slane %v1998, 5
      %v2067 = vrot.slane %v2066, 4
      %v2068 = vrot.slane %v1999, 5
      %v2069 = vsel %vm1096, %v2067, %v2068
      %v2070 = vrot.slane %v2000, 5
      %v2071 = vrot.slane %v2070, 4
      %v2072 = vrot.slane %v2001, 5
      %v2073 = vsel %vm1096, %v2071, %v2072
      %v2074 = vrot.slane %v2002, 5
      %v2075 = vrot.slane %v2074, 4
      %v2076 = vrot.slane %v2003, 5
      %v2077 = vsel %vm1096, %v2075, %v2076
      %v2078 = vrot.slane %v2004, 5
      %v2079 = vrot.slane %v2078, 4
      %v2080 = vrot.slane %v2005, 5
      %v2081 = vsel %vm1096, %v2079, %v2080
      %v2082 = vrot.slane %v2006, 5
      %v2083 = vrot.slane %v2082, 4
      %v2084 = vrot.slane %v2007, 5
      %v2085 = vsel %vm1096, %v2083, %v2084
      %v2086 = vrot.slane %v2008, 5
      %v2087 = vrot.slane %v2086, 4
      %v2088 = vrot.slane %v2009, 5
      %v2089 = vsel %vm1096, %v2087, %v2088
      %v2090 = vrot.slane %v2010, 5
      %v2091 = vrot.slane %v2090, 4
      %v2092 = vrot.slane %v2011, 5
      %v2093 = vsel %vm1096, %v2091, %v2092
      %v2094 = vrot.slane %v2012, 5
      %v2095 = vrot.slane %v2094, 4
      %v2096 = vrot.slane %v2013, 5
      %v2097 = vsel %vm1096, %v2095, %v2096
      %v2098 = vrot.slane %v2014, 5
      %v2099 = vrot.slane %v2098, 4
      %v2100 = vrot.slane %v2015, 5
      %v2101 = vsel %vm1096, %v2099, %v2100
      %v2102 = vrot.slane %v2016, 5
      %v2103 = vrot.slane %v2102, 4
      %v2104 = vrot.slane %v2017, 5
      %v2105 = vsel %vm1096, %v2103, %v2104
      %v2106 = vrot.slane %v2018, 5
      %v2107 = vrot.slane %v2106, 4
      %v2108 = vrot.slane %v2019, 5
      %v2109 = vsel %vm1096, %v2107, %v2108
      %v2110 = vrot.slane %v2020, 5
      %v2111 = vrot.slane %v2110, 4
      %v2112 = vrot.slane %v2021, 5
      %v2113 = vsel %vm1096, %v2111, %v2112
      %v2114 = vrot.slane %v2022, 5
      %v2115 = vrot.slane %v2114, 4
      %v2116 = vrot.slane %v2023, 5
      %v2117 = vsel %vm1096, %v2115, %v2116
      %v2118 = vrot.slane %v2024, 5
      %v2119 = vrot.slane %v2118, 4
      %v2120 = vrot.slane %v2025, 5
      %v2121 = vsel %vm1096, %v2119, %v2120
      %2138 = vst [vmem:[#allocation4 + $0x20] sm:$0xf] %v2061
      %2139 = vst [vmem:[#allocation4 + $0x44] sm:$0xf] %v2065
      %2140 = vst [vmem:[#allocation4 + $0x68] sm:$0xf] %v2069
      %2141 = vst [vmem:[#allocation4 + $0x8c] sm:$0xf] %v2073
      %2142 = vst [vmem:[#allocation4 + $0xb0] sm:$0xf] %v2077
      %2143 = vst [vmem:[#allocation4 + $0xd4] sm:$0xf] %v2081
      %2144 = vst [vmem:[#allocation4 + $0xf8] sm:$0xf] %v2085
      %2145 = vst [vmem:[#allocation4 + $0x11c] sm:$0xf] %v2089
      %2146 = vst [vmem:[#allocation4 + $0x140] sm:$0xf] %v2093
      %2147 = vst [vmem:[#allocation4 + $0x164] sm:$0xf] %v2097
      %2148 = vst [vmem:[#allocation4 + $0x188] sm:$0xf] %v2101
      %2149 = vst [vmem:[#allocation4 + $0x1ac] sm:$0xf] %v2105
      %2150 = vst [vmem:[#allocation4 + $0x1d0] sm:$0xf] %v2109
      %2151 = vst [vmem:[#allocation4 + $0x1f4] sm:$0xf] %v2113
      %2152 = vst [vmem:[#allocation4 + $0x218] sm:$0xf] %v2117
      %2153 = vst [vmem:[#allocation4 + $0x23c] sm:$0xf] %v2121
      %v2154 = vld [vmem:[#allocation4] sm:$0xff]
      %v2155 = vld [vmem:[#allocation4 + $0x8] sm:$0xff]
      %v2156 = vld [vmem:[#allocation4 + $0x10] sm:$0xff]
      %v2157 = vld [vmem:[#allocation4 + $0x18] sm:$0xff]
      %v2158 = vld [vmem:[#allocation4 + $0x20] sm:$0xf]
      %v2159 = vld [vmem:[#allocation4 + $0x24] sm:$0xff]
      %v2160 = vld [vmem:[#allocation4 + $0x2c] sm:$0xff]
      %v2161 = vld [vmem:[#allocation4 + $0x34] sm:$0xff]
      %v2162 = vld [vmem:[#allocation4 + $0x3c] sm:$0xff]
      %v2163 = vld [vmem:[#allocation4 + $0x44] sm:$0xf]
      %v2164 = vld [vmem:[#allocation4 + $0x48] sm:$0xff]
      %v2165 = vld [vmem:[#allocation4 + $0x50] sm:$0xff]
      %v2166 = vld [vmem:[#allocation4 + $0x58] sm:$0xff]
      %v2167 = vld [vmem:[#allocation4 + $0x60] sm:$0xff]
      %v2168 = vld [vmem:[#allocation4 + $0x68] sm:$0xf]
      %v2169 = vld [vmem:[#allocation4 + $0x6c] sm:$0xff]
      %v2170 = vld [vmem:[#allocation4 + $0x74] sm:$0xff]
      %v2171 = vld [vmem:[#allocation4 + $0x7c] sm:$0xff]
      %v2172 = vld [vmem:[#allocation4 + $0x84] sm:$0xff]
      %v2173 = vld [vmem:[#allocation4 + $0x8c] sm:$0xf]
      %v2174 = vld [vmem:[#allocation4 + $0x90] sm:$0xff]
      %v2175 = vld [vmem:[#allocation4 + $0x98] sm:$0xff]
      %v2176 = vld [vmem:[#allocation4 + $0xa0] sm:$0xff]
      %v2177 = vld [vmem:[#allocation4 + $0xa8] sm:$0xff]
      %v2178 = vld [vmem:[#allocation4 + $0xb0] sm:$0xf]
      %v2179 = vld [vmem:[#allocation4 + $0xb4] sm:$0xff]
      %v2180 = vld [vmem:[#allocation4 + $0xbc] sm:$0xff]
      %v2181 = vld [vmem:[#allocation4 + $0xc4] sm:$0xff]
      %v2182 = vld [vmem:[#allocation4 + $0xcc] sm:$0xff]
      %v2183 = vld [vmem:[#allocation4 + $0xd4] sm:$0xf]
      %v2184 = vld [vmem:[#allocation4 + $0xd8] sm:$0xff]
      %v2185 = vld [vmem:[#allocation4 + $0xe0] sm:$0xff]
      %v2186 = vld [vmem:[#allocation4 + $0xe8] sm:$0xff]
      %v2187 = vld [vmem:[#allocation4 + $0xf0] sm:$0xff]
      %v2188 = vld [vmem:[#allocation4 + $0xf8] sm:$0xf]
      %v2189 = vld [vmem:[#allocation4 + $0xfc] sm:$0xff]
      %v2190 = vld [vmem:[#allocation4 + $0x104] sm:$0xff]
      %v2191 = vld [vmem:[#allocation4 + $0x10c] sm:$0xff]
      %v2192 = vld [vmem:[#allocation4 + $0x114] sm:$0xff]
      %v2193 = vld [vmem:[#allocation4 + $0x11c] sm:$0xf]
      %v2194 = vld [vmem:[#allocation4 + $0x120] sm:$0xff]
      %v2195 = vld [vmem:[#allocation4 + $0x128] sm:$0xff]
      %v2196 = vld [vmem:[#allocation4 + $0x130] sm:$0xff]
      %v2197 = vld [vmem:[#allocation4 + $0x138] sm:$0xff]
      %v2198 = vld [vmem:[#allocation4 + $0x140] sm:$0xf]
      %v2199 = vld [vmem:[#allocation4 + $0x144] sm:$0xff]
      %v2200 = vld [vmem:[#allocation4 + $0x14c] sm:$0xff]
      %v2201 = vld [vmem:[#allocation4 + $0x154] sm:$0xff]
      %v2202 = vld [vmem:[#allocation4 + $0x15c] sm:$0xff]
      %v2203 = vld [vmem:[#allocation4 + $0x164] sm:$0xf]
      %v2204 = vld [vmem:[#allocation4 + $0x168] sm:$0xff]
      %v2205 = vld [vmem:[#allocation4 + $0x170] sm:$0xff]
      %v2206 = vld [vmem:[#allocation4 + $0x178] sm:$0xff]
      %v2207 = vld [vmem:[#allocation4 + $0x180] sm:$0xff]
      %v2208 = vld [vmem:[#allocation4 + $0x188] sm:$0xf]
      %v2209 = vld [vmem:[#allocation4 + $0x18c] sm:$0xff]
      %v2210 = vld [vmem:[#allocation4 + $0x194] sm:$0xff]
      %v2211 = vld [vmem:[#allocation4 + $0x19c] sm:$0xff]
      %v2212 = vld [vmem:[#allocation4 + $0x1a4] sm:$0xff]
      %v2213 = vld [vmem:[#allocation4 + $0x1ac] sm:$0xf]
      %v2214 = vld [vmem:[#allocation4 + $0x1b0] sm:$0xff]
      %v2215 = vld [vmem:[#allocation4 + $0x1b8] sm:$0xff]
      %v2216 = vld [vmem:[#allocation4 + $0x1c0] sm:$0xff]
      %v2217 = vld [vmem:[#allocation4 + $0x1c8] sm:$0xff]
      %v2218 = vld [vmem:[#allocation4 + $0x1d0] sm:$0xf]
      %v2219 = vld [vmem:[#allocation4 + $0x1d4] sm:$0xff]
      %v2220 = vld [vmem:[#allocation4 + $0x1dc] sm:$0xff]
      %v2221 = vld [vmem:[#allocation4 + $0x1e4] sm:$0xff]
      %v2222 = vld [vmem:[#allocation4 + $0x1ec] sm:$0xff]
      %v2223 = vld [vmem:[#allocation4 + $0x1f4] sm:$0xf]
      %v2224 = vld [vmem:[#allocation4 + $0x1f8] sm:$0xff]
      %v2225 = vld [vmem:[#allocation4 + $0x200] sm:$0xff]
      %v2226 = vld [vmem:[#allocation4 + $0x208] sm:$0xff]
      %v2227 = vld [vmem:[#allocation4 + $0x210] sm:$0xff]
      %v2228 = vld [vmem:[#allocation4 + $0x218] sm:$0xf]
      %v2229 = vld [vmem:[#allocation4 + $0x21c] sm:$0xff]
      %v2230 = vld [vmem:[#allocation4 + $0x224] sm:$0xff]
      %v2231 = vld [vmem:[#allocation4 + $0x22c] sm:$0xff]
      %v2232 = vld [vmem:[#allocation4 + $0x234] sm:$0xff]
      %v2233 = vld [vmem:[#allocation4 + $0x23c] sm:$0xf]
      %v2234 = vld [vmem:[%s1] sm:$0xf]
      %v2235 = vld [vmem:[%s1 + $0x4] sm:$0xf]
      %v2236 = vld [vmem:[%s1 + $0x8] sm:$0xf]
      %v2237 = vld [vmem:[%s1 + $0xc] sm:$0xf]
      %v2238 = vld [vmem:[%s1 + $0x10] sm:$0xf]
      %v2239 = vld [vmem:[%s1 + $0x14] sm:$0xf]
      %v2240 = vld [vmem:[%s1 + $0x18] sm:$0xf]
      %v2241 = vld [vmem:[%s1 + $0x1c] sm:$0xf]
      %v2242 = vld [vmem:[%s1 + $0x20] sm:$0xf]
      %v2243 = vld [vmem:[%s1 + $0x24] sm:$0xf]
      %v2244 = vld [vmem:[%s1 + $0x28] sm:$0xf]
      %v2245 = vld [vmem:[%s1 + $0x2c] sm:$0xf]
      %v2246 = vld [vmem:[%s1 + $0x30] sm:$0xf]
      %v2247 = vld [vmem:[%s1 + $0x34] sm:$0xf]
      %v2248 = vld [vmem:[%s1 + $0x38] sm:$0xf]
      %v2249 = vld [vmem:[%s1 + $0x3c] sm:$0xf]
      %v2250 = vld [vmem:[%s1 + $0x40] sm:$0xf]
      %v2251 = vld [vmem:[%s1 + $0x44] sm:$0xf]
      %v2252 = vld [vmem:[%s1 + $0x48] sm:$0xf]
      %v2253 = vld [vmem:[%s1 + $0x4c] sm:$0xf]
      %v2254 = vld [vmem:[%s1 + $0x50] sm:$0xf]
      %v2255 = vld [vmem:[%s1 + $0x54] sm:$0xf]
      %v2256 = vld [vmem:[%s1 + $0x58] sm:$0xf]
      %v2257 = vld [vmem:[%s1 + $0x5c] sm:$0xf]
      %v2258 = vld [vmem:[%s1 + $0x60] sm:$0xf]
      %v2259 = vld [vmem:[%s1 + $0x64] sm:$0xf]
      %v2260 = vld [vmem:[%s1 + $0x68] sm:$0xf]
      %v2261 = vld [vmem:[%s1 + $0x6c] sm:$0xf]
      %v2262 = vld [vmem:[%s1 + $0x70] sm:$0xf]
      %v2263 = vld [vmem:[%s1 + $0x74] sm:$0xf]
      %v2264 = vld [vmem:[%s1 + $0x78] sm:$0xf]
      %v2265 = vld [vmem:[%s1 + $0x7c] sm:$0xf]
      %v2266 = vld [vmem:[%s1 + $0x80] sm:$0xf]
      %v2267 = vld [vmem:[%s1 + $0x84] sm:$0xf]
      %v2268 = vld [vmem:[%s1 + $0x88] sm:$0xf]
      %v2269 = vld [vmem:[%s1 + $0x8c] sm:$0xf]
      %v2270 = vld [vmem:[%s1 + $0x90] sm:$0xf]
      %v2271 = vld [vmem:[%s1 + $0x94] sm:$0xf]
      %v2272 = vld [vmem:[%s1 + $0x98] sm:$0xf]
      %v2273 = vld [vmem:[%s1 + $0x9c] sm:$0xf]
      %v2274 = vld [vmem:[%s1 + $0xa0] sm:$0xf]
      %v2275 = vld [vmem:[%s1 + $0xa4] sm:$0xf]
      %v2276 = vld [vmem:[%s1 + $0xa8] sm:$0xf]
      %v2277 = vld [vmem:[%s1 + $0xac] sm:$0xf]
      %v2278 = vld [vmem:[%s1 + $0xb0] sm:$0xf]
      %v2279 = vld [vmem:[%s1 + $0xb4] sm:$0xf]
      %v2280 = vld [vmem:[%s1 + $0xb8] sm:$0xf]
      %v2281 = vld [vmem:[%s1 + $0xbc] sm:$0xf]
      %v2282 = vld [vmem:[%s1 + $0xc0] sm:$0xf]
      %v2283 = vld [vmem:[%s1 + $0xc4] sm:$0xf]
      %v2284 = vld [vmem:[%s1 + $0xc8] sm:$0xf]
      %v2285 = vld [vmem:[%s1 + $0xcc] sm:$0xf]
      %v2286 = vld [vmem:[%s1 + $0xd0] sm:$0xf]
      %v2287 = vld [vmem:[%s1 + $0xd4] sm:$0xf]
      %v2288 = vld [vmem:[%s1 + $0xd8] sm:$0xf]
      %v2289 = vld [vmem:[%s1 + $0xdc] sm:$0xf]
      %v2290 = vld [vmem:[%s1 + $0xe0] sm:$0xf]
      %v2291 = vld [vmem:[%s1 + $0xe4] sm:$0xf]
      %v2292 = vld [vmem:[%s1 + $0xe8] sm:$0xf]
      %v2293 = vld [vmem:[%s1 + $0xec] sm:$0xf]
      %v2294 = vld [vmem:[%s1 + $0xf0] sm:$0xf]
      %v2295 = vld [vmem:[%s1 + $0xf4] sm:$0xf]
      %v2296 = vld [vmem:[%s1 + $0xf8] sm:$0xf]
      %v2297 = vld [vmem:[%s1 + $0xfc] sm:$0xf]
      %v2298 = vld [vmem:[%s1 + $0x100] sm:$0xf]
      %v2299 = vld [vmem:[%s1 + $0x104] sm:$0xf]
      %v2300 = vld [vmem:[%s1 + $0x108] sm:$0xf]
      %v2301 = vld [vmem:[%s1 + $0x10c] sm:$0xf]
      %v2302 = vld [vmem:[%s1 + $0x110] sm:$0xf]
      %v2303 = vld [vmem:[%s1 + $0x114] sm:$0xf]
      %v2304 = vld [vmem:[%s1 + $0x118] sm:$0xf]
      %v2305 = vld [vmem:[%s1 + $0x11c] sm:$0xf]
      %v2306 = vld [vmem:[%s1 + $0x120] sm:$0xf]
      %v2307 = vld [vmem:[%s1 + $0x124] sm:$0xf]
      %v2308 = vld [vmem:[%s1 + $0x128] sm:$0xf]
      %v2309 = vld [vmem:[%s1 + $0x12c] sm:$0xf]
      %v2310 = vld [vmem:[%s1 + $0x130] sm:$0xf]
      %v2311 = vld [vmem:[%s1 + $0x134] sm:$0xf]
      %v2312 = vld [vmem:[%s1 + $0x138] sm:$0xf]
      %v2313 = vld [vmem:[%s1 + $0x13c] sm:$0xf]
      %v2314 = vld [vmem:[%s1 + $0x140] sm:$0xf]
      %v2315 = vld [vmem:[%s1 + $0x144] sm:$0xf]
      %v2316 = vld [vmem:[%s1 + $0x148] sm:$0xf]
      %v2317 = vld [vmem:[%s1 + $0x14c] sm:$0xf]
      %v2318 = vld [vmem:[%s1 + $0x150] sm:$0xf]
      %v2319 = vld [vmem:[%s1 + $0x154] sm:$0xf]
      %v2320 = vld [vmem:[%s1 + $0x158] sm:$0xf]
      %v2321 = vld [vmem:[%s1 + $0x15c] sm:$0xf]
      %v2322 = vld [vmem:[%s1 + $0x160] sm:$0xf]
      %v2323 = vld [vmem:[%s1 + $0x164] sm:$0xf]
      %v2324 = vld [vmem:[%s1 + $0x168] sm:$0xf]
      %v2325 = vld [vmem:[%s1 + $0x16c] sm:$0xf]
      %v2326 = vld [vmem:[%s1 + $0x170] sm:$0xf]
      %v2327 = vld [vmem:[%s1 + $0x174] sm:$0xf]
      %v2328 = vld [vmem:[%s1 + $0x178] sm:$0xf]
      %v2329 = vld [vmem:[%s1 + $0x17c] sm:$0xf]
      %v2330 = vld [vmem:[%s1 + $0x180] sm:$0xf]
      %v2331 = vld [vmem:[%s1 + $0x184] sm:$0xf]
      %v2332 = vld [vmem:[%s1 + $0x188] sm:$0xf]
      %v2333 = vld [vmem:[%s1 + $0x18c] sm:$0xf]
      %v2334 = vld [vmem:[%s1 + $0x190] sm:$0xf]
      %v2335 = vld [vmem:[%s1 + $0x194] sm:$0xf]
      %v2336 = vld [vmem:[%s1 + $0x198] sm:$0xf]
      %v2337 = vld [vmem:[%s1 + $0x19c] sm:$0xf]
      %v2338 = vld [vmem:[%s1 + $0x1a0] sm:$0xf]
      %v2339 = vld [vmem:[%s1 + $0x1a4] sm:$0xf]
      %v2340 = vld [vmem:[%s1 + $0x1a8] sm:$0xf]
      %v2341 = vld [vmem:[%s1 + $0x1ac] sm:$0xf]
      %v2342 = vld [vmem:[%s1 + $0x1b0] sm:$0xf]
      %v2343 = vld [vmem:[%s1 + $0x1b4] sm:$0xf]
      %v2344 = vld [vmem:[%s1 + $0x1b8] sm:$0xf]
      %v2345 = vld [vmem:[%s1 + $0x1bc] sm:$0xf]
      %v2346 = vld [vmem:[%s1 + $0x1c0] sm:$0xf]
      %v2347 = vld [vmem:[%s1 + $0x1c4] sm:$0xf]
      %v2348 = vld [vmem:[%s1 + $0x1c8] sm:$0xf]
      %v2349 = vld [vmem:[%s1 + $0x1cc] sm:$0xf]
      %v2350 = vld [vmem:[%s1 + $0x1d0] sm:$0xf]
      %v2351 = vld [vmem:[%s1 + $0x1d4] sm:$0xf]
      %v2352 = vld [vmem:[%s1 + $0x1d8] sm:$0xf]
      %v2353 = vld [vmem:[%s1 + $0x1dc] sm:$0xf]
      %v2354 = vld [vmem:[%s1 + $0x1e0] sm:$0xf]
      %v2355 = vld [vmem:[%s1 + $0x1e4] sm:$0xf]
      %v2356 = vld [vmem:[%s1 + $0x1e8] sm:$0xf]
      %v2357 = vld [vmem:[%s1 + $0x1ec] sm:$0xf]
      %v2358 = vld [vmem:[%s1 + $0x1f0] sm:$0xf]
      %v2359 = vld [vmem:[%s1 + $0x1f4] sm:$0xf]
      %v2360 = vld [vmem:[%s1 + $0x1f8] sm:$0xf]
      %v2361 = vld [vmem:[%s1 + $0x1fc] sm:$0xf]
      %v2362 = vld [vmem:[%s1 + $0x200] sm:$0xf]
      %v2363 = vld [vmem:[%s1 + $0x204] sm:$0xf]
      %v2364 = vld [vmem:[%s1 + $0x208] sm:$0xf]
      %v2365 = vld [vmem:[%s1 + $0x20c] sm:$0xf]
      %v2366 = vld [vmem:[%s1 + $0x210] sm:$0xf]
      %v2367 = vld [vmem:[%s1 + $0x214] sm:$0xf]
      %v2368 = vld [vmem:[%s1 + $0x218] sm:$0xf]
      %v2369 = vld [vmem:[%s1 + $0x21c] sm:$0xf]
      %v2370 = vld [vmem:[%s1 + $0x220] sm:$0xf]
      %v2371 = vld [vmem:[%s1 + $0x224] sm:$0xf]
      %v2372 = vld [vmem:[%s1 + $0x228] sm:$0xf]
      %v2373 = vld [vmem:[%s1 + $0x22c] sm:$0xf]
      %v2374 = vld [vmem:[%s1 + $0x230] sm:$0xf]
      %v2375 = vld [vmem:[%s1 + $0x234] sm:$0xf]
      %v2376 = vld [vmem:[%s1 + $0x238] sm:$0xf]
      %v2377 = vld [vmem:[%s1 + $0x23c] sm:$0xf]
      %v2378 = vld [vmem:[%s2] sm:$0x1]
      %v2380 = vlaneseq
      %v2381 = vshrl.u32 %v2380, 7
      %v2382 = vsub.s32 0, %v2381
      %v2383 = vrot.slane %v2378, %v2382
      %v2465 = vunpack.c.l.b16 %v2154
      %v2466 = vunpack.c.h.b16 %v2154
      %v2467 = vunpack.c.l.b16 %v2155
      %v2468 = vunpack.c.h.b16 %v2155
      %v2469 = vunpack.c.l.b16 %v2156
      %v2470 = vunpack.c.h.b16 %v2156
      %v2471 = vunpack.c.l.b16 %v2157
      %v2472 = vunpack.c.h.b16 %v2157
      %v2473 = vunpack.c.l.b16 %v2158
      %v2474 = vunpack.c.l.b16 %v2159
      %v2475 = vunpack.c.h.b16 %v2159
      %v2476 = vunpack.c.l.b16 %v2160
      %v2477 = vunpack.c.h.b16 %v2160
      %v2478 = vunpack.c.l.b16 %v2161
      %v2479 = vunpack.c.h.b16 %v2161
      %v2480 = vunpack.c.l.b16 %v2162
      %v2481 = vunpack.c.h.b16 %v2162
      %v2482 = vunpack.c.l.b16 %v2163
      %v2483 = vunpack.c.l.b16 %v2164
      %v2484 = vunpack.c.h.b16 %v2164
      %v2485 = vunpack.c.l.b16 %v2165
      %v2486 = vunpack.c.h.b16 %v2165
      %v2487 = vunpack.c.l.b16 %v2166
      %v2488 = vunpack.c.h.b16 %v2166
      %v2489 = vunpack.c.l.b16 %v2167
      %v2490 = vunpack.c.h.b16 %v2167
      %v2491 = vunpack.c.l.b16 %v2168
      %v2492 = vunpack.c.l.b16 %v2169
      %v2493 = vunpack.c.h.b16 %v2169
      %v2494 = vunpack.c.l.b16 %v2170
      %v2495 = vunpack.c.h.b16 %v2170
      %v2496 = vunpack.c.l.b16 %v2171
      %v2497 = vunpack.c.h.b16 %v2171
      %v2498 = vunpack.c.l.b16 %v2172
      %v2499 = vunpack.c.h.b16 %v2172
      %v2500 = vunpack.c.l.b16 %v2173
      %v2501 = vunpack.c.l.b16 %v2174
      %v2502 = vunpack.c.h.b16 %v2174
      %v2503 = vunpack.c.l.b16 %v2175
      %v2504 = vunpack.c.h.b16 %v2175
      %v2505 = vunpack.c.l.b16 %v2176
      %v2506 = vunpack.c.h.b16 %v2176
      %v2507 = vunpack.c.l.b16 %v2177
      %v2508 = vunpack.c.h.b16 %v2177
      %v2509 = vunpack.c.l.b16 %v2178
      %v2510 = vunpack.c.l.b16 %v2179
      %v2511 = vunpack.c.h.b16 %v2179
      %v2512 = vunpack.c.l.b16 %v2180
      %v2513 = vunpack.c.h.b16 %v2180
      %v2514 = vunpack.c.l.b16 %v2181
      %v2515 = vunpack.c.h.b16 %v2181
      %v2516 = vunpack.c.l.b16 %v2182
      %v2517 = vunpack.c.h.b16 %v2182
      %v2518 = vunpack.c.l.b16 %v2183
      %v2519 = vunpack.c.l.b16 %v2184
      %v2520 = vunpack.c.h.b16 %v2184
      %v2521 = vunpack.c.l.b16 %v2185
      %v2522 = vunpack.c.h.b16 %v2185
      %v2523 = vunpack.c.l.b16 %v2186
      %v2524 = vunpack.c.h.b16 %v2186
      %v2525 = vunpack.c.l.b16 %v2187
      %v2526 = vunpack.c.h.b16 %v2187
      %v2527 = vunpack.c.l.b16 %v2188
      %v2528 = vunpack.c.l.b16 %v2189
      %v2529 = vunpack.c.h.b16 %v2189
      %v2530 = vunpack.c.l.b16 %v2190
      %v2531 = vunpack.c.h.b16 %v2190
      %v2532 = vunpack.c.l.b16 %v2191
      %v2533 = vunpack.c.h.b16 %v2191
      %v2534 = vunpack.c.l.b16 %v2192
      %v2535 = vunpack.c.h.b16 %v2192
      %v2536 = vunpack.c.l.b16 %v2193
      %v2537 = vunpack.c.l.b16 %v2194
      %v2538 = vunpack.c.h.b16 %v2194
      %v2539 = vunpack.c.l.b16 %v2195
      %v2540 = vunpack.c.h.b16 %v2195
      %v2541 = vunpack.c.l.b16 %v2196
      %v2542 = vunpack.c.h.b16 %v2196
      %v2543 = vunpack.c.l.b16 %v2197
      %v2544 = vunpack.c.h.b16 %v2197
      %v2545 = vunpack.c.l.b16 %v2198
      %v2546 = vunpack.c.l.b16 %v2199
      %v2547 = vunpack.c.h.b16 %v2199
      %v2548 = vunpack.c.l.b16 %v2200
      %v2549 = vunpack.c.h.b16 %v2200
      %v2550 = vunpack.c.l.b16 %v2201
      %v2551 = vunpack.c.h.b16 %v2201
      %v2552 = vunpack.c.l.b16 %v2202
      %v2553 = vunpack.c.h.b16 %v2202
      %v2554 = vunpack.c.l.b16 %v2203
      %v2555 = vunpack.c.l.b16 %v2204
      %v2556 = vunpack.c.h.b16 %v2204
      %v2557 = vunpack.c.l.b16 %v2205
      %v2558 = vunpack.c.h.b16 %v2205
      %v2559 = vunpack.c.l.b16 %v2206
      %v2560 = vunpack.c.h.b16 %v2206
      %v2561 = vunpack.c.l.b16 %v2207
      %v2562 = vunpack.c.h.b16 %v2207
      %v2563 = vunpack.c.l.b16 %v2208
      %v2564 = vunpack.c.l.b16 %v2209
      %v2565 = vunpack.c.h.b16 %v2209
      %v2566 = vunpack.c.l.b16 %v2210
      %v2567 = vunpack.c.h.b16 %v2210
      %v2568 = vunpack.c.l.b16 %v2211
      %v2569 = vunpack.c.h.b16 %v2211
      %v2570 = vunpack.c.l.b16 %v2212
      %v2571 = vunpack.c.h.b16 %v2212
      %v2572 = vunpack.c.l.b16 %v2213
      %v2573 = vunpack.c.l.b16 %v2214
      %v2574 = vunpack.c.h.b16 %v2214
      %v2575 = vunpack.c.l.b16 %v2215
      %v2576 = vunpack.c.h.b16 %v2215
      %v2577 = vunpack.c.l.b16 %v2216
      %v2578 = vunpack.c.h.b16 %v2216
      %v2579 = vunpack.c.l.b16 %v2217
      %v2580 = vunpack.c.h.b16 %v2217
      %v2581 = vunpack.c.l.b16 %v2218
      %v2582 = vunpack.c.l.b16 %v2219
      %v2583 = vunpack.c.h.b16 %v2219
      %v2584 = vunpack.c.l.b16 %v2220
      %v2585 = vunpack.c.h.b16 %v2220
      %v2586 = vunpack.c.l.b16 %v2221
      %v2587 = vunpack.c.h.b16 %v2221
      %v2588 = vunpack.c.l.b16 %v2222
      %v2589 = vunpack.c.h.b16 %v2222
      %v2590 = vunpack.c.l.b16 %v2223
      %v2591 = vunpack.c.l.b16 %v2224
      %v2592 = vunpack.c.h.b16 %v2224
      %v2593 = vunpack.c.l.b16 %v2225
      %v2594 = vunpack.c.h.b16 %v2225
      %v2595 = vunpack.c.l.b16 %v2226
      %v2596 = vunpack.c.h.b16 %v2226
      %v2597 = vunpack.c.l.b16 %v2227
      %v2598 = vunpack.c.h.b16 %v2227
      %v2599 = vunpack.c.l.b16 %v2228
      %v2600 = vunpack.c.l.b16 %v2229
      %v2601 = vunpack.c.h.b16 %v2229
      %v2602 = vunpack.c.l.b16 %v2230
      %v2603 = vunpack.c.h.b16 %v2230
      %v2604 = vunpack.c.l.b16 %v2231
      %v2605 = vunpack.c.h.b16 %v2231
      %v2606 = vunpack.c.l.b16 %v2232
      %v2607 = vunpack.c.h.b16 %v2232
      %v2608 = vunpack.c.l.b16 %v2233
      %v2609 = vpack.c.b16 %v2474, %v2465
      %v2610 = vpack.c.b16 %v2475, %v2466
      %v2611 = vpack.c.b16 %v2476, %v2467
      %v2612 = vpack.c.b16 %v2477, %v2468
      %v2613 = vpack.c.b16 %v2478, %v2469
      %v2614 = vpack.c.b16 %v2479, %v2470
      %v2615 = vpack.c.b16 %v2480, %v2471
      %v2616 = vpack.c.b16 %v2481, %v2472
      %v2617 = vpack.c.b16 %v2482, %v2473
      %v2618 = vpack.c.b16 %v2492, %v2483
      %v2619 = vpack.c.b16 %v2493, %v2484
      %v2620 = vpack.c.b16 %v2494, %v2485
      %v2621 = vpack.c.b16 %v2495, %v2486
      %v2622 = vpack.c.b16 %v2496, %v2487
      %v2623 = vpack.c.b16 %v2497, %v2488
      %v2624 = vpack.c.b16 %v2498, %v2489
      %v2625 = vpack.c.b16 %v2499, %v2490
      %v2626 = vpack.c.b16 %v2500, %v2491
      %v2627 = vpack.c.b16 %v2510, %v2501
      %v2628 = vpack.c.b16 %v2511, %v2502
      %v2629 = vpack.c.b16 %v2512, %v2503
      %v2630 = vpack.c.b16 %v2513, %v2504
      %v2631 = vpack.c.b16 %v2514, %v2505
      %v2632 = vpack.c.b16 %v2515, %v2506
      %v2633 = vpack.c.b16 %v2516, %v2507
      %v2634 = vpack.c.b16 %v2517, %v2508
      %v2635 = vpack.c.b16 %v2518, %v2509
      %v2636 = vpack.c.b16 %v2528, %v2519
      %v2637 = vpack.c.b16 %v2529, %v2520
      %v2638 = vpack.c.b16 %v2530, %v2521
      %v2639 = vpack.c.b16 %v2531, %v2522
      %v2640 = vpack.c.b16 %v2532, %v2523
      %v2641 = vpack.c.b16 %v2533, %v2524
      %v2642 = vpack.c.b16 %v2534, %v2525
      %v2643 = vpack.c.b16 %v2535, %v2526
      %v2644 = vpack.c.b16 %v2536, %v2527
      %v2645 = vpack.c.b16 %v2546, %v2537
      %v2646 = vpack.c.b16 %v2547, %v2538
      %v2647 = vpack.c.b16 %v2548, %v2539
      %v2648 = vpack.c.b16 %v2549, %v2540
      %v2649 = vpack.c.b16 %v2550, %v2541
      %v2650 = vpack.c.b16 %v2551, %v2542
      %v2651 = vpack.c.b16 %v2552, %v2543
      %v2652 = vpack.c.b16 %v2553, %v2544
      %v2653 = vpack.c.b16 %v2554, %v2545
      %v2654 = vpack.c.b16 %v2564, %v2555
      %v2655 = vpack.c.b16 %v2565, %v2556
      %v2656 = vpack.c.b16 %v2566, %v2557
      %v2657 = vpack.c.b16 %v2567, %v2558
      %v2658 = vpack.c.b16 %v2568, %v2559
      %v2659 = vpack.c.b16 %v2569, %v2560
      %v2660 = vpack.c.b16 %v2570, %v2561
      %v2661 = vpack.c.b16 %v2571, %v2562
      %v2662 = vpack.c.b16 %v2572, %v2563
      %v2663 = vpack.c.b16 %v2582, %v2573
      %v2664 = vpack.c.b16 %v2583, %v2574
      %v2665 = vpack.c.b16 %v2584, %v2575
      %v2666 = vpack.c.b16 %v2585, %v2576
      %v2667 = vpack.c.b16 %v2586, %v2577
      %v2668 = vpack.c.b16 %v2587, %v2578
      %v2669 = vpack.c.b16 %v2588, %v2579
      %v2670 = vpack.c.b16 %v2589, %v2580
      %v2671 = vpack.c.b16 %v2590, %v2581
      %v2672 = vpack.c.b16 %v2600, %v2591
      %v2673 = vpack.c.b16 %v2601, %v2592
      %v2674 = vpack.c.b16 %v2602, %v2593
      %v2675 = vpack.c.b16 %v2603, %v2594
      %v2676 = vpack.c.b16 %v2604, %v2595
      %v2677 = vpack.c.b16 %v2605, %v2596
      %v2678 = vpack.c.b16 %v2606, %v2597
      %v2679 = vpack.c.b16 %v2607, %v2598
      %v2680 = vpack.c.b16 %v2608, %v2599
      %v2897 = vunpack.c.l.b16 %v2234
      %v2898 = vunpack.c.l.b16 %v2235
      %v2899 = vunpack.c.l.b16 %v2236
      %v2900 = vunpack.c.l.b16 %v2237
      %v2901 = vunpack.c.l.b16 %v2238
      %v2902 = vunpack.c.l.b16 %v2239
      %v2903 = vunpack.c.l.b16 %v2240
      %v2904 = vunpack.c.l.b16 %v2241
      %v2905 = vunpack.c.l.b16 %v2242
      %v2906 = vunpack.c.l.b16 %v2243
      %v2907 = vunpack.c.l.b16 %v2244
      %v2908 = vunpack.c.l.b16 %v2245
      %v2909 = vunpack.c.l.b16 %v2246
      %v2910 = vunpack.c.l.b16 %v2247
      %v2911 = vunpack.c.l.b16 %v2248
      %v2912 = vunpack.c.l.b16 %v2249
      %v2913 = vunpack.c.l.b16 %v2250
      %v2914 = vunpack.c.l.b16 %v2251
      %v2915 = vunpack.c.l.b16 %v2252
      %v2916 = vunpack.c.l.b16 %v2253
      %v2917 = vunpack.c.l.b16 %v2254
      %v2918 = vunpack.c.l.b16 %v2255
      %v2919 = vunpack.c.l.b16 %v2256
      %v2920 = vunpack.c.l.b16 %v2257
      %v2921 = vunpack.c.l.b16 %v2258
      %v2922 = vunpack.c.l.b16 %v2259
      %v2923 = vunpack.c.l.b16 %v2260
      %v2924 = vunpack.c.l.b16 %v2261
      %v2925 = vunpack.c.l.b16 %v2262
      %v2926 = vunpack.c.l.b16 %v2263
      %v2927 = vunpack.c.l.b16 %v2264
      %v2928 = vunpack.c.l.b16 %v2265
      %v2929 = vunpack.c.l.b16 %v2266
      %v2930 = vunpack.c.l.b16 %v2267
      %v2931 = vunpack.c.l.b16 %v2268
      %v2932 = vunpack.c.l.b16 %v2269
      %v2933 = vunpack.c.l.b16 %v2270
      %v2934 = vunpack.c.l.b16 %v2271
      %v2935 = vunpack.c.l.b16 %v2272
      %v2936 = vunpack.c.l.b16 %v2273
      %v2937 = vunpack.c.l.b16 %v2274
      %v2938 = vunpack.c.l.b16 %v2275
      %v2939 = vunpack.c.l.b16 %v2276
      %v2940 = vunpack.c.l.b16 %v2277
      %v2941 = vunpack.c.l.b16 %v2278
      %v2942 = vunpack.c.l.b16 %v2279
      %v2943 = vunpack.c.l.b16 %v2280
      %v2944 = vunpack.c.l.b16 %v2281
      %v2945 = vunpack.c.l.b16 %v2282
      %v2946 = vunpack.c.l.b16 %v2283
      %v2947 = vunpack.c.l.b16 %v2284
      %v2948 = vunpack.c.l.b16 %v2285
      %v2949 = vunpack.c.l.b16 %v2286
      %v2950 = vunpack.c.l.b16 %v2287
      %v2951 = vunpack.c.l.b16 %v2288
      %v2952 = vunpack.c.l.b16 %v2289
      %v2953 = vunpack.c.l.b16 %v2290
      %v2954 = vunpack.c.l.b16 %v2291
      %v2955 = vunpack.c.l.b16 %v2292
      %v2956 = vunpack.c.l.b16 %v2293
      %v2957 = vunpack.c.l.b16 %v2294
      %v2958 = vunpack.c.l.b16 %v2295
      %v2959 = vunpack.c.l.b16 %v2296
      %v2960 = vunpack.c.l.b16 %v2297
      %v2961 = vunpack.c.l.b16 %v2298
      %v2962 = vunpack.c.l.b16 %v2299
      %v2963 = vunpack.c.l.b16 %v2300
      %v2964 = vunpack.c.l.b16 %v2301
      %v2965 = vunpack.c.l.b16 %v2302
      %v2966 = vunpack.c.l.b16 %v2303
      %v2967 = vunpack.c.l.b16 %v2304
      %v2968 = vunpack.c.l.b16 %v2305
      %v2969 = vunpack.c.l.b16 %v2306
      %v2970 = vunpack.c.l.b16 %v2307
      %v2971 = vunpack.c.l.b16 %v2308
      %v2972 = vunpack.c.l.b16 %v2309
      %v2973 = vunpack.c.l.b16 %v2310
      %v2974 = vunpack.c.l.b16 %v2311
      %v2975 = vunpack.c.l.b16 %v2312
      %v2976 = vunpack.c.l.b16 %v2313
      %v2977 = vunpack.c.l.b16 %v2314
      %v2978 = vunpack.c.l.b16 %v2315
      %v2979 = vunpack.c.l.b16 %v2316
      %v2980 = vunpack.c.l.b16 %v2317
      %v2981 = vunpack.c.l.b16 %v2318
      %v2982 = vunpack.c.l.b16 %v2319
      %v2983 = vunpack.c.l.b16 %v2320
      %v2984 = vunpack.c.l.b16 %v2321
      %v2985 = vunpack.c.l.b16 %v2322
      %v2986 = vunpack.c.l.b16 %v2323
      %v2987 = vunpack.c.l.b16 %v2324
      %v2988 = vunpack.c.l.b16 %v2325
      %v2989 = vunpack.c.l.b16 %v2326
      %v2990 = vunpack.c.l.b16 %v2327
      %v2991 = vunpack.c.l.b16 %v2328
      %v2992 = vunpack.c.l.b16 %v2329
      %v2993 = vunpack.c.l.b16 %v2330
      %v2994 = vunpack.c.l.b16 %v2331
      %v2995 = vunpack.c.l.b16 %v2332
      %v2996 = vunpack.c.l.b16 %v2333
      %v2997 = vunpack.c.l.b16 %v2334
      %v2998 = vunpack.c.l.b16 %v2335
      %v2999 = vunpack.c.l.b16 %v2336
      %v3000 = vunpack.c.l.b16 %v2337
      %v3001 = vunpack.c.l.b16 %v2338
      %v3002 = vunpack.c.l.b16 %v2339
      %v3003 = vunpack.c.l.b16 %v2340
      %v3004 = vunpack.c.l.b16 %v2341
      %v3005 = vunpack.c.l.b16 %v2342
      %v3006 = vunpack.c.l.b16 %v2343
      %v3007 = vunpack.c.l.b16 %v2344
      %v3008 = vunpack.c.l.b16 %v2345
      %v3009 = vunpack.c.l.b16 %v2346
      %v3010 = vunpack.c.l.b16 %v2347
      %v3011 = vunpack.c.l.b16 %v2348
      %v3012 = vunpack.c.l.b16 %v2349
      %v3013 = vunpack.c.l.b16 %v2350
      %v3014 = vunpack.c.l.b16 %v2351
      %v3015 = vunpack.c.l.b16 %v2352
      %v3016 = vunpack.c.l.b16 %v2353
      %v3017 = vunpack.c.l.b16 %v2354
      %v3018 = vunpack.c.l.b16 %v2355
      %v3019 = vunpack.c.l.b16 %v2356
      %v3020 = vunpack.c.l.b16 %v2357
      %v3021 = vunpack.c.l.b16 %v2358
      %v3022 = vunpack.c.l.b16 %v2359
      %v3023 = vunpack.c.l.b16 %v2360
      %v3024 = vunpack.c.l.b16 %v2361
      %v3025 = vunpack.c.l.b16 %v2362
      %v3026 = vunpack.c.l.b16 %v2363
      %v3027 = vunpack.c.l.b16 %v2364
      %v3028 = vunpack.c.l.b16 %v2365
      %v3029 = vunpack.c.l.b16 %v2366
      %v3030 = vunpack.c.l.b16 %v2367
      %v3031 = vunpack.c.l.b16 %v2368
      %v3032 = vunpack.c.l.b16 %v2369
      %v3033 = vunpack.c.l.b16 %v2370
      %v3034 = vunpack.c.l.b16 %v2371
      %v3035 = vunpack.c.l.b16 %v2372
      %v3036 = vunpack.c.l.b16 %v2373
      %v3037 = vunpack.c.l.b16 %v2374
      %v3038 = vunpack.c.l.b16 %v2375
      %v3039 = vunpack.c.l.b16 %v2376
      %v3040 = vunpack.c.l.b16 %v2377
      %v3041 = vpack.c.b16 %v2898, %v2897
      %v3042 = vpack.c.b16 %v2900, %v2899
      %v3043 = vpack.c.b16 %v2902, %v2901
      %v3044 = vpack.c.b16 %v2904, %v2903
      %v3045 = vpack.c.b16 %v2906, %v2905
      %v3046 = vpack.c.b16 %v2908, %v2907
      %v3047 = vpack.c.b16 %v2910, %v2909
      %v3048 = vpack.c.b16 %v2912, %v2911
      %v3049 = vpack.c.b16 %v2914, %v2913
      %v3050 = vpack.c.b16 %v2916, %v2915
      %v3051 = vpack.c.b16 %v2918, %v2917
      %v3052 = vpack.c.b16 %v2920, %v2919
      %v3053 = vpack.c.b16 %v2922, %v2921
      %v3054 = vpack.c.b16 %v2924, %v2923
      %v3055 = vpack.c.b16 %v2926, %v2925
      %v3056 = vpack.c.b16 %v2928, %v2927
      %v3057 = vpack.c.b16 %v2930, %v2929
      %v3058 = vpack.c.b16 %v2932, %v2931
      %v3059 = vpack.c.b16 %v2934, %v2933
      %v3060 = vpack.c.b16 %v2936, %v2935
      %v3061 = vpack.c.b16 %v2938, %v2937
      %v3062 = vpack.c.b16 %v2940, %v2939
      %v3063 = vpack.c.b16 %v2942, %v2941
      %v3064 = vpack.c.b16 %v2944, %v2943
      %v3065 = vpack.c.b16 %v2946, %v2945
      %v3066 = vpack.c.b16 %v2948, %v2947
      %v3067 = vpack.c.b16 %v2950, %v2949
      %v3068 = vpack.c.b16 %v2952, %v2951
      %v3069 = vpack.c.b16 %v2954, %v2953
      %v3070 = vpack.c.b16 %v2956, %v2955
      %v3071 = vpack.c.b16 %v2958, %v2957
      %v3072 = vpack.c.b16 %v2960, %v2959
      %v3073 = vpack.c.b16 %v2962, %v2961
      %v3074 = vpack.c.b16 %v2964, %v2963
      %v3075 = vpack.c.b16 %v2966, %v2965
      %v3076 = vpack.c.b16 %v2968, %v2967
      %v3077 = vpack.c.b16 %v2970, %v2969
      %v3078 = vpack.c.b16 %v2972, %v2971
      %v3079 = vpack.c.b16 %v2974, %v2973
      %v3080 = vpack.c.b16 %v2976, %v2975
      %v3081 = vpack.c.b16 %v2978, %v2977
      %v3082 = vpack.c.b16 %v2980, %v2979
      %v3083 = vpack.c.b16 %v2982, %v2981
      %v3084 = vpack.c.b16 %v2984, %v2983
      %v3085 = vpack.c.b16 %v2986, %v2985
      %v3086 = vpack.c.b16 %v2988, %v2987
      %v3087 = vpack.c.b16 %v2990, %v2989
      %v3088 = vpack.c.b16 %v2992, %v2991
      %v3089 = vpack.c.b16 %v2994, %v2993
      %v3090 = vpack.c.b16 %v2996, %v2995
      %v3091 = vpack.c.b16 %v2998, %v2997
      %v3092 = vpack.c.b16 %v3000, %v2999
      %v3093 = vpack.c.b16 %v3002, %v3001
      %v3094 = vpack.c.b16 %v3004, %v3003
      %v3095 = vpack.c.b16 %v3006, %v3005
      %v3096 = vpack.c.b16 %v3008, %v3007
      %v3097 = vpack.c.b16 %v3010, %v3009
      %v3098 = vpack.c.b16 %v3012, %v3011
      %v3099 = vpack.c.b16 %v3014, %v3013
      %v3100 = vpack.c.b16 %v3016, %v3015
      %v3101 = vpack.c.b16 %v3018, %v3017
      %v3102 = vpack.c.b16 %v3020, %v3019
      %v3103 = vpack.c.b16 %v3022, %v3021
      %v3104 = vpack.c.b16 %v3024, %v3023
      %v3105 = vpack.c.b16 %v3026, %v3025
      %v3106 = vpack.c.b16 %v3028, %v3027
      %v3107 = vpack.c.b16 %v3030, %v3029
      %v3108 = vpack.c.b16 %v3032, %v3031
      %v3109 = vpack.c.b16 %v3034, %v3033
      %v3110 = vpack.c.b16 %v3036, %v3035
      %v3111 = vpack.c.b16 %v3038, %v3037
      %v3112 = vpack.c.b16 %v3040, %v3039
      %3185 = vmatprep.subr.bf16.mxu0 0
      %3186 = vmatpush1.bf16.msra.mxu0 %v3041
      %3187 = vmatprep.subr.bf16.mxu0 0
      %3188 = vmatpush1.bf16.msra.mxu0 %v3042
      %3189 = vmatprep.subr.bf16.mxu0 0
      %3190 = vmatpush1.bf16.msra.mxu0 %v3043
      %3191 = vmatprep.subr.bf16.mxu0 0
      %3192 = vmatpush1.bf16.msra.mxu0 %v3044
      %3193 = vmatprep.subr.bf16.mxu0 0
      %3194 = vmatpush1.bf16.msra.mxu0 %v3045
      %3195 = vmatprep.subr.bf16.mxu0 0
      %3196 = vmatpush1.bf16.msra.mxu0 %v3046
      %3197 = vmatprep.subr.bf16.mxu0 0
      %3198 = vmatpush1.bf16.msra.mxu0 %v3047
      %3199 = vmatprep.subr.bf16.mxu0 0
      %3200 = vmatpush1.bf16.msra.mxu0 %v3048
      %3201 = vmatprep.subr.bf16.mxu0 0
      %3202 = vmatpush1.bf16.msra.mxu0 %v3049
      %3203 = vmatprep.subr.bf16.mxu0 0
      %3204 = vmatpush1.bf16.msra.mxu0 %v3050
      %3205 = vmatprep.subr.bf16.mxu0 0
      %3206 = vmatpush1.bf16.msra.mxu0 %v3051
      %3207 = vmatprep.subr.bf16.mxu0 0
      %3208 = vmatpush1.bf16.msra.mxu0 %v3052
      %3209 = vmatprep.subr.bf16.mxu0 0
      %3210 = vmatpush1.bf16.msra.mxu0 %v3053
      %3211 = vmatprep.subr.bf16.mxu0 0
      %3212 = vmatpush1.bf16.msra.mxu0 %v3054
      %3213 = vmatprep.subr.bf16.mxu0 0
      %3214 = vmatpush1.bf16.msra.mxu0 %v3055
      %3215 = vmatprep.subr.bf16.mxu0 0
      %3216 = vmatpush1.bf16.msra.mxu0 %v3056
      %3217 = vmatprep.mubr.bf16.mxu0 %v2610
      %3218 = vmatmul.mubr.bf16.gmra.mrb[0].mxu0 %v2609
      %v3219 = vpop.f32.mrb[0].mxu0
      %v3220 = vadd.f32 %v2383, %v3219
      %v3221 = vpop.f32.mrb[0].mxu0
      %v3222 = vpop.f32.mrb[0].mxu0
      %v3223 = vadd.f32 %v2383, %v3222
      %v3224 = vpop.f32.mrb[0].mxu0
      %3225 = vmatprep.mubr.bf16.mxu0 %v2619
      %3226 = vmatmul.mubr.bf16.gmra.mrb[0].mxu0 %v2618
      %v3227 = vpop.f32.mrb[0].mxu0
      %v3228 = vadd.f32 %v2383, %v3227
      %v3229 = vpop.f32.mrb[0].mxu0
      %v3230 = vpop.f32.mrb[0].mxu0
      %v3231 = vadd.f32 %v2383, %v3230
      %v3232 = vpop.f32.mrb[0].mxu0
      %3233 = vmatprep.mubr.bf16.mxu0 %v2628
      %3234 = vmatmul.mubr.bf16.gmra.mrb[0].mxu0 %v2627
      %v3235 = vpop.f32.mrb[0].mxu0
      %v3236 = vadd.f32 %v2383, %v3235
      %v3237 = vpop.f32.mrb[0].mxu0
      %v3238 = vpop.f32.mrb[0].mxu0
      %v3239 = vadd.f32 %v2383, %v3238
      %v3240 = vpop.f32.mrb[0].mxu0
      %3241 = vmatprep.mubr.bf16.mxu0 %v2637
      %3242 = vmatmul.mubr.bf16.gmra.mrb[0].mxu0 %v2636
      %v3243 = vpop.f32.mrb[0].mxu0
      %v3244 = vadd.f32 %v2383, %v3243
      %v3245 = vpop.f32.mrb[0].mxu0
      %v3246 = vpop.f32.mrb[0].mxu0
      %v3247 = vadd.f32 %v2383, %v3246
      %v3248 = vpop.f32.mrb[0].mxu0
      %3249 = vmatprep.mubr.bf16.mxu0 %v2646
      %3250 = vmatmul.mubr.bf16.gmra.mrb[0].mxu0 %v2645
      %v3251 = vpop.f32.mrb[0].mxu0
      %v3252 = vadd.f32 %v2383, %v3251
      %v3253 = vpop.f32.mrb[0].mxu0
      %v3254 = vpop.f32.mrb[0].mxu0
      %v3255 = vadd.f32 %v2383, %v3254
      %v3256 = vpop.f32.mrb[0].mxu0
      %3257 = vmatprep.mubr.bf16.mxu0 %v2655
      %3258 = vmatmul.mubr.bf16.gmra.mrb[0].mxu0 %v2654
      %v3259 = vpop.f32.mrb[0].mxu0
      %v3260 = vadd.f32 %v2383, %v3259
      %v3261 = vpop.f32.mrb[0].mxu0
      %v3262 = vpop.f32.mrb[0].mxu0
      %v3263 = vadd.f32 %v2383, %v3262
      %v3264 = vpop.f32.mrb[0].mxu0
      %3265 = vmatprep.mubr.bf16.mxu0 %v2664
      %3266 = vmatmul.mubr.bf16.gmra.mrb[0].mxu0 %v2663
      %v3267 = vpop.f32.mrb[0].mxu0
      %v3268 = vadd.f32 %v2383, %v3267
      %v3269 = vpop.f32.mrb[0].mxu0
      %v3270 = vpop.f32.mrb[0].mxu0
      %v3271 = vadd.f32 %v2383, %v3270
      %v3272 = vpop.f32.mrb[0].mxu0
      %3273 = vmatprep.mubr.bf16.mxu0 %v2673
      %3274 = vmatmul.mubr.bf16.gmra.mrb[0].mxu0 %v2672
      %v3275 = vpop.f32.mrb[0].mxu0
      %v3276 = vadd.f32 %v2383, %v3275
      %v3277 = vpop.f32.mrb[0].mxu0
      %v3278 = vpop.f32.mrb[0].mxu0
      %v3279 = vadd.f32 %v2383, %v3278
      %v3280 = vpop.f32.mrb[0].mxu0
      %3281 = vdwg.mxu0
      %3282 = vmatprep.subr.bf16.mxu0 0
      %3283 = vmatpush1.bf16.msra.mxu0 %v3057
      %3284 = vmatprep.subr.bf16.mxu0 0
      %3285 = vmatpush1.bf16.msra.mxu0 %v3058
      %3286 = vmatprep.subr.bf16.mxu0 0
      %3287 = vmatpush1.bf16.msra.mxu0 %v3059
      %3288 = vmatprep.subr.bf16.mxu0 0
      %3289 = vmatpush1.bf16.msra.mxu0 %v3060
      %3290 = vmatprep.subr.bf16.mxu0 0
      %3291 = vmatpush1.bf16.msra.mxu0 %v3061
      %3292 = vmatprep.subr.bf16.mxu0 0
      %3293 = vmatpush1.bf16.msra.mxu0 %v3062
      %3294 = vmatprep.subr.bf16.mxu0 0
      %3295 = vmatpush1.bf16.msra.mxu0 %v3063
      %3296 = vmatprep.subr.bf16.mxu0 0
      %3297 = vmatpush1.bf16.msra.mxu0 %v3064
      %3298 = vmatprep.subr.bf16.mxu0 0
      %3299 = vmatpush1.bf16.msra.mxu0 %v3065
      %3300 = vmatprep.subr.bf16.mxu0 0
      %3301 = vmatpush1.bf16.msra.mxu0 %v3066
      %3302 = vmatprep.subr.bf16.mxu0 0
      %3303 = vmatpush1.bf16.msra.mxu0 %v3067
      %3304 = vmatprep.subr.bf16.mxu0 0
      %3305 = vmatpush1.bf16.msra.mxu0 %v3068
      %3306 = vmatprep.subr.bf16.mxu0 0
      %3307 = vmatpush1.bf16.msra.mxu0 %v3069
      %3308 = vmatprep.subr.bf16.mxu0 0
      %3309 = vmatpush1.bf16.msra.mxu0 %v3070
      %3310 = vmatprep.subr.bf16.mxu0 0
      %3311 = vmatpush1.bf16.msra.mxu0 %v3071
      %3312 = vmatprep.subr.bf16.mxu0 0
      %3313 = vmatpush1.bf16.msra.mxu0 %v3072
      %3314 = vmatprep.mubr.bf16.mxu0 %v2612
      %3315 = vmatmul.mubr.bf16.gmra.mrb[0].mxu0 %v2611
      %v3316 = vpop.f32.mrb[0].mxu0
      %v3317 = vadd.f32 %v3220, %v3316
      %v3318 = vpop.f32.mrb[0].mxu0
      %v3319 = vpop.f32.mrb[0].mxu0
      %v3320 = vadd.f32 %v3223, %v3319
      %v3321 = vpop.f32.mrb[0].mxu0
      %3322 = vmatprep.mubr.bf16.mxu0 %v2621
      %3323 = vmatmul.mubr.bf16.gmra.mrb[0].mxu0 %v2620
      %v3324 = vpop.f32.mrb[0].mxu0
      %v3325 = vadd.f32 %v3228, %v3324
      %v3326 = vpop.f32.mrb[0].mxu0
      %v3327 = vpop.f32.mrb[0].mxu0
      %v3328 = vadd.f32 %v3231, %v3327
      %v3329 = vpop.f32.mrb[0].mxu0
      %3330 = vmatprep.mubr.bf16.mxu0 %v2630
      %3331 = vmatmul.mubr.bf16.gmra.mrb[0].mxu0 %v2629
      %v3332 = vpop.f32.mrb[0].mxu0
      %v3333 = vadd.f32 %v3236, %v3332
      %v3334 = vpop.f32.mrb[0].mxu0
      %v3335 = vpop.f32.mrb[0].mxu0
      %v3336 = vadd.f32 %v3239, %v3335
      %v3337 = vpop.f32.mrb[0].mxu0
      %3338 = vmatprep.mubr.bf16.mxu0 %v2639
      %3339 = vmatmul.mubr.bf16.gmra.mrb[0].mxu0 %v2638
      %v3340 = vpop.f32.mrb[0].mxu0
      %v3341 = vadd.f32 %v3244, %v3340
      %v3342 = vpop.f32.mrb[0].mxu0
      %v3343 = vpop.f32.mrb[0].mxu0
      %v3344 = vadd.f32 %v3247, %v3343
      %v3345 = vpop.f32.mrb[0].mxu0
      %3346 = vmatprep.mubr.bf16.mxu0 %v2648
      %3347 = vmatmul.mubr.bf16.gmra.mrb[0].mxu0 %v2647
      %v3348 = vpop.f32.mrb[0].mxu0
      %v3349 = vadd.f32 %v3252, %v3348
      %v3350 = vpop.f32.mrb[0].mxu0
      %v3351 = vpop.f32.mrb[0].mxu0
      %v3352 = vadd.f32 %v3255, %v3351
      %v3353 = vpop.f32.mrb[0].mxu0
      %3354 = vmatprep.mubr.bf16.mxu0 %v2657
      %3355 = vmatmul.mubr.bf16.gmra.mrb[0].mxu0 %v2656
      %v3356 = vpop.f32.mrb[0].mxu0
      %v3357 = vadd.f32 %v3260, %v3356
      %v3358 = vpop.f32.mrb[0].mxu0
      %v3359 = vpop.f32.mrb[0].mxu0
      %v3360 = vadd.f32 %v3263, %v3359
      %v3361 = vpop.f32.mrb[0].mxu0
      %3362 = vmatprep.mubr.bf16.mxu0 %v2666
      %3363 = vmatmul.mubr.bf16.gmra.mrb[0].mxu0 %v2665
      %v3364 = vpop.f32.mrb[0].mxu0
      %v3365 = vadd.f32 %v3268, %v3364
      %v3366 = vpop.f32.mrb[0].mxu0
      %v3367 = vpop.f32.mrb[0].mxu0
      %v3368 = vadd.f32 %v3271, %v3367
      %v3369 = vpop.f32.mrb[0].mxu0
      %3370 = vmatprep.mubr.bf16.mxu0 %v2675
      %3371 = vmatmul.mubr.bf16.gmra.mrb[0].mxu0 %v2674
      %v3372 = vpop.f32.mrb[0].mxu0
      %v3373 = vadd.f32 %v3276, %v3372
      %v3374 = vpop.f32.mrb[0].mxu0
      %v3375 = vpop.f32.mrb[0].mxu0
      %v3376 = vadd.f32 %v3279, %v3375
      %v3377 = vpop.f32.mrb[0].mxu0
      %3378 = vdwg.mxu0
      %3379 = vmatprep.subr.bf16.mxu0 0
      %3380 = vmatpush1.bf16.msra.mxu0 %v3073
      %3381 = vmatprep.subr.bf16.mxu0 0
      %3382 = vmatpush1.bf16.msra.mxu0 %v3074
      %3383 = vmatprep.subr.bf16.mxu0 0
      %3384 = vmatpush1.bf16.msra.mxu0 %v3075
      %3385 = vmatprep.subr.bf16.mxu0 0
      %3386 = vmatpush1.bf16.msra.mxu0 %v3076
      %3387 = vmatprep.subr.bf16.mxu0 0
      %3388 = vmatpush1.bf16.msra.mxu0 %v3077
      %3389 = vmatprep.subr.bf16.mxu0 0
      %3390 = vmatpush1.bf16.msra.mxu0 %v3078
      %3391 = vmatprep.subr.bf16.mxu0 0
      %3392 = vmatpush1.bf16.msra.mxu0 %v3079
      %3393 = vmatprep.subr.bf16.mxu0 0
      %3394 = vmatpush1.bf16.msra.mxu0 %v3080
      %3395 = vmatprep.subr.bf16.mxu0 0
      %3396 = vmatpush1.bf16.msra.mxu0 %v3081
      %3397 = vmatprep.subr.bf16.mxu0 0
      %3398 = vmatpush1.bf16.msra.mxu0 %v3082
      %3399 = vmatprep.subr.bf16.mxu0 0
      %3400 = vmatpush1.bf16.msra.mxu0 %v3083
      %3401 = vmatprep.subr.bf16.mxu0 0
      %3402 = vmatpush1.bf16.msra.mxu0 %v3084
      %3403 = vmatprep.subr.bf16.mxu0 0
      %3404 = vmatpush1.bf16.msra.mxu0 %v3085
      %3405 = vmatprep.subr.bf16.mxu0 0
      %3406 = vmatpush1.bf16.msra.mxu0 %v3086
      %3407 = vmatprep.subr.bf16.mxu0 0
      %3408 = vmatpush1.bf16.msra.mxu0 %v3087
      %3409 = vmatprep.subr.bf16.mxu0 0
      %3410 = vmatpush1.bf16.msra.mxu0 %v3088
      %3411 = vmatprep.mubr.bf16.mxu0 %v2614
      %3412 = vmatmul.mubr.bf16.gmra.mrb[0].mxu0 %v2613
      %v3413 = vpop.f32.mrb[0].mxu0
      %v3414 = vadd.f32 %v3317, %v3413
      %v3415 = vpop.f32.mrb[0].mxu0
      %v3416 = vpop.f32.mrb[0].mxu0
      %v3417 = vadd.f32 %v3320, %v3416
      %v3418 = vpop.f32.mrb[0].mxu0
      %3419 = vmatprep.mubr.bf16.mxu0 %v2623
      %3420 = vmatmul.mubr.bf16.gmra.mrb[0].mxu0 %v2622
      %v3421 = vpop.f32.mrb[0].mxu0
      %v3422 = vadd.f32 %v3325, %v3421
      %v3423 = vpop.f32.mrb[0].mxu0
      %v3424 = vpop.f32.mrb[0].mxu0
      %v3425 = vadd.f32 %v3328, %v3424
      %v3426 = vpop.f32.mrb[0].mxu0
      %3427 = vmatprep.mubr.bf16.mxu0 %v2632
      %3428 = vmatmul.mubr.bf16.gmra.mrb[0].mxu0 %v2631
      %v3429 = vpop.f32.mrb[0].mxu0
      %v3430 = vadd.f32 %v3333, %v3429
      %v3431 = vpop.f32.mrb[0].mxu0
      %v3432 = vpop.f32.mrb[0].mxu0
      %v3433 = vadd.f32 %v3336, %v3432
      %v3434 = vpop.f32.mrb[0].mxu0
      %3435 = vmatprep.mubr.bf16.mxu0 %v2641
      %3436 = vmatmul.mubr.bf16.gmra.mrb[0].mxu0 %v2640
      %v3437 = vpop.f32.mrb[0].mxu0
      %v3438 = vadd.f32 %v3341, %v3437
      %v3439 = vpop.f32.mrb[0].mxu0
      %v3440 = vpop.f32.mrb[0].mxu0
      %v3441 = vadd.f32 %v3344, %v3440
      %v3442 = vpop.f32.mrb[0].mxu0
      %3443 = vmatprep.mubr.bf16.mxu0 %v2650
      %3444 = vmatmul.mubr.bf16.gmra.mrb[0].mxu0 %v2649
      %v3445 = vpop.f32.mrb[0].mxu0
      %v3446 = vadd.f32 %v3349, %v3445
      %v3447 = vpop.f32.mrb[0].mxu0
      %v3448 = vpop.f32.mrb[0].mxu0
      %v3449 = vadd.f32 %v3352, %v3448
      %v3450 = vpop.f32.mrb[0].mxu0
      %3451 = vmatprep.mubr.bf16.mxu0 %v2659
      %3452 = vmatmul.mubr.bf16.gmra.mrb[0].mxu0 %v2658
      %v3453 = vpop.f32.mrb[0].mxu0
      %v3454 = vadd.f32 %v3357, %v3453
      %v3455 = vpop.f32.mrb[0].mxu0
      %v3456 = vpop.f32.mrb[0].mxu0
      %v3457 = vadd.f32 %v3360, %v3456
      %v3458 = vpop.f32.mrb[0].mxu0
      %3459 = vmatprep.mubr.bf16.mxu0 %v2668
      %3460 = vmatmul.mubr.bf16.gmra.mrb[0].mxu0 %v2667
      %v3461 = vpop.f32.mrb[0].mxu0
      %v3462 = vadd.f32 %v3365, %v3461
      %v3463 = vpop.f32.mrb[0].mxu0
      %v3464 = vpop.f32.mrb[0].mxu0
      %v3465 = vadd.f32 %v3368, %v3464
      %v3466 = vpop.f32.mrb[0].mxu0
      %3467 = vmatprep.mubr.bf16.mxu0 %v2677
      %3468 = vmatmul.mubr.bf16.gmra.mrb[0].mxu0 %v2676
      %v3469 = vpop.f32.mrb[0].mxu0
      %v3470 = vadd.f32 %v3373, %v3469
      %v3471 = vpop.f32.mrb[0].mxu0
      %v3472 = vpop.f32.mrb[0].mxu0
      %v3473 = vadd.f32 %v3376, %v3472
      %v3474 = vpop.f32.mrb[0].mxu0
      %3475 = vdwg.mxu0
      %3476 = vmatprep.subr.bf16.mxu0 0
      %3477 = vmatpush1.bf16.msra.mxu0 %v3089
      %3478 = vmatprep.subr.bf16.mxu0 0
      %3479 = vmatpush1.bf16.msra.mxu0 %v3090
      %3480 = vmatprep.subr.bf16.mxu0 0
      %3481 = vmatpush1.bf16.msra.mxu0 %v3091
      %3482 = vmatprep.subr.bf16.mxu0 0
      %3483 = vmatpush1.bf16.msra.mxu0 %v3092
      %3484 = vmatprep.subr.bf16.mxu0 0
      %3485 = vmatpush1.bf16.msra.mxu0 %v3093
      %3486 = vmatprep.subr.bf16.mxu0 0
      %3487 = vmatpush1.bf16.msra.mxu0 %v3094
      %3488 = vmatprep.subr.bf16.mxu0 0
      %3489 = vmatpush1.bf16.msra.mxu0 %v3095
      %3490 = vmatprep.subr.bf16.mxu0 0
      %3491 = vmatpush1.bf16.msra.mxu0 %v3096
      %3492 = vmatprep.subr.bf16.mxu0 0
      %3493 = vmatpush1.bf16.msra.mxu0 %v3097
      %3494 = vmatprep.subr.bf16.mxu0 0
      %3495 = vmatpush1.bf16.msra.mxu0 %v3098
      %3496 = vmatprep.subr.bf16.mxu0 0
      %3497 = vmatpush1.bf16.msra.mxu0 %v3099
      %3498 = vmatprep.subr.bf16.mxu0 0
      %3499 = vmatpush1.bf16.msra.mxu0 %v3100
      %3500 = vmatprep.subr.bf16.mxu0 0
      %3501 = vmatpush1.bf16.msra.mxu0 %v3101
      %3502 = vmatprep.subr.bf16.mxu0 0
      %3503 = vmatpush1.bf16.msra.mxu0 %v3102
      %3504 = vmatprep.subr.bf16.mxu0 0
      %3505 = vmatpush1.bf16.msra.mxu0 %v3103
      %3506 = vmatprep.subr.bf16.mxu0 0
      %3507 = vmatpush1.bf16.msra.mxu0 %v3104
      %3508 = vmatprep.mubr.bf16.mxu0 %v2616
      %3509 = vmatmul.mubr.bf16.gmra.mrb[0].mxu0 %v2615
      %v3510 = vpop.f32.mrb[0].mxu0
      %v3511 = vadd.f32 %v3414, %v3510
      %v3512 = vpop.f32.mrb[0].mxu0
      %v3513 = vpop.f32.mrb[0].mxu0
      %v3514 = vadd.f32 %v3417, %v3513
      %v3515 = vpop.f32.mrb[0].mxu0
      %3516 = vmatprep.mubr.bf16.mxu0 %v2625
      %3517 = vmatmul.mubr.bf16.gmra.mrb[0].mxu0 %v2624
      %v3518 = vpop.f32.mrb[0].mxu0
      %v3519 = vadd.f32 %v3422, %v3518
      %v3520 = vpop.f32.mrb[0].mxu0
      %v3521 = vpop.f32.mrb[0].mxu0
      %v3522 = vadd.f32 %v3425, %v3521
      %v3523 = vpop.f32.mrb[0].mxu0
      %3524 = vmatprep.mubr.bf16.mxu0 %v2634
      %3525 = vmatmul.mubr.bf16.gmra.mrb[0].mxu0 %v2633
      %v3526 = vpop.f32.mrb[0].mxu0
      %v3527 = vadd.f32 %v3430, %v3526
      %v3528 = vpop.f32.mrb[0].mxu0
      %v3529 = vpop.f32.mrb[0].mxu0
      %v3530 = vadd.f32 %v3433, %v3529
      %v3531 = vpop.f32.mrb[0].mxu0
      %3532 = vmatprep.mubr.bf16.mxu0 %v2643
      %3533 = vmatmul.mubr.bf16.gmra.mrb[0].mxu0 %v2642
      %v3534 = vpop.f32.mrb[0].mxu0
      %v3535 = vadd.f32 %v3438, %v3534
      %v3536 = vpop.f32.mrb[0].mxu0
      %v3537 = vpop.f32.mrb[0].mxu0
      %v3538 = vadd.f32 %v3441, %v3537
      %v3539 = vpop.f32.mrb[0].mxu0
      %3540 = vmatprep.mubr.bf16.mxu0 %v2652
      %3541 = vmatmul.mubr.bf16.gmra.mrb[0].mxu0 %v2651
      %v3542 = vpop.f32.mrb[0].mxu0
      %v3543 = vadd.f32 %v3446, %v3542
      %v3544 = vpop.f32.mrb[0].mxu0
      %v3545 = vpop.f32.mrb[0].mxu0
      %v3546 = vadd.f32 %v3449, %v3545
      %v3547 = vpop.f32.mrb[0].mxu0
      %3548 = vmatprep.mubr.bf16.mxu0 %v2661
      %3549 = vmatmul.mubr.bf16.gmra.mrb[0].mxu0 %v2660
      %v3550 = vpop.f32.mrb[0].mxu0
      %v3551 = vadd.f32 %v3454, %v3550
      %v3552 = vpop.f32.mrb[0].mxu0
      %v3553 = vpop.f32.mrb[0].mxu0
      %v3554 = vadd.f32 %v3457, %v3553
      %v3555 = vpop.f32.mrb[0].mxu0
      %3556 = vmatprep.mubr.bf16.mxu0 %v2670
      %3557 = vmatmul.mubr.bf16.gmra.mrb[0].mxu0 %v2669
      %v3558 = vpop.f32.mrb[0].mxu0
      %v3559 = vadd.f32 %v3462, %v3558
      %v3560 = vpop.f32.mrb[0].mxu0
      %v3561 = vpop.f32.mrb[0].mxu0
      %v3562 = vadd.f32 %v3465, %v3561
      %v3563 = vpop.f32.mrb[0].mxu0
      %3564 = vmatprep.mubr.bf16.mxu0 %v2679
      %3565 = vmatmul.mubr.bf16.gmra.mrb[0].mxu0 %v2678
      %v3566 = vpop.f32.mrb[0].mxu0
      %v3567 = vadd.f32 %v3470, %v3566
      %v3568 = vpop.f32.mrb[0].mxu0
      %v3569 = vpop.f32.mrb[0].mxu0
      %v3570 = vadd.f32 %v3473, %v3569
      %v3571 = vpop.f32.mrb[0].mxu0
      %3572 = vdwg.mxu0
      %3573 = vmatprep.subr.bf16.mxu0 0
      %3574 = vmatpush1.bf16.msra.mxu0 %v3105
      %3575 = vmatprep.subr.bf16.mxu0 0
      %3576 = vmatpush1.bf16.msra.mxu0 %v3106
      %3577 = vmatprep.subr.bf16.mxu0 0
      %3578 = vmatpush1.bf16.msra.mxu0 %v3107
      %3579 = vmatprep.subr.bf16.mxu0 0
      %3580 = vmatpush1.bf16.msra.mxu0 %v3108
      %3581 = vmatprep.subr.bf16.mxu0 0
      %3582 = vmatpush1.bf16.msra.mxu0 %v3109
      %3583 = vmatprep.subr.bf16.mxu0 0
      %3584 = vmatpush1.bf16.msra.mxu0 %v3110
      %3585 = vmatprep.subr.bf16.mxu0 0
      %3586 = vmatpush1.bf16.msra.mxu0 %v3111
      %3587 = vmatprep.subr.bf16.mxu0 0
      %3588 = vmatpush1.bf16.msra.mxu0 %v3112
      %3589 = vmatprep.subr.bf16.mxu0 0
      %3590 = vmatpush1.bf16.msra.mxu0 0
      %3591 = vmatprep.subr.bf16.mxu0 0
      %3592 = vmatpush1.bf16.msra.mxu0 0
      %3593 = vmatprep.subr.bf16.mxu0 0
      %3594 = vmatpush1.bf16.msra.mxu0 0
      %3595 = vmatprep.subr.bf16.mxu0 0
      %3596 = vmatpush1.bf16.msra.mxu0 0
      %3597 = vmatprep.subr.bf16.mxu0 0
      %3598 = vmatpush1.bf16.msra.mxu0 0
      %3599 = vmatprep.subr.bf16.mxu0 0
      %3600 = vmatpush1.bf16.msra.mxu0 0
      %3601 = vmatprep.subr.bf16.mxu0 0
      %3602 = vmatpush1.bf16.msra.mxu0 0
      %3603 = vmatprep.subr.bf16.mxu0 0
      %3604 = vmatpush1.bf16.msra.mxu0 0
      %3605 = vmatprep.mubr.bf16.mxu0 0
      %3606 = vmatmul.mubr.bf16.gmra.mrb[0].mxu0 %v2617
      %v3607 = vpop.f32.mrb[0].mxu0
      %v3608 = vadd.f32 %v3511, %v3607
      %v3609 = vpop.f32.mrb[0].mxu0
      %v3610 = vpop.f32.mrb[0].mxu0
      %v3611 = vadd.f32 %v3514, %v3610
      %v3612 = vpop.f32.mrb[0].mxu0
      %3613 = vmatprep.mubr.bf16.mxu0 0
      %3614 = vmatmul.mubr.bf16.gmra.mrb[0].mxu0 %v2626
      %v3615 = vpop.f32.mrb[0].mxu0
      %v3616 = vadd.f32 %v3519, %v3615
      %v3617 = vpop.f32.mrb[0].mxu0
      %v3618 = vpop.f32.mrb[0].mxu0
      %v3619 = vadd.f32 %v3522, %v3618
      %v3620 = vpop.f32.mrb[0].mxu0
      %3621 = vmatprep.mubr.bf16.mxu0 0
      %3622 = vmatmul.mubr.bf16.gmra.mrb[0].mxu0 %v2635
      %v3623 = vpop.f32.mrb[0].mxu0
      %v3624 = vadd.f32 %v3527, %v3623
      %v3625 = vpop.f32.mrb[0].mxu0
      %v3626 = vpop.f32.mrb[0].mxu0
      %v3627 = vadd.f32 %v3530, %v3626
      %v3628 = vpop.f32.mrb[0].mxu0
      %3629 = vmatprep.mubr.bf16.mxu0 0
      %3630 = vmatmul.mubr.bf16.gmra.mrb[0].mxu0 %v2644
      %v3631 = vpop.f32.mrb[0].mxu0
      %v3632 = vadd.f32 %v3535, %v3631
      %v3633 = vpop.f32.mrb[0].mxu0
      %v3634 = vpop.f32.mrb[0].mxu0
      %v3635 = vadd.f32 %v3538, %v3634
      %v3636 = vpop.f32.mrb[0].mxu0
      %3637 = vmatprep.mubr.bf16.mxu0 0
      %3638 = vmatmul.mubr.bf16.gmra.mrb[0].mxu0 %v2653
      %v3639 = vpop.f32.mrb[0].mxu0
      %v3640 = vadd.f32 %v3543, %v3639
      %v3641 = vpop.f32.mrb[0].mxu0
      %v3642 = vpop.f32.mrb[0].mxu0
      %v3643 = vadd.f32 %v3546, %v3642
      %v3644 = vpop.f32.mrb[0].mxu0
      %3645 = vmatprep.mubr.bf16.mxu0 0
      %3646 = vmatmul.mubr.bf16.gmra.mrb[0].mxu0 %v2662
      %v3647 = vpop.f32.mrb[0].mxu0
      %v3648 = vadd.f32 %v3551, %v3647
      %v3649 = vpop.f32.mrb[0].mxu0
      %v3650 = vpop.f32.mrb[0].mxu0
      %v3651 = vadd.f32 %v3554, %v3650
      %v3652 = vpop.f32.mrb[0].mxu0
      %3653 = vmatprep.mubr.bf16.mxu0 0
      %3654 = vmatmul.mubr.bf16.gmra.mrb[0].mxu0 %v2671
      %v3655 = vpop.f32.mrb[0].mxu0
      %v3656 = vadd.f32 %v3559, %v3655
      %v3657 = vpop.f32.mrb[0].mxu0
      %v3658 = vpop.f32.mrb[0].mxu0
      %v3659 = vadd.f32 %v3562, %v3658
      %v3660 = vpop.f32.mrb[0].mxu0
      %3661 = vmatprep.mubr.bf16.mxu0 0
      %3662 = vmatmul.mubr.bf16.gmra.mrb[0].mxu0 %v2680
      %v3663 = vpop.f32.mrb[0].mxu0
      %v3664 = vadd.f32 %v3567, %v3663
      %v3665 = vpop.f32.mrb[0].mxu0
      %v3666 = vpop.f32.mrb[0].mxu0
      %v3667 = vadd.f32 %v3570, %v3666
      %v3668 = vpop.f32.mrb[0].mxu0
      %3669 = vdwg.mxu0
      %v3670 = vmax.f32 %v3608, 0.0
      %v3671 = vmax.f32 %v3611, 0.0
      %v3672 = vmax.f32 %v3616, 0.0
      %v3673 = vmax.f32 %v3619, 0.0
      %v3674 = vmax.f32 %v3624, 0.0
      %v3675 = vmax.f32 %v3627, 0.0
      %v3676 = vmax.f32 %v3632, 0.0
      %v3677 = vmax.f32 %v3635, 0.0
      %v3678 = vmax.f32 %v3640, 0.0
      %v3679 = vmax.f32 %v3643, 0.0
      %v3680 = vmax.f32 %v3648, 0.0
      %v3681 = vmax.f32 %v3651, 0.0
      %v3682 = vmax.f32 %v3656, 0.0
      %v3683 = vmax.f32 %v3659, 0.0
      %v3684 = vmax.f32 %v3664, 0.0
      %v3685 = vmax.f32 %v3667, 0.0
      %3686 = vst [vmem:[#allocation3] sm:$0xf] 0
      %3687 = vst [vmem:[#allocation3 + $0x4] sm:$0x1] 0
      %3688 = vst [vmem:[#allocation3 + $0x50] sm:$0xf] 0
      %3689 = vst [vmem:[#allocation3 + $0x54] sm:$0x1] 0
      %s3690 = scalar_lea.vmem [#allocation3], 72
      %3691 = vst [vmem:[%s3690] sm:$0xf] 0
      %3692 = vst [vmem:[%s3690 + $0x4] sm:$0x1] 0
      %3693 = vst [vmem:[%s3690 + $0x50] sm:$0xf] 0
      %3694 = vst [vmem:[%s3690 + $0x54] sm:$0x1] 0
      %v3695 = vld [vmem:[#allocation3] sm:$0x1]
      %v3696 = vsel %vm245, 0, %v3695
      %3697 = vst [vmem:[#allocation3] sm:$0x1] %v3696
      %v3698 = vld [vmem:[#allocation3 + $0x8] sm:$0x1]
      %v3699 = vsel %vm245, 0, %v3698
      %3700 = vst [vmem:[#allocation3 + $0x8] sm:$0x1] %v3699
      %v3701 = vld [vmem:[#allocation3 + $0x10] sm:$0x1]
      %v3702 = vsel %vm245, 0, %v3701
      %3703 = vst [vmem:[#allocation3 + $0x10] sm:$0x1] %v3702
      %v3704 = vld [vmem:[#allocation3 + $0x18] sm:$0x1]
      %v3705 = vsel %vm245, 0, %v3704
      %3706 = vst [vmem:[#allocation3 + $0x18] sm:$0x1] %v3705
      %v3707 = vld [vmem:[#allocation3 + $0x20] sm:$0x1]
      %v3708 = vsel %vm245, 0, %v3707
      %3709 = vst [vmem:[#allocation3 + $0x20] sm:$0x1] %v3708
      %v3710 = vld [vmem:[#allocation3 + $0x28] sm:$0x1]
      %v3711 = vsel %vm245, 0, %v3710
      %3712 = vst [vmem:[#allocation3 + $0x28] sm:$0x1] %v3711
      %v3713 = vld [vmem:[#allocation3 + $0x30] sm:$0x1]
      %v3714 = vsel %vm245, 0, %v3713
      %3715 = vst [vmem:[#allocation3 + $0x30] sm:$0x1] %v3714
      %v3716 = vld [vmem:[#allocation3 + $0x38] sm:$0x1]
      %v3717 = vsel %vm245, 0, %v3716
      %3718 = vst [vmem:[#allocation3 + $0x38] sm:$0x1] %v3717
      %v3719 = vld [vmem:[#allocation3 + $0x40] sm:$0x1]
      %v3720 = vsel %vm245, 0, %v3719
      %3721 = vst [vmem:[#allocation3 + $0x40] sm:$0x1] %v3720
      %v3722 = vld [vmem:[#allocation3 + $0x48] sm:$0x1]
      %v3723 = vsel %vm245, 0, %v3722
      %3724 = vst [vmem:[#allocation3 + $0x48] sm:$0x1] %v3723
      %v3725 = vld [vmem:[#allocation3 + $0x50] sm:$0x1]
      %v3726 = vsel %vm245, 0, %v3725
      %3727 = vst [vmem:[#allocation3 + $0x50] sm:$0x1] %v3726
      %v3728 = vld [vmem:[#allocation3 + $0x58] sm:$0x1]
      %v3729 = vsel %vm245, 0, %v3728
      %3730 = vst [vmem:[#allocation3 + $0x58] sm:$0x1] %v3729
      %v3731 = vld [vmem:[#allocation3 + $0x60] sm:$0x1]
      %v3732 = vsel %vm245, 0, %v3731
      %3733 = vst [vmem:[#allocation3 + $0x60] sm:$0x1] %v3732
      %v3734 = vld [vmem:[#allocation3 + $0x68] sm:$0x1]
      %v3735 = vsel %vm245, 0, %v3734
      %3736 = vst [vmem:[#allocation3 + $0x68] sm:$0x1] %v3735
      %v3737 = vld [vmem:[#allocation3 + $0x70] sm:$0x1]
      %v3738 = vsel %vm245, 0, %v3737
      %3739 = vst [vmem:[#allocation3 + $0x70] sm:$0x1] %v3738
      %v3740 = vld [vmem:[#allocation3 + $0x78] sm:$0x1]
      %v3741 = vsel %vm245, 0, %v3740
      %3742 = vst [vmem:[#allocation3 + $0x78] sm:$0x1] %v3741
      %v3743 = vld [vmem:[#allocation3 + $0x80] sm:$0x1]
      %v3744 = vsel %vm245, 0, %v3743
      %3745 = vst [vmem:[#allocation3 + $0x80] sm:$0x1] %v3744
      %v3746 = vld [vmem:[#allocation3 + $0x88] sm:$0x1]
      %v3747 = vsel %vm245, 0, %v3746
      %3748 = vst [vmem:[#allocation3 + $0x88] sm:$0x1] %v3747
      %v3749 = vld [vmem:[#allocation3 + $0x90] sm:$0x1]
      %v3750 = vsel %vm245, 0, %v3749
      %3751 = vst [vmem:[#allocation3 + $0x90] sm:$0x1] %v3750
      %v3752 = vld [vmem:[#allocation3 + $0x98] sm:$0x1]
      %v3753 = vsel %vm245, 0, %v3752
      %3754 = vst [vmem:[#allocation3 + $0x98] sm:$0x1] %v3753
      %v3755 = vld [vmem:[#allocation3 + $0x4] sm:$0x1]
      %v3756 = vsel %vm307, 0, %v3755
      %3757 = vst [vmem:[#allocation3 + $0x4] sm:$0x1] %v3756
      %v3758 = vld [vmem:[#allocation3 + $0xc] sm:$0x1]
      %v3759 = vsel %vm307, 0, %v3758
      %3760 = vst [vmem:[#allocation3 + $0xc] sm:$0x1] %v3759
      %v3761 = vld [vmem:[#allocation3 + $0x14] sm:$0x1]
      %v3762 = vsel %vm307, 0, %v3761
      %3763 = vst [vmem:[#allocation3 + $0x14] sm:$0x1] %v3762
      %v3764 = vld [vmem:[#allocation3 + $0x1c] sm:$0x1]
      %v3765 = vsel %vm307, 0, %v3764
      %3766 = vst [vmem:[#allocation3 + $0x1c] sm:$0x1] %v3765
      %v3767 = vld [vmem:[#allocation3 + $0x24] sm:$0x1]
      %v3768 = vsel %vm307, 0, %v3767
      %3769 = vst [vmem:[#allocation3 + $0x24] sm:$0x1] %v3768
      %v3770 = vld [vmem:[#allocation3 + $0x2c] sm:$0x1]
      %v3771 = vsel %vm307, 0, %v3770
      %3772 = vst [vmem:[#allocation3 + $0x2c] sm:$0x1] %v3771
      %v3773 = vld [vmem:[#allocation3 + $0x34] sm:$0x1]
      %v3774 = vsel %vm307, 0, %v3773
      %3775 = vst [vmem:[#allocation3 + $0x34] sm:$0x1] %v3774
      %v3776 = vld [vmem:[#allocation3 + $0x3c] sm:$0x1]
      %v3777 = vsel %vm307, 0, %v3776
      %3778 = vst [vmem:[#allocation3 + $0x3c] sm:$0x1] %v3777
      %v3779 = vld [vmem:[#allocation3 + $0x44] sm:$0x1]
      %v3780 = vsel %vm307, 0, %v3779
      %3781 = vst [vmem:[#allocation3 + $0x44] sm:$0x1] %v3780
      %v3782 = vld [vmem:[#allocation3 + $0x4c] sm:$0x1]
      %v3783 = vsel %vm307, 0, %v3782
      %3784 = vst [vmem:[#allocation3 + $0x4c] sm:$0x1] %v3783
      %v3785 = vld [vmem:[#allocation3 + $0x54] sm:$0x1]
      %v3786 = vsel %vm307, 0, %v3785
      %3787 = vst [vmem:[#allocation3 + $0x54] sm:$0x1] %v3786
      %v3788 = vld [vmem:[#allocation3 + $0x5c] sm:$0x1]
      %v3789 = vsel %vm307, 0, %v3788
      %3790 = vst [vmem:[#allocation3 + $0x5c] sm:$0x1] %v3789
      %v3791 = vld [vmem:[#allocation3 + $0x64] sm:$0x1]
      %v3792 = vsel %vm307, 0, %v3791
      %3793 = vst [vmem:[#allocation3 + $0x64] sm:$0x1] %v3792
      %v3794 = vld [vmem:[#allocation3 + $0x6c] sm:$0x1]
      %v3795 = vsel %vm307, 0, %v3794
      %3796 = vst [vmem:[#allocation3 + $0x6c] sm:$0x1] %v3795
      %v3797 = vld [vmem:[#allocation3 + $0x74] sm:$0x1]
      %v3798 = vsel %vm307, 0, %v3797
      %3799 = vst [vmem:[#allocation3 + $0x74] sm:$0x1] %v3798
      %v3800 = vld [vmem:[#allocation3 + $0x7c] sm:$0x1]
      %v3801 = vsel %vm307, 0, %v3800
      %3802 = vst [vmem:[#allocation3 + $0x7c] sm:$0x1] %v3801
      %v3803 = vld [vmem:[#allocation3 + $0x84] sm:$0x1]
      %v3804 = vsel %vm307, 0, %v3803
      %3805 = vst [vmem:[#allocation3 + $0x84] sm:$0x1] %v3804
      %v3806 = vld [vmem:[#allocation3 + $0x8c] sm:$0x1]
      %v3807 = vsel %vm307, 0, %v3806
      %3808 = vst [vmem:[#allocation3 + $0x8c] sm:$0x1] %v3807
      %v3809 = vld [vmem:[#allocation3 + $0x94] sm:$0x1]
      %v3810 = vsel %vm307, 0, %v3809
      %3811 = vst [vmem:[#allocation3 + $0x94] sm:$0x1] %v3810
      %v3812 = vld [vmem:[#allocation3 + $0x9c] sm:$0x1]
      %v3813 = vsel %vm307, 0, %v3812
      %3814 = vst [vmem:[#allocation3 + $0x9c] sm:$0x1] %v3813
      %v3815 = vpack.c.bf16 %v3670, %v3670
      %v3816 = vpack.c.bf16 %v3671, %v3671
      %v3817 = vpack.c.bf16 %v3672, %v3672
      %v3818 = vpack.c.bf16 %v3673, %v3673
      %v3819 = vpack.c.bf16 %v3674, %v3674
      %v3820 = vpack.c.bf16 %v3675, %v3675
      %v3821 = vpack.c.bf16 %v3676, %v3676
      %v3822 = vpack.c.bf16 %v3677, %v3677
      %v3823 = vpack.c.bf16 %v3678, %v3678
      %v3824 = vpack.c.bf16 %v3679, %v3679
      %v3825 = vpack.c.bf16 %v3680, %v3680
      %v3826 = vpack.c.bf16 %v3681, %v3681
      %v3827 = vpack.c.bf16 %v3682, %v3682
      %v3828 = vpack.c.bf16 %v3683, %v3683
      %v3829 = vpack.c.bf16 %v3684, %v3684
      %v3830 = vpack.c.bf16 %v3685, %v3685
      %v3847 = vunpack.c.l.b16 %v3815
      %v3848 = vunpack.c.l.b16 %v3816
      %v3849 = vunpack.c.l.b16 %v3817
      %v3850 = vunpack.c.l.b16 %v3818
      %v3851 = vunpack.c.l.b16 %v3819
      %v3852 = vunpack.c.l.b16 %v3820
      %v3853 = vunpack.c.l.b16 %v3821
      %v3854 = vunpack.c.l.b16 %v3822
      %v3855 = vunpack.c.l.b16 %v3823
      %v3856 = vunpack.c.l.b16 %v3824
      %v3857 = vunpack.c.l.b16 %v3825
      %v3858 = vunpack.c.l.b16 %v3826
      %v3859 = vunpack.c.l.b16 %v3827
      %v3860 = vunpack.c.l.b16 %v3828
      %v3861 = vunpack.c.l.b16 %v3829
      %v3862 = vunpack.c.l.b16 %v3830
      %v3863 = vpack.c.b16 %v3847, %v3847
      %v3864 = vpack.c.b16 %v3848, %v3848
      %v3865 = vpack.c.b16 %v3849, %v3849
      %v3866 = vpack.c.b16 %v3850, %v3850
      %v3867 = vpack.c.b16 %v3851, %v3851
      %v3868 = vpack.c.b16 %v3852, %v3852
      %v3869 = vpack.c.b16 %v3853, %v3853
      %v3870 = vpack.c.b16 %v3854, %v3854
      %v3871 = vpack.c.b16 %v3855, %v3855
      %v3872 = vpack.c.b16 %v3856, %v3856
      %v3873 = vpack.c.b16 %v3857, %v3857
      %v3874 = vpack.c.b16 %v3858, %v3858
      %v3875 = vpack.c.b16 %v3859, %v3859
      %v3876 = vpack.c.b16 %v3860, %v3860
      %v3877 = vpack.c.b16 %v3861, %v3861
      %v3878 = vpack.c.b16 %v3862, %v3862
      %v3880 = vshrl.u32 %v3863, 16
      %v3882 = vrot.slane %v3880, 7
      %v3883 = vshll.u32 %v3863, 16
      %v3885 = vor.u32 %v3882, %v3883
      %v3886 = vrot.slane %v3882, 4
      %v3888 = vshrl.u32 %v3864, 16
      %v3890 = vrot.slane %v3888, 7
      %v3891 = vshll.u32 %v3864, 16
      %v3893 = vor.u32 %v3890, %v3891
      %v3894 = vrot.slane %v3890, 4
      %v3896 = vshrl.u32 %v3865, 16
      %v3898 = vrot.slane %v3896, 7
      %v3899 = vshll.u32 %v3865, 16
      %v3901 = vor.u32 %v3898, %v3899
      %v3902 = vrot.slane %v3898, 4
      %v3904 = vshrl.u32 %v3866, 16
      %v3906 = vrot.slane %v3904, 7
      %v3907 = vshll.u32 %v3866, 16
      %v3909 = vor.u32 %v3906, %v3907
      %v3910 = vrot.slane %v3906, 4
      %v3912 = vshrl.u32 %v3867, 16
      %v3914 = vrot.slane %v3912, 7
      %v3915 = vshll.u32 %v3867, 16
      %v3917 = vor.u32 %v3914, %v3915
      %v3918 = vrot.slane %v3914, 4
      %v3920 = vshrl.u32 %v3868, 16
      %v3922 = vrot.slane %v3920, 7
      %v3923 = vshll.u32 %v3868, 16
      %v3925 = vor.u32 %v3922, %v3923
      %v3926 = vrot.slane %v3922, 4
      %v3928 = vshrl.u32 %v3869, 16
      %v3930 = vrot.slane %v3928, 7
      %v3931 = vshll.u32 %v3869, 16
      %v3933 = vor.u32 %v3930, %v3931
      %v3934 = vrot.slane %v3930, 4
      %v3936 = vshrl.u32 %v3870, 16
      %v3938 = vrot.slane %v3936, 7
      %v3939 = vshll.u32 %v3870, 16
      %v3941 = vor.u32 %v3938, %v3939
      %v3942 = vrot.slane %v3938, 4
      %v3944 = vshrl.u32 %v3871, 16
      %v3946 = vrot.slane %v3944, 7
      %v3947 = vshll.u32 %v3871, 16
      %v3949 = vor.u32 %v3946, %v3947
      %v3950 = vrot.slane %v3946, 4
      %v3952 = vshrl.u32 %v3872, 16
      %v3954 = vrot.slane %v3952, 7
      %v3955 = vshll.u32 %v3872, 16
      %v3957 = vor.u32 %v3954, %v3955
      %v3958 = vrot.slane %v3954, 4
      %v3960 = vshrl.u32 %v3873, 16
      %v3962 = vrot.slane %v3960, 7
      %v3963 = vshll.u32 %v3873, 16
      %v3965 = vor.u32 %v3962, %v3963
      %v3966 = vrot.slane %v3962, 4
      %v3968 = vshrl.u32 %v3874, 16
      %v3970 = vrot.slane %v3968, 7
      %v3971 = vshll.u32 %v3874, 16
      %v3973 = vor.u32 %v3970, %v3971
      %v3974 = vrot.slane %v3970, 4
      %v3976 = vshrl.u32 %v3875, 16
      %v3978 = vrot.slane %v3976, 7
      %v3979 = vshll.u32 %v3875, 16
      %v3981 = vor.u32 %v3978, %v3979
      %v3982 = vrot.slane %v3978, 4
      %v3984 = vshrl.u32 %v3876, 16
      %v3986 = vrot.slane %v3984, 7
      %v3987 = vshll.u32 %v3876, 16
      %v3989 = vor.u32 %v3986, %v3987
      %v3990 = vrot.slane %v3986, 4
      %v3992 = vshrl.u32 %v3877, 16
      %v3994 = vrot.slane %v3992, 7
      %v3995 = vshll.u32 %v3877, 16
      %v3997 = vor.u32 %v3994, %v3995
      %v3998 = vrot.slane %v3994, 4
      %v4000 = vshrl.u32 %v3878, 16
      %v4002 = vrot.slane %v4000, 7
      %v4003 = vshll.u32 %v3878, 16
      %v4005 = vor.u32 %v4002, %v4003
      %v4006 = vrot.slane %v4002, 4
      %s4039 = scalar_lea.vmem [#allocation3], 8
      %v4040 = vld [vmem:[%s4039] sm:$0xf]
      %v4041 = vsel %vm610, %v3885, %v4040
      %4042 = vst [vmem:[%s4039] sm:$0xf] %v4041
      %v4043 = vld [vmem:[%s4039 + $0x4] sm:$0x1]
      %v4044 = vsel %vm245, %v3886, %v4043
      %4045 = vst [vmem:[%s4039 + $0x4] sm:$0x1] %v4044
      %v4046 = vld [vmem:[%s4039 + $0x8] sm:$0xf]
      %v4047 = vsel %vm610, %v3893, %v4046
      %4048 = vst [vmem:[%s4039 + $0x8] sm:$0xf] %v4047
      %v4049 = vld [vmem:[%s4039 + $0xc] sm:$0x1]
      %v4050 = vsel %vm245, %v3894, %v4049
      %4051 = vst [vmem:[%s4039 + $0xc] sm:$0x1] %v4050
      %v4052 = vld [vmem:[%s4039 + $0x10] sm:$0xf]
      %v4053 = vsel %vm610, %v3901, %v4052
      %4054 = vst [vmem:[%s4039 + $0x10] sm:$0xf] %v4053
      %v4055 = vld [vmem:[%s4039 + $0x14] sm:$0x1]
      %v4056 = vsel %vm245, %v3902, %v4055
      %4057 = vst [vmem:[%s4039 + $0x14] sm:$0x1] %v4056
      %v4058 = vld [vmem:[%s4039 + $0x18] sm:$0xf]
      %v4059 = vsel %vm610, %v3909, %v4058
      %4060 = vst [vmem:[%s4039 + $0x18] sm:$0xf] %v4059
      %v4061 = vld [vmem:[%s4039 + $0x1c] sm:$0x1]
      %v4062 = vsel %vm245, %v3910, %v4061
      %4063 = vst [vmem:[%s4039 + $0x1c] sm:$0x1] %v4062
      %v4064 = vld [vmem:[%s4039 + $0x20] sm:$0xf]
      %v4065 = vsel %vm610, %v3917, %v4064
      %4066 = vst [vmem:[%s4039 + $0x20] sm:$0xf] %v4065
      %v4067 = vld [vmem:[%s4039 + $0x24] sm:$0x1]
      %v4068 = vsel %vm245, %v3918, %v4067
      %4069 = vst [vmem:[%s4039 + $0x24] sm:$0x1] %v4068
      %v4070 = vld [vmem:[%s4039 + $0x28] sm:$0xf]
      %v4071 = vsel %vm610, %v3925, %v4070
      %4072 = vst [vmem:[%s4039 + $0x28] sm:$0xf] %v4071
      %v4073 = vld [vmem:[%s4039 + $0x2c] sm:$0x1]
      %v4074 = vsel %vm245, %v3926, %v4073
      %4075 = vst [vmem:[%s4039 + $0x2c] sm:$0x1] %v4074
      %v4076 = vld [vmem:[%s4039 + $0x30] sm:$0xf]
      %v4077 = vsel %vm610, %v3933, %v4076
      %4078 = vst [vmem:[%s4039 + $0x30] sm:$0xf] %v4077
      %v4079 = vld [vmem:[%s4039 + $0x34] sm:$0x1]
      %v4080 = vsel %vm245, %v3934, %v4079
      %4081 = vst [vmem:[%s4039 + $0x34] sm:$0x1] %v4080
      %v4082 = vld [vmem:[%s4039 + $0x38] sm:$0xf]
      %v4083 = vsel %vm610, %v3941, %v4082
      %4084 = vst [vmem:[%s4039 + $0x38] sm:$0xf] %v4083
      %v4085 = vld [vmem:[%s4039 + $0x3c] sm:$0x1]
      %v4086 = vsel %vm245, %v3942, %v4085
      %4087 = vst [vmem:[%s4039 + $0x3c] sm:$0x1] %v4086
      %v4088 = vld [vmem:[%s4039 + $0x50] sm:$0xf]
      %v4089 = vsel %vm610, %v3949, %v4088
      %4090 = vst [vmem:[%s4039 + $0x50] sm:$0xf] %v4089
      %v4091 = vld [vmem:[%s4039 + $0x54] sm:$0x1]
      %v4092 = vsel %vm245, %v3950, %v4091
      %4093 = vst [vmem:[%s4039 + $0x54] sm:$0x1] %v4092
      %v4094 = vld [vmem:[%s4039 + $0x58] sm:$0xf]
      %v4095 = vsel %vm610, %v3957, %v4094
      %4096 = vst [vmem:[%s4039 + $0x58] sm:$0xf] %v4095
      %v4097 = vld [vmem:[%s4039 + $0x5c] sm:$0x1]
      %v4098 = vsel %vm245, %v3958, %v4097
      %4099 = vst [vmem:[%s4039 + $0x5c] sm:$0x1] %v4098
      %v4100 = vld [vmem:[%s4039 + $0x60] sm:$0xf]
      %v4101 = vsel %vm610, %v3965, %v4100
      %4102 = vst [vmem:[%s4039 + $0x60] sm:$0xf] %v4101
      %v4103 = vld [vmem:[%s4039 + $0x64] sm:$0x1]
      %v4104 = vsel %vm245, %v3966, %v4103
      %4105 = vst [vmem:[%s4039 + $0x64] sm:$0x1] %v4104
      %v4106 = vld [vmem:[%s4039 + $0x68] sm:$0xf]
      %v4107 = vsel %vm610, %v3973, %v4106
      %4108 = vst [vmem:[%s4039 + $0x68] sm:$0xf] %v4107
      %v4109 = vld [vmem:[%s4039 + $0x6c] sm:$0x1]
      %v4110 = vsel %vm245, %v3974, %v4109
      %4111 = vst [vmem:[%s4039 + $0x6c] sm:$0x1] %v4110
      %v4112 = vld [vmem:[%s4039 + $0x70] sm:$0xf]
      %v4113 = vsel %vm610, %v3981, %v4112
      %4114 = vst [vmem:[%s4039 + $0x70] sm:$0xf] %v4113
      %v4115 = vld [vmem:[%s4039 + $0x74] sm:$0x1]
      %v4116 = vsel %vm245, %v3982, %v4115
      %4117 = vst [vmem:[%s4039 + $0x74] sm:$0x1] %v4116
      %v4118 = vld [vmem:[%s4039 + $0x78] sm:$0xf]
      %v4119 = vsel %vm610, %v3989, %v4118
      %4120 = vst [vmem:[%s4039 + $0x78] sm:$0xf] %v4119
      %v4121 = vld [vmem:[%s4039 + $0x7c] sm:$0x1]
      %v4122 = vsel %vm245, %v3990, %v4121
      %4123 = vst [vmem:[%s4039 + $0x7c] sm:$0x1] %v4122
      %v4124 = vld [vmem:[%s4039 + $0x80] sm:$0xf]
      %v4125 = vsel %vm610, %v3997, %v4124
      %4126 = vst [vmem:[%s4039 + $0x80] sm:$0xf] %v4125
      %v4127 = vld [vmem:[%s4039 + $0x84] sm:$0x1]
      %v4128 = vsel %vm245, %v3998, %v4127
      %4129 = vst [vmem:[%s4039 + $0x84] sm:$0x1] %v4128
      %v4130 = vld [vmem:[%s4039 + $0x88] sm:$0xf]
      %v4131 = vsel %vm610, %v4005, %v4130
      %4132 = vst [vmem:[%s4039 + $0x88] sm:$0xf] %v4131
      %v4133 = vld [vmem:[%s4039 + $0x8c] sm:$0x1]
      %v4134 = vsel %vm245, %v4006, %v4133
      %4135 = vst [vmem:[%s4039 + $0x8c] sm:$0x1] %v4134
      %v4136 = vld [vmem:[#allocation3] sm:$0xf]
      %v4137 = vld [vmem:[#allocation3 + $0x8] sm:$0xf]
      %v4138 = vld [vmem:[#allocation3 + $0x10] sm:$0xf]
      %v4139 = vld [vmem:[#allocation3 + $0x18] sm:$0xf]
      %v4140 = vld [vmem:[#allocation3 + $0x20] sm:$0xf]
      %v4141 = vld [vmem:[#allocation3 + $0x28] sm:$0xf]
      %v4142 = vld [vmem:[#allocation3 + $0x30] sm:$0xf]
      %v4143 = vld [vmem:[#allocation3 + $0x38] sm:$0xf]
      %v4144 = vld [vmem:[#allocation3 + $0x50] sm:$0xf]
      %v4145 = vld [vmem:[#allocation3 + $0x58] sm:$0xf]
      %v4146 = vld [vmem:[#allocation3 + $0x60] sm:$0xf]
      %v4147 = vld [vmem:[#allocation3 + $0x68] sm:$0xf]
      %v4148 = vld [vmem:[#allocation3 + $0x70] sm:$0xf]
      %v4149 = vld [vmem:[#allocation3 + $0x78] sm:$0xf]
      %v4150 = vld [vmem:[#allocation3 + $0x80] sm:$0xf]
      %v4151 = vld [vmem:[#allocation3 + $0x88] sm:$0xf]
      %4152 = vst [vmem:[#allocation4] sm:$0xf] %v4136
      %4153 = vst [vmem:[#allocation4 + $0x24] sm:$0xf] %v4137
      %4154 = vst [vmem:[#allocation4 + $0x48] sm:$0xf] %v4138
      %4155 = vst [vmem:[#allocation4 + $0x6c] sm:$0xf] %v4139
      %4156 = vst [vmem:[#allocation4 + $0x90] sm:$0xf] %v4140
      %4157 = vst [vmem:[#allocation4 + $0xb4] sm:$0xf] %v4141
      %4158 = vst [vmem:[#allocation4 + $0xd8] sm:$0xf] %v4142
      %4159 = vst [vmem:[#allocation4 + $0xfc] sm:$0xf] %v4143
      %4160 = vst [vmem:[#allocation4 + $0x120] sm:$0xf] %v4144
      %4161 = vst [vmem:[#allocation4 + $0x144] sm:$0xf] %v4145
      %4162 = vst [vmem:[#allocation4 + $0x168] sm:$0xf] %v4146
      %4163 = vst [vmem:[#allocation4 + $0x18c] sm:$0xf] %v4147
      %4164 = vst [vmem:[#allocation4 + $0x1b0] sm:$0xf] %v4148
      %4165 = vst [vmem:[#allocation4 + $0x1d4] sm:$0xf] %v4149
      %4166 = vst [vmem:[#allocation4 + $0x1f8] sm:$0xf] %v4150
      %4167 = vst [vmem:[#allocation4 + $0x21c] sm:$0xf] %v4151
      %v4168 = vld [vmem:[#allocation3] sm:$0xf]
      %v4169 = vld [vmem:[#allocation3 + $0x4] sm:$0x1]
      %v4170 = vld [vmem:[#allocation3 + $0x8] sm:$0xf]
      %v4171 = vld [vmem:[#allocation3 + $0xc] sm:$0x1]
      %v4172 = vld [vmem:[#allocation3 + $0x10] sm:$0xf]
      %v4173 = vld [vmem:[#allocation3 + $0x14] sm:$0x1]
      %v4174 = vld [vmem:[#allocation3 + $0x18] sm:$0xf]
      %v4175 = vld [vmem:[#allocation3 + $0x1c] sm:$0x1]
      %v4176 = vld [vmem:[#allocation3 + $0x20] sm:$0xf]
      %v4177 = vld [vmem:[#allocation3 + $0x24] sm:$0x1]
      %v4178 = vld [vmem:[#allocation3 + $0x28] sm:$0xf]
      %v4179 = vld [vmem:[#allocation3 + $0x2c] sm:$0x1]
      %v4180 = vld [vmem:[#allocation3 + $0x30] sm:$0xf]
      %v4181 = vld [vmem:[#allocation3 + $0x34] sm:$0x1]
      %v4182 = vld [vmem:[#allocation3 + $0x38] sm:$0xf]
      %v4183 = vld [vmem:[#allocation3 + $0x3c] sm:$0x1]
      %v4184 = vld [vmem:[#allocation3 + $0x50] sm:$0xf]
      %v4185 = vld [vmem:[#allocation3 + $0x54] sm:$0x1]
      %v4186 = vld [vmem:[#allocation3 + $0x58] sm:$0xf]
      %v4187 = vld [vmem:[#allocation3 + $0x5c] sm:$0x1]
      %v4188 = vld [vmem:[#allocation3 + $0x60] sm:$0xf]
      %v4189 = vld [vmem:[#allocation3 + $0x64] sm:$0x1]
      %v4190 = vld [vmem:[#allocation3 + $0x68] sm:$0xf]
      %v4191 = vld [vmem:[#allocation3 + $0x6c] sm:$0x1]
      %v4192 = vld [vmem:[#allocation3 + $0x70] sm:$0xf]
      %v4193 = vld [vmem:[#allocation3 + $0x74] sm:$0x1]
      %v4194 = vld [vmem:[#allocation3 + $0x78] sm:$0xf]
      %v4195 = vld [vmem:[#allocation3 + $0x7c] sm:$0x1]
      %v4196 = vld [vmem:[#allocation3 + $0x80] sm:$0xf]
      %v4197 = vld [vmem:[#allocation3 + $0x84] sm:$0x1]
      %v4198 = vld [vmem:[#allocation3 + $0x88] sm:$0xf]
      %v4199 = vld [vmem:[#allocation3 + $0x8c] sm:$0x1]
      %v4201 = vshrl.u32 %v4168, 16
      %v4203 = vrot.slane %v4201, 4
      %v4204 = vshll.u32 %v4168, 16
      %v4206 = vrot.slane %v4204, 5
      %v4207 = vor.u32 %v4203, %v4206
      %v4208 = vrot.slane %v4207, 4
      %v4210 = vshll.u32 %v4169, 16
      %v4212 = vrot.slane %v4210, 5
      %v4213 = vsel %vm773, %v4208, %v4212
      %v4215 = vshrl.u32 %v4170, 16
      %v4217 = vrot.slane %v4215, 4
      %v4218 = vshll.u32 %v4170, 16
      %v4220 = vrot.slane %v4218, 5
      %v4221 = vor.u32 %v4217, %v4220
      %v4222 = vrot.slane %v4221, 4
      %v4224 = vshll.u32 %v4171, 16
      %v4226 = vrot.slane %v4224, 5
      %v4227 = vsel %vm773, %v4222, %v4226
      %v4229 = vshrl.u32 %v4172, 16
      %v4231 = vrot.slane %v4229, 4
      %v4232 = vshll.u32 %v4172, 16
      %v4234 = vrot.slane %v4232, 5
      %v4235 = vor.u32 %v4231, %v4234
      %v4236 = vrot.slane %v4235, 4
      %v4238 = vshll.u32 %v4173, 16
      %v4240 = vrot.slane %v4238, 5
      %v4241 = vsel %vm773, %v4236, %v4240
      %v4243 = vshrl.u32 %v4174, 16
      %v4245 = vrot.slane %v4243, 4
      %v4246 = vshll.u32 %v4174, 16
      %v4248 = vrot.slane %v4246, 5
      %v4249 = vor.u32 %v4245, %v4248
      %v4250 = vrot.slane %v4249, 4
      %v4252 = vshll.u32 %v4175, 16
      %v4254 = vrot.slane %v4252, 5
      %v4255 = vsel %vm773, %v4250, %v4254
      %v4257 = vshrl.u32 %v4176, 16
      %v4259 = vrot.slane %v4257, 4
      %v4260 = vshll.u32 %v4176, 16
      %v4262 = vrot.slane %v4260, 5
      %v4263 = vor.u32 %v4259, %v4262
      %v4264 = vrot.slane %v4263, 4
      %v4266 = vshll.u32 %v4177, 16
      %v4268 = vrot.slane %v4266, 5
      %v4269 = vsel %vm773, %v4264, %v4268
      %v4271 = vshrl.u32 %v4178, 16
      %v4273 = vrot.slane %v4271, 4
      %v4274 = vshll.u32 %v4178, 16
      %v4276 = vrot.slane %v4274, 5
      %v4277 = vor.u32 %v4273, %v4276
      %v4278 = vrot.slane %v4277, 4
      %v4280 = vshll.u32 %v4179, 16
      %v4282 = vrot.slane %v4280, 5
      %v4283 = vsel %vm773, %v4278, %v4282
      %v4285 = vshrl.u32 %v4180, 16
      %v4287 = vrot.slane %v4285, 4
      %v4288 = vshll.u32 %v4180, 16
      %v4290 = vrot.slane %v4288, 5
      %v4291 = vor.u32 %v4287, %v4290
      %v4292 = vrot.slane %v4291, 4
      %v4294 = vshll.u32 %v4181, 16
      %v4296 = vrot.slane %v4294, 5
      %v4297 = vsel %vm773, %v4292, %v4296
      %v4299 = vshrl.u32 %v4182, 16
      %v4301 = vrot.slane %v4299, 4
      %v4302 = vshll.u32 %v4182, 16
      %v4304 = vrot.slane %v4302, 5
      %v4305 = vor.u32 %v4301, %v4304
      %v4306 = vrot.slane %v4305, 4
      %v4308 = vshll.u32 %v4183, 16
      %v4310 = vrot.slane %v4308, 5
      %v4311 = vsel %vm773, %v4306, %v4310
      %v4313 = vshrl.u32 %v4184, 16
      %v4315 = vrot.slane %v4313, 4
      %v4316 = vshll.u32 %v4184, 16
      %v4318 = vrot.slane %v4316, 5
      %v4319 = vor.u32 %v4315, %v4318
      %v4320 = vrot.slane %v4319, 4
      %v4322 = vshll.u32 %v4185, 16
      %v4324 = vrot.slane %v4322, 5
      %v4325 = vsel %vm773, %v4320, %v4324
      %v4327 = vshrl.u32 %v4186, 16
      %v4329 = vrot.slane %v4327, 4
      %v4330 = vshll.u32 %v4186, 16
      %v4332 = vrot.slane %v4330, 5
      %v4333 = vor.u32 %v4329, %v4332
      %v4334 = vrot.slane %v4333, 4
      %v4336 = vshll.u32 %v4187, 16
      %v4338 = vrot.slane %v4336, 5
      %v4339 = vsel %vm773, %v4334, %v4338
      %v4341 = vshrl.u32 %v4188, 16
      %v4343 = vrot.slane %v4341, 4
      %v4344 = vshll.u32 %v4188, 16
      %v4346 = vrot.slane %v4344, 5
      %v4347 = vor.u32 %v4343, %v4346
      %v4348 = vrot.slane %v4347, 4
      %v4350 = vshll.u32 %v4189, 16
      %v4352 = vrot.slane %v4350, 5
      %v4353 = vsel %vm773, %v4348, %v4352
      %v4355 = vshrl.u32 %v4190, 16
      %v4357 = vrot.slane %v4355, 4
      %v4358 = vshll.u32 %v4190, 16
      %v4360 = vrot.slane %v4358, 5
      %v4361 = vor.u32 %v4357, %v4360
      %v4362 = vrot.slane %v4361, 4
      %v4364 = vshll.u32 %v4191, 16
      %v4366 = vrot.slane %v4364, 5
      %v4367 = vsel %vm773, %v4362, %v4366
      %v4369 = vshrl.u32 %v4192, 16
      %v4371 = vrot.slane %v4369, 4
      %v4372 = vshll.u32 %v4192, 16
      %v4374 = vrot.slane %v4372, 5
      %v4375 = vor.u32 %v4371, %v4374
      %v4376 = vrot.slane %v4375, 4
      %v4378 = vshll.u32 %v4193, 16
      %v4380 = vrot.slane %v4378, 5
      %v4381 = vsel %vm773, %v4376, %v4380
      %v4383 = vshrl.u32 %v4194, 16
      %v4385 = vrot.slane %v4383, 4
      %v4386 = vshll.u32 %v4194, 16
      %v4388 = vrot.slane %v4386, 5
      %v4389 = vor.u32 %v4385, %v4388
      %v4390 = vrot.slane %v4389, 4
      %v4392 = vshll.u32 %v4195, 16
      %v4394 = vrot.slane %v4392, 5
      %v4395 = vsel %vm773, %v4390, %v4394
      %v4397 = vshrl.u32 %v4196, 16
      %v4399 = vrot.slane %v4397, 4
      %v4400 = vshll.u32 %v4196, 16
      %v4402 = vrot.slane %v4400, 5
      %v4403 = vor.u32 %v4399, %v4402
      %v4404 = vrot.slane %v4403, 4
      %v4406 = vshll.u32 %v4197, 16
      %v4408 = vrot.slane %v4406, 5
      %v4409 = vsel %vm773, %v4404, %v4408
      %v4411 = vshrl.u32 %v4198, 16
      %v4413 = vrot.slane %v4411, 4
      %v4414 = vshll.u32 %v4198, 16
      %v4416 = vrot.slane %v4414, 5
      %v4417 = vor.u32 %v4413, %v4416
      %v4418 = vrot.slane %v4417, 4
      %v4420 = vshll.u32 %v4199, 16
      %v4422 = vrot.slane %v4420, 5
      %v4423 = vsel %vm773, %v4418, %v4422
      %4440 = vst [vmem:[#allocation4 + $0x4] sm:$0xf] %v4213
      %4441 = vst [vmem:[#allocation4 + $0x28] sm:$0xf] %v4227
      %4442 = vst [vmem:[#allocation4 + $0x4c] sm:$0xf] %v4241
      %4443 = vst [vmem:[#allocation4 + $0x70] sm:$0xf] %v4255
      %4444 = vst [vmem:[#allocation4 + $0x94] sm:$0xf] %v4269
      %4445 = vst [vmem:[#allocation4 + $0xb8] sm:$0xf] %v4283
      %4446 = vst [vmem:[#allocation4 + $0xdc] sm:$0xf] %v4297
      %4447 = vst [vmem:[#allocation4 + $0x100] sm:$0xf] %v4311
      %4448 = vst [vmem:[#allocation4 + $0x124] sm:$0xf] %v4325
      %4449 = vst [vmem:[#allocation4 + $0x148] sm:$0xf] %v4339
      %4450 = vst [vmem:[#allocation4 + $0x16c] sm:$0xf] %v4353
      %4451 = vst [vmem:[#allocation4 + $0x190] sm:$0xf] %v4367
      %4452 = vst [vmem:[#allocation4 + $0x1b4] sm:$0xf] %v4381
      %4453 = vst [vmem:[#allocation4 + $0x1d8] sm:$0xf] %v4395
      %4454 = vst [vmem:[#allocation4 + $0x1fc] sm:$0xf] %v4409
      %4455 = vst [vmem:[#allocation4 + $0x220] sm:$0xf] %v4423
      %v4456 = vld [vmem:[#allocation3] sm:$0xe]
      %v4457 = vld [vmem:[#allocation3 + $0x4] sm:$0x1]
      %v4458 = vld [vmem:[#allocation3 + $0x8] sm:$0xe]
      %v4459 = vld [vmem:[#allocation3 + $0xc] sm:$0x1]
      %v4460 = vld [vmem:[#allocation3 + $0x10] sm:$0xe]
      %v4461 = vld [vmem:[#allocation3 + $0x14] sm:$0x1]
      %v4462 = vld [vmem:[#allocation3 + $0x18] sm:$0xe]
      %v4463 = vld [vmem:[#allocation3 + $0x1c] sm:$0x1]
      %v4464 = vld [vmem:[#allocation3 + $0x20] sm:$0xe]
      %v4465 = vld [vmem:[#allocation3 + $0x24] sm:$0x1]
      %v4466 = vld [vmem:[#allocation3 + $0x28] sm:$0xe]
      %v4467 = vld [vmem:[#allocation3 + $0x2c] sm:$0x1]
      %v4468 = vld [vmem:[#allocation3 + $0x30] sm:$0xe]
      %v4469 = vld [vmem:[#allocation3 + $0x34] sm:$0x1]
      %v4470 = vld [vmem:[#allocation3 + $0x38] sm:$0xe]
      %v4471 = vld [vmem:[#allocation3 + $0x3c] sm:$0x1]
      %v4472 = vld [vmem:[#allocation3 + $0x50] sm:$0xe]
      %v4473 = vld [vmem:[#allocation3 + $0x54] sm:$0x1]
      %v4474 = vld [vmem:[#allocation3 + $0x58] sm:$0xe]
      %v4475 = vld [vmem:[#allocation3 + $0x5c] sm:$0x1]
      %v4476 = vld [vmem:[#allocation3 + $0x60] sm:$0xe]
      %v4477 = vld [vmem:[#allocation3 + $0x64] sm:$0x1]
      %v4478 = vld [vmem:[#allocation3 + $0x68] sm:$0xe]
      %v4479 = vld [vmem:[#allocation3 + $0x6c] sm:$0x1]
      %v4480 = vld [vmem:[#allocation3 + $0x70] sm:$0xe]
      %v4481 = vld [vmem:[#allocation3 + $0x74] sm:$0x1]
      %v4482 = vld [vmem:[#allocation3 + $0x78] sm:$0xe]
      %v4483 = vld [vmem:[#allocation3 + $0x7c] sm:$0x1]
      %v4484 = vld [vmem:[#allocation3 + $0x80] sm:$0xe]
      %v4485 = vld [vmem:[#allocation3 + $0x84] sm:$0x1]
      %v4486 = vld [vmem:[#allocation3 + $0x88] sm:$0xe]
      %v4487 = vld [vmem:[#allocation3 + $0x8c] sm:$0x1]
      %v4520 = vrot.slane %v4456, 5
      %v4521 = vrot.slane %v4520, 4
      %v4522 = vrot.slane %v4457, 5
      %v4523 = vsel %vm1096, %v4521, %v4522
      %v4524 = vrot.slane %v4458, 5
      %v4525 = vrot.slane %v4524, 4
      %v4526 = vrot.slane %v4459, 5
      %v4527 = vsel %vm1096, %v4525, %v4526
      %v4528 = vrot.slane %v4460, 5
      %v4529 = vrot.slane %v4528, 4
      %v4530 = vrot.slane %v4461, 5
      %v4531 = vsel %vm1096, %v4529, %v4530
      %v4532 = vrot.slane %v4462, 5
      %v4533 = vrot.slane %v4532, 4
      %v4534 = vrot.slane %v4463, 5
      %v4535 = vsel %vm1096, %v4533, %v4534
      %v4536 = vrot.slane %v4464, 5
      %v4537 = vrot.slane %v4536, 4
      %v4538 = vrot.slane %v4465, 5
      %v4539 = vsel %vm1096, %v4537, %v4538
      %v4540 = vrot.slane %v4466, 5
      %v4541 = vrot.slane %v4540, 4
      %v4542 = vrot.slane %v4467, 5
      %v4543 = vsel %vm1096, %v4541, %v4542
      %v4544 = vrot.slane %v4468, 5
      %v4545 = vrot.slane %v4544, 4
      %v4546 = vrot.slane %v4469, 5
      %v4547 = vsel %vm1096, %v4545, %v4546
      %v4548 = vrot.slane %v4470, 5
      %v4549 = vrot.slane %v4548, 4
      %v4550 = vrot.slane %v4471, 5
      %v4551 = vsel %vm1096, %v4549, %v4550
      %v4552 = vrot.slane %v4472, 5
      %v4553 = vrot.slane %v4552, 4
      %v4554 = vrot.slane %v4473, 5
      %v4555 = vsel %vm1096, %v4553, %v4554
      %v4556 = vrot.slane %v4474, 5
      %v4557 = vrot.slane %v4556, 4
      %v4558 = vrot.slane %v4475, 5
      %v4559 = vsel %vm1096, %v4557, %v4558
      %v4560 = vrot.slane %v4476, 5
      %v4561 = vrot.slane %v4560, 4
      %v4562 = vrot.slane %v4477, 5
      %v4563 = vsel %vm1096, %v4561, %v4562
      %v4564 = vrot.slane %v4478, 5
      %v4565 = vrot.slane %v4564, 4
      %v4566 = vrot.slane %v4479, 5
      %v4567 = vsel %vm1096, %v4565, %v4566
      %v4568 = vrot.slane %v4480, 5
      %v4569 = vrot.slane %v4568, 4
      %v4570 = vrot.slane %v4481, 5
      %v4571 = vsel %vm1096, %v4569, %v4570
      %v4572 = vrot.slane %v4482, 5
      %v4573 = vrot.slane %v4572, 4
      %v4574 = vrot.slane %v4483, 5
      %v4575 = vsel %vm1096, %v4573, %v4574
      %v4576 = vrot.slane %v4484, 5
      %v4577 = vrot.slane %v4576, 4
      %v4578 = vrot.slane %v4485, 5
      %v4579 = vsel %vm1096, %v4577, %v4578
      %v4580 = vrot.slane %v4486, 5
      %v4581 = vrot.slane %v4580, 4
      %v4582 = vrot.slane %v4487, 5
      %v4583 = vsel %vm1096, %v4581, %v4582
      %4600 = vst [vmem:[#allocation4 + $0x8] sm:$0xf] %v4523
      %4601 = vst [vmem:[#allocation4 + $0x2c] sm:$0xf] %v4527
      %4602 = vst [vmem:[#allocation4 + $0x50] sm:$0xf] %v4531
      %4603 = vst [vmem:[#allocation4 + $0x74] sm:$0xf] %v4535
      %4604 = vst [vmem:[#allocation4 + $0x98] sm:$0xf] %v4539
      %4605 = vst [vmem:[#allocation4 + $0xbc] sm:$0xf] %v4543
      %4606 = vst [vmem:[#allocation4 + $0xe0] sm:$0xf] %v4547
      %4607 = vst [vmem:[#allocation4 + $0x104] sm:$0xf] %v4551
      %4608 = vst [vmem:[#allocation4 + $0x128] sm:$0xf] %v4555
      %4609 = vst [vmem:[#allocation4 + $0x14c] sm:$0xf] %v4559
      %4610 = vst [vmem:[#allocation4 + $0x170] sm:$0xf] %v4563
      %4611 = vst [vmem:[#allocation4 + $0x194] sm:$0xf] %v4567
      %4612 = vst [vmem:[#allocation4 + $0x1b8] sm:$0xf] %v4571
      %4613 = vst [vmem:[#allocation4 + $0x1dc] sm:$0xf] %v4575
      %4614 = vst [vmem:[#allocation4 + $0x200] sm:$0xf] %v4579
      %4615 = vst [vmem:[#allocation4 + $0x224] sm:$0xf] %v4583
      %v4616 = vld [vmem:[%s4039] sm:$0xf]
      %v4617 = vld [vmem:[%s4039 + $0x8] sm:$0xf]
      %v4618 = vld [vmem:[%s4039 + $0x10] sm:$0xf]
      %v4619 = vld [vmem:[%s4039 + $0x18] sm:$0xf]
      %v4620 = vld [vmem:[%s4039 + $0x20] sm:$0xf]
      %v4621 = vld [vmem:[%s4039 + $0x28] sm:$0xf]
      %v4622 = vld [vmem:[%s4039 + $0x30] sm:$0xf]
      %v4623 = vld [vmem:[%s4039 + $0x38] sm:$0xf]
      %v4624 = vld [vmem:[%s4039 + $0x50] sm:$0xf]
      %v4625 = vld [vmem:[%s4039 + $0x58] sm:$0xf]
      %v4626 = vld [vmem:[%s4039 + $0x60] sm:$0xf]
      %v4627 = vld [vmem:[%s4039 + $0x68] sm:$0xf]
      %v4628 = vld [vmem:[%s4039 + $0x70] sm:$0xf]
      %v4629 = vld [vmem:[%s4039 + $0x78] sm:$0xf]
      %v4630 = vld [vmem:[%s4039 + $0x80] sm:$0xf]
      %v4631 = vld [vmem:[%s4039 + $0x88] sm:$0xf]
      %4632 = vst [vmem:[#allocation4 + $0xc] sm:$0xf] %v4616
      %4633 = vst [vmem:[#allocation4 + $0x30] sm:$0xf] %v4617
      %4634 = vst [vmem:[#allocation4 + $0x54] sm:$0xf] %v4618
      %4635 = vst [vmem:[#allocation4 + $0x78] sm:$0xf] %v4619
      %4636 = vst [vmem:[#allocation4 + $0x9c] sm:$0xf] %v4620
      %4637 = vst [vmem:[#allocation4 + $0xc0] sm:$0xf] %v4621
      %4638 = vst [vmem:[#allocation4 + $0xe4] sm:$0xf] %v4622
      %4639 = vst [vmem:[#allocation4 + $0x108] sm:$0xf] %v4623
      %4640 = vst [vmem:[#allocation4 + $0x12c] sm:$0xf] %v4624
      %4641 = vst [vmem:[#allocation4 + $0x150] sm:$0xf] %v4625
      %4642 = vst [vmem:[#allocation4 + $0x174] sm:$0xf] %v4626
      %4643 = vst [vmem:[#allocation4 + $0x198] sm:$0xf] %v4627
      %4644 = vst [vmem:[#allocation4 + $0x1bc] sm:$0xf] %v4628
      %4645 = vst [vmem:[#allocation4 + $0x1e0] sm:$0xf] %v4629
      %4646 = vst [vmem:[#allocation4 + $0x204] sm:$0xf] %v4630
      %4647 = vst [vmem:[#allocation4 + $0x228] sm:$0xf] %v4631
      %v4648 = vld [vmem:[%s4039] sm:$0xf]
      %v4649 = vld [vmem:[%s4039 + $0x4] sm:$0x1]
      %v4650 = vld [vmem:[%s4039 + $0x8] sm:$0xf]
      %v4651 = vld [vmem:[%s4039 + $0xc] sm:$0x1]
      %v4652 = vld [vmem:[%s4039 + $0x10] sm:$0xf]
      %v4653 = vld [vmem:[%s4039 + $0x14] sm:$0x1]
      %v4654 = vld [vmem:[%s4039 + $0x18] sm:$0xf]
      %v4655 = vld [vmem:[%s4039 + $0x1c] sm:$0x1]
      %v4656 = vld [vmem:[%s4039 + $0x20] sm:$0xf]
      %v4657 = vld [vmem:[%s4039 + $0x24] sm:$0x1]
      %v4658 = vld [vmem:[%s4039 + $0x28] sm:$0xf]
      %v4659 = vld [vmem:[%s4039 + $0x2c] sm:$0x1]
      %v4660 = vld [vmem:[%s4039 + $0x30] sm:$0xf]
      %v4661 = vld [vmem:[%s4039 + $0x34] sm:$0x1]
      %v4662 = vld [vmem:[%s4039 + $0x38] sm:$0xf]
      %v4663 = vld [vmem:[%s4039 + $0x3c] sm:$0x1]
      %v4664 = vld [vmem:[%s4039 + $0x50] sm:$0xf]
      %v4665 = vld [vmem:[%s4039 + $0x54] sm:$0x1]
      %v4666 = vld [vmem:[%s4039 + $0x58] sm:$0xf]
      %v4667 = vld [vmem:[%s4039 + $0x5c] sm:$0x1]
      %v4668 = vld [vmem:[%s4039 + $0x60] sm:$0xf]
      %v4669 = vld [vmem:[%s4039 + $0x64] sm:$0x1]
      %v4670 = vld [vmem:[%s4039 + $0x68] sm:$0xf]
      %v4671 = vld [vmem:[%s4039 + $0x6c] sm:$0x1]
      %v4672 = vld [vmem:[%s4039 + $0x70] sm:$0xf]
      %v4673 = vld [vmem:[%s4039 + $0x74] sm:$0x1]
      %v4674 = vld [vmem:[%s4039 + $0x78] sm:$0xf]
      %v4675 = vld [vmem:[%s4039 + $0x7c] sm:$0x1]
      %v4676 = vld [vmem:[%s4039 + $0x80] sm:$0xf]
      %v4677 = vld [vmem:[%s4039 + $0x84] sm:$0x1]
      %v4678 = vld [vmem:[%s4039 + $0x88] sm:$0xf]
      %v4679 = vld [vmem:[%s4039 + $0x8c] sm:$0x1]
      %v4681 = vshrl.u32 %v4648, 16
      %v4683 = vrot.slane %v4681, 4
      %v4684 = vshll.u32 %v4648, 16
      %v4686 = vrot.slane %v4684, 5
      %v4687 = vor.u32 %v4683, %v4686
      %v4688 = vrot.slane %v4687, 4
      %v4690 = vshll.u32 %v4649, 16
      %v4692 = vrot.slane %v4690, 5
      %v4693 = vsel %vm773, %v4688, %v4692
      %v4695 = vshrl.u32 %v4650, 16
      %v4697 = vrot.slane %v4695, 4
      %v4698 = vshll.u32 %v4650, 16
      %v4700 = vrot.slane %v4698, 5
      %v4701 = vor.u32 %v4697, %v4700
      %v4702 = vrot.slane %v4701, 4
      %v4704 = vshll.u32 %v4651, 16
      %v4706 = vrot.slane %v4704, 5
      %v4707 = vsel %vm773, %v4702, %v4706
      %v4709 = vshrl.u32 %v4652, 16
      %v4711 = vrot.slane %v4709, 4
      %v4712 = vshll.u32 %v4652, 16
      %v4714 = vrot.slane %v4712, 5
      %v4715 = vor.u32 %v4711, %v4714
      %v4716 = vrot.slane %v4715, 4
      %v4718 = vshll.u32 %v4653, 16
      %v4720 = vrot.slane %v4718, 5
      %v4721 = vsel %vm773, %v4716, %v4720
      %v4723 = vshrl.u32 %v4654, 16
      %v4725 = vrot.slane %v4723, 4
      %v4726 = vshll.u32 %v4654, 16
      %v4728 = vrot.slane %v4726, 5
      %v4729 = vor.u32 %v4725, %v4728
      %v4730 = vrot.slane %v4729, 4
      %v4732 = vshll.u32 %v4655, 16
      %v4734 = vrot.slane %v4732, 5
      %v4735 = vsel %vm773, %v4730, %v4734
      %v4737 = vshrl.u32 %v4656, 16
      %v4739 = vrot.slane %v4737, 4
      %v4740 = vshll.u32 %v4656, 16
      %v4742 = vrot.slane %v4740, 5
      %v4743 = vor.u32 %v4739, %v4742
      %v4744 = vrot.slane %v4743, 4
      %v4746 = vshll.u32 %v4657, 16
      %v4748 = vrot.slane %v4746, 5
      %v4749 = vsel %vm773, %v4744, %v4748
      %v4751 = vshrl.u32 %v4658, 16
      %v4753 = vrot.slane %v4751, 4
      %v4754 = vshll.u32 %v4658, 16
      %v4756 = vrot.slane %v4754, 5
      %v4757 = vor.u32 %v4753, %v4756
      %v4758 = vrot.slane %v4757, 4
      %v4760 = vshll.u32 %v4659, 16
      %v4762 = vrot.slane %v4760, 5
      %v4763 = vsel %vm773, %v4758, %v4762
      %v4765 = vshrl.u32 %v4660, 16
      %v4767 = vrot.slane %v4765, 4
      %v4768 = vshll.u32 %v4660, 16
      %v4770 = vrot.slane %v4768, 5
      %v4771 = vor.u32 %v4767, %v4770
      %v4772 = vrot.slane %v4771, 4
      %v4774 = vshll.u32 %v4661, 16
      %v4776 = vrot.slane %v4774, 5
      %v4777 = vsel %vm773, %v4772, %v4776
      %v4779 = vshrl.u32 %v4662, 16
      %v4781 = vrot.slane %v4779, 4
      %v4782 = vshll.u32 %v4662, 16
      %v4784 = vrot.slane %v4782, 5
      %v4785 = vor.u32 %v4781, %v4784
      %v4786 = vrot.slane %v4785, 4
      %v4788 = vshll.u32 %v4663, 16
      %v4790 = vrot.slane %v4788, 5
      %v4791 = vsel %vm773, %v4786, %v4790
      %v4793 = vshrl.u32 %v4664, 16
      %v4795 = vrot.slane %v4793, 4
      %v4796 = vshll.u32 %v4664, 16
      %v4798 = vrot.slane %v4796, 5
      %v4799 = vor.u32 %v4795, %v4798
      %v4800 = vrot.slane %v4799, 4
      %v4802 = vshll.u32 %v4665, 16
      %v4804 = vrot.slane %v4802, 5
      %v4805 = vsel %vm773, %v4800, %v4804
      %v4807 = vshrl.u32 %v4666, 16
      %v4809 = vrot.slane %v4807, 4
      %v4810 = vshll.u32 %v4666, 16
      %v4812 = vrot.slane %v4810, 5
      %v4813 = vor.u32 %v4809, %v4812
      %v4814 = vrot.slane %v4813, 4
      %v4816 = vshll.u32 %v4667, 16
      %v4818 = vrot.slane %v4816, 5
      %v4819 = vsel %vm773, %v4814, %v4818
      %v4821 = vshrl.u32 %v4668, 16
      %v4823 = vrot.slane %v4821, 4
      %v4824 = vshll.u32 %v4668, 16
      %v4826 = vrot.slane %v4824, 5
      %v4827 = vor.u32 %v4823, %v4826
      %v4828 = vrot.slane %v4827, 4
      %v4830 = vshll.u32 %v4669, 16
      %v4832 = vrot.slane %v4830, 5
      %v4833 = vsel %vm773, %v4828, %v4832
      %v4835 = vshrl.u32 %v4670, 16
      %v4837 = vrot.slane %v4835, 4
      %v4838 = vshll.u32 %v4670, 16
      %v4840 = vrot.slane %v4838, 5
      %v4841 = vor.u32 %v4837, %v4840
      %v4842 = vrot.slane %v4841, 4
      %v4844 = vshll.u32 %v4671, 16
      %v4846 = vrot.slane %v4844, 5
      %v4847 = vsel %vm773, %v4842, %v4846
      %v4849 = vshrl.u32 %v4672, 16
      %v4851 = vrot.slane %v4849, 4
      %v4852 = vshll.u32 %v4672, 16
      %v4854 = vrot.slane %v4852, 5
      %v4855 = vor.u32 %v4851, %v4854
      %v4856 = vrot.slane %v4855, 4
      %v4858 = vshll.u32 %v4673, 16
      %v4860 = vrot.slane %v4858, 5
      %v4861 = vsel %vm773, %v4856, %v4860
      %v4863 = vshrl.u32 %v4674, 16
      %v4865 = vrot.slane %v4863, 4
      %v4866 = vshll.u32 %v4674, 16
      %v4868 = vrot.slane %v4866, 5
      %v4869 = vor.u32 %v4865, %v4868
      %v4870 = vrot.slane %v4869, 4
      %v4872 = vshll.u32 %v4675, 16
      %v4874 = vrot.slane %v4872, 5
      %v4875 = vsel %vm773, %v4870, %v4874
      %v4877 = vshrl.u32 %v4676, 16
      %v4879 = vrot.slane %v4877, 4
      %v4880 = vshll.u32 %v4676, 16
      %v4882 = vrot.slane %v4880, 5
      %v4883 = vor.u32 %v4879, %v4882
      %v4884 = vrot.slane %v4883, 4
      %v4886 = vshll.u32 %v4677, 16
      %v4888 = vrot.slane %v4886, 5
      %v4889 = vsel %vm773, %v4884, %v4888
      %v4891 = vshrl.u32 %v4678, 16
      %v4893 = vrot.slane %v4891, 4
      %v4894 = vshll.u32 %v4678, 16
      %v4896 = vrot.slane %v4894, 5
      %v4897 = vor.u32 %v4893, %v4896
      %v4898 = vrot.slane %v4897, 4
      %v4900 = vshll.u32 %v4679, 16
      %v4902 = vrot.slane %v4900, 5
      %v4903 = vsel %vm773, %v4898, %v4902
      %4920 = vst [vmem:[#allocation4 + $0x10] sm:$0xf] %v4693
      %4921 = vst [vmem:[#allocation4 + $0x34] sm:$0xf] %v4707
      %4922 = vst [vmem:[#allocation4 + $0x58] sm:$0xf] %v4721
      %4923 = vst [vmem:[#allocation4 + $0x7c] sm:$0xf] %v4735
      %4924 = vst [vmem:[#allocation4 + $0xa0] sm:$0xf] %v4749
      %4925 = vst [vmem:[#allocation4 + $0xc4] sm:$0xf] %v4763
      %4926 = vst [vmem:[#allocation4 + $0xe8] sm:$0xf] %v4777
      %4927 = vst [vmem:[#allocation4 + $0x10c] sm:$0xf] %v4791
      %4928 = vst [vmem:[#allocation4 + $0x130] sm:$0xf] %v4805
      %4929 = vst [vmem:[#allocation4 + $0x154] sm:$0xf] %v4819
      %4930 = vst [vmem:[#allocation4 + $0x178] sm:$0xf] %v4833
      %4931 = vst [vmem:[#allocation4 + $0x19c] sm:$0xf] %v4847
      %4932 = vst [vmem:[#allocation4 + $0x1c0] sm:$0xf] %v4861
      %4933 = vst [vmem:[#allocation4 + $0x1e4] sm:$0xf] %v4875
      %4934 = vst [vmem:[#allocation4 + $0x208] sm:$0xf] %v4889
      %4935 = vst [vmem:[#allocation4 + $0x22c] sm:$0xf] %v4903
      %v4936 = vld [vmem:[%s4039] sm:$0xe]
      %v4937 = vld [vmem:[%s4039 + $0x4] sm:$0x1]
      %v4938 = vld [vmem:[%s4039 + $0x8] sm:$0xe]
      %v4939 = vld [vmem:[%s4039 + $0xc] sm:$0x1]
      %v4940 = vld [vmem:[%s4039 + $0x10] sm:$0xe]
      %v4941 = vld [vmem:[%s4039 + $0x14] sm:$0x1]
      %v4942 = vld [vmem:[%s4039 + $0x18] sm:$0xe]
      %v4943 = vld [vmem:[%s4039 + $0x1c] sm:$0x1]
      %v4944 = vld [vmem:[%s4039 + $0x20] sm:$0xe]
      %v4945 = vld [vmem:[%s4039 + $0x24] sm:$0x1]
      %v4946 = vld [vmem:[%s4039 + $0x28] sm:$0xe]
      %v4947 = vld [vmem:[%s4039 + $0x2c] sm:$0x1]
      %v4948 = vld [vmem:[%s4039 + $0x30] sm:$0xe]
      %v4949 = vld [vmem:[%s4039 + $0x34] sm:$0x1]
      %v4950 = vld [vmem:[%s4039 + $0x38] sm:$0xe]
      %v4951 = vld [vmem:[%s4039 + $0x3c] sm:$0x1]
      %v4952 = vld [vmem:[%s4039 + $0x50] sm:$0xe]
      %v4953 = vld [vmem:[%s4039 + $0x54] sm:$0x1]
      %v4954 = vld [vmem:[%s4039 + $0x58] sm:$0xe]
      %v4955 = vld [vmem:[%s4039 + $0x5c] sm:$0x1]
      %v4956 = vld [vmem:[%s4039 + $0x60] sm:$0xe]
      %v4957 = vld [vmem:[%s4039 + $0x64] sm:$0x1]
      %v4958 = vld [vmem:[%s4039 + $0x68] sm:$0xe]
      %v4959 = vld [vmem:[%s4039 + $0x6c] sm:$0x1]
      %v4960 = vld [vmem:[%s4039 + $0x70] sm:$0xe]
      %v4961 = vld [vmem:[%s4039 + $0x74] sm:$0x1]
      %v4962 = vld [vmem:[%s4039 + $0x78] sm:$0xe]
      %v4963 = vld [vmem:[%s4039 + $0x7c] sm:$0x1]
      %v4964 = vld [vmem:[%s4039 + $0x80] sm:$0xe]
      %v4965 = vld [vmem:[%s4039 + $0x84] sm:$0x1]
      %v4966 = vld [vmem:[%s4039 + $0x88] sm:$0xe]
      %v4967 = vld [vmem:[%s4039 + $0x8c] sm:$0x1]
      %v5000 = vrot.slane %v4936, 5
      %v5001 = vrot.slane %v5000, 4
      %v5002 = vrot.slane %v4937, 5
      %v5003 = vsel %vm1096, %v5001, %v5002
      %v5004 = vrot.slane %v4938, 5
      %v5005 = vrot.slane %v5004, 4
      %v5006 = vrot.slane %v4939, 5
      %v5007 = vsel %vm1096, %v5005, %v5006
      %v5008 = vrot.slane %v4940, 5
      %v5009 = vrot.slane %v5008, 4
      %v5010 = vrot.slane %v4941, 5
      %v5011 = vsel %vm1096, %v5009, %v5010
      %v5012 = vrot.slane %v4942, 5
      %v5013 = vrot.slane %v5012, 4
      %v5014 = vrot.slane %v4943, 5
      %v5015 = vsel %vm1096, %v5013, %v5014
      %v5016 = vrot.slane %v4944, 5
      %v5017 = vrot.slane %v5016, 4
      %v5018 = vrot.slane %v4945, 5
      %v5019 = vsel %vm1096, %v5017, %v5018
      %v5020 = vrot.slane %v4946, 5
      %v5021 = vrot.slane %v5020, 4
      %v5022 = vrot.slane %v4947, 5
      %v5023 = vsel %vm1096, %v5021, %v5022
      %v5024 = vrot.slane %v4948, 5
      %v5025 = vrot.slane %v5024, 4
      %v5026 = vrot.slane %v4949, 5
      %v5027 = vsel %vm1096, %v5025, %v5026
      %v5028 = vrot.slane %v4950, 5
      %v5029 = vrot.slane %v5028, 4
      %v5030 = vrot.slane %v4951, 5
      %v5031 = vsel %vm1096, %v5029, %v5030
      %v5032 = vrot.slane %v4952, 5
      %v5033 = vrot.slane %v5032, 4
      %v5034 = vrot.slane %v4953, 5
      %v5035 = vsel %vm1096, %v5033, %v5034
      %v5036 = vrot.slane %v4954, 5
      %v5037 = vrot.slane %v5036, 4
      %v5038 = vrot.slane %v4955, 5
      %v5039 = vsel %vm1096, %v5037, %v5038
      %v5040 = vrot.slane %v4956, 5
      %v5041 = vrot.slane %v5040, 4
      %v5042 = vrot.slane %v4957, 5
      %v5043 = vsel %vm1096, %v5041, %v5042
      %v5044 = vrot.slane %v4958, 5
      %v5045 = vrot.slane %v5044, 4
      %v5046 = vrot.slane %v4959, 5
      %v5047 = vsel %vm1096, %v5045, %v5046
      %v5048 = vrot.slane %v4960, 5
      %v5049 = vrot.slane %v5048, 4
      %v5050 = vrot.slane %v4961, 5
      %v5051 = vsel %vm1096, %v5049, %v5050
      %v5052 = vrot.slane %v4962, 5
      %v5053 = vrot.slane %v5052, 4
      %v5054 = vrot.slane %v4963, 5
      %v5055 = vsel %vm1096, %v5053, %v5054
      %v5056 = vrot.slane %v4964, 5
      %v5057 = vrot.slane %v5056, 4
      %v5058 = vrot.slane %v4965, 5
      %v5059 = vsel %vm1096, %v5057, %v5058
      %v5060 = vrot.slane %v4966, 5
      %v5061 = vrot.slane %v5060, 4
      %v5062 = vrot.slane %v4967, 5
      %v5063 = vsel %vm1096, %v5061, %v5062
      %5080 = vst [vmem:[#allocation4 + $0x14] sm:$0xf] %v5003
      %5081 = vst [vmem:[#allocation4 + $0x38] sm:$0xf] %v5007
      %5082 = vst [vmem:[#allocation4 + $0x5c] sm:$0xf] %v5011
      %5083 = vst [vmem:[#allocation4 + $0x80] sm:$0xf] %v5015
      %5084 = vst [vmem:[#allocation4 + $0xa4] sm:$0xf] %v5019
      %5085 = vst [vmem:[#allocation4 + $0xc8] sm:$0xf] %v5023
      %5086 = vst [vmem:[#allocation4 + $0xec] sm:$0xf] %v5027
      %5087 = vst [vmem:[#allocation4 + $0x110] sm:$0xf] %v5031
      %5088 = vst [vmem:[#allocation4 + $0x134] sm:$0xf] %v5035
      %5089 = vst [vmem:[#allocation4 + $0x158] sm:$0xf] %v5039
      %5090 = vst [vmem:[#allocation4 + $0x17c] sm:$0xf] %v5043
      %5091 = vst [vmem:[#allocation4 + $0x1a0] sm:$0xf] %v5047
      %5092 = vst [vmem:[#allocation4 + $0x1c4] sm:$0xf] %v5051
      %5093 = vst [vmem:[#allocation4 + $0x1e8] sm:$0xf] %v5055
      %5094 = vst [vmem:[#allocation4 + $0x20c] sm:$0xf] %v5059
      %5095 = vst [vmem:[#allocation4 + $0x230] sm:$0xf] %v5063
      %s5096 = scalar_lea.vmem [#allocation3], 16
      %v5097 = vld [vmem:[%s5096] sm:$0xf]
      %v5098 = vld [vmem:[%s5096 + $0x8] sm:$0xf]
      %v5099 = vld [vmem:[%s5096 + $0x10] sm:$0xf]
      %v5100 = vld [vmem:[%s5096 + $0x18] sm:$0xf]
      %v5101 = vld [vmem:[%s5096 + $0x20] sm:$0xf]
      %v5102 = vld [vmem:[%s5096 + $0x28] sm:$0xf]
      %v5103 = vld [vmem:[%s5096 + $0x30] sm:$0xf]
      %v5104 = vld [vmem:[%s5096 + $0x38] sm:$0xf]
      %v5105 = vld [vmem:[%s5096 + $0x50] sm:$0xf]
      %v5106 = vld [vmem:[%s5096 + $0x58] sm:$0xf]
      %v5107 = vld [vmem:[%s5096 + $0x60] sm:$0xf]
      %v5108 = vld [vmem:[%s5096 + $0x68] sm:$0xf]
      %v5109 = vld [vmem:[%s5096 + $0x70] sm:$0xf]
      %v5110 = vld [vmem:[%s5096 + $0x78] sm:$0xf]
      %v5111 = vld [vmem:[%s5096 + $0x80] sm:$0xf]
      %v5112 = vld [vmem:[%s5096 + $0x88] sm:$0xf]
      %5113 = vst [vmem:[#allocation4 + $0x18] sm:$0xf] %v5097
      %5114 = vst [vmem:[#allocation4 + $0x3c] sm:$0xf] %v5098
      %5115 = vst [vmem:[#allocation4 + $0x60] sm:$0xf] %v5099
      %5116 = vst [vmem:[#allocation4 + $0x84] sm:$0xf] %v5100
      %5117 = vst [vmem:[#allocation4 + $0xa8] sm:$0xf] %v5101
      %5118 = vst [vmem:[#allocation4 + $0xcc] sm:$0xf] %v5102
      %5119 = vst [vmem:[#allocation4 + $0xf0] sm:$0xf] %v5103
      %5120 = vst [vmem:[#allocation4 + $0x114] sm:$0xf] %v5104
      %5121 = vst [vmem:[#allocation4 + $0x138] sm:$0xf] %v5105
      %5122 = vst [vmem:[#allocation4 + $0x15c] sm:$0xf] %v5106
      %5123 = vst [vmem:[#allocation4 + $0x180] sm:$0xf] %v5107
      %5124 = vst [vmem:[#allocation4 + $0x1a4] sm:$0xf] %v5108
      %5125 = vst [vmem:[#allocation4 + $0x1c8] sm:$0xf] %v5109
      %5126 = vst [vmem:[#allocation4 + $0x1ec] sm:$0xf] %v5110
      %5127 = vst [vmem:[#allocation4 + $0x210] sm:$0xf] %v5111
      %5128 = vst [vmem:[#allocation4 + $0x234] sm:$0xf] %v5112
      %v5129 = vld [vmem:[%s5096] sm:$0xf]
      %v5130 = vld [vmem:[%s5096 + $0x4] sm:$0x1]
      %v5131 = vld [vmem:[%s5096 + $0x8] sm:$0xf]
      %v5132 = vld [vmem:[%s5096 + $0xc] sm:$0x1]
      %v5133 = vld [vmem:[%s5096 + $0x10] sm:$0xf]
      %v5134 = vld [vmem:[%s5096 + $0x14] sm:$0x1]
      %v5135 = vld [vmem:[%s5096 + $0x18] sm:$0xf]
      %v5136 = vld [vmem:[%s5096 + $0x1c] sm:$0x1]
      %v5137 = vld [vmem:[%s5096 + $0x20] sm:$0xf]
      %v5138 = vld [vmem:[%s5096 + $0x24] sm:$0x1]
      %v5139 = vld [vmem:[%s5096 + $0x28] sm:$0xf]
      %v5140 = vld [vmem:[%s5096 + $0x2c] sm:$0x1]
      %v5141 = vld [vmem:[%s5096 + $0x30] sm:$0xf]
      %v5142 = vld [vmem:[%s5096 + $0x34] sm:$0x1]
      %v5143 = vld [vmem:[%s5096 + $0x38] sm:$0xf]
      %v5144 = vld [vmem:[%s5096 + $0x3c] sm:$0x1]
      %v5145 = vld [vmem:[%s5096 + $0x50] sm:$0xf]
      %v5146 = vld [vmem:[%s5096 + $0x54] sm:$0x1]
      %v5147 = vld [vmem:[%s5096 + $0x58] sm:$0xf]
      %v5148 = vld [vmem:[%s5096 + $0x5c] sm:$0x1]
      %v5149 = vld [vmem:[%s5096 + $0x60] sm:$0xf]
      %v5150 = vld [vmem:[%s5096 + $0x64] sm:$0x1]
      %v5151 = vld [vmem:[%s5096 + $0x68] sm:$0xf]
      %v5152 = vld [vmem:[%s5096 + $0x6c] sm:$0x1]
      %v5153 = vld [vmem:[%s5096 + $0x70] sm:$0xf]
      %v5154 = vld [vmem:[%s5096 + $0x74] sm:$0x1]
      %v5155 = vld [vmem:[%s5096 + $0x78] sm:$0xf]
      %v5156 = vld [vmem:[%s5096 + $0x7c] sm:$0x1]
      %v5157 = vld [vmem:[%s5096 + $0x80] sm:$0xf]
      %v5158 = vld [vmem:[%s5096 + $0x84] sm:$0x1]
      %v5159 = vld [vmem:[%s5096 + $0x88] sm:$0xf]
      %v5160 = vld [vmem:[%s5096 + $0x8c] sm:$0x1]
      %v5162 = vshrl.u32 %v5129, 16
      %v5164 = vrot.slane %v5162, 4
      %v5165 = vshll.u32 %v5129, 16
      %v5167 = vrot.slane %v5165, 5
      %v5168 = vor.u32 %v5164, %v5167
      %v5169 = vrot.slane %v5168, 4
      %v5171 = vshll.u32 %v5130, 16
      %v5173 = vrot.slane %v5171, 5
      %v5174 = vsel %vm773, %v5169, %v5173
      %v5176 = vshrl.u32 %v5131, 16
      %v5178 = vrot.slane %v5176, 4
      %v5179 = vshll.u32 %v5131, 16
      %v5181 = vrot.slane %v5179, 5
      %v5182 = vor.u32 %v5178, %v5181
      %v5183 = vrot.slane %v5182, 4
      %v5185 = vshll.u32 %v5132, 16
      %v5187 = vrot.slane %v5185, 5
      %v5188 = vsel %vm773, %v5183, %v5187
      %v5190 = vshrl.u32 %v5133, 16
      %v5192 = vrot.slane %v5190, 4
      %v5193 = vshll.u32 %v5133, 16
      %v5195 = vrot.slane %v5193, 5
      %v5196 = vor.u32 %v5192, %v5195
      %v5197 = vrot.slane %v5196, 4
      %v5199 = vshll.u32 %v5134, 16
      %v5201 = vrot.slane %v5199, 5
      %v5202 = vsel %vm773, %v5197, %v5201
      %v5204 = vshrl.u32 %v5135, 16
      %v5206 = vrot.slane %v5204, 4
      %v5207 = vshll.u32 %v5135, 16
      %v5209 = vrot.slane %v5207, 5
      %v5210 = vor.u32 %v5206, %v5209
      %v5211 = vrot.slane %v5210, 4
      %v5213 = vshll.u32 %v5136, 16
      %v5215 = vrot.slane %v5213, 5
      %v5216 = vsel %vm773, %v5211, %v5215
      %v5218 = vshrl.u32 %v5137, 16
      %v5220 = vrot.slane %v5218, 4
      %v5221 = vshll.u32 %v5137, 16
      %v5223 = vrot.slane %v5221, 5
      %v5224 = vor.u32 %v5220, %v5223
      %v5225 = vrot.slane %v5224, 4
      %v5227 = vshll.u32 %v5138, 16
      %v5229 = vrot.slane %v5227, 5
      %v5230 = vsel %vm773, %v5225, %v5229
      %v5232 = vshrl.u32 %v5139, 16
      %v5234 = vrot.slane %v5232, 4
      %v5235 = vshll.u32 %v5139, 16
      %v5237 = vrot.slane %v5235, 5
      %v5238 = vor.u32 %v5234, %v5237
      %v5239 = vrot.slane %v5238, 4
      %v5241 = vshll.u32 %v5140, 16
      %v5243 = vrot.slane %v5241, 5
      %v5244 = vsel %vm773, %v5239, %v5243
      %v5246 = vshrl.u32 %v5141, 16
      %v5248 = vrot.slane %v5246, 4
      %v5249 = vshll.u32 %v5141, 16
      %v5251 = vrot.slane %v5249, 5
      %v5252 = vor.u32 %v5248, %v5251
      %v5253 = vrot.slane %v5252, 4
      %v5255 = vshll.u32 %v5142, 16
      %v5257 = vrot.slane %v5255, 5
      %v5258 = vsel %vm773, %v5253, %v5257
      %v5260 = vshrl.u32 %v5143, 16
      %v5262 = vrot.slane %v5260, 4
      %v5263 = vshll.u32 %v5143, 16
      %v5265 = vrot.slane %v5263, 5
      %v5266 = vor.u32 %v5262, %v5265
      %v5267 = vrot.slane %v5266, 4
      %v5269 = vshll.u32 %v5144, 16
      %v5271 = vrot.slane %v5269, 5
      %v5272 = vsel %vm773, %v5267, %v5271
      %v5274 = vshrl.u32 %v5145, 16
      %v5276 = vrot.slane %v5274, 4
      %v5277 = vshll.u32 %v5145, 16
      %v5279 = vrot.slane %v5277, 5
      %v5280 = vor.u32 %v5276, %v5279
      %v5281 = vrot.slane %v5280, 4
      %v5283 = vshll.u32 %v5146, 16
      %v5285 = vrot.slane %v5283, 5
      %v5286 = vsel %vm773, %v5281, %v5285
      %v5288 = vshrl.u32 %v5147, 16
      %v5290 = vrot.slane %v5288, 4
      %v5291 = vshll.u32 %v5147, 16
      %v5293 = vrot.slane %v5291, 5
      %v5294 = vor.u32 %v5290, %v5293
      %v5295 = vrot.slane %v5294, 4
      %v5297 = vshll.u32 %v5148, 16
      %v5299 = vrot.slane %v5297, 5
      %v5300 = vsel %vm773, %v5295, %v5299
      %v5302 = vshrl.u32 %v5149, 16
      %v5304 = vrot.slane %v5302, 4
      %v5305 = vshll.u32 %v5149, 16
      %v5307 = vrot.slane %v5305, 5
      %v5308 = vor.u32 %v5304, %v5307
      %v5309 = vrot.slane %v5308, 4
      %v5311 = vshll.u32 %v5150, 16
      %v5313 = vrot.slane %v5311, 5
      %v5314 = vsel %vm773, %v5309, %v5313
      %v5316 = vshrl.u32 %v5151, 16
      %v5318 = vrot.slane %v5316, 4
      %v5319 = vshll.u32 %v5151, 16
      %v5321 = vrot.slane %v5319, 5
      %v5322 = vor.u32 %v5318, %v5321
      %v5323 = vrot.slane %v5322, 4
      %v5325 = vshll.u32 %v5152, 16
      %v5327 = vrot.slane %v5325, 5
      %v5328 = vsel %vm773, %v5323, %v5327
      %v5330 = vshrl.u32 %v5153, 16
      %v5332 = vrot.slane %v5330, 4
      %v5333 = vshll.u32 %v5153, 16
      %v5335 = vrot.slane %v5333, 5
      %v5336 = vor.u32 %v5332, %v5335
      %v5337 = vrot.slane %v5336, 4
      %v5339 = vshll.u32 %v5154, 16
      %v5341 = vrot.slane %v5339, 5
      %v5342 = vsel %vm773, %v5337, %v5341
      %v5344 = vshrl.u32 %v5155, 16
      %v5346 = vrot.slane %v5344, 4
      %v5347 = vshll.u32 %v5155, 16
      %v5349 = vrot.slane %v5347, 5
      %v5350 = vor.u32 %v5346, %v5349
      %v5351 = vrot.slane %v5350, 4
      %v5353 = vshll.u32 %v5156, 16
      %v5355 = vrot.slane %v5353, 5
      %v5356 = vsel %vm773, %v5351, %v5355
      %v5358 = vshrl.u32 %v5157, 16
      %v5360 = vrot.slane %v5358, 4
      %v5361 = vshll.u32 %v5157, 16
      %v5363 = vrot.slane %v5361, 5
      %v5364 = vor.u32 %v5360, %v5363
      %v5365 = vrot.slane %v5364, 4
      %v5367 = vshll.u32 %v5158, 16
      %v5369 = vrot.slane %v5367, 5
      %v5370 = vsel %vm773, %v5365, %v5369
      %v5372 = vshrl.u32 %v5159, 16
      %v5374 = vrot.slane %v5372, 4
      %v5375 = vshll.u32 %v5159, 16
      %v5377 = vrot.slane %v5375, 5
      %v5378 = vor.u32 %v5374, %v5377
      %v5379 = vrot.slane %v5378, 4
      %v5381 = vshll.u32 %v5160, 16
      %v5383 = vrot.slane %v5381, 5
      %v5384 = vsel %vm773, %v5379, %v5383
      %5401 = vst [vmem:[#allocation4 + $0x1c] sm:$0xf] %v5174
      %5402 = vst [vmem:[#allocation4 + $0x40] sm:$0xf] %v5188
      %5403 = vst [vmem:[#allocation4 + $0x64] sm:$0xf] %v5202
      %5404 = vst [vmem:[#allocation4 + $0x88] sm:$0xf] %v5216
      %5405 = vst [vmem:[#allocation4 + $0xac] sm:$0xf] %v5230
      %5406 = vst [vmem:[#allocation4 + $0xd0] sm:$0xf] %v5244
      %5407 = vst [vmem:[#allocation4 + $0xf4] sm:$0xf] %v5258
      %5408 = vst [vmem:[#allocation4 + $0x118] sm:$0xf] %v5272
      %5409 = vst [vmem:[#allocation4 + $0x13c] sm:$0xf] %v5286
      %5410 = vst [vmem:[#allocation4 + $0x160] sm:$0xf] %v5300
      %5411 = vst [vmem:[#allocation4 + $0x184] sm:$0xf] %v5314
      %5412 = vst [vmem:[#allocation4 + $0x1a8] sm:$0xf] %v5328
      %5413 = vst [vmem:[#allocation4 + $0x1cc] sm:$0xf] %v5342
      %5414 = vst [vmem:[#allocation4 + $0x1f0] sm:$0xf] %v5356
      %5415 = vst [vmem:[#allocation4 + $0x214] sm:$0xf] %v5370
      %5416 = vst [vmem:[#allocation4 + $0x238] sm:$0xf] %v5384
      %v5417 = vld [vmem:[%s5096] sm:$0xe]
      %v5418 = vld [vmem:[%s5096 + $0x4] sm:$0x1]
      %v5419 = vld [vmem:[%s5096 + $0x8] sm:$0xe]
      %v5420 = vld [vmem:[%s5096 + $0xc] sm:$0x1]
      %v5421 = vld [vmem:[%s5096 + $0x10] sm:$0xe]
      %v5422 = vld [vmem:[%s5096 + $0x14] sm:$0x1]
      %v5423 = vld [vmem:[%s5096 + $0x18] sm:$0xe]
      %v5424 = vld [vmem:[%s5096 + $0x1c] sm:$0x1]
      %v5425 = vld [vmem:[%s5096 + $0x20] sm:$0xe]
      %v5426 = vld [vmem:[%s5096 + $0x24] sm:$0x1]
      %v5427 = vld [vmem:[%s5096 + $0x28] sm:$0xe]
      %v5428 = vld [vmem:[%s5096 + $0x2c] sm:$0x1]
      %v5429 = vld [vmem:[%s5096 + $0x30] sm:$0xe]
      %v5430 = vld [vmem:[%s5096 + $0x34] sm:$0x1]
      %v5431 = vld [vmem:[%s5096 + $0x38] sm:$0xe]
      %v5432 = vld [vmem:[%s5096 + $0x3c] sm:$0x1]
      %v5433 = vld [vmem:[%s5096 + $0x50] sm:$0xe]
      %v5434 = vld [vmem:[%s5096 + $0x54] sm:$0x1]
      %v5435 = vld [vmem:[%s5096 + $0x58] sm:$0xe]
      %v5436 = vld [vmem:[%s5096 + $0x5c] sm:$0x1]
      %v5437 = vld [vmem:[%s5096 + $0x60] sm:$0xe]
      %v5438 = vld [vmem:[%s5096 + $0x64] sm:$0x1]
      %v5439 = vld [vmem:[%s5096 + $0x68] sm:$0xe]
      %v5440 = vld [vmem:[%s5096 + $0x6c] sm:$0x1]
      %v5441 = vld [vmem:[%s5096 + $0x70] sm:$0xe]
      %v5442 = vld [vmem:[%s5096 + $0x74] sm:$0x1]
      %v5443 = vld [vmem:[%s5096 + $0x78] sm:$0xe]
      %v5444 = vld [vmem:[%s5096 + $0x7c] sm:$0x1]
      %v5445 = vld [vmem:[%s5096 + $0x80] sm:$0xe]
      %v5446 = vld [vmem:[%s5096 + $0x84] sm:$0x1]
      %v5447 = vld [vmem:[%s5096 + $0x88] sm:$0xe]
      %v5448 = vld [vmem:[%s5096 + $0x8c] sm:$0x1]
      %v5481 = vrot.slane %v5417, 5
      %v5482 = vrot.slane %v5481, 4
      %v5483 = vrot.slane %v5418, 5
      %v5484 = vsel %vm1096, %v5482, %v5483
      %v5485 = vrot.slane %v5419, 5
      %v5486 = vrot.slane %v5485, 4
      %v5487 = vrot.slane %v5420, 5
      %v5488 = vsel %vm1096, %v5486, %v5487
      %v5489 = vrot.slane %v5421, 5
      %v5490 = vrot.slane %v5489, 4
      %v5491 = vrot.slane %v5422, 5
      %v5492 = vsel %vm1096, %v5490, %v5491
      %v5493 = vrot.slane %v5423, 5
      %v5494 = vrot.slane %v5493, 4
      %v5495 = vrot.slane %v5424, 5
      %v5496 = vsel %vm1096, %v5494, %v5495
      %v5497 = vrot.slane %v5425, 5
      %v5498 = vrot.slane %v5497, 4
      %v5499 = vrot.slane %v5426, 5
      %v5500 = vsel %vm1096, %v5498, %v5499
      %v5501 = vrot.slane %v5427, 5
      %v5502 = vrot.slane %v5501, 4
      %v5503 = vrot.slane %v5428, 5
      %v5504 = vsel %vm1096, %v5502, %v5503
      %v5505 = vrot.slane %v5429, 5
      %v5506 = vrot.slane %v5505, 4
      %v5507 = vrot.slane %v5430, 5
      %v5508 = vsel %vm1096, %v5506, %v5507
      %v5509 = vrot.slane %v5431, 5
      %v5510 = vrot.slane %v5509, 4
      %v5511 = vrot.slane %v5432, 5
      %v5512 = vsel %vm1096, %v5510, %v5511
      %v5513 = vrot.slane %v5433, 5
      %v5514 = vrot.slane %v5513, 4
      %v5515 = vrot.slane %v5434, 5
      %v5516 = vsel %vm1096, %v5514, %v5515
      %v5517 = vrot.slane %v5435, 5
      %v5518 = vrot.slane %v5517, 4
      %v5519 = vrot.slane %v5436, 5
      %v5520 = vsel %vm1096, %v5518, %v5519
      %v5521 = vrot.slane %v5437, 5
      %v5522 = vrot.slane %v5521, 4
      %v5523 = vrot.slane %v5438, 5
      %v5524 = vsel %vm1096, %v5522, %v5523
      %v5525 = vrot.slane %v5439, 5
      %v5526 = vrot.slane %v5525, 4
      %v5527 = vrot.slane %v5440, 5
      %v5528 = vsel %vm1096, %v5526, %v5527
      %v5529 = vrot.slane %v5441, 5
      %v5530 = vrot.slane %v5529, 4
      %v5531 = vrot.slane %v5442, 5
      %v5532 = vsel %vm1096, %v5530, %v5531
      %v5533 = vrot.slane %v5443, 5
      %v5534 = vrot.slane %v5533, 4
      %v5535 = vrot.slane %v5444, 5
      %v5536 = vsel %vm1096, %v5534, %v5535
      %v5537 = vrot.slane %v5445, 5
      %v5538 = vrot.slane %v5537, 4
      %v5539 = vrot.slane %v5446, 5
      %v5540 = vsel %vm1096, %v5538, %v5539
      %v5541 = vrot.slane %v5447, 5
      %v5542 = vrot.slane %v5541, 4
      %v5543 = vrot.slane %v5448, 5
      %v5544 = vsel %vm1096, %v5542, %v5543
      %5561 = vst [vmem:[#allocation4 + $0x20] sm:$0xf] %v5484
      %5562 = vst [vmem:[#allocation4 + $0x44] sm:$0xf] %v5488
      %5563 = vst [vmem:[#allocation4 + $0x68] sm:$0xf] %v5492
      %5564 = vst [vmem:[#allocation4 + $0x8c] sm:$0xf] %v5496
      %5565 = vst [vmem:[#allocation4 + $0xb0] sm:$0xf] %v5500
      %5566 = vst [vmem:[#allocation4 + $0xd4] sm:$0xf] %v5504
      %5567 = vst [vmem:[#allocation4 + $0xf8] sm:$0xf] %v5508
      %5568 = vst [vmem:[#allocation4 + $0x11c] sm:$0xf] %v5512
      %5569 = vst [vmem:[#allocation4 + $0x140] sm:$0xf] %v5516
      %5570 = vst [vmem:[#allocation4 + $0x164] sm:$0xf] %v5520
      %5571 = vst [vmem:[#allocation4 + $0x188] sm:$0xf] %v5524
      %5572 = vst [vmem:[#allocation4 + $0x1ac] sm:$0xf] %v5528
      %5573 = vst [vmem:[#allocation4 + $0x1d0] sm:$0xf] %v5532
      %5574 = vst [vmem:[#allocation4 + $0x1f4] sm:$0xf] %v5536
      %5575 = vst [vmem:[#allocation4 + $0x218] sm:$0xf] %v5540
      %5576 = vst [vmem:[#allocation4 + $0x23c] sm:$0xf] %v5544
      %v5577 = vld [vmem:[#allocation4] sm:$0xff]
      %v5578 = vld [vmem:[#allocation4 + $0x8] sm:$0xff]
      %v5579 = vld [vmem:[#allocation4 + $0x10] sm:$0xff]
      %v5580 = vld [vmem:[#allocation4 + $0x18] sm:$0xff]
      %v5581 = vld [vmem:[#allocation4 + $0x20] sm:$0xf]
      %v5582 = vld [vmem:[#allocation4 + $0x24] sm:$0xff]
      %v5583 = vld [vmem:[#allocation4 + $0x2c] sm:$0xff]
      %v5584 = vld [vmem:[#allocation4 + $0x34] sm:$0xff]
      %v5585 = vld [vmem:[#allocation4 + $0x3c] sm:$0xff]
      %v5586 = vld [vmem:[#allocation4 + $0x44] sm:$0xf]
      %v5587 = vld [vmem:[#allocation4 + $0x48] sm:$0xff]
      %v5588 = vld [vmem:[#allocation4 + $0x50] sm:$0xff]
      %v5589 = vld [vmem:[#allocation4 + $0x58] sm:$0xff]
      %v5590 = vld [vmem:[#allocation4 + $0x60] sm:$0xff]
      %v5591 = vld [vmem:[#allocation4 + $0x68] sm:$0xf]
      %v5592 = vld [vmem:[#allocation4 + $0x6c] sm:$0xff]
      %v5593 = vld [vmem:[#allocation4 + $0x74] sm:$0xff]
      %v5594 = vld [vmem:[#allocation4 + $0x7c] sm:$0xff]
      %v5595 = vld [vmem:[#allocation4 + $0x84] sm:$0xff]
      %v5596 = vld [vmem:[#allocation4 + $0x8c] sm:$0xf]
      %v5597 = vld [vmem:[#allocation4 + $0x90] sm:$0xff]
      %v5598 = vld [vmem:[#allocation4 + $0x98] sm:$0xff]
      %v5599 = vld [vmem:[#allocation4 + $0xa0] sm:$0xff]
      %v5600 = vld [vmem:[#allocation4 + $0xa8] sm:$0xff]
      %v5601 = vld [vmem:[#allocation4 + $0xb0] sm:$0xf]
      %v5602 = vld [vmem:[#allocation4 + $0xb4] sm:$0xff]
      %v5603 = vld [vmem:[#allocation4 + $0xbc] sm:$0xff]
      %v5604 = vld [vmem:[#allocation4 + $0xc4] sm:$0xff]
      %v5605 = vld [vmem:[#allocation4 + $0xcc] sm:$0xff]
      %v5606 = vld [vmem:[#allocation4 + $0xd4] sm:$0xf]
      %v5607 = vld [vmem:[#allocation4 + $0xd8] sm:$0xff]
      %v5608 = vld [vmem:[#allocation4 + $0xe0] sm:$0xff]
      %v5609 = vld [vmem:[#allocation4 + $0xe8] sm:$0xff]
      %v5610 = vld [vmem:[#allocation4 + $0xf0] sm:$0xff]
      %v5611 = vld [vmem:[#allocation4 + $0xf8] sm:$0xf]
      %v5612 = vld [vmem:[#allocation4 + $0xfc] sm:$0xff]
      %v5613 = vld [vmem:[#allocation4 + $0x104] sm:$0xff]
      %v5614 = vld [vmem:[#allocation4 + $0x10c] sm:$0xff]
      %v5615 = vld [vmem:[#allocation4 + $0x114] sm:$0xff]
      %v5616 = vld [vmem:[#allocation4 + $0x11c] sm:$0xf]
      %v5617 = vld [vmem:[#allocation4 + $0x120] sm:$0xff]
      %v5618 = vld [vmem:[#allocation4 + $0x128] sm:$0xff]
      %v5619 = vld [vmem:[#allocation4 + $0x130] sm:$0xff]
      %v5620 = vld [vmem:[#allocation4 + $0x138] sm:$0xff]
      %v5621 = vld [vmem:[#allocation4 + $0x140] sm:$0xf]
      %v5622 = vld [vmem:[#allocation4 + $0x144] sm:$0xff]
      %v5623 = vld [vmem:[#allocation4 + $0x14c] sm:$0xff]
      %v5624 = vld [vmem:[#allocation4 + $0x154] sm:$0xff]
      %v5625 = vld [vmem:[#allocation4 + $0x15c] sm:$0xff]
      %v5626 = vld [vmem:[#allocation4 + $0x164] sm:$0xf]
      %v5627 = vld [vmem:[#allocation4 + $0x168] sm:$0xff]
      %v5628 = vld [vmem:[#allocation4 + $0x170] sm:$0xff]
      %v5629 = vld [vmem:[#allocation4 + $0x178] sm:$0xff]
      %v5630 = vld [vmem:[#allocation4 + $0x180] sm:$0xff]
      %v5631 = vld [vmem:[#allocation4 + $0x188] sm:$0xf]
      %v5632 = vld [vmem:[#allocation4 + $0x18c] sm:$0xff]
      %v5633 = vld [vmem:[#allocation4 + $0x194] sm:$0xff]
      %v5634 = vld [vmem:[#allocation4 + $0x19c] sm:$0xff]
      %v5635 = vld [vmem:[#allocation4 + $0x1a4] sm:$0xff]
      %v5636 = vld [vmem:[#allocation4 + $0x1ac] sm:$0xf]
      %v5637 = vld [vmem:[#allocation4 + $0x1b0] sm:$0xff]
      %v5638 = vld [vmem:[#allocation4 + $0x1b8] sm:$0xff]
      %v5639 = vld [vmem:[#allocation4 + $0x1c0] sm:$0xff]
      %v5640 = vld [vmem:[#allocation4 + $0x1c8] sm:$0xff]
      %v5641 = vld [vmem:[#allocation4 + $0x1d0] sm:$0xf]
      %v5642 = vld [vmem:[#allocation4 + $0x1d4] sm:$0xff]
      %v5643 = vld [vmem:[#allocation4 + $0x1dc] sm:$0xff]
      %v5644 = vld [vmem:[#allocation4 + $0x1e4] sm:$0xff]
      %v5645 = vld [vmem:[#allocation4 + $0x1ec] sm:$0xff]
      %v5646 = vld [vmem:[#allocation4 + $0x1f4] sm:$0xf]
      %v5647 = vld [vmem:[#allocation4 + $0x1f8] sm:$0xff]
      %v5648 = vld [vmem:[#allocation4 + $0x200] sm:$0xff]
      %v5649 = vld [vmem:[#allocation4 + $0x208] sm:$0xff]
      %v5650 = vld [vmem:[#allocation4 + $0x210] sm:$0xff]
      %v5651 = vld [vmem:[#allocation4 + $0x218] sm:$0xf]
      %v5652 = vld [vmem:[#allocation4 + $0x21c] sm:$0xff]
      %v5653 = vld [vmem:[#allocation4 + $0x224] sm:$0xff]
      %v5654 = vld [vmem:[#allocation4 + $0x22c] sm:$0xff]
      %v5655 = vld [vmem:[#allocation4 + $0x234] sm:$0xff]
      %v5656 = vld [vmem:[#allocation4 + $0x23c] sm:$0xf]
      %v5657 = vld [vmem:[%s3] sm:$0xf]
      %v5658 = vld [vmem:[%s3 + $0x4] sm:$0xf]
      %v5659 = vld [vmem:[%s3 + $0x8] sm:$0xf]
      %v5660 = vld [vmem:[%s3 + $0xc] sm:$0xf]
      %v5661 = vld [vmem:[%s3 + $0x10] sm:$0xf]
      %v5662 = vld [vmem:[%s3 + $0x14] sm:$0xf]
      %v5663 = vld [vmem:[%s3 + $0x18] sm:$0xf]
      %v5664 = vld [vmem:[%s3 + $0x1c] sm:$0xf]
      %v5665 = vld [vmem:[%s3 + $0x20] sm:$0xf]
      %v5666 = vld [vmem:[%s3 + $0x24] sm:$0xf]
      %v5667 = vld [vmem:[%s3 + $0x28] sm:$0xf]
      %v5668 = vld [vmem:[%s3 + $0x2c] sm:$0xf]
      %v5669 = vld [vmem:[%s3 + $0x30] sm:$0xf]
      %v5670 = vld [vmem:[%s3 + $0x34] sm:$0xf]
      %v5671 = vld [vmem:[%s3 + $0x38] sm:$0xf]
      %v5672 = vld [vmem:[%s3 + $0x3c] sm:$0xf]
      %v5673 = vld [vmem:[%s3 + $0x40] sm:$0xf]
      %v5674 = vld [vmem:[%s3 + $0x44] sm:$0xf]
      %v5675 = vld [vmem:[%s3 + $0x48] sm:$0xf]
      %v5676 = vld [vmem:[%s3 + $0x4c] sm:$0xf]
      %v5677 = vld [vmem:[%s3 + $0x50] sm:$0xf]
      %v5678 = vld [vmem:[%s3 + $0x54] sm:$0xf]
      %v5679 = vld [vmem:[%s3 + $0x58] sm:$0xf]
      %v5680 = vld [vmem:[%s3 + $0x5c] sm:$0xf]
      %v5681 = vld [vmem:[%s3 + $0x60] sm:$0xf]
      %v5682 = vld [vmem:[%s3 + $0x64] sm:$0xf]
      %v5683 = vld [vmem:[%s3 + $0x68] sm:$0xf]
      %v5684 = vld [vmem:[%s3 + $0x6c] sm:$0xf]
      %v5685 = vld [vmem:[%s3 + $0x70] sm:$0xf]
      %v5686 = vld [vmem:[%s3 + $0x74] sm:$0xf]
      %v5687 = vld [vmem:[%s3 + $0x78] sm:$0xf]
      %v5688 = vld [vmem:[%s3 + $0x7c] sm:$0xf]
      %v5689 = vld [vmem:[%s3 + $0x80] sm:$0xf]
      %v5690 = vld [vmem:[%s3 + $0x84] sm:$0xf]
      %v5691 = vld [vmem:[%s3 + $0x88] sm:$0xf]
      %v5692 = vld [vmem:[%s3 + $0x8c] sm:$0xf]
      %v5693 = vld [vmem:[%s3 + $0x90] sm:$0xf]
      %v5694 = vld [vmem:[%s3 + $0x94] sm:$0xf]
      %v5695 = vld [vmem:[%s3 + $0x98] sm:$0xf]
      %v5696 = vld [vmem:[%s3 + $0x9c] sm:$0xf]
      %v5697 = vld [vmem:[%s3 + $0xa0] sm:$0xf]
      %v5698 = vld [vmem:[%s3 + $0xa4] sm:$0xf]
      %v5699 = vld [vmem:[%s3 + $0xa8] sm:$0xf]
      %v5700 = vld [vmem:[%s3 + $0xac] sm:$0xf]
      %v5701 = vld [vmem:[%s3 + $0xb0] sm:$0xf]
      %v5702 = vld [vmem:[%s3 + $0xb4] sm:$0xf]
      %v5703 = vld [vmem:[%s3 + $0xb8] sm:$0xf]
      %v5704 = vld [vmem:[%s3 + $0xbc] sm:$0xf]
      %v5705 = vld [vmem:[%s3 + $0xc0] sm:$0xf]
      %v5706 = vld [vmem:[%s3 + $0xc4] sm:$0xf]
      %v5707 = vld [vmem:[%s3 + $0xc8] sm:$0xf]
      %v5708 = vld [vmem:[%s3 + $0xcc] sm:$0xf]
      %v5709 = vld [vmem:[%s3 + $0xd0] sm:$0xf]
      %v5710 = vld [vmem:[%s3 + $0xd4] sm:$0xf]
      %v5711 = vld [vmem:[%s3 + $0xd8] sm:$0xf]
      %v5712 = vld [vmem:[%s3 + $0xdc] sm:$0xf]
      %v5713 = vld [vmem:[%s3 + $0xe0] sm:$0xf]
      %v5714 = vld [vmem:[%s3 + $0xe4] sm:$0xf]
      %v5715 = vld [vmem:[%s3 + $0xe8] sm:$0xf]
      %v5716 = vld [vmem:[%s3 + $0xec] sm:$0xf]
      %v5717 = vld [vmem:[%s3 + $0xf0] sm:$0xf]
      %v5718 = vld [vmem:[%s3 + $0xf4] sm:$0xf]
      %v5719 = vld [vmem:[%s3 + $0xf8] sm:$0xf]
      %v5720 = vld [vmem:[%s3 + $0xfc] sm:$0xf]
      %v5721 = vld [vmem:[%s3 + $0x100] sm:$0xf]
      %v5722 = vld [vmem:[%s3 + $0x104] sm:$0xf]
      %v5723 = vld [vmem:[%s3 + $0x108] sm:$0xf]
      %v5724 = vld [vmem:[%s3 + $0x10c] sm:$0xf]
      %v5725 = vld [vmem:[%s3 + $0x110] sm:$0xf]
      %v5726 = vld [vmem:[%s3 + $0x114] sm:$0xf]
      %v5727 = vld [vmem:[%s3 + $0x118] sm:$0xf]
      %v5728 = vld [vmem:[%s3 + $0x11c] sm:$0xf]
      %v5729 = vld [vmem:[%s3 + $0x120] sm:$0xf]
      %v5730 = vld [vmem:[%s3 + $0x124] sm:$0xf]
      %v5731 = vld [vmem:[%s3 + $0x128] sm:$0xf]
      %v5732 = vld [vmem:[%s3 + $0x12c] sm:$0xf]
      %v5733 = vld [vmem:[%s3 + $0x130] sm:$0xf]
      %v5734 = vld [vmem:[%s3 + $0x134] sm:$0xf]
      %v5735 = vld [vmem:[%s3 + $0x138] sm:$0xf]
      %v5736 = vld [vmem:[%s3 + $0x13c] sm:$0xf]
      %v5737 = vld [vmem:[%s3 + $0x140] sm:$0xf]
      %v5738 = vld [vmem:[%s3 + $0x144] sm:$0xf]
      %v5739 = vld [vmem:[%s3 + $0x148] sm:$0xf]
      %v5740 = vld [vmem:[%s3 + $0x14c] sm:$0xf]
      %v5741 = vld [vmem:[%s3 + $0x150] sm:$0xf]
      %v5742 = vld [vmem:[%s3 + $0x154] sm:$0xf]
      %v5743 = vld [vmem:[%s3 + $0x158] sm:$0xf]
      %v5744 = vld [vmem:[%s3 + $0x15c] sm:$0xf]
      %v5745 = vld [vmem:[%s3 + $0x160] sm:$0xf]
      %v5746 = vld [vmem:[%s3 + $0x164] sm:$0xf]
      %v5747 = vld [vmem:[%s3 + $0x168] sm:$0xf]
      %v5748 = vld [vmem:[%s3 + $0x16c] sm:$0xf]
      %v5749 = vld [vmem:[%s3 + $0x170] sm:$0xf]
      %v5750 = vld [vmem:[%s3 + $0x174] sm:$0xf]
      %v5751 = vld [vmem:[%s3 + $0x178] sm:$0xf]
      %v5752 = vld [vmem:[%s3 + $0x17c] sm:$0xf]
      %v5753 = vld [vmem:[%s3 + $0x180] sm:$0xf]
      %v5754 = vld [vmem:[%s3 + $0x184] sm:$0xf]
      %v5755 = vld [vmem:[%s3 + $0x188] sm:$0xf]
      %v5756 = vld [vmem:[%s3 + $0x18c] sm:$0xf]
      %v5757 = vld [vmem:[%s3 + $0x190] sm:$0xf]
      %v5758 = vld [vmem:[%s3 + $0x194] sm:$0xf]
      %v5759 = vld [vmem:[%s3 + $0x198] sm:$0xf]
      %v5760 = vld [vmem:[%s3 + $0x19c] sm:$0xf]
      %v5761 = vld [vmem:[%s3 + $0x1a0] sm:$0xf]
      %v5762 = vld [vmem:[%s3 + $0x1a4] sm:$0xf]
      %v5763 = vld [vmem:[%s3 + $0x1a8] sm:$0xf]
      %v5764 = vld [vmem:[%s3 + $0x1ac] sm:$0xf]
      %v5765 = vld [vmem:[%s3 + $0x1b0] sm:$0xf]
      %v5766 = vld [vmem:[%s3 + $0x1b4] sm:$0xf]
      %v5767 = vld [vmem:[%s3 + $0x1b8] sm:$0xf]
      %v5768 = vld [vmem:[%s3 + $0x1bc] sm:$0xf]
      %v5769 = vld [vmem:[%s3 + $0x1c0] sm:$0xf]
      %v5770 = vld [vmem:[%s3 + $0x1c4] sm:$0xf]
      %v5771 = vld [vmem:[%s3 + $0x1c8] sm:$0xf]
      %v5772 = vld [vmem:[%s3 + $0x1cc] sm:$0xf]
      %v5773 = vld [vmem:[%s3 + $0x1d0] sm:$0xf]
      %v5774 = vld [vmem:[%s3 + $0x1d4] sm:$0xf]
      %v5775 = vld [vmem:[%s3 + $0x1d8] sm:$0xf]
      %v5776 = vld [vmem:[%s3 + $0x1dc] sm:$0xf]
      %v5777 = vld [vmem:[%s3 + $0x1e0] sm:$0xf]
      %v5778 = vld [vmem:[%s3 + $0x1e4] sm:$0xf]
      %v5779 = vld [vmem:[%s3 + $0x1e8] sm:$0xf]
      %v5780 = vld [vmem:[%s3 + $0x1ec] sm:$0xf]
      %v5781 = vld [vmem:[%s3 + $0x1f0] sm:$0xf]
      %v5782 = vld [vmem:[%s3 + $0x1f4] sm:$0xf]
      %v5783 = vld [vmem:[%s3 + $0x1f8] sm:$0xf]
      %v5784 = vld [vmem:[%s3 + $0x1fc] sm:$0xf]
      %v5785 = vld [vmem:[%s3 + $0x200] sm:$0xf]
      %v5786 = vld [vmem:[%s3 + $0x204] sm:$0xf]
      %v5787 = vld [vmem:[%s3 + $0x208] sm:$0xf]
      %v5788 = vld [vmem:[%s3 + $0x20c] sm:$0xf]
      %v5789 = vld [vmem:[%s3 + $0x210] sm:$0xf]
      %v5790 = vld [vmem:[%s3 + $0x214] sm:$0xf]
      %v5791 = vld [vmem:[%s3 + $0x218] sm:$0xf]
      %v5792 = vld [vmem:[%s3 + $0x21c] sm:$0xf]
      %v5793 = vld [vmem:[%s3 + $0x220] sm:$0xf]
      %v5794 = vld [vmem:[%s3 + $0x224] sm:$0xf]
      %v5795 = vld [vmem:[%s3 + $0x228] sm:$0xf]
      %v5796 = vld [vmem:[%s3 + $0x22c] sm:$0xf]
      %v5797 = vld [vmem:[%s3 + $0x230] sm:$0xf]
      %v5798 = vld [vmem:[%s3 + $0x234] sm:$0xf]
      %v5799 = vld [vmem:[%s3 + $0x238] sm:$0xf]
      %v5800 = vld [vmem:[%s3 + $0x23c] sm:$0xf]
      %v5801 = vld [vmem:[%s4] sm:$0x1]
      %v5803 = vlaneseq
      %v5804 = vshrl.u32 %v5803, 7
      %v5805 = vsub.s32 0, %v5804
      %v5806 = vrot.slane %v5801, %v5805
      %v5888 = vunpack.c.l.b16 %v5577
      %v5889 = vunpack.c.h.b16 %v5577
      %v5890 = vunpack.c.l.b16 %v5578
      %v5891 = vunpack.c.h.b16 %v5578
      %v5892 = vunpack.c.l.b16 %v5579
      %v5893 = vunpack.c.h.b16 %v5579
      %v5894 = vunpack.c.l.b16 %v5580
      %v5895 = vunpack.c.h.b16 %v5580
      %v5896 = vunpack.c.l.b16 %v5581
      %v5897 = vunpack.c.l.b16 %v5582
      %v5898 = vunpack.c.h.b16 %v5582
      %v5899 = vunpack.c.l.b16 %v5583
      %v5900 = vunpack.c.h.b16 %v5583
      %v5901 = vunpack.c.l.b16 %v5584
      %v5902 = vunpack.c.h.b16 %v5584
      %v5903 = vunpack.c.l.b16 %v5585
      %v5904 = vunpack.c.h.b16 %v5585
      %v5905 = vunpack.c.l.b16 %v5586
      %v5906 = vunpack.c.l.b16 %v5587
      %v5907 = vunpack.c.h.b16 %v5587
      %v5908 = vunpack.c.l.b16 %v5588
      %v5909 = vunpack.c.h.b16 %v5588
      %v5910 = vunpack.c.l.b16 %v5589
      %v5911 = vunpack.c.h.b16 %v5589
      %v5912 = vunpack.c.l.b16 %v5590
      %v5913 = vunpack.c.h.b16 %v5590
      %v5914 = vunpack.c.l.b16 %v5591
      %v5915 = vunpack.c.l.b16 %v5592
      %v5916 = vunpack.c.h.b16 %v5592
      %v5917 = vunpack.c.l.b16 %v5593
      %v5918 = vunpack.c.h.b16 %v5593
      %v5919 = vunpack.c.l.b16 %v5594
      %v5920 = vunpack.c.h.b16 %v5594
      %v5921 = vunpack.c.l.b16 %v5595
      %v5922 = vunpack.c.h.b16 %v5595
      %v5923 = vunpack.c.l.b16 %v5596
      %v5924 = vunpack.c.l.b16 %v5597
      %v5925 = vunpack.c.h.b16 %v5597
      %v5926 = vunpack.c.l.b16 %v5598
      %v5927 = vunpack.c.h.b16 %v5598
      %v5928 = vunpack.c.l.b16 %v5599
      %v5929 = vunpack.c.h.b16 %v5599
      %v5930 = vunpack.c.l.b16 %v5600
      %v5931 = vunpack.c.h.b16 %v5600
      %v5932 = vunpack.c.l.b16 %v5601
      %v5933 = vunpack.c.l.b16 %v5602
      %v5934 = vunpack.c.h.b16 %v5602
      %v5935 = vunpack.c.l.b16 %v5603
      %v5936 = vunpack.c.h.b16 %v5603
      %v5937 = vunpack.c.l.b16 %v5604
      %v5938 = vunpack.c.h.b16 %v5604
      %v5939 = vunpack.c.l.b16 %v5605
      %v5940 = vunpack.c.h.b16 %v5605
      %v5941 = vunpack.c.l.b16 %v5606
      %v5942 = vunpack.c.l.b16 %v5607
      %v5943 = vunpack.c.h.b16 %v5607
      %v5944 = vunpack.c.l.b16 %v5608
      %v5945 = vunpack.c.h.b16 %v5608
      %v5946 = vunpack.c.l.b16 %v5609
      %v5947 = vunpack.c.h.b16 %v5609
      %v5948 = vunpack.c.l.b16 %v5610
      %v5949 = vunpack.c.h.b16 %v5610
      %v5950 = vunpack.c.l.b16 %v5611
      %v5951 = vunpack.c.l.b16 %v5612
      %v5952 = vunpack.c.h.b16 %v5612
      %v5953 = vunpack.c.l.b16 %v5613
      %v5954 = vunpack.c.h.b16 %v5613
      %v5955 = vunpack.c.l.b16 %v5614
      %v5956 = vunpack.c.h.b16 %v5614
      %v5957 = vunpack.c.l.b16 %v5615
      %v5958 = vunpack.c.h.b16 %v5615
      %v5959 = vunpack.c.l.b16 %v5616
      %v5960 = vunpack.c.l.b16 %v5617
      %v5961 = vunpack.c.h.b16 %v5617
      %v5962 = vunpack.c.l.b16 %v5618
      %v5963 = vunpack.c.h.b16 %v5618
      %v5964 = vunpack.c.l.b16 %v5619
      %v5965 = vunpack.c.h.b16 %v5619
      %v5966 = vunpack.c.l.b16 %v5620
      %v5967 = vunpack.c.h.b16 %v5620
      %v5968 = vunpack.c.l.b16 %v5621
      %v5969 = vunpack.c.l.b16 %v5622
      %v5970 = vunpack.c.h.b16 %v5622
      %v5971 = vunpack.c.l.b16 %v5623
      %v5972 = vunpack.c.h.b16 %v5623
      %v5973 = vunpack.c.l.b16 %v5624
      %v5974 = vunpack.c.h.b16 %v5624
      %v5975 = vunpack.c.l.b16 %v5625
      %v5976 = vunpack.c.h.b16 %v5625
      %v5977 = vunpack.c.l.b16 %v5626
      %v5978 = vunpack.c.l.b16 %v5627
      %v5979 = vunpack.c.h.b16 %v5627
      %v5980 = vunpack.c.l.b16 %v5628
      %v5981 = vunpack.c.h.b16 %v5628
      %v5982 = vunpack.c.l.b16 %v5629
      %v5983 = vunpack.c.h.b16 %v5629
      %v5984 = vunpack.c.l.b16 %v5630
      %v5985 = vunpack.c.h.b16 %v5630
      %v5986 = vunpack.c.l.b16 %v5631
      %v5987 = vunpack.c.l.b16 %v5632
      %v5988 = vunpack.c.h.b16 %v5632
      %v5989 = vunpack.c.l.b16 %v5633
      %v5990 = vunpack.c.h.b16 %v5633
      %v5991 = vunpack.c.l.b16 %v5634
      %v5992 = vunpack.c.h.b16 %v5634
      %v5993 = vunpack.c.l.b16 %v5635
      %v5994 = vunpack.c.h.b16 %v5635
      %v5995 = vunpack.c.l.b16 %v5636
      %v5996 = vunpack.c.l.b16 %v5637
      %v5997 = vunpack.c.h.b16 %v5637
      %v5998 = vunpack.c.l.b16 %v5638
      %v5999 = vunpack.c.h.b16 %v5638
      %v6000 = vunpack.c.l.b16 %v5639
      %v6001 = vunpack.c.h.b16 %v5639
      %v6002 = vunpack.c.l.b16 %v5640
      %v6003 = vunpack.c.h.b16 %v5640
      %v6004 = vunpack.c.l.b16 %v5641
      %v6005 = vunpack.c.l.b16 %v5642
      %v6006 = vunpack.c.h.b16 %v5642
      %v6007 = vunpack.c.l.b16 %v5643
      %v6008 = vunpack.c.h.b16 %v5643
      %v6009 = vunpack.c.l.b16 %v5644
      %v6010 = vunpack.c.h.b16 %v5644
      %v6011 = vunpack.c.l.b16 %v5645
      %v6012 = vunpack.c.h.b16 %v5645
      %v6013 = vunpack.c.l.b16 %v5646
      %v6014 = vunpack.c.l.b16 %v5647
      %v6015 = vunpack.c.h.b16 %v5647
      %v6016 = vunpack.c.l.b16 %v5648
      %v6017 = vunpack.c.h.b16 %v5648
      %v6018 = vunpack.c.l.b16 %v5649
      %v6019 = vunpack.c.h.b16 %v5649
      %v6020 = vunpack.c.l.b16 %v5650
      %v6021 = vunpack.c.h.b16 %v5650
      %v6022 = vunpack.c.l.b16 %v5651
      %v6023 = vunpack.c.l.b16 %v5652
      %v6024 = vunpack.c.h.b16 %v5652
      %v6025 = vunpack.c.l.b16 %v5653
      %v6026 = vunpack.c.h.b16 %v5653
      %v6027 = vunpack.c.l.b16 %v5654
      %v6028 = vunpack.c.h.b16 %v5654
      %v6029 = vunpack.c.l.b16 %v5655
      %v6030 = vunpack.c.h.b16 %v5655
      %v6031 = vunpack.c.l.b16 %v5656
      %v6032 = vpack.c.b16 %v5897, %v5888
      %v6033 = vpack.c.b16 %v5898, %v5889
      %v6034 = vpack.c.b16 %v5899, %v5890
      %v6035 = vpack.c.b16 %v5900, %v5891
      %v6036 = vpack.c.b16 %v5901, %v5892
      %v6037 = vpack.c.b16 %v5902, %v5893
      %v6038 = vpack.c.b16 %v5903, %v5894
      %v6039 = vpack.c.b16 %v5904, %v5895
      %v6040 = vpack.c.b16 %v5905, %v5896
      %v6041 = vpack.c.b16 %v5915, %v5906
      %v6042 = vpack.c.b16 %v5916, %v5907
      %v6043 = vpack.c.b16 %v5917, %v5908
      %v6044 = vpack.c.b16 %v5918, %v5909
      %v6045 = vpack.c.b16 %v5919, %v5910
      %v6046 = vpack.c.b16 %v5920, %v5911
      %v6047 = vpack.c.b16 %v5921, %v5912
      %v6048 = vpack.c.b16 %v5922, %v5913
      %v6049 = vpack.c.b16 %v5923, %v5914
      %v6050 = vpack.c.b16 %v5933, %v5924
      %v6051 = vpack.c.b16 %v5934, %v5925
      %v6052 = vpack.c.b16 %v5935, %v5926
      %v6053 = vpack.c.b16 %v5936, %v5927
      %v6054 = vpack.c.b16 %v5937, %v5928
      %v6055 = vpack.c.b16 %v5938, %v5929
      %v6056 = vpack.c.b16 %v5939, %v5930
      %v6057 = vpack.c.b16 %v5940, %v5931
      %v6058 = vpack.c.b16 %v5941, %v5932
      %v6059 = vpack.c.b16 %v5951, %v5942
      %v6060 = vpack.c.b16 %v5952, %v5943
      %v6061 = vpack.c.b16 %v5953, %v5944
      %v6062 = vpack.c.b16 %v5954, %v5945
      %v6063 = vpack.c.b16 %v5955, %v5946
      %v6064 = vpack.c.b16 %v5956, %v5947
      %v6065 = vpack.c.b16 %v5957, %v5948
      %v6066 = vpack.c.b16 %v5958, %v5949
      %v6067 = vpack.c.b16 %v5959, %v5950
      %v6068 = vpack.c.b16 %v5969, %v5960
      %v6069 = vpack.c.b16 %v5970, %v5961
      %v6070 = vpack.c.b16 %v5971, %v5962
      %v6071 = vpack.c.b16 %v5972, %v5963
      %v6072 = vpack.c.b16 %v5973, %v5964
      %v6073 = vpack.c.b16 %v5974, %v5965
      %v6074 = vpack.c.b16 %v5975, %v5966
      %v6075 = vpack.c.b16 %v5976, %v5967
      %v6076 = vpack.c.b16 %v5977, %v5968
      %v6077 = vpack.c.b16 %v5987, %v5978
      %v6078 = vpack.c.b16 %v5988, %v5979
      %v6079 = vpack.c.b16 %v5989, %v5980
      %v6080 = vpack.c.b16 %v5990, %v5981
      %v6081 = vpack.c.b16 %v5991, %v5982
      %v6082 = vpack.c.b16 %v5992, %v5983
      %v6083 = vpack.c.b16 %v5993, %v5984
      %v6084 = vpack.c.b16 %v5994, %v5985
      %v6085 = vpack.c.b16 %v5995, %v5986
      %v6086 = vpack.c.b16 %v6005, %v5996
      %v6087 = vpack.c.b16 %v6006, %v5997
      %v6088 = vpack.c.b16 %v6007, %v5998
      %v6089 = vpack.c.b16 %v6008, %v5999
      %v6090 = vpack.c.b16 %v6009, %v6000
      %v6091 = vpack.c.b16 %v6010, %v6001
      %v6092 = vpack.c.b16 %v6011, %v6002
      %v6093 = vpack.c.b16 %v6012, %v6003
      %v6094 = vpack.c.b16 %v6013, %v6004
      %v6095 = vpack.c.b16 %v6023, %v6014
      %v6096 = vpack.c.b16 %v6024, %v6015
      %v6097 = vpack.c.b16 %v6025, %v6016
      %v6098 = vpack.c.b16 %v6026, %v6017
      %v6099 = vpack.c.b16 %v6027, %v6018
      %v6100 = vpack.c.b16 %v6028, %v6019
      %v6101 = vpack.c.b16 %v6029, %v6020
      %v6102 = vpack.c.b16 %v6030, %v6021
      %v6103 = vpack.c.b16 %v6031, %v6022
      %v6320 = vunpack.c.l.b16 %v5657
      %v6321 = vunpack.c.l.b16 %v5658
      %v6322 = vunpack.c.l.b16 %v5659
      %v6323 = vunpack.c.l.b16 %v5660
      %v6324 = vunpack.c.l.b16 %v5661
      %v6325 = vunpack.c.l.b16 %v5662
      %v6326 = vunpack.c.l.b16 %v5663
      %v6327 = vunpack.c.l.b16 %v5664
      %v6328 = vunpack.c.l.b16 %v5665
      %v6329 = vunpack.c.l.b16 %v5666
      %v6330 = vunpack.c.l.b16 %v5667
      %v6331 = vunpack.c.l.b16 %v5668
      %v6332 = vunpack.c.l.b16 %v5669
      %v6333 = vunpack.c.l.b16 %v5670
      %v6334 = vunpack.c.l.b16 %v5671
      %v6335 = vunpack.c.l.b16 %v5672
      %v6336 = vunpack.c.l.b16 %v5673
      %v6337 = vunpack.c.l.b16 %v5674
      %v6338 = vunpack.c.l.b16 %v5675
      %v6339 = vunpack.c.l.b16 %v5676
      %v6340 = vunpack.c.l.b16 %v5677
      %v6341 = vunpack.c.l.b16 %v5678
      %v6342 = vunpack.c.l.b16 %v5679
      %v6343 = vunpack.c.l.b16 %v5680
      %v6344 = vunpack.c.l.b16 %v5681
      %v6345 = vunpack.c.l.b16 %v5682
      %v6346 = vunpack.c.l.b16 %v5683
      %v6347 = vunpack.c.l.b16 %v5684
      %v6348 = vunpack.c.l.b16 %v5685
      %v6349 = vunpack.c.l.b16 %v5686
      %v6350 = vunpack.c.l.b16 %v5687
      %v6351 = vunpack.c.l.b16 %v5688
      %v6352 = vunpack.c.l.b16 %v5689
      %v6353 = vunpack.c.l.b16 %v5690
      %v6354 = vunpack.c.l.b16 %v5691
      %v6355 = vunpack.c.l.b16 %v5692
      %v6356 = vunpack.c.l.b16 %v5693
      %v6357 = vunpack.c.l.b16 %v5694
      %v6358 = vunpack.c.l.b16 %v5695
      %v6359 = vunpack.c.l.b16 %v5696
      %v6360 = vunpack.c.l.b16 %v5697
      %v6361 = vunpack.c.l.b16 %v5698
      %v6362 = vunpack.c.l.b16 %v5699
      %v6363 = vunpack.c.l.b16 %v5700
      %v6364 = vunpack.c.l.b16 %v5701
      %v6365 = vunpack.c.l.b16 %v5702
      %v6366 = vunpack.c.l.b16 %v5703
      %v6367 = vunpack.c.l.b16 %v5704
      %v6368 = vunpack.c.l.b16 %v5705
      %v6369 = vunpack.c.l.b16 %v5706
      %v6370 = vunpack.c.l.b16 %v5707
      %v6371 = vunpack.c.l.b16 %v5708
      %v6372 = vunpack.c.l.b16 %v5709
      %v6373 = vunpack.c.l.b16 %v5710
      %v6374 = vunpack.c.l.b16 %v5711
      %v6375 = vunpack.c.l.b16 %v5712
      %v6376 = vunpack.c.l.b16 %v5713
      %v6377 = vunpack.c.l.b16 %v5714
      %v6378 = vunpack.c.l.b16 %v5715
      %v6379 = vunpack.c.l.b16 %v5716
      %v6380 = vunpack.c.l.b16 %v5717
      %v6381 = vunpack.c.l.b16 %v5718
      %v6382 = vunpack.c.l.b16 %v5719
      %v6383 = vunpack.c.l.b16 %v5720
      %v6384 = vunpack.c.l.b16 %v5721
      %v6385 = vunpack.c.l.b16 %v5722
      %v6386 = vunpack.c.l.b16 %v5723
      %v6387 = vunpack.c.l.b16 %v5724
      %v6388 = vunpack.c.l.b16 %v5725
      %v6389 = vunpack.c.l.b16 %v5726
      %v6390 = vunpack.c.l.b16 %v5727
      %v6391 = vunpack.c.l.b16 %v5728
      %v6392 = vunpack.c.l.b16 %v5729
      %v6393 = vunpack.c.l.b16 %v5730
      %v6394 = vunpack.c.l.b16 %v5731
      %v6395 = vunpack.c.l.b16 %v5732
      %v6396 = vunpack.c.l.b16 %v5733
      %v6397 = vunpack.c.l.b16 %v5734
      %v6398 = vunpack.c.l.b16 %v5735
      %v6399 = vunpack.c.l.b16 %v5736
      %v6400 = vunpack.c.l.b16 %v5737
      %v6401 = vunpack.c.l.b16 %v5738
      %v6402 = vunpack.c.l.b16 %v5739
      %v6403 = vunpack.c.l.b16 %v5740
      %v6404 = vunpack.c.l.b16 %v5741
      %v6405 = vunpack.c.l.b16 %v5742
      %v6406 = vunpack.c.l.b16 %v5743
      %v6407 = vunpack.c.l.b16 %v5744
      %v6408 = vunpack.c.l.b16 %v5745
      %v6409 = vunpack.c.l.b16 %v5746
      %v6410 = vunpack.c.l.b16 %v5747
      %v6411 = vunpack.c.l.b16 %v5748
      %v6412 = vunpack.c.l.b16 %v5749
      %v6413 = vunpack.c.l.b16 %v5750
      %v6414 = vunpack.c.l.b16 %v5751
      %v6415 = vunpack.c.l.b16 %v5752
      %v6416 = vunpack.c.l.b16 %v5753
      %v6417 = vunpack.c.l.b16 %v5754
      %v6418 = vunpack.c.l.b16 %v5755
      %v6419 = vunpack.c.l.b16 %v5756
      %v6420 = vunpack.c.l.b16 %v5757
      %v6421 = vunpack.c.l.b16 %v5758
      %v6422 = vunpack.c.l.b16 %v5759
      %v6423 = vunpack.c.l.b16 %v5760
      %v6424 = vunpack.c.l.b16 %v5761
      %v6425 = vunpack.c.l.b16 %v5762
      %v6426 = vunpack.c.l.b16 %v5763
      %v6427 = vunpack.c.l.b16 %v5764
      %v6428 = vunpack.c.l.b16 %v5765
      %v6429 = vunpack.c.l.b16 %v5766
      %v6430 = vunpack.c.l.b16 %v5767
      %v6431 = vunpack.c.l.b16 %v5768
      %v6432 = vunpack.c.l.b16 %v5769
      %v6433 = vunpack.c.l.b16 %v5770
      %v6434 = vunpack.c.l.b16 %v5771
      %v6435 = vunpack.c.l.b16 %v5772
      %v6436 = vunpack.c.l.b16 %v5773
      %v6437 = vunpack.c.l.b16 %v5774
      %v6438 = vunpack.c.l.b16 %v5775
      %v6439 = vunpack.c.l.b16 %v5776
      %v6440 = vunpack.c.l.b16 %v5777
      %v6441 = vunpack.c.l.b16 %v5778
      %v6442 = vunpack.c.l.b16 %v5779
      %v6443 = vunpack.c.l.b16 %v5780
      %v6444 = vunpack.c.l.b16 %v5781
      %v6445 = vunpack.c.l.b16 %v5782
      %v6446 = vunpack.c.l.b16 %v5783
      %v6447 = vunpack.c.l.b16 %v5784
      %v6448 = vunpack.c.l.b16 %v5785
      %v6449 = vunpack.c.l.b16 %v5786
      %v6450 = vunpack.c.l.b16 %v5787
      %v6451 = vunpack.c.l.b16 %v5788
      %v6452 = vunpack.c.l.b16 %v5789
      %v6453 = vunpack.c.l.b16 %v5790
      %v6454 = vunpack.c.l.b16 %v5791
      %v6455 = vunpack.c.l.b16 %v5792
      %v6456 = vunpack.c.l.b16 %v5793
      %v6457 = vunpack.c.l.b16 %v5794
      %v6458 = vunpack.c.l.b16 %v5795
      %v6459 = vunpack.c.l.b16 %v5796
      %v6460 = vunpack.c.l.b16 %v5797
      %v6461 = vunpack.c.l.b16 %v5798
      %v6462 = vunpack.c.l.b16 %v5799
      %v6463 = vunpack.c.l.b16 %v5800
      %v6464 = vpack.c.b16 %v6321, %v6320
      %v6465 = vpack.c.b16 %v6323, %v6322
      %v6466 = vpack.c.b16 %v6325, %v6324
      %v6467 = vpack.c.b16 %v6327, %v6326
      %v6468 = vpack.c.b16 %v6329, %v6328
      %v6469 = vpack.c.b16 %v6331, %v6330
      %v6470 = vpack.c.b16 %v6333, %v6332
      %v6471 = vpack.c.b16 %v6335, %v6334
      %v6472 = vpack.c.b16 %v6337, %v6336
      %v6473 = vpack.c.b16 %v6339, %v6338
      %v6474 = vpack.c.b16 %v6341, %v6340
      %v6475 = vpack.c.b16 %v6343, %v6342
      %v6476 = vpack.c.b16 %v6345, %v6344
      %v6477 = vpack.c.b16 %v6347, %v6346
      %v6478 = vpack.c.b16 %v6349, %v6348
      %v6479 = vpack.c.b16 %v6351, %v6350
      %v6480 = vpack.c.b16 %v6353, %v6352
      %v6481 = vpack.c.b16 %v6355, %v6354
      %v6482 = vpack.c.b16 %v6357, %v6356
      %v6483 = vpack.c.b16 %v6359, %v6358
      %v6484 = vpack.c.b16 %v6361, %v6360
      %v6485 = vpack.c.b16 %v6363, %v6362
      %v6486 = vpack.c.b16 %v6365, %v6364
      %v6487 = vpack.c.b16 %v6367, %v6366
      %v6488 = vpack.c.b16 %v6369, %v6368
      %v6489 = vpack.c.b16 %v6371, %v6370
      %v6490 = vpack.c.b16 %v6373, %v6372
      %v6491 = vpack.c.b16 %v6375, %v6374
      %v6492 = vpack.c.b16 %v6377, %v6376
      %v6493 = vpack.c.b16 %v6379, %v6378
      %v6494 = vpack.c.b16 %v6381, %v6380
      %v6495 = vpack.c.b16 %v6383, %v6382
      %v6496 = vpack.c.b16 %v6385, %v6384
      %v6497 = vpack.c.b16 %v6387, %v6386
      %v6498 = vpack.c.b16 %v6389, %v6388
      %v6499 = vpack.c.b16 %v6391, %v6390
      %v6500 = vpack.c.b16 %v6393, %v6392
      %v6501 = vpack.c.b16 %v6395, %v6394
      %v6502 = vpack.c.b16 %v6397, %v6396
      %v6503 = vpack.c.b16 %v6399, %v6398
      %v6504 = vpack.c.b16 %v6401, %v6400
      %v6505 = vpack.c.b16 %v6403, %v6402
      %v6506 = vpack.c.b16 %v6405, %v6404
      %v6507 = vpack.c.b16 %v6407, %v6406
      %v6508 = vpack.c.b16 %v6409, %v6408
      %v6509 = vpack.c.b16 %v6411, %v6410
      %v6510 = vpack.c.b16 %v6413, %v6412
      %v6511 = vpack.c.b16 %v6415, %v6414
      %v6512 = vpack.c.b16 %v6417, %v6416
      %v6513 = vpack.c.b16 %v6419, %v6418
      %v6514 = vpack.c.b16 %v6421, %v6420
      %v6515 = vpack.c.b16 %v6423, %v6422
      %v6516 = vpack.c.b16 %v6425, %v6424
      %v6517 = vpack.c.b16 %v6427, %v6426
      %v6518 = vpack.c.b16 %v6429, %v6428
      %v6519 = vpack.c.b16 %v6431, %v6430
      %v6520 = vpack.c.b16 %v6433, %v6432
      %v6521 = vpack.c.b16 %v6435, %v6434
      %v6522 = vpack.c.b16 %v6437, %v6436
      %v6523 = vpack.c.b16 %v6439, %v6438
      %v6524 = vpack.c.b16 %v6441, %v6440
      %v6525 = vpack.c.b16 %v6443, %v6442
      %v6526 = vpack.c.b16 %v6445, %v6444
      %v6527 = vpack.c.b16 %v6447, %v6446
      %v6528 = vpack.c.b16 %v6449, %v6448
      %v6529 = vpack.c.b16 %v6451, %v6450
      %v6530 = vpack.c.b16 %v6453, %v6452
      %v6531 = vpack.c.b16 %v6455, %v6454
      %v6532 = vpack.c.b16 %v6457, %v6456
      %v6533 = vpack.c.b16 %v6459, %v6458
      %v6534 = vpack.c.b16 %v6461, %v6460
      %v6535 = vpack.c.b16 %v6463, %v6462
      %6608 = vmatprep.subr.bf16.mxu0 0
      %6609 = vmatpush1.bf16.msra.mxu0 %v6464
      %6610 = vmatprep.subr.bf16.mxu0 0
      %6611 = vmatpush1.bf16.msra.mxu0 %v6465
      %6612 = vmatprep.subr.bf16.mxu0 0
      %6613 = vmatpush1.bf16.msra.mxu0 %v6466
      %6614 = vmatprep.subr.bf16.mxu0 0
      %6615 = vmatpush1.bf16.msra.mxu0 %v6467
      %6616 = vmatprep.subr.bf16.mxu0 0
      %6617 = vmatpush1.bf16.msra.mxu0 %v6468
      %6618 = vmatprep.subr.bf16.mxu0 0
      %6619 = vmatpush1.bf16.msra.mxu0 %v6469
      %6620 = vmatprep.subr.bf16.mxu0 0
      %6621 = vmatpush1.bf16.msra.mxu0 %v6470
      %6622 = vmatprep.subr.bf16.mxu0 0
      %6623 = vmatpush1.bf16.msra.mxu0 %v6471
      %6624 = vmatprep.subr.bf16.mxu0 0
      %6625 = vmatpush1.bf16.msra.mxu0 %v6472
      %6626 = vmatprep.subr.bf16.mxu0 0
      %6627 = vmatpush1.bf16.msra.mxu0 %v6473
      %6628 = vmatprep.subr.bf16.mxu0 0
      %6629 = vmatpush1.bf16.msra.mxu0 %v6474
      %6630 = vmatprep.subr.bf16.mxu0 0
      %6631 = vmatpush1.bf16.msra.mxu0 %v6475
      %6632 = vmatprep.subr.bf16.mxu0 0
      %6633 = vmatpush1.bf16.msra.mxu0 %v6476
      %6634 = vmatprep.subr.bf16.mxu0 0
      %6635 = vmatpush1.bf16.msra.mxu0 %v6477
      %6636 = vmatprep.subr.bf16.mxu0 0
      %6637 = vmatpush1.bf16.msra.mxu0 %v6478
      %6638 = vmatprep.subr.bf16.mxu0 0
      %6639 = vmatpush1.bf16.msra.mxu0 %v6479
      %6640 = vmatprep.mubr.bf16.mxu0 %v6033
      %6641 = vmatmul.mubr.bf16.gmra.mrb[0].mxu0 %v6032
      %v6642 = vpop.f32.mrb[0].mxu0
      %v6643 = vadd.f32 %v5806, %v6642
      %v6644 = vpop.f32.mrb[0].mxu0
      %v6645 = vpop.f32.mrb[0].mxu0
      %v6646 = vadd.f32 %v5806, %v6645
      %v6647 = vpop.f32.mrb[0].mxu0
      %6648 = vmatprep.mubr.bf16.mxu0 %v6042
      %6649 = vmatmul.mubr.bf16.gmra.mrb[0].mxu0 %v6041
      %v6650 = vpop.f32.mrb[0].mxu0
      %v6651 = vadd.f32 %v5806, %v6650
      %v6652 = vpop.f32.mrb[0].mxu0
      %v6653 = vpop.f32.mrb[0].mxu0
      %v6654 = vadd.f32 %v5806, %v6653
      %v6655 = vpop.f32.mrb[0].mxu0
      %6656 = vmatprep.mubr.bf16.mxu0 %v6051
      %6657 = vmatmul.mubr.bf16.gmra.mrb[0].mxu0 %v6050
      %v6658 = vpop.f32.mrb[0].mxu0
      %v6659 = vadd.f32 %v5806, %v6658
      %v6660 = vpop.f32.mrb[0].mxu0
      %v6661 = vpop.f32.mrb[0].mxu0
      %v6662 = vadd.f32 %v5806, %v6661
      %v6663 = vpop.f32.mrb[0].mxu0
      %6664 = vmatprep.mubr.bf16.mxu0 %v6060
      %6665 = vmatmul.mubr.bf16.gmra.mrb[0].mxu0 %v6059
      %v6666 = vpop.f32.mrb[0].mxu0
      %v6667 = vadd.f32 %v5806, %v6666
      %v6668 = vpop.f32.mrb[0].mxu0
      %v6669 = vpop.f32.mrb[0].mxu0
      %v6670 = vadd.f32 %v5806, %v6669
      %v6671 = vpop.f32.mrb[0].mxu0
      %6672 = vmatprep.mubr.bf16.mxu0 %v6069
      %6673 = vmatmul.mubr.bf16.gmra.mrb[0].mxu0 %v6068
      %v6674 = vpop.f32.mrb[0].mxu0
      %v6675 = vadd.f32 %v5806, %v6674
      %v6676 = vpop.f32.mrb[0].mxu0
      %v6677 = vpop.f32.mrb[0].mxu0
      %v6678 = vadd.f32 %v5806, %v6677
      %v6679 = vpop.f32.mrb[0].mxu0
      %6680 = vmatprep.mubr.bf16.mxu0 %v6078
      %6681 = vmatmul.mubr.bf16.gmra.mrb[0].mxu0 %v6077
      %v6682 = vpop.f32.mrb[0].mxu0
      %v6683 = vadd.f32 %v5806, %v6682
      %v6684 = vpop.f32.mrb[0].mxu0
      %v6685 = vpop.f32.mrb[0].mxu0
      %v6686 = vadd.f32 %v5806, %v6685
      %v6687 = vpop.f32.mrb[0].mxu0
      %6688 = vmatprep.mubr.bf16.mxu0 %v6087
      %6689 = vmatmul.mubr.bf16.gmra.mrb[0].mxu0 %v6086
      %v6690 = vpop.f32.mrb[0].mxu0
      %v6691 = vadd.f32 %v5806, %v6690
      %v6692 = vpop.f32.mrb[0].mxu0
      %v6693 = vpop.f32.mrb[0].mxu0
      %v6694 = vadd.f32 %v5806, %v6693
      %v6695 = vpop.f32.mrb[0].mxu0
      %6696 = vmatprep.mubr.bf16.mxu0 %v6096
      %6697 = vmatmul.mubr.bf16.gmra.mrb[0].mxu0 %v6095
      %v6698 = vpop.f32.mrb[0].mxu0
      %v6699 = vadd.f32 %v5806, %v6698
      %v6700 = vpop.f32.mrb[0].mxu0
      %v6701 = vpop.f32.mrb[0].mxu0
      %v6702 = vadd.f32 %v5806, %v6701
      %v6703 = vpop.f32.mrb[0].mxu0
      %6704 = vdwg.mxu0
      %6705 = vmatprep.subr.bf16.mxu0 0
      %6706 = vmatpush1.bf16.msra.mxu0 %v6480
      %6707 = vmatprep.subr.bf16.mxu0 0
      %6708 = vmatpush1.bf16.msra.mxu0 %v6481
      %6709 = vmatprep.subr.bf16.mxu0 0
      %6710 = vmatpush1.bf16.msra.mxu0 %v6482
      %6711 = vmatprep.subr.bf16.mxu0 0
      %6712 = vmatpush1.bf16.msra.mxu0 %v6483
      %6713 = vmatprep.subr.bf16.mxu0 0
      %6714 = vmatpush1.bf16.msra.mxu0 %v6484
      %6715 = vmatprep.subr.bf16.mxu0 0
      %6716 = vmatpush1.bf16.msra.mxu0 %v6485
      %6717 = vmatprep.subr.bf16.mxu0 0
      %6718 = vmatpush1.bf16.msra.mxu0 %v6486
      %6719 = vmatprep.subr.bf16.mxu0 0
      %6720 = vmatpush1.bf16.msra.mxu0 %v6487
      %6721 = vmatprep.subr.bf16.mxu0 0
      %6722 = vmatpush1.bf16.msra.mxu0 %v6488
      %6723 = vmatprep.subr.bf16.mxu0 0
      %6724 = vmatpush1.bf16.msra.mxu0 %v6489
      %6725 = vmatprep.subr.bf16.mxu0 0
      %6726 = vmatpush1.bf16.msra.mxu0 %v6490
      %6727 = vmatprep.subr.bf16.mxu0 0
      %6728 = vmatpush1.bf16.msra.mxu0 %v6491
      %6729 = vmatprep.subr.bf16.mxu0 0
      %6730 = vmatpush1.bf16.msra.mxu0 %v6492
      %6731 = vmatprep.subr.bf16.mxu0 0
      %6732 = vmatpush1.bf16.msra.mxu0 %v6493
      %6733 = vmatprep.subr.bf16.mxu0 0
      %6734 = vmatpush1.bf16.msra.mxu0 %v6494
      %6735 = vmatprep.subr.bf16.mxu0 0
      %6736 = vmatpush1.bf16.msra.mxu0 %v6495
      %6737 = vmatprep.mubr.bf16.mxu0 %v6035
      %6738 = vmatmul.mubr.bf16.gmra.mrb[0].mxu0 %v6034
      %v6739 = vpop.f32.mrb[0].mxu0
      %v6740 = vadd.f32 %v6643, %v6739
      %v6741 = vpop.f32.mrb[0].mxu0
      %v6742 = vpop.f32.mrb[0].mxu0
      %v6743 = vadd.f32 %v6646, %v6742
      %v6744 = vpop.f32.mrb[0].mxu0
      %6745 = vmatprep.mubr.bf16.mxu0 %v6044
      %6746 = vmatmul.mubr.bf16.gmra.mrb[0].mxu0 %v6043
      %v6747 = vpop.f32.mrb[0].mxu0
      %v6748 = vadd.f32 %v6651, %v6747
      %v6749 = vpop.f32.mrb[0].mxu0
      %v6750 = vpop.f32.mrb[0].mxu0
      %v6751 = vadd.f32 %v6654, %v6750
      %v6752 = vpop.f32.mrb[0].mxu0
      %6753 = vmatprep.mubr.bf16.mxu0 %v6053
      %6754 = vmatmul.mubr.bf16.gmra.mrb[0].mxu0 %v6052
      %v6755 = vpop.f32.mrb[0].mxu0
      %v6756 = vadd.f32 %v6659, %v6755
      %v6757 = vpop.f32.mrb[0].mxu0
      %v6758 = vpop.f32.mrb[0].mxu0
      %v6759 = vadd.f32 %v6662, %v6758
      %v6760 = vpop.f32.mrb[0].mxu0
      %6761 = vmatprep.mubr.bf16.mxu0 %v6062
      %6762 = vmatmul.mubr.bf16.gmra.mrb[0].mxu0 %v6061
      %v6763 = vpop.f32.mrb[0].mxu0
      %v6764 = vadd.f32 %v6667, %v6763
      %v6765 = vpop.f32.mrb[0].mxu0
      %v6766 = vpop.f32.mrb[0].mxu0
      %v6767 = vadd.f32 %v6670, %v6766
      %v6768 = vpop.f32.mrb[0].mxu0
      %6769 = vmatprep.mubr.bf16.mxu0 %v6071
      %6770 = vmatmul.mubr.bf16.gmra.mrb[0].mxu0 %v6070
      %v6771 = vpop.f32.mrb[0].mxu0
      %v6772 = vadd.f32 %v6675, %v6771
      %v6773 = vpop.f32.mrb[0].mxu0
      %v6774 = vpop.f32.mrb[0].mxu0
      %v6775 = vadd.f32 %v6678, %v6774
      %v6776 = vpop.f32.mrb[0].mxu0
      %6777 = vmatprep.mubr.bf16.mxu0 %v6080
      %6778 = vmatmul.mubr.bf16.gmra.mrb[0].mxu0 %v6079
      %v6779 = vpop.f32.mrb[0].mxu0
      %v6780 = vadd.f32 %v6683, %v6779
      %v6781 = vpop.f32.mrb[0].mxu0
      %v6782 = vpop.f32.mrb[0].mxu0
      %v6783 = vadd.f32 %v6686, %v6782
      %v6784 = vpop.f32.mrb[0].mxu0
      %6785 = vmatprep.mubr.bf16.mxu0 %v6089
      %6786 = vmatmul.mubr.bf16.gmra.mrb[0].mxu0 %v6088
      %v6787 = vpop.f32.mrb[0].mxu0
      %v6788 = vadd.f32 %v6691, %v6787
      %v6789 = vpop.f32.mrb[0].mxu0
      %v6790 = vpop.f32.mrb[0].mxu0
      %v6791 = vadd.f32 %v6694, %v6790
      %v6792 = vpop.f32.mrb[0].mxu0
      %6793 = vmatprep.mubr.bf16.mxu0 %v6098
      %6794 = vmatmul.mubr.bf16.gmra.mrb[0].mxu0 %v6097
      %v6795 = vpop.f32.mrb[0].mxu0
      %v6796 = vadd.f32 %v6699, %v6795
      %v6797 = vpop.f32.mrb[0].mxu0
      %v6798 = vpop.f32.mrb[0].mxu0
      %v6799 = vadd.f32 %v6702, %v6798
      %v6800 = vpop.f32.mrb[0].mxu0
      %6801 = vdwg.mxu0
      %6802 = vmatprep.subr.bf16.mxu0 0
      %6803 = vmatpush1.bf16.msra.mxu0 %v6496
      %6804 = vmatprep.subr.bf16.mxu0 0
      %6805 = vmatpush1.bf16.msra.mxu0 %v6497
      %6806 = vmatprep.subr.bf16.mxu0 0
      %6807 = vmatpush1.bf16.msra.mxu0 %v6498
      %6808 = vmatprep.subr.bf16.mxu0 0
      %6809 = vmatpush1.bf16.msra.mxu0 %v6499
      %6810 = vmatprep.subr.bf16.mxu0 0
      %6811 = vmatpush1.bf16.msra.mxu0 %v6500
      %6812 = vmatprep.subr.bf16.mxu0 0
      %6813 = vmatpush1.bf16.msra.mxu0 %v6501
      %6814 = vmatprep.subr.bf16.mxu0 0
      %6815 = vmatpush1.bf16.msra.mxu0 %v6502
      %6816 = vmatprep.subr.bf16.mxu0 0
      %6817 = vmatpush1.bf16.msra.mxu0 %v6503
      %6818 = vmatprep.subr.bf16.mxu0 0
      %6819 = vmatpush1.bf16.msra.mxu0 %v6504
      %6820 = vmatprep.subr.bf16.mxu0 0
      %6821 = vmatpush1.bf16.msra.mxu0 %v6505
      %6822 = vmatprep.subr.bf16.mxu0 0
      %6823 = vmatpush1.bf16.msra.mxu0 %v6506
      %6824 = vmatprep.subr.bf16.mxu0 0
      %6825 = vmatpush1.bf16.msra.mxu0 %v6507
      %6826 = vmatprep.subr.bf16.mxu0 0
      %6827 = vmatpush1.bf16.msra.mxu0 %v6508
      %6828 = vmatprep.subr.bf16.mxu0 0
      %6829 = vmatpush1.bf16.msra.mxu0 %v6509
      %6830 = vmatprep.subr.bf16.mxu0 0
      %6831 = vmatpush1.bf16.msra.mxu0 %v6510
      %6832 = vmatprep.subr.bf16.mxu0 0
      %6833 = vmatpush1.bf16.msra.mxu0 %v6511
      %6834 = vmatprep.mubr.bf16.mxu0 %v6037
      %6835 = vmatmul.mubr.bf16.gmra.mrb[0].mxu0 %v6036
      %v6836 = vpop.f32.mrb[0].mxu0
      %v6837 = vadd.f32 %v6740, %v6836
      %v6838 = vpop.f32.mrb[0].mxu0
      %v6839 = vpop.f32.mrb[0].mxu0
      %v6840 = vadd.f32 %v6743, %v6839
      %v6841 = vpop.f32.mrb[0].mxu0
      %6842 = vmatprep.mubr.bf16.mxu0 %v6046
      %6843 = vmatmul.mubr.bf16.gmra.mrb[0].mxu0 %v6045
      %v6844 = vpop.f32.mrb[0].mxu0
      %v6845 = vadd.f32 %v6748, %v6844
      %v6846 = vpop.f32.mrb[0].mxu0
      %v6847 = vpop.f32.mrb[0].mxu0
      %v6848 = vadd.f32 %v6751, %v6847
      %v6849 = vpop.f32.mrb[0].mxu0
      %6850 = vmatprep.mubr.bf16.mxu0 %v6055
      %6851 = vmatmul.mubr.bf16.gmra.mrb[0].mxu0 %v6054
      %v6852 = vpop.f32.mrb[0].mxu0
      %v6853 = vadd.f32 %v6756, %v6852
      %v6854 = vpop.f32.mrb[0].mxu0
      %v6855 = vpop.f32.mrb[0].mxu0
      %v6856 = vadd.f32 %v6759, %v6855
      %v6857 = vpop.f32.mrb[0].mxu0
      %6858 = vmatprep.mubr.bf16.mxu0 %v6064
      %6859 = vmatmul.mubr.bf16.gmra.mrb[0].mxu0 %v6063
      %v6860 = vpop.f32.mrb[0].mxu0
      %v6861 = vadd.f32 %v6764, %v6860
      %v6862 = vpop.f32.mrb[0].mxu0
      %v6863 = vpop.f32.mrb[0].mxu0
      %v6864 = vadd.f32 %v6767, %v6863
      %v6865 = vpop.f32.mrb[0].mxu0
      %6866 = vmatprep.mubr.bf16.mxu0 %v6073
      %6867 = vmatmul.mubr.bf16.gmra.mrb[0].mxu0 %v6072
      %v6868 = vpop.f32.mrb[0].mxu0
      %v6869 = vadd.f32 %v6772, %v6868
      %v6870 = vpop.f32.mrb[0].mxu0
      %v6871 = vpop.f32.mrb[0].mxu0
      %v6872 = vadd.f32 %v6775, %v6871
      %v6873 = vpop.f32.mrb[0].mxu0
      %6874 = vmatprep.mubr.bf16.mxu0 %v6082
      %6875 = vmatmul.mubr.bf16.gmra.mrb[0].mxu0 %v6081
      %v6876 = vpop.f32.mrb[0].mxu0
      %v6877 = vadd.f32 %v6780, %v6876
      %v6878 = vpop.f32.mrb[0].mxu0
      %v6879 = vpop.f32.mrb[0].mxu0
      %v6880 = vadd.f32 %v6783, %v6879
      %v6881 = vpop.f32.mrb[0].mxu0
      %6882 = vmatprep.mubr.bf16.mxu0 %v6091
      %6883 = vmatmul.mubr.bf16.gmra.mrb[0].mxu0 %v6090
      %v6884 = vpop.f32.mrb[0].mxu0
      %v6885 = vadd.f32 %v6788, %v6884
      %v6886 = vpop.f32.mrb[0].mxu0
      %v6887 = vpop.f32.mrb[0].mxu0
      %v6888 = vadd.f32 %v6791, %v6887
      %v6889 = vpop.f32.mrb[0].mxu0
      %6890 = vmatprep.mubr.bf16.mxu0 %v6100
      %6891 = vmatmul.mubr.bf16.gmra.mrb[0].mxu0 %v6099
      %v6892 = vpop.f32.mrb[0].mxu0
      %v6893 = vadd.f32 %v6796, %v6892
      %v6894 = vpop.f32.mrb[0].mxu0
      %v6895 = vpop.f32.mrb[0].mxu0
      %v6896 = vadd.f32 %v6799, %v6895
      %v6897 = vpop.f32.mrb[0].mxu0
      %6898 = vdwg.mxu0
      %6899 = vmatprep.subr.bf16.mxu0 0
      %6900 = vmatpush1.bf16.msra.mxu0 %v6512
      %6901 = vmatprep.subr.bf16.mxu0 0
      %6902 = vmatpush1.bf16.msra.mxu0 %v6513
      %6903 = vmatprep.subr.bf16.mxu0 0
      %6904 = vmatpush1.bf16.msra.mxu0 %v6514
      %6905 = vmatprep.subr.bf16.mxu0 0
      %6906 = vmatpush1.bf16.msra.mxu0 %v6515
      %6907 = vmatprep.subr.bf16.mxu0 0
      %6908 = vmatpush1.bf16.msra.mxu0 %v6516
      %6909 = vmatprep.subr.bf16.mxu0 0
      %6910 = vmatpush1.bf16.msra.mxu0 %v6517
      %6911 = vmatprep.subr.bf16.mxu0 0
      %6912 = vmatpush1.bf16.msra.mxu0 %v6518
      %6913 = vmatprep.subr.bf16.mxu0 0
      %6914 = vmatpush1.bf16.msra.mxu0 %v6519
      %6915 = vmatprep.subr.bf16.mxu0 0
      %6916 = vmatpush1.bf16.msra.mxu0 %v6520
      %6917 = vmatprep.subr.bf16.mxu0 0
      %6918 = vmatpush1.bf16.msra.mxu0 %v6521
      %6919 = vmatprep.subr.bf16.mxu0 0
      %6920 = vmatpush1.bf16.msra.mxu0 %v6522
      %6921 = vmatprep.subr.bf16.mxu0 0
      %6922 = vmatpush1.bf16.msra.mxu0 %v6523
      %6923 = vmatprep.subr.bf16.mxu0 0
      %6924 = vmatpush1.bf16.msra.mxu0 %v6524
      %6925 = vmatprep.subr.bf16.mxu0 0
      %6926 = vmatpush1.bf16.msra.mxu0 %v6525
      %6927 = vmatprep.subr.bf16.mxu0 0
      %6928 = vmatpush1.bf16.msra.mxu0 %v6526
      %6929 = vmatprep.subr.bf16.mxu0 0
      %6930 = vmatpush1.bf16.msra.mxu0 %v6527
      %6931 = vmatprep.mubr.bf16.mxu0 %v6039
      %6932 = vmatmul.mubr.bf16.gmra.mrb[0].mxu0 %v6038
      %v6933 = vpop.f32.mrb[0].mxu0
      %v6934 = vadd.f32 %v6837, %v6933
      %v6935 = vpop.f32.mrb[0].mxu0
      %v6936 = vpop.f32.mrb[0].mxu0
      %v6937 = vadd.f32 %v6840, %v6936
      %v6938 = vpop.f32.mrb[0].mxu0
      %6939 = vmatprep.mubr.bf16.mxu0 %v6048
      %6940 = vmatmul.mubr.bf16.gmra.mrb[0].mxu0 %v6047
      %v6941 = vpop.f32.mrb[0].mxu0
      %v6942 = vadd.f32 %v6845, %v6941
      %v6943 = vpop.f32.mrb[0].mxu0
      %v6944 = vpop.f32.mrb[0].mxu0
      %v6945 = vadd.f32 %v6848, %v6944
      %v6946 = vpop.f32.mrb[0].mxu0
      %6947 = vmatprep.mubr.bf16.mxu0 %v6057
      %6948 = vmatmul.mubr.bf16.gmra.mrb[0].mxu0 %v6056
      %v6949 = vpop.f32.mrb[0].mxu0
      %v6950 = vadd.f32 %v6853, %v6949
      %v6951 = vpop.f32.mrb[0].mxu0
      %v6952 = vpop.f32.mrb[0].mxu0
      %v6953 = vadd.f32 %v6856, %v6952
      %v6954 = vpop.f32.mrb[0].mxu0
      %6955 = vmatprep.mubr.bf16.mxu0 %v6066
      %6956 = vmatmul.mubr.bf16.gmra.mrb[0].mxu0 %v6065
      %v6957 = vpop.f32.mrb[0].mxu0
      %v6958 = vadd.f32 %v6861, %v6957
      %v6959 = vpop.f32.mrb[0].mxu0
      %v6960 = vpop.f32.mrb[0].mxu0
      %v6961 = vadd.f32 %v6864, %v6960
      %v6962 = vpop.f32.mrb[0].mxu0
      %6963 = vmatprep.mubr.bf16.mxu0 %v6075
      %6964 = vmatmul.mubr.bf16.gmra.mrb[0].mxu0 %v6074
      %v6965 = vpop.f32.mrb[0].mxu0
      %v6966 = vadd.f32 %v6869, %v6965
      %v6967 = vpop.f32.mrb[0].mxu0
      %v6968 = vpop.f32.mrb[0].mxu0
      %v6969 = vadd.f32 %v6872, %v6968
      %v6970 = vpop.f32.mrb[0].mxu0
      %6971 = vmatprep.mubr.bf16.mxu0 %v6084
      %6972 = vmatmul.mubr.bf16.gmra.mrb[0].mxu0 %v6083
      %v6973 = vpop.f32.mrb[0].mxu0
      %v6974 = vadd.f32 %v6877, %v6973
      %v6975 = vpop.f32.mrb[0].mxu0
      %v6976 = vpop.f32.mrb[0].mxu0
      %v6977 = vadd.f32 %v6880, %v6976
      %v6978 = vpop.f32.mrb[0].mxu0
      %6979 = vmatprep.mubr.bf16.mxu0 %v6093
      %6980 = vmatmul.mubr.bf16.gmra.mrb[0].mxu0 %v6092
      %v6981 = vpop.f32.mrb[0].mxu0
      %v6982 = vadd.f32 %v6885, %v6981
      %v6983 = vpop.f32.mrb[0].mxu0
      %v6984 = vpop.f32.mrb[0].mxu0
      %v6985 = vadd.f32 %v6888, %v6984
      %v6986 = vpop.f32.mrb[0].mxu0
      %6987 = vmatprep.mubr.bf16.mxu0 %v6102
      %6988 = vmatmul.mubr.bf16.gmra.mrb[0].mxu0 %v6101
      %v6989 = vpop.f32.mrb[0].mxu0
      %v6990 = vadd.f32 %v6893, %v6989
      %v6991 = vpop.f32.mrb[0].mxu0
      %v6992 = vpop.f32.mrb[0].mxu0
      %v6993 = vadd.f32 %v6896, %v6992
      %v6994 = vpop.f32.mrb[0].mxu0
      %6995 = vdwg.mxu0
      %6996 = vmatprep.subr.bf16.mxu0 0
      %6997 = vmatpush1.bf16.msra.mxu0 %v6528
      %6998 = vmatprep.subr.bf16.mxu0 0
      %6999 = vmatpush1.bf16.msra.mxu0 %v6529
      %7000 = vmatprep.subr.bf16.mxu0 0
      %7001 = vmatpush1.bf16.msra.mxu0 %v6530
      %7002 = vmatprep.subr.bf16.mxu0 0
      %7003 = vmatpush1.bf16.msra.mxu0 %v6531
      %7004 = vmatprep.subr.bf16.mxu0 0
      %7005 = vmatpush1.bf16.msra.mxu0 %v6532
      %7006 = vmatprep.subr.bf16.mxu0 0
      %7007 = vmatpush1.bf16.msra.mxu0 %v6533
      %7008 = vmatprep.subr.bf16.mxu0 0
      %7009 = vmatpush1.bf16.msra.mxu0 %v6534
      %7010 = vmatprep.subr.bf16.mxu0 0
      %7011 = vmatpush1.bf16.msra.mxu0 %v6535
      %7012 = vmatprep.subr.bf16.mxu0 0
      %7013 = vmatpush1.bf16.msra.mxu0 0
      %7014 = vmatprep.subr.bf16.mxu0 0
      %7015 = vmatpush1.bf16.msra.mxu0 0
      %7016 = vmatprep.subr.bf16.mxu0 0
      %7017 = vmatpush1.bf16.msra.mxu0 0
      %7018 = vmatprep.subr.bf16.mxu0 0
      %7019 = vmatpush1.bf16.msra.mxu0 0
      %7020 = vmatprep.subr.bf16.mxu0 0
      %7021 = vmatpush1.bf16.msra.mxu0 0
      %7022 = vmatprep.subr.bf16.mxu0 0
      %7023 = vmatpush1.bf16.msra.mxu0 0
      %7024 = vmatprep.subr.bf16.mxu0 0
      %7025 = vmatpush1.bf16.msra.mxu0 0
      %7026 = vmatprep.subr.bf16.mxu0 0
      %7027 = vmatpush1.bf16.msra.mxu0 0
      %7028 = vmatprep.mubr.bf16.mxu0 0
      %7029 = vmatmul.mubr.bf16.gmra.mrb[0].mxu0 %v6040
      %v7030 = vpop.f32.mrb[0].mxu0
      %v7031 = vadd.f32 %v6934, %v7030
      %v7032 = vpop.f32.mrb[0].mxu0
      %v7033 = vpop.f32.mrb[0].mxu0
      %v7034 = vadd.f32 %v6937, %v7033
      %v7035 = vpop.f32.mrb[0].mxu0
      %7036 = vmatprep.mubr.bf16.mxu0 0
      %7037 = vmatmul.mubr.bf16.gmra.mrb[0].mxu0 %v6049
      %v7038 = vpop.f32.mrb[0].mxu0
      %v7039 = vadd.f32 %v6942, %v7038
      %v7040 = vpop.f32.mrb[0].mxu0
      %v7041 = vpop.f32.mrb[0].mxu0
      %v7042 = vadd.f32 %v6945, %v7041
      %v7043 = vpop.f32.mrb[0].mxu0
      %7044 = vmatprep.mubr.bf16.mxu0 0
      %7045 = vmatmul.mubr.bf16.gmra.mrb[0].mxu0 %v6058
      %v7046 = vpop.f32.mrb[0].mxu0
      %v7047 = vadd.f32 %v6950, %v7046
      %v7048 = vpop.f32.mrb[0].mxu0
      %v7049 = vpop.f32.mrb[0].mxu0
      %v7050 = vadd.f32 %v6953, %v7049
      %v7051 = vpop.f32.mrb[0].mxu0
      %7052 = vmatprep.mubr.bf16.mxu0 0
      %7053 = vmatmul.mubr.bf16.gmra.mrb[0].mxu0 %v6067
      %v7054 = vpop.f32.mrb[0].mxu0
      %v7055 = vadd.f32 %v6958, %v7054
      %v7056 = vpop.f32.mrb[0].mxu0
      %v7057 = vpop.f32.mrb[0].mxu0
      %v7058 = vadd.f32 %v6961, %v7057
      %v7059 = vpop.f32.mrb[0].mxu0
      %7060 = vmatprep.mubr.bf16.mxu0 0
      %7061 = vmatmul.mubr.bf16.gmra.mrb[0].mxu0 %v6076
      %v7062 = vpop.f32.mrb[0].mxu0
      %v7063 = vadd.f32 %v6966, %v7062
      %v7064 = vpop.f32.mrb[0].mxu0
      %v7065 = vpop.f32.mrb[0].mxu0
      %v7066 = vadd.f32 %v6969, %v7065
      %v7067 = vpop.f32.mrb[0].mxu0
      %7068 = vmatprep.mubr.bf16.mxu0 0
      %7069 = vmatmul.mubr.bf16.gmra.mrb[0].mxu0 %v6085
      %v7070 = vpop.f32.mrb[0].mxu0
      %v7071 = vadd.f32 %v6974, %v7070
      %v7072 = vpop.f32.mrb[0].mxu0
      %v7073 = vpop.f32.mrb[0].mxu0
      %v7074 = vadd.f32 %v6977, %v7073
      %v7075 = vpop.f32.mrb[0].mxu0
      %7076 = vmatprep.mubr.bf16.mxu0 0
      %7077 = vmatmul.mubr.bf16.gmra.mrb[0].mxu0 %v6094
      %v7078 = vpop.f32.mrb[0].mxu0
      %v7079 = vadd.f32 %v6982, %v7078
      %v7080 = vpop.f32.mrb[0].mxu0
      %v7081 = vpop.f32.mrb[0].mxu0
      %v7082 = vadd.f32 %v6985, %v7081
      %v7083 = vpop.f32.mrb[0].mxu0
      %7084 = vmatprep.mubr.bf16.mxu0 0
      %7085 = vmatmul.mubr.bf16.gmra.mrb[0].mxu0 %v6103
      %v7086 = vpop.f32.mrb[0].mxu0
      %v7087 = vadd.f32 %v6990, %v7086
      %v7088 = vpop.f32.mrb[0].mxu0
      %v7089 = vpop.f32.mrb[0].mxu0
      %v7090 = vadd.f32 %v6993, %v7089
      %v7091 = vpop.f32.mrb[0].mxu0
      %7092 = vdwg.mxu0
      %v7093 = vmax.f32 %v7031, 0.0
      %v7094 = vmax.f32 %v7034, 0.0
      %v7095 = vmax.f32 %v7039, 0.0
      %v7096 = vmax.f32 %v7042, 0.0
      %v7097 = vmax.f32 %v7047, 0.0
      %v7098 = vmax.f32 %v7050, 0.0
      %v7099 = vmax.f32 %v7055, 0.0
      %v7100 = vmax.f32 %v7058, 0.0
      %v7101 = vmax.f32 %v7063, 0.0
      %v7102 = vmax.f32 %v7066, 0.0
      %v7103 = vmax.f32 %v7071, 0.0
      %v7104 = vmax.f32 %v7074, 0.0
      %v7105 = vmax.f32 %v7079, 0.0
      %v7106 = vmax.f32 %v7082, 0.0
      %v7107 = vmax.f32 %v7087, 0.0
      %v7108 = vmax.f32 %v7090, 0.0
      %v7109 = vld [vmem:[%s224] sm:$0xff]
      %v7110 = vld [vmem:[%s224 + $0x8] sm:$0xff]
      %v7111 = vld [vmem:[%s224 + $0x10] sm:$0xff]
      %v7112 = vld [vmem:[%s224 + $0x18] sm:$0xff]
      %v7113 = vld [vmem:[%s224 + $0x20] sm:$0xff]
      %v7114 = vld [vmem:[%s224 + $0x28] sm:$0xff]
      %v7115 = vld [vmem:[%s224 + $0x30] sm:$0xff]
      %v7116 = vld [vmem:[%s224 + $0x38] sm:$0xff]
      %v7117 = vld [vmem:[%s224 + $0x40] sm:$0xff]
      %v7118 = vld [vmem:[%s224 + $0x48] sm:$0xff]
      %v7119 = vld [vmem:[%s224 + $0x50] sm:$0xff]
      %v7120 = vld [vmem:[%s224 + $0x58] sm:$0xff]
      %v7121 = vld [vmem:[%s224 + $0x60] sm:$0xff]
      %v7122 = vld [vmem:[%s224 + $0x68] sm:$0xff]
      %v7123 = vld [vmem:[%s224 + $0x70] sm:$0xff]
      %v7124 = vld [vmem:[%s224 + $0x78] sm:$0xff]
      %v7125 = vadd.f32 %v7093, %v7109
      %v7126 = vadd.f32 %v7094, %v7110
      %v7127 = vadd.f32 %v7095, %v7111
      %v7128 = vadd.f32 %v7096, %v7112
      %v7129 = vadd.f32 %v7097, %v7113
      %v7130 = vadd.f32 %v7098, %v7114
      %v7131 = vadd.f32 %v7099, %v7115
      %v7132 = vadd.f32 %v7100, %v7116
      %v7133 = vadd.f32 %v7101, %v7117
      %v7134 = vadd.f32 %v7102, %v7118
      %v7135 = vadd.f32 %v7103, %v7119
      %v7136 = vadd.f32 %v7104, %v7120
      %v7137 = vadd.f32 %v7105, %v7121
      %v7138 = vadd.f32 %v7106, %v7122
      %v7139 = vadd.f32 %v7107, %v7123
      %v7140 = vadd.f32 %v7108, %v7124
      %7141 = vst [vmem:[%s231] sm:$0xff] %v7125
      %7142 = vst [vmem:[%s231 + $0x8] sm:$0xff] %v7126
      %7143 = vst [vmem:[%s231 + $0x10] sm:$0xff] %v7127
      %7144 = vst [vmem:[%s231 + $0x18] sm:$0xff] %v7128
      %7145 = vst [vmem:[%s231 + $0x20] sm:$0xff] %v7129
      %7146 = vst [vmem:[%s231 + $0x28] sm:$0xff] %v7130
      %7147 = vst [vmem:[%s231 + $0x30] sm:$0xff] %v7131
      %7148 = vst [vmem:[%s231 + $0x38] sm:$0xff] %v7132
      %7149 = vst [vmem:[%s231 + $0x40] sm:$0xff] %v7133
      %7150 = vst [vmem:[%s231 + $0x48] sm:$0xff] %v7134
      %7151 = vst [vmem:[%s231 + $0x50] sm:$0xff] %v7135
      %7152 = vst [vmem:[%s231 + $0x58] sm:$0xff] %v7136
      %7153 = vst [vmem:[%s231 + $0x60] sm:$0xff] %v7137
      %7154 = vst [vmem:[%s231 + $0x68] sm:$0xff] %v7138
      %7155 = vst [vmem:[%s231 + $0x70] sm:$0xff] %v7139
      %7156 = vst [vmem:[%s231 + $0x78] sm:$0xff] %v7140
      %s7157 = smul.u32 2, %s16
      %p7158 = scmp.lt.s32.totalorder %s7157, 3
      %s7159 = scalar_select %p7158, %s7157, 3
      %s7160 = smul.addr %s7159, 8
      %s7161 = smul.addr %s7160, 8
      %s7162 = scalar_lea.vmem %s5, %s7161
      // Predicated region
      $region41: #{unet_res_conv3d.1} parent=39 // pred_check
        %p7163 = pneg %p144
      $region42: #{unet_res_conv3d.1} parent=39 // pred_check_branch
        %7165 = sbr.rel (%p7163) target = $region44
      $region43: #{unet_res_conv3d.1} parent=39 // pred_region
        %s7166 = smul.u32 2, %s16
      $region44: #{unet_res_conv3d.1} parent=39 // pred_fallthru
        _
    $region40: #{unet_res_conv3d.1} parent=5 // pred_fallthru
      _
    %p7167 = scmp.le.s32.totalorder 2, %s11
    // Predicated region
    $region45: #{unet_res_conv3d.1} parent=5 // pred_check
      %p7168 = pneg %p7167
    $region46: #{unet_res_conv3d.1} parent=5 // pred_check_branch
      %7170 = sbr.rel (%p7168) target = $region48
    $region47: #{unet_res_conv3d.1} parent=5 // pred_region
      %s7171 = ssub.s32 %s11, 2
      // Predicated region
      $region49: #{unet_res_conv3d.1} parent=47 // pred_check
        %p7172 = pneg %p150
      $region50: #{unet_res_conv3d.1} parent=47 // pred_check_branch
        %7174 = sbr.rel (%p7172) target = $region52
      $region51: #{unet_res_conv3d.1} parent=47 // pred_region
        %s7175 = smul.u32 2, %s17
        %p7176 = scmp.lt.s32.totalorder %s7175, 3
        %s7177 = scalar_select %p7176, %s7175, 3
        %s7178 = smul.addr %s7177, 8
        %s7179 = smul.addr %s7178, 8
        %s7180 = scalar_lea.vmem %s5, %s7179
      $region52: #{unet_res_conv3d.1} parent=47 // pred_fallthru
        _
    $region48: #{unet_res_conv3d.1} parent=5 // pred_fallthru
      _
  $region6: #{unet_res_conv3d.1} parent=0 // loop_footer
    %s15 = sadd.s32 1, %s11
  $region7: #{unet_res_conv3d.1} parent=0 // loop_footer_branch
    %10 = sbr.rel target = $region3
  $region8: #{unet_res_conv3d.1} parent=0 // loop_exit
    _

</llo_original>
